<compile_context>
chip_gen: v6e
topology: v6e:2x2x1
jax: 0.10.0
libtpu: 0.0.40
codegen_flags: <defaults>
</compile_context>

<pallas_src>
import jax
import jax.numpy as jnp
from jax import lax
from jax.experimental import pallas as pl
from jax.experimental.pallas import tpu as pltpu


def _lossnet_kernel(x1_ref, x2_ref, x3_ref, x4_ref,
                    w1_ref, w2_ref, w3_ref, w4_ref, bb_ref,
                    cat_ref, norm_ref):
    """Fused: (avg-pool folded into matmul) -> +bias -> ReLU
    (== concat of the four per-scale relu(FC_i(avgpool_i)))  -> l2_norm."""

    def fc(x_ref, w_ref):
        # x: (TB, C_i*HW_i) full-lane-width stream; w: expanded weight with
        # the per-scale block placed in columns [i*D, (i+1)*D) and zero
        # elsewhere, so accumulation reproduces the concat.
        return jnp.dot(x_ref[...].astype(jnp.float32), w_ref[...],
                       preferred_element_type=jnp.float32)

    acc = fc(x1_ref, w1_ref)
    acc += fc(x2_ref, w2_ref)
    acc += fc(x3_ref, w3_ref)
    acc += fc(x4_ref, w4_ref)

    cat = jnp.maximum(acc + bb_ref[...], 0.0)            # (TB, 4D) == dim_10
    cat_ref[...] = cat

    # l2_norm: input / sqrt(sum(input^2, dim=1) + 1e-10)  (EUP rsqrt)
    # TODO(synk): in the PyTorch source dim_512 is only assigned when
    # is_norm=True (otherwise forward raises UnboundLocalError); we return
    # l2_norm(cat) so all three outputs are defined.
    normp = jnp.sum(cat * cat, axis=-1, keepdims=True) + 1e-10
    norm_ref[...] = cat * lax.rsqrt(normp)


def _choose_tb(B, per_sample_bytes, out_row_bytes, resident_weight_bytes,
               budget_bytes=40 << 20):
    """Largest batch tile whose (double-buffered) working set fits the VMEM
    budget, preferring >=2 grid steps so the 'parallel' batch axis splits
    across v7x's two TensorCores."""
    for tb in (512, 256, 128, 64, 32, 16, 8):
        step = (2 * tb * per_sample_bytes          # 4 input streams, 2-deep
                + 2 * 2 * tb * out_row_bytes       # 2 outputs, 2-deep
                + resident_weight_bytes)           # packed weights + bias
        if step <= budget_bytes and B >= 2 * tb:
            return tb
    return 8                                       # tiny batches: pad to 8


def lossnet_forward(features, params):
    """features: list of 4 NCHW arrays (f32 or bf16). Returns (out, dim_10, dim_512)."""
    B = features[0].shape[0]
    D4 = params["bb"].shape[-1]

    # NCHW -> (B, C*H*W): contiguous reshape, no transpose / extra HBM pass.
    xs = [f.reshape(f.shape[0], -1) for f in features]
    ws = [params["W1e"], params["W2e"], params["W3e"], params["W4e"]]

    per_sample_bytes = sum(x.shape[1] * x.dtype.itemsize for x in xs)
    resident_w_bytes = 2 * (sum(int(w.size) for w in ws) * 4 + D4 * 4)
    TB = _choose_tb(B, per_sample_bytes, D4 * 4, resident_w_bytes)

    # Pad the batch to a multiple of TB; padded rows are sliced off below.
    Bp = -(-B // TB) * TB
    if Bp != B:
        xs = [jnp.pad(x, ((0, Bp - B), (0, 0))) for x in xs]
    grid = (Bp // TB,)

    # Size the scoped VMEM limit to the actual tiling (defaults: 16 MiB v5e,
    # 32 MiB v6e/v7x). Cap below v7x's 64 MiB physical VMEM.
    step_bytes = (2 * TB * per_sample_bytes + 2 * 2 * TB * D4 * 4
                  + resident_w_bytes)
    vmem_limit = max(min(int(1.3 * step_bytes) + (2 << 20), 56 << 20), 32 << 20)

    row_map = lambda b: (b, 0)
    const_map = lambda b: (0, 0)      # weights stay resident across steps

    cat_p, norm_p = pl.pallas_call(
        _lossnet_kernel,
        out_shape=(
            jax.ShapeDtypeStruct((Bp, D4), jnp.float32),   # dim_10 (concat)
            jax.ShapeDtypeStruct((Bp, D4), jnp.float32),   # dim_512 (l2_norm)
        ),
        grid=grid,
        in_specs=[
            pl.BlockSpec((TB, xs[0].shape[1]), row_map),
            pl.BlockSpec((TB, xs[1].shape[1]), row_map),
            pl.BlockSpec((TB, xs[2].shape[1]), row_map),
            pl.BlockSpec((TB, xs[3].shape[1]), row_map),
            pl.BlockSpec(ws[0].shape, const_map),
            pl.BlockSpec(ws[1].shape, const_map),
            pl.BlockSpec(ws[2].shape, const_map),
            pl.BlockSpec(ws[3].shape, const_map),
            pl.BlockSpec((1, D4), const_map),
        ],
        out_specs=(
            pl.BlockSpec((TB, D4), row_map),
            pl.BlockSpec((TB, D4), row_map),
        ),
        compiler_params=pltpu.CompilerParams(
            dimension_semantics=("parallel",),   # batch splits across v7x's 2 TCs
            vmem_limit_bytes=vmem_limit,
        ),
    )(xs[0], xs[1], xs[2], xs[3], ws[0], ws[1], ws[2], ws[3], params["bb"])

    cat = cat_p[:B] if Bp != B else cat_p
    norm = norm_p[:B] if Bp != B else norm_p

    # Scalar head outside the kernel: (B,4D)@(4D,1)+b is a trivial lane-dense
    # XLA op and avoids a masked (TB,1) store inside the kernel.
    out = cat @ params["wl"] + params["bl"]
    return out, cat, norm


def init_params(key, num_channels, feature_sizes, interm_dim):
    """Per-layer weights (for the reference) + packed kernel weights.

    Packed once at init: per-scale pool-folded expanded weights
    W_i_exp[(c,hw), d] = W_i[c, d]/HW_i placed in column block
    [i*D, (i+1)*D) of a (C_i*HW_i, 4D) matrix, plus packed bias bb (1, 4D)."""
    keys = jax.random.split(key, 10)
    D4 = 4 * interm_dim
    params = {}
    for i, c in enumerate(num_channels):
        params[f"w{i + 1}"] = (jax.random.normal(keys[2 * i], (c, interm_dim),
                                                 jnp.float32) * 0.05)
        params[f"b{i + 1}"] = (jax.random.normal(keys[2 * i + 1], (1, interm_dim),
                                                 jnp.float32) * 0.05)
    params["wl"] = jax.random.normal(keys[8], (D4, 1), jnp.float32) * 0.05
    params["bl"] = jax.random.normal(keys[9], (1, 1), jnp.float32) * 0.05

    for i, (c, s) in enumerate(zip(num_channels, feature_sizes)):
        hw = s * s
        block = jnp.repeat(params[f"w{i + 1}"], hw, axis=0) / float(hw)  # (c*hw, D)
        Wexp = jnp.zeros((c * hw, D4), jnp.float32)
        Wexp = Wexp.at[:, i * interm_dim:(i + 1) * interm_dim].set(block)
        params[f"W{i + 1}e"] = Wexp
    params["bb"] = jnp.concatenate([params[f"b{i + 1}"] for i in range(4)], axis=-1)
    return params


def reference_forward(features, params):
    """Pure-JAX reference of the same forward pass (for correctness check)."""
    hs = []
    for i, f in enumerate(features):
        pooled = jnp.mean(f.astype(jnp.float32), axis=(2, 3))     # global avg pool
        h = pooled @ params[f"w{i + 1}"] + params[f"b{i + 1}"]
        hs.append(jnp.maximum(h, 0.0))
    cat = jnp.concatenate(hs, axis=1)
    out = cat @ params["wl"] + params["bl"]
    norm = cat / jnp.sqrt(jnp.sum(cat * cat, axis=1, keepdims=True) + 1e-10)
    return out, cat, norm


if __name__ == "__main__":
    key = jax.random.PRNGKey(0)
    k_feat, k_param = jax.random.split(key)

    # Small shapes consistent with LossNet(feature_sizes, num_channels, interm_dim).
    # batch=256 exercises the enlarged batch tile (TB=128, grid=(2,)).
    batch = 256
    feature_sizes = [16, 8, 4, 2]
    num_channels = [16, 32, 64, 128]
    interm_dim = 32                  # 4*interm_dim = 128: lane-aligned outputs

    fkeys = jax.random.split(k_feat, 4)
    features = [
        jax.random.normal(fkeys[i], (batch, num_channels[i],
                                     feature_sizes[i], feature_sizes[i]), jnp.float32)
        for i in range(4)
    ]

    params = init_params(k_param, num_channels, feature_sizes, interm_dim)

    out, dim_10, dim_512 = lossnet_forward(features, params)
    jax.block_until_ready((out, dim_10, dim_512))

    ref_out, ref_cat, ref_norm = reference_forward(features, params)
    # Tolerance slightly relaxed vs. 1e-4: folding the pool into the matmul
    # changes the f32 accumulation order over C*H*W terms.
    assert jnp.allclose(out, ref_out, atol=2e-4, rtol=2e-4)
    assert jnp.allclose(dim_10, ref_cat, atol=2e-4, rtol=2e-4)
    assert jnp.allclose(dim_512, ref_norm, atol=2e-4, rtol=2e-4)

    print("KERNEL_OK")
</pallas_src>

<mosaic_0001>
module attributes {stable_mosaic.version = 11 : i64} {
  func.func @_lossnet_kernel(%arg0: i32, %arg1: memref<128x4096xf32, #tpu.memory_space<vmem>>, %arg2: memref<128x2048xf32, #tpu.memory_space<vmem>>, %arg3: memref<128x1024xf32, #tpu.memory_space<vmem>>, %arg4: memref<128x512xf32, #tpu.memory_space<vmem>>, %arg5: memref<4096x128xf32, #tpu.memory_space<vmem>>, %arg6: memref<2048x128xf32, #tpu.memory_space<vmem>>, %arg7: memref<1024x128xf32, #tpu.memory_space<vmem>>, %arg8: memref<512x128xf32, #tpu.memory_space<vmem>>, %arg9: memref<1x128xf32, #tpu.memory_space<vmem>>, %arg10: memref<128x128xf32, #tpu.memory_space<vmem>>, %arg11: memref<128x128xf32, #tpu.memory_space<vmem>>) attributes {dimension_semantics = [#tpu.dimension_semantics<parallel>], iteration_bounds = array<i64: 2>, scalar_prefetch = 0 : i64, scratch_operands = 0 : i64, tpu.core_type = #tpu.core_type<tc>, window_params = [{transform_indices = @transform_0, window_bounds = array<i64: 128, 4096>}, {transform_indices = @transform_1, window_bounds = array<i64: 128, 2048>}, {transform_indices = @transform_2, window_bounds = array<i64: 128, 1024>}, {transform_indices = @transform_3, window_bounds = array<i64: 128, 512>}, {pipeline_mode = #tpu.pipeline_mode<synchronous>, transform_indices = @transform_4, window_bounds = array<i64: 4096, 128>}, {pipeline_mode = #tpu.pipeline_mode<synchronous>, transform_indices = @transform_5, window_bounds = array<i64: 2048, 128>}, {pipeline_mode = #tpu.pipeline_mode<synchronous>, transform_indices = @transform_6, window_bounds = array<i64: 1024, 128>}, {pipeline_mode = #tpu.pipeline_mode<synchronous>, transform_indices = @transform_7, window_bounds = array<i64: 512, 128>}, {pipeline_mode = #tpu.pipeline_mode<synchronous>, transform_indices = @transform_8, window_bounds = array<i64: 1, 128>}, {transform_indices = @transform_9, window_bounds = array<i64: 128, 128>}, {transform_indices = @transform_10, window_bounds = array<i64: 128, 128>}]} {
    %c0 = arith.constant 0 : index
    %c0_0 = arith.constant 0 : index
    %0 = vector.load %arg1[%c0, %c0_0] : memref<128x4096xf32, #tpu.memory_space<vmem>>, vector<128x4096xf32>
    %c0_1 = arith.constant 0 : index
    %c0_2 = arith.constant 0 : index
    %1 = vector.load %arg5[%c0_1, %c0_2] : memref<4096x128xf32, #tpu.memory_space<vmem>>, vector<4096x128xf32>
    %cst = arith.constant dense<0.000000e+00> : vector<128x128xf32>
    %2 = tpu.matmul %0, %1, %cst {dimension_numbers = #tpu.dot_dimension_numbers<[1], [0], [0], [1], [0, 0, 1, 1], [], []>} : vector<128x4096xf32>, vector<4096x128xf32>, vector<128x128xf32> -> vector<128x128xf32>
    %c0_3 = arith.constant 0 : index
    %c0_4 = arith.constant 0 : index
    %3 = vector.load %arg2[%c0_3, %c0_4] : memref<128x2048xf32, #tpu.memory_space<vmem>>, vector<128x2048xf32>
    %c0_5 = arith.constant 0 : index
    %c0_6 = arith.constant 0 : index
    %4 = vector.load %arg6[%c0_5, %c0_6] : memref<2048x128xf32, #tpu.memory_space<vmem>>, vector<2048x128xf32>
    %cst_7 = arith.constant dense<0.000000e+00> : vector<128x128xf32>
    %5 = tpu.matmul %3, %4, %cst_7 {dimension_numbers = #tpu.dot_dimension_numbers<[1], [0], [0], [1], [0, 0, 1, 1], [], []>} : vector<128x2048xf32>, vector<2048x128xf32>, vector<128x128xf32> -> vector<128x128xf32>
    %6 = arith.addf %2, %5 : vector<128x128xf32>
    %c0_8 = arith.constant 0 : index
    %c0_9 = arith.constant 0 : index
    %7 = vector.load %arg3[%c0_8, %c0_9] : memref<128x1024xf32, #tpu.memory_space<vmem>>, vector<128x1024xf32>
    %c0_10 = arith.constant 0 : index
    %c0_11 = arith.constant 0 : index
    %8 = vector.load %arg7[%c0_10, %c0_11] : memref<1024x128xf32, #tpu.memory_space<vmem>>, vector<1024x128xf32>
    %cst_12 = arith.constant dense<0.000000e+00> : vector<128x128xf32>
    %9 = tpu.matmul %7, %8, %cst_12 {dimension_numbers = #tpu.dot_dimension_numbers<[1], [0], [0], [1], [0, 0, 1, 1], [], []>} : vector<128x1024xf32>, vector<1024x128xf32>, vector<128x128xf32> -> vector<128x128xf32>
    %10 = arith.addf %6, %9 : vector<128x128xf32>
    %c0_13 = arith.constant 0 : index
    %c0_14 = arith.constant 0 : index
    %11 = vector.load %arg4[%c0_13, %c0_14] : memref<128x512xf32, #tpu.memory_space<vmem>>, vector<128x512xf32>
    %c0_15 = arith.constant 0 : index
    %c0_16 = arith.constant 0 : index
    %12 = vector.load %arg8[%c0_15, %c0_16] : memref<512x128xf32, #tpu.memory_space<vmem>>, vector<512x128xf32>
    %cst_17 = arith.constant dense<0.000000e+00> : vector<128x128xf32>
    %13 = tpu.matmul %11, %12, %cst_17 {dimension_numbers = #tpu.dot_dimension_numbers<[1], [0], [0], [1], [0, 0, 1, 1], [], []>} : vector<128x512xf32>, vector<512x128xf32>, vector<128x128xf32> -> vector<128x128xf32>
    %14 = arith.addf %10, %13 : vector<128x128xf32>
    %c0_18 = arith.constant 0 : index
    %c0_19 = arith.constant 0 : index
    %15 = vector.load %arg9[%c0_18, %c0_19] : memref<1x128xf32, #tpu.memory_space<vmem>>, vector<1x128xf32>
    %16 = vector.broadcast %15 : vector<1x128xf32> to vector<128x128xf32>
    %17 = arith.addf %14, %16 : vector<128x128xf32>
    %cst_20 = arith.constant 0.000000e+00 : f32
    %18 = vector.broadcast %cst_20 : f32 to vector<128x128xf32>
    %19 = arith.maximumf %17, %18 : vector<128x128xf32>
    %c0_21 = arith.constant 0 : index
    %c0_22 = arith.constant 0 : index
    %20 = vector.load %arg10[%c0_21, %c0_22] : memref<128x128xf32, #tpu.memory_space<vmem>>, vector<128x128xf32>
    tpu.vector_store %arg10[%c0_21, %c0_22], %19 {strides = array<i32>} : memref<128x128xf32, #tpu.memory_space<vmem>>, vector<128x128xf32>,
    %21 = arith.mulf %19, %19 : vector<128x128xf32>
    %cst_23 = arith.constant dense<0.000000e+00> : vector<128xf32>
    %22 = vector.multi_reduction <add>, %21, %cst_23 [1] : vector<128x128xf32> to vector<128xf32>
    %23 = vector.shape_cast %22 : vector<128xf32> to vector<128x1xf32>
    %cst_24 = arith.constant 1.000000e-10 : f32
    %24 = vector.broadcast %cst_24 : f32 to vector<128x1xf32>
    %25 = arith.addf %23, %24 : vector<128x1xf32>
    %26 = math.rsqrt %25 : vector<128x1xf32>
    %27 = vector.broadcast %26 : vector<128x1xf32> to vector<128x128xf32>
    %28 = arith.mulf %19, %27 : vector<128x128xf32>
    %c0_25 = arith.constant 0 : index
    %c0_26 = arith.constant 0 : index
    %29 = vector.load %arg11[%c0_25, %c0_26] : memref<128x128xf32, #tpu.memory_space<vmem>>, vector<128x128xf32>
    tpu.vector_store %arg11[%c0_25, %c0_26], %28 {strides = array<i32>} : memref<128x128xf32, #tpu.memory_space<vmem>>, vector<128x128xf32>,
    return
  }
  func.func @transform_0(%arg0: i32) -> (i32, i32) {
    %c0_i32 = arith.constant 0 : i32
    %c0_i32_0 = arith.constant 0 : i32
    return %arg0, %c0_i32 : i32, i32
  }
  func.func @transform_1(%arg0: i32) -> (i32, i32) {
    %c0_i32 = arith.constant 0 : i32
    %c0_i32_0 = arith.constant 0 : i32
    return %arg0, %c0_i32 : i32, i32
  }
  func.func @transform_2(%arg0: i32) -> (i32, i32) {
    %c0_i32 = arith.constant 0 : i32
    %c0_i32_0 = arith.constant 0 : i32
    return %arg0, %c0_i32 : i32, i32
  }
  func.func @transform_3(%arg0: i32) -> (i32, i32) {
    %c0_i32 = arith.constant 0 : i32
    %c0_i32_0 = arith.constant 0 : i32
    return %arg0, %c0_i32 : i32, i32
  }
  func.func @transform_4(%arg0: i32) -> (i32, i32) {
    %c0_i32 = arith.constant 0 : i32
    %c0_i32_0 = arith.constant 0 : i32
    %c0_i32_1 = arith.constant 0 : i32
    return %c0_i32, %c0_i32_0 : i32, i32
  }
  func.func @transform_5(%arg0: i32) -> (i32, i32) {
    %c0_i32 = arith.constant 0 : i32
    %c0_i32_0 = arith.constant 0 : i32
    %c0_i32_1 = arith.constant 0 : i32
    return %c0_i32, %c0_i32_0 : i32, i32
  }
  func.func @transform_6(%arg0: i32) -> (i32, i32) {
    %c0_i32 = arith.constant 0 : i32
    %c0_i32_0 = arith.constant 0 : i32
    %c0_i32_1 = arith.constant 0 : i32
    return %c0_i32, %c0_i32_0 : i32, i32
  }
  func.func @transform_7(%arg0: i32) -> (i32, i32) {
    %c0_i32 = arith.constant 0 : i32
    %c0_i32_0 = arith.constant 0 : i32
    %c0_i32_1 = arith.constant 0 : i32
    return %c0_i32, %c0_i32_0 : i32, i32
  }
  func.func @transform_8(%arg0: i32) -> (i32, i32) {
    %c0_i32 = arith.constant 0 : i32
    %c0_i32_0 = arith.constant 0 : i32
    %c0_i32_1 = arith.constant 0 : i32
    return %c0_i32, %c0_i32_0 : i32, i32
  }
  func.func @transform_9(%arg0: i32) -> (i32, i32) {
    %c0_i32 = arith.constant 0 : i32
    %c0_i32_0 = arith.constant 0 : i32
    return %arg0, %c0_i32 : i32, i32
  }
  func.func @transform_10(%arg0: i32) -> (i32, i32) {
    %c0_i32 = arith.constant 0 : i32
    %c0_i32_0 = arith.constant 0 : i32
    return %arg0, %c0_i32 : i32, i32
  }
}

</mosaic_0001>

<llo_original>
// kernel: tpu_custom_call.1
$region0: #{tpu_custom_call.1}
  #allocation0 [shape = 'u32[]', space=smem, size = 0x4, offset = 0x4, fixed_abs, tag = 'smem constant byte address 0x4 - core index']
  #allocation1 [shape = 'u32[144,128]{1,0:T(1,128)}', space=vmem, size = 0x12000, scoped, tag = 'internal scratch']
  %s0 = inlined_call_operand.hbm [shape: f32[256,4096], index: 0, kind: input, shape index: {}]
  %s1 = inlined_call_operand.hbm [shape: f32[256,2048], index: 1, kind: input, shape index: {}]
  %s2 = inlined_call_operand.hbm [shape: f32[256,1024], index: 2, kind: input, shape index: {}]
  %s3 = inlined_call_operand.hbm [shape: f32[256,512], index: 3, kind: input, shape index: {}]
  %s4 = inlined_call_operand.hbm [shape: f32[4096,128], index: 4, kind: input, shape index: {}]
  %s5 = inlined_call_operand.hbm [shape: f32[2048,128], index: 5, kind: input, shape index: {}]
  %s6 = inlined_call_operand.hbm [shape: f32[1024,128], index: 6, kind: input, shape index: {}]
  %s7 = inlined_call_operand.hbm [shape: f32[512,128], index: 7, kind: input, shape index: {}]
  %s8 = inlined_call_operand.hbm [shape: f32[1,128], index: 8, kind: input, shape index: {}]
  %s9 = inlined_call_operand.hbm [shape: f32[256,128], index: 9, kind: output, shape index: {0}]
  %s10 = inlined_call_operand.hbm [shape: f32[256,128], index: 10, kind: output, shape index: {1}]
  %11 = xla_tuple %s9, %s10
  %s12 = sld [smem:[#allocation0]]
  $region113: #{tpu_custom_call.1} parent=0
    _
  %s14 = ssub.s32 1, %s12
  %s15 = scalar_select 0, %s14, %s12
  $region1: #{tpu_custom_call.1} parent=0
    #allocation2 [shape = 'u8[4194304]{0}', space=vmem, size = 0x400000, scoped, tag = 'input window, operand 0']
    #allocation3 [shape = 's32[2]{0}', space=sflag, size = 0x8, scoped, tag = 'scoped memory for tpu_custom_call.1']
    #allocation4 [shape = 's32[2]{0}', space=sflag, size = 0x8, scoped, tag = 'scoped memory for tpu_custom_call.1']
    #allocation5 [shape = 'u8[2097152]{0}', space=vmem, size = 0x200000, scoped, tag = 'input window, operand 1']
    #allocation6 [shape = 's32[2]{0}', space=sflag, size = 0x8, scoped, tag = 'scoped memory for tpu_custom_call.1']
    #allocation7 [shape = 'u8[1048576]{0}', space=vmem, size = 0x100000, scoped, tag = 'input window, operand 2']
    #allocation8 [shape = 'u8[524288]{0}', space=vmem, size = 0x80000, scoped, tag = 'input window, operand 3']
    #allocation9 [shape = 's32[2]{0}', space=sflag, size = 0x8, scoped, tag = 'scoped memory for tpu_custom_call.1']
    #allocation10 [shape = 'u8[2097152]{0}', space=vmem, size = 0x200000, scoped, tag = 'input window, operand 4, single buffered']
    #allocation11 [shape = 'u8[1048576]{0}', space=vmem, size = 0x100000, scoped, tag = 'input window, operand 5, single buffered']
    #allocation12 [shape = 's32[1]{0}', space=sflag, size = 0x4, scoped, tag = 'scoped memory for tpu_custom_call.1']
    #allocation13 [shape = 'u8[524288]{0}', space=vmem, size = 0x80000, scoped, tag = 'input window, operand 6, single buffered']
    #allocation14 [shape = 'u8[262144]{0}', space=vmem, size = 0x40000, scoped, tag = 'input window, operand 7, single buffered']
    #allocation15 [shape = 's32[1]{0}', space=sflag, size = 0x4, scoped, tag = 'scoped memory for tpu_custom_call.1']
    #allocation16 [shape = 'u8[512]{0}', space=vmem, size = 0x400, scoped, tag = 'input window, operand 8, single buffered']
    #allocation17 [shape = 'u8[131072]{0}', space=vmem, size = 0x20000, scoped, tag = 'output window, operand 0']
    #allocation18 [shape = 'u8[131072]{0}', space=vmem, size = 0x20000, scoped, tag = 'output window, operand 1']
    #allocation19 [shape = 's32[2]{0}', space=sflag, size = 0x8, scoped, tag = 'scoped memory for tpu_custom_call.1']
    %16 = vsyncpa [#allocation3], 0
    %s17 = scalar_lea.sflag [#allocation3], 1
    %18 = vsyncpa %s17, 0
    %19 = vsyncpa [#allocation6], 0
    %s20 = scalar_lea.sflag [#allocation6], 1
    %21 = vsyncpa %s20, 0
    %22 = vsyncpa [#allocation9], 0
    %s23 = scalar_lea.sflag [#allocation9], 1
    %24 = vsyncpa %s23, 0
    %25 = vsyncpa [#allocation12], 0
    %26 = vsyncpa [#allocation15], 0
    %27 = vsyncpa [#allocation4], 0
    %s28 = scalar_lea.sflag [#allocation4], 1
    %29 = vsyncpa %s28, 0
    %30 = vsyncpa [#allocation19], 0
    %s31 = scalar_lea.sflag [#allocation19], 1
    %32 = vsyncpa %s31, 0
    loop: start=0, step=1, limit=4
    $region2: #{tpu_custom_call.1} parent=1 // loop_pre_header
      _
    $region3: #{tpu_custom_call.1} parent=1 // loop_header
      %s34 = sphi 0, %s38
      %p35 = scmp.ge.s32.totalorder %s34, 4
      %s44 = sphi 0, %s46
      %s47 = sphi 0, %s44
      %s48 = sphi 0, %s47
      %s64 = sphi 0, %s48
      %s70 = sphi 0, %s72
      %s73 = sphi 0, %s70
      %s74 = sphi 0, %s73
      %s90 = sphi 0, %s74
      %s96 = sphi 0, %s98
      %s99 = sphi 0, %s96
      %s100 = sphi 0, %s99
      %s116 = sphi 0, %s100
      %s122 = sphi 0, %s124
      %s125 = sphi 0, %s122
      %s126 = sphi 0, %s125
      %s142 = sphi 0, %s126
      %s146 = sphi 0, %s146
      %s148 = sphi 0, %s146
      %s149 = sphi 0, %s148
      %s163 = sphi 0, %s149
      %s167 = sphi 0, %s167
      %s169 = sphi 0, %s167
      %s170 = sphi 0, %s169
      %s184 = sphi 0, %s170
      %s188 = sphi 0, %s188
      %s190 = sphi 0, %s188
      %s191 = sphi 0, %s190
      %s205 = sphi 0, %s191
      %s209 = sphi 0, %s209
      %s211 = sphi 0, %s209
      %s212 = sphi 0, %s211
      %s226 = sphi 0, %s212
      %s230 = sphi 0, %s230
      %s232 = sphi 0, %s230
      %s233 = sphi 0, %s232
      %s247 = sphi 0, %s233
      %s253 = sphi 0, %s255
      %s256 = sphi 0, %s253
      %s257 = sphi 0, %s256
      %s273 = sphi 0, %s257
      %s279 = sphi 0, %s281
      %s282 = sphi 0, %s279
      %s283 = sphi 0, %s282
      %s299 = sphi 0, %s283
    $region4: #{tpu_custom_call.1} parent=1 // loop_header_branch
      %37 = sbr.rel (%p35) target = $region8
    $region5: #{tpu_custom_call.1} parent=1 // loop_body
      %s39 = ssub.s32 %s34, 1
      %s40 = ssub.s32 %s34, 2
      %s41 = sadd.s32 %s34, 1
      %s42 = ssub.s32 %s34, %s41
      %p43 = scmp.eq.s32.totalorder %s42, 0
      %s45 = sadd.s32 %s44, 1
      %s46 = scalar_select %p43, %s44, %s45
      %p49 = pneg %p43
      %p50 = scmp.eq.s32.totalorder %s34, 1
      %p51 = por %p49, %p50
      %p52 = scmp.ne.s32.totalorder %s44, %s47
      %p53 = scmp.eq.s32.totalorder %s34, 0
      %p54 = por %p52, %p53
      %p55 = scmp.ne.s32.totalorder %s44, %s47
      %p56 = scmp.eq.s32.totalorder %s39, 1
      %p57 = por %p55, %p56
      %p58 = scmp.ne.s32.totalorder %s47, %s48
      %p59 = scmp.eq.s32.totalorder %s39, 0
      %p60 = por %p58, %p59
      %p61 = scmp.ne.s32.totalorder %s47, %s48
      %p62 = scmp.eq.s32.totalorder %s40, 1
      %p63 = por %p61, %p62
      %p65 = scmp.ne.s32.totalorder %s48, %s64
      %p66 = scmp.eq.s32.totalorder %s40, 0
      %p67 = por %p65, %p66
      %s68 = ssub.s32 %s34, %s41
      %p69 = scmp.eq.s32.totalorder %s68, 0
      %s71 = sadd.s32 %s70, 1
      %s72 = scalar_select %p69, %s70, %s71
      %p75 = pneg %p69
      %p76 = scmp.eq.s32.totalorder %s34, 1
      %p77 = por %p75, %p76
      %p78 = scmp.ne.s32.totalorder %s70, %s73
      %p79 = scmp.eq.s32.totalorder %s34, 0
      %p80 = por %p78, %p79
      %p81 = scmp.ne.s32.totalorder %s70, %s73
      %p82 = scmp.eq.s32.totalorder %s39, 1
      %p83 = por %p81, %p82
      %p84 = scmp.ne.s32.totalorder %s73, %s74
      %p85 = scmp.eq.s32.totalorder %s39, 0
      %p86 = por %p84, %p85
      %p87 = scmp.ne.s32.totalorder %s73, %s74
      %p88 = scmp.eq.s32.totalorder %s40, 1
      %p89 = por %p87, %p88
      %p91 = scmp.ne.s32.totalorder %s74, %s90
      %p92 = scmp.eq.s32.totalorder %s40, 0
      %p93 = por %p91, %p92
      %s94 = ssub.s32 %s34, %s41
      %p95 = scmp.eq.s32.totalorder %s94, 0
      %s97 = sadd.s32 %s96, 1
      %s98 = scalar_select %p95, %s96, %s97
      %p101 = pneg %p95
      %p102 = scmp.eq.s32.totalorder %s34, 1
      %p103 = por %p101, %p102
      %p104 = scmp.ne.s32.totalorder %s96, %s99
      %p105 = scmp.eq.s32.totalorder %s34, 0
      %p106 = por %p104, %p105
      %p107 = scmp.ne.s32.totalorder %s96, %s99
      %p108 = scmp.eq.s32.totalorder %s39, 1
      %p109 = por %p107, %p108
      %p110 = scmp.ne.s32.totalorder %s99, %s100
      %p111 = scmp.eq.s32.totalorder %s39, 0
      %p112 = por %p110, %p111
      %p113 = scmp.ne.s32.totalorder %s99, %s100
      %p114 = scmp.eq.s32.totalorder %s40, 1
      %p115 = por %p113, %p114
      %p117 = scmp.ne.s32.totalorder %s100, %s116
      %p118 = scmp.eq.s32.totalorder %s40, 0
      %p119 = por %p117, %p118
      %s120 = ssub.s32 %s34, %s41
      %p121 = scmp.eq.s32.totalorder %s120, 0
      %s123 = sadd.s32 %s122, 1
      %s124 = scalar_select %p121, %s122, %s123
      %p127 = pneg %p121
      %p128 = scmp.eq.s32.totalorder %s34, 1
      %p129 = por %p127, %p128
      %p130 = scmp.ne.s32.totalorder %s122, %s125
      %p131 = scmp.eq.s32.totalorder %s34, 0
      %p132 = por %p130, %p131
      %p133 = scmp.ne.s32.totalorder %s122, %s125
      %p134 = scmp.eq.s32.totalorder %s39, 1
      %p135 = por %p133, %p134
      %p136 = scmp.ne.s32.totalorder %s125, %s126
      %p137 = scmp.eq.s32.totalorder %s39, 0
      %p138 = por %p136, %p137
      %p139 = scmp.ne.s32.totalorder %s125, %s126
      %p140 = scmp.eq.s32.totalorder %s40, 1
      %p141 = por %p139, %p140
      %p143 = scmp.ne.s32.totalorder %s126, %s142
      %p144 = scmp.eq.s32.totalorder %s40, 0
      %p145 = por %p143, %p144
      %s147 = sadd.s32 %s146, 1
      %p150 = scmp.eq.s32.totalorder %s34, 1
      %p151 = scmp.ne.s32.totalorder %s146, %s148
      %p152 = scmp.eq.s32.totalorder %s34, 0
      %p153 = por %p151, %p152
      %p154 = scmp.ne.s32.totalorder %s146, %s148
      %p155 = scmp.eq.s32.totalorder %s39, 1
      %p156 = por %p154, %p155
      %p157 = scmp.ne.s32.totalorder %s148, %s149
      %p158 = scmp.eq.s32.totalorder %s39, 0
      %p159 = por %p157, %p158
      %p160 = scmp.ne.s32.totalorder %s148, %s149
      %p161 = scmp.eq.s32.totalorder %s40, 1
      %p162 = por %p160, %p161
      %p164 = scmp.ne.s32.totalorder %s149, %s163
      %p165 = scmp.eq.s32.totalorder %s40, 0
      %p166 = por %p164, %p165
      %s168 = sadd.s32 %s167, 1
      %p171 = scmp.eq.s32.totalorder %s34, 1
      %p172 = scmp.ne.s32.totalorder %s167, %s169
      %p173 = scmp.eq.s32.totalorder %s34, 0
      %p174 = por %p172, %p173
      %p175 = scmp.ne.s32.totalorder %s167, %s169
      %p176 = scmp.eq.s32.totalorder %s39, 1
      %p177 = por %p175, %p176
      %p178 = scmp.ne.s32.totalorder %s169, %s170
      %p179 = scmp.eq.s32.totalorder %s39, 0
      %p180 = por %p178, %p179
      %p181 = scmp.ne.s32.totalorder %s169, %s170
      %p182 = scmp.eq.s32.totalorder %s40, 1
      %p183 = por %p181, %p182
      %p185 = scmp.ne.s32.totalorder %s170, %s184
      %p186 = scmp.eq.s32.totalorder %s40, 0
      %p187 = por %p185, %p186
      %s189 = sadd.s32 %s188, 1
      %p192 = scmp.eq.s32.totalorder %s34, 1
      %p193 = scmp.ne.s32.totalorder %s188, %s190
      %p194 = scmp.eq.s32.totalorder %s34, 0
      %p195 = por %p193, %p194
      %p196 = scmp.ne.s32.totalorder %s188, %s190
      %p197 = scmp.eq.s32.totalorder %s39, 1
      %p198 = por %p196, %p197
      %p199 = scmp.ne.s32.totalorder %s190, %s191
      %p200 = scmp.eq.s32.totalorder %s39, 0
      %p201 = por %p199, %p200
      %p202 = scmp.ne.s32.totalorder %s190, %s191
      %p203 = scmp.eq.s32.totalorder %s40, 1
      %p204 = por %p202, %p203
      %p206 = scmp.ne.s32.totalorder %s191, %s205
      %p207 = scmp.eq.s32.totalorder %s40, 0
      %p208 = por %p206, %p207
      %s210 = sadd.s32 %s209, 1
      %p213 = scmp.eq.s32.totalorder %s34, 1
      %p214 = scmp.ne.s32.totalorder %s209, %s211
      %p215 = scmp.eq.s32.totalorder %s34, 0
      %p216 = por %p214, %p215
      %p217 = scmp.ne.s32.totalorder %s209, %s211
      %p218 = scmp.eq.s32.totalorder %s39, 1
      %p219 = por %p217, %p218
      %p220 = scmp.ne.s32.totalorder %s211, %s212
      %p221 = scmp.eq.s32.totalorder %s39, 0
      %p222 = por %p220, %p221
      %p223 = scmp.ne.s32.totalorder %s211, %s212
      %p224 = scmp.eq.s32.totalorder %s40, 1
      %p225 = por %p223, %p224
      %p227 = scmp.ne.s32.totalorder %s212, %s226
      %p228 = scmp.eq.s32.totalorder %s40, 0
      %p229 = por %p227, %p228
      %s231 = sadd.s32 %s230, 1
      %p234 = scmp.eq.s32.totalorder %s34, 1
      %p235 = scmp.ne.s32.totalorder %s230, %s232
      %p236 = scmp.eq.s32.totalorder %s34, 0
      %p237 = por %p235, %p236
      %p238 = scmp.ne.s32.totalorder %s230, %s232
      %p239 = scmp.eq.s32.totalorder %s39, 1
      %p240 = por %p238, %p239
      %p241 = scmp.ne.s32.totalorder %s232, %s233
      %p242 = scmp.eq.s32.totalorder %s39, 0
      %p243 = por %p241, %p242
      %p244 = scmp.ne.s32.totalorder %s232, %s233
      %p245 = scmp.eq.s32.totalorder %s40, 1
      %p246 = por %p244, %p245
      %p248 = scmp.ne.s32.totalorder %s233, %s247
      %p249 = scmp.eq.s32.totalorder %s40, 0
      %p250 = por %p248, %p249
      %s251 = ssub.s32 %s34, %s41
      %p252 = scmp.eq.s32.totalorder %s251, 0
      %s254 = sadd.s32 %s253, 1
      %s255 = scalar_select %p252, %s253, %s254
      %p258 = pneg %p252
      %p259 = scmp.eq.s32.totalorder %s34, 1
      %p260 = por %p258, %p259
      %p261 = scmp.ne.s32.totalorder %s253, %s256
      %p262 = scmp.eq.s32.totalorder %s34, 0
      %p263 = por %p261, %p262
      %p264 = scmp.ne.s32.totalorder %s253, %s256
      %p265 = scmp.eq.s32.totalorder %s39, 1
      %p266 = por %p264, %p265
      %p267 = scmp.ne.s32.totalorder %s256, %s257
      %p268 = scmp.eq.s32.totalorder %s39, 0
      %p269 = por %p267, %p268
      %p270 = scmp.ne.s32.totalorder %s256, %s257
      %p271 = scmp.eq.s32.totalorder %s40, 1
      %p272 = por %p270, %p271
      %p274 = scmp.ne.s32.totalorder %s257, %s273
      %p275 = scmp.eq.s32.totalorder %s40, 0
      %p276 = por %p274, %p275
      %s277 = ssub.s32 %s34, %s41
      %p278 = scmp.eq.s32.totalorder %s277, 0
      %s280 = sadd.s32 %s279, 1
      %s281 = scalar_select %p278, %s279, %s280
      %p284 = pneg %p278
      %p285 = scmp.eq.s32.totalorder %s34, 1
      %p286 = por %p284, %p285
      %p287 = scmp.ne.s32.totalorder %s279, %s282
      %p288 = scmp.eq.s32.totalorder %s34, 0
      %p289 = por %p287, %p288
      %p290 = scmp.ne.s32.totalorder %s279, %s282
      %p291 = scmp.eq.s32.totalorder %s39, 1
      %p292 = por %p290, %p291
      %p293 = scmp.ne.s32.totalorder %s282, %s283
      %p294 = scmp.eq.s32.totalorder %s39, 0
      %p295 = por %p293, %p294
      %p296 = scmp.ne.s32.totalorder %s282, %s283
      %p297 = scmp.eq.s32.totalorder %s40, 1
      %p298 = por %p296, %p297
      %p300 = scmp.ne.s32.totalorder %s283, %s299
      %p301 = scmp.eq.s32.totalorder %s40, 0
      %p302 = por %p300, %p301
      %p303 = scmp.le.s32.totalorder 1, %s34
      %p304 = scmp.lt.s32.totalorder %s34, 3
      %p305 = pnand %p303, %p304
      %p306 = pneg %p305
      // Predicated region
      $region9: #{tpu_custom_call.1} parent=5 // pred_check
        _
      $region10: #{tpu_custom_call.1} parent=5 // pred_check_branch
        %308 = sbr.rel (%p305) target = $region12
      $region11: #{tpu_custom_call.1} parent=5 // pred_region
        %s309 = ssub.s32 %s34, 1
        // Predicated region
        $region13: #{tpu_custom_call.1} parent=11 // pred_check
          %p310 = pneg %p159
        $region14: #{tpu_custom_call.1} parent=11 // pred_check_branch
          %312 = sbr.rel (%p310) target = $region16
        $region15: #{tpu_custom_call.1} parent=11 // pred_region
          %s314 = ssub.s32 65536, 65536
          %315 = vsyncadd [#allocation9], %s314
          %s316 = sshll.u32 [#allocation10], 4
          %s317 = int_to_ptr.vmem [resolvable:$true] %s316
          %322 = dma.hbm_to_vmem [thread:$0]  %s4, 65536, %s317, [#allocation9], 128, 128, 8
        $region16: #{tpu_custom_call.1} parent=11 // pred_fallthru
          _
        // Predicated region
        $region17: #{tpu_custom_call.1} parent=11 // pred_check
          %p323 = pneg %p180
        $region18: #{tpu_custom_call.1} parent=11 // pred_check_branch
          %325 = sbr.rel (%p323) target = $region20
        $region19: #{tpu_custom_call.1} parent=11 // pred_region
          %s327 = ssub.s32 32768, 32768
          %328 = vsyncadd [#allocation12], %s327
          %s329 = sshll.u32 [#allocation11], 4
          %s330 = int_to_ptr.vmem [resolvable:$true] %s329
          %335 = dma.hbm_to_vmem [thread:$0]  %s5, 32768, %s330, [#allocation12], 128, 128, 8
        $region20: #{tpu_custom_call.1} parent=11 // pred_fallthru
          _
        // Predicated region
        $region21: #{tpu_custom_call.1} parent=11 // pred_check
          %p336 = pneg %p201
        $region22: #{tpu_custom_call.1} parent=11 // pred_check_branch
          %338 = sbr.rel (%p336) target = $region24
        $region23: #{tpu_custom_call.1} parent=11 // pred_region
          %s340 = ssub.s32 16384, 16384
          %341 = vsyncadd [#allocation12], %s340
          %s342 = sshll.u32 [#allocation13], 4
          %s343 = int_to_ptr.vmem [resolvable:$true] %s342
          %348 = dma.hbm_to_vmem [thread:$0]  %s6, 16384, %s343, [#allocation12], 128, 128, 8
        $region24: #{tpu_custom_call.1} parent=11 // pred_fallthru
          _
        // Predicated region
        $region25: #{tpu_custom_call.1} parent=11 // pred_check
          %p349 = pneg %p222
        $region26: #{tpu_custom_call.1} parent=11 // pred_check_branch
          %351 = sbr.rel (%p349) target = $region28
        $region27: #{tpu_custom_call.1} parent=11 // pred_region
          %s353 = ssub.s32 8192, 8192
          %354 = vsyncadd [#allocation15], %s353
          %s355 = sshll.u32 [#allocation14], 4
          %s356 = int_to_ptr.vmem [resolvable:$true] %s355
          %361 = dma.hbm_to_vmem [thread:$0]  %s7, 8192, %s356, [#allocation15], 128, 128, 8
        $region28: #{tpu_custom_call.1} parent=11 // pred_fallthru
          _
        // Predicated region
        $region29: #{tpu_custom_call.1} parent=11 // pred_check
          %p362 = pneg %p243
        $region30: #{tpu_custom_call.1} parent=11 // pred_check_branch
          %364 = sbr.rel (%p362) target = $region32
        $region31: #{tpu_custom_call.1} parent=11 // pred_region
          %s366 = ssub.s32 16, 16
          %367 = vsyncadd [#allocation15], %s366
          %s369 = sshll.u32 [#allocation16], 4
          %s370 = int_to_ptr.vmem [resolvable:$true] %s369
          %372 = dma.hbm_to_vmem [thread:$0]  %s8, 16, %s370, [#allocation15]
        $region32: #{tpu_custom_call.1} parent=11 // pred_fallthru
          _
      $region12: #{tpu_custom_call.1} parent=5 // pred_fallthru
        _
      %p373 = scmp.lt.s32.totalorder %s34, 2
      // Predicated region
      $region33: #{tpu_custom_call.1} parent=5 // pred_check
        %p374 = pneg %p373
      $region34: #{tpu_custom_call.1} parent=5 // pred_check_branch
        %376 = sbr.rel (%p374) target = $region36
      $region35: #{tpu_custom_call.1} parent=5 // pred_region
        // Predicated region
        $region37: #{tpu_custom_call.1} parent=35 // pred_check
          %p377 = pneg %p54
        $region38: #{tpu_custom_call.1} parent=35 // pred_check_branch
          %379 = sbr.rel (%p377) target = $region40
        $region39: #{tpu_custom_call.1} parent=35 // pred_region
          %s380 = sand.u32 %s44, 1
          %s381 = scalar_lea.sflag [#allocation3], %s380
          %s382 = sand.u32 %s44, 1
          %s383 = smul.addr %s382, 4096
          %s384 = scalar_lea.vmem [#allocation2], %s383
          %s385 = smul.u32 16, %s34
          %s387 = ssub.s32 65536, 65536
          %388 = vsyncadd %s381, %s387
          %s389 = smul.addr %s385, 32
          %s390 = smul.addr %s389, 128
          %s391 = scalar_lea.hbm %s0, %s390
          %s392 = sshll.u32 %s384, 4
          %s393 = int_to_ptr.vmem [resolvable:$true] %s392
          %398 = dma.hbm_to_vmem [thread:$0]  %s391, 65536, %s393, %s381, 4096, 4096, 256
        $region40: #{tpu_custom_call.1} parent=35 // pred_fallthru
          _
        // Predicated region
        $region41: #{tpu_custom_call.1} parent=35 // pred_check
          %p399 = pneg %p80
        $region42: #{tpu_custom_call.1} parent=35 // pred_check_branch
          %401 = sbr.rel (%p399) target = $region44
        $region43: #{tpu_custom_call.1} parent=35 // pred_region
          %s402 = sand.u32 %s34, 1
          %s403 = scalar_lea.sflag [#allocation6], %s402
          %s404 = sand.u32 %s70, 1
          %s405 = smul.addr %s404, 2048
          %s406 = scalar_lea.vmem [#allocation5], %s405
          %s407 = smul.u32 16, %s34
          %s409 = ssub.s32 32768, 32768
          %410 = vsyncadd %s403, %s409
          %s411 = smul.addr %s407, 16
          %s412 = smul.addr %s411, 128
          %s413 = scalar_lea.hbm %s1, %s412
          %s414 = sshll.u32 %s406, 4
          %s415 = int_to_ptr.vmem [resolvable:$true] %s414
          %420 = dma.hbm_to_vmem [thread:$0]  %s413, 32768, %s415, %s403, 2048, 2048, 128
        $region44: #{tpu_custom_call.1} parent=35 // pred_fallthru
          _
        // Predicated region
        $region45: #{tpu_custom_call.1} parent=35 // pred_check
          %p421 = pneg %p106
        $region46: #{tpu_custom_call.1} parent=35 // pred_check_branch
          %423 = sbr.rel (%p421) target = $region48
        $region47: #{tpu_custom_call.1} parent=35 // pred_region
          %s424 = sand.u32 %s34, 1
          %s425 = scalar_lea.sflag [#allocation6], %s424
          %s426 = sand.u32 %s96, 1
          %s427 = smul.addr %s426, 1024
          %s428 = scalar_lea.vmem [#allocation7], %s427
          %s429 = smul.u32 16, %s34
          %s431 = ssub.s32 16384, 16384
          %432 = vsyncadd %s425, %s431
          %s433 = smul.addr %s429, 8
          %s434 = smul.addr %s433, 128
          %s435 = scalar_lea.hbm %s2, %s434
          %s436 = sshll.u32 %s428, 4
          %s437 = int_to_ptr.vmem [resolvable:$true] %s436
          %442 = dma.hbm_to_vmem [thread:$0]  %s435, 16384, %s437, %s425, 1024, 1024, 64
        $region48: #{tpu_custom_call.1} parent=35 // pred_fallthru
          _
        // Predicated region
        $region49: #{tpu_custom_call.1} parent=35 // pred_check
          %p443 = pneg %p132
        $region50: #{tpu_custom_call.1} parent=35 // pred_check_branch
          %445 = sbr.rel (%p443) target = $region52
        $region51: #{tpu_custom_call.1} parent=35 // pred_region
          %s446 = sand.u32 %s34, 1
          %s447 = scalar_lea.sflag [#allocation9], %s446
          %s448 = sand.u32 %s122, 1
          %s449 = smul.addr %s448, 512
          %s450 = scalar_lea.vmem [#allocation8], %s449
          %s451 = smul.u32 16, %s34
          %s453 = ssub.s32 8192, 8192
          %454 = vsyncadd %s447, %s453
          %s455 = smul.addr %s451, 4
          %s456 = smul.addr %s455, 128
          %s457 = scalar_lea.hbm %s3, %s456
          %s458 = sshll.u32 %s450, 4
          %s459 = int_to_ptr.vmem [resolvable:$true] %s458
          %464 = dma.hbm_to_vmem [thread:$0]  %s457, 8192, %s459, %s447, 512, 512, 32
        $region52: #{tpu_custom_call.1} parent=35 // pred_fallthru
          _
      $region36: #{tpu_custom_call.1} parent=5 // pred_fallthru
        _
      %p465 = scmp.le.s32.totalorder 1, %s34
      %p466 = scmp.lt.s32.totalorder %s34, 3
      %p467 = pnand %p465, %p466
      %p468 = pneg %p467
      // Predicated region
      $region53: #{tpu_custom_call.1} parent=5 // pred_check
        _
      $region54: #{tpu_custom_call.1} parent=5 // pred_check_branch
        %470 = sbr.rel (%p467) target = $region56
      $region55: #{tpu_custom_call.1} parent=5 // pred_region
        %s471 = ssub.s32 %s34, 1
        %s472 = sand.u32 %s47, 1
        %s473 = scalar_lea.sflag [#allocation3], %s472
        %s474 = sand.u32 %s47, 1
        %s475 = smul.addr %s474, 4096
        %s476 = scalar_lea.vmem [#allocation2], %s475
        // Predicated region
        $region57: #{tpu_custom_call.1} parent=55 // pred_check
          %p477 = pneg %p60
        $region58: #{tpu_custom_call.1} parent=55 // pred_check_branch
          %479 = sbr.rel (%p477) target = $region60
        $region59: #{tpu_custom_call.1} parent=55 // pred_region
          %480 = dma.done %s473, 65536
        $region60: #{tpu_custom_call.1} parent=55 // pred_fallthru
          _
        %s481 = sand.u32 %s39, 1
        %s482 = scalar_lea.sflag [#allocation6], %s481
        %s483 = sand.u32 %s73, 1
        %s484 = smul.addr %s483, 2048
        %s485 = scalar_lea.vmem [#allocation5], %s484
        // Predicated region
        $region61: #{tpu_custom_call.1} parent=55 // pred_check
          %p486 = pneg %p86
        $region62: #{tpu_custom_call.1} parent=55 // pred_check_branch
          %488 = sbr.rel (%p486) target = $region64
        $region63: #{tpu_custom_call.1} parent=55 // pred_region
          %489 = dma.done %s482, 32768
        $region64: #{tpu_custom_call.1} parent=55 // pred_fallthru
          _
        %s490 = sand.u32 %s39, 1
        %s491 = scalar_lea.sflag [#allocation6], %s490
        %s492 = sand.u32 %s99, 1
        %s493 = smul.addr %s492, 1024
        %s494 = scalar_lea.vmem [#allocation7], %s493
        // Predicated region
        $region65: #{tpu_custom_call.1} parent=55 // pred_check
          %p495 = pneg %p112
        $region66: #{tpu_custom_call.1} parent=55 // pred_check_branch
          %497 = sbr.rel (%p495) target = $region68
        $region67: #{tpu_custom_call.1} parent=55 // pred_region
          %498 = dma.done %s491, 16384
        $region68: #{tpu_custom_call.1} parent=55 // pred_fallthru
          _
        %s499 = sand.u32 %s39, 1
        %s500 = scalar_lea.sflag [#allocation9], %s499
        %s501 = sand.u32 %s125, 1
        %s502 = smul.addr %s501, 512
        %s503 = scalar_lea.vmem [#allocation8], %s502
        // Predicated region
        $region69: #{tpu_custom_call.1} parent=55 // pred_check
          %p504 = pneg %p138
        $region70: #{tpu_custom_call.1} parent=55 // pred_check_branch
          %506 = sbr.rel (%p504) target = $region72
        $region71: #{tpu_custom_call.1} parent=55 // pred_region
          %507 = dma.done %s500, 8192
        $region72: #{tpu_custom_call.1} parent=55 // pred_fallthru
          _
        // Predicated region
        $region73: #{tpu_custom_call.1} parent=55 // pred_check
          %p508 = pneg %p159
        $region74: #{tpu_custom_call.1} parent=55 // pred_check_branch
          %510 = sbr.rel (%p508) target = $region76
        $region75: #{tpu_custom_call.1} parent=55 // pred_region
          %511 = dma.done [#allocation9], 65536
        $region76: #{tpu_custom_call.1} parent=55 // pred_fallthru
          _
        // Predicated region
        $region77: #{tpu_custom_call.1} parent=55 // pred_check
          %p512 = pneg %p180
        $region78: #{tpu_custom_call.1} parent=55 // pred_check_branch
          %514 = sbr.rel (%p512) target = $region80
        $region79: #{tpu_custom_call.1} parent=55 // pred_region
          %515 = dma.done [#allocation12], 32768
        $region80: #{tpu_custom_call.1} parent=55 // pred_fallthru
          _
        // Predicated region
        $region81: #{tpu_custom_call.1} parent=55 // pred_check
          %p516 = pneg %p201
        $region82: #{tpu_custom_call.1} parent=55 // pred_check_branch
          %518 = sbr.rel (%p516) target = $region84
        $region83: #{tpu_custom_call.1} parent=55 // pred_region
          %519 = dma.done [#allocation12], 16384
        $region84: #{tpu_custom_call.1} parent=55 // pred_fallthru
          _
        // Predicated region
        $region85: #{tpu_custom_call.1} parent=55 // pred_check
          %p520 = pneg %p222
        $region86: #{tpu_custom_call.1} parent=55 // pred_check_branch
          %522 = sbr.rel (%p520) target = $region88
        $region87: #{tpu_custom_call.1} parent=55 // pred_region
          %523 = dma.done [#allocation15], 8192
        $region88: #{tpu_custom_call.1} parent=55 // pred_fallthru
          _
        // Predicated region
        $region89: #{tpu_custom_call.1} parent=55 // pred_check
          %p524 = pneg %p243
        $region90: #{tpu_custom_call.1} parent=55 // pred_check_branch
          %526 = sbr.rel (%p524) target = $region92
        $region91: #{tpu_custom_call.1} parent=55 // pred_region
          %527 = dma.done [#allocation15], 16
        $region92: #{tpu_custom_call.1} parent=55 // pred_fallthru
          _
        %s528 = sand.u32 %s47, 1
        %s529 = scalar_lea.sflag [#allocation3], %s528
        %s530 = sand.u32 %s47, 1
        %s531 = smul.addr %s530, 4096
        %s532 = scalar_lea.vmem [#allocation2], %s531
        %p533 = pneg %p60
        %p534 = pneg %p57
        %s535 = sand.u32 %s39, 1
        %s536 = scalar_lea.sflag [#allocation6], %s535
        %s537 = sand.u32 %s73, 1
        %s538 = smul.addr %s537, 2048
        %s539 = scalar_lea.vmem [#allocation5], %s538
        %p540 = pneg %p86
        %p541 = pneg %p83
        %s542 = sand.u32 %s39, 1
        %s543 = scalar_lea.sflag [#allocation6], %s542
        %s544 = sand.u32 %s99, 1
        %s545 = smul.addr %s544, 1024
        %s546 = scalar_lea.vmem [#allocation7], %s545
        %p547 = pneg %p112
        %p548 = pneg %p109
        %s549 = sand.u32 %s39, 1
        %s550 = scalar_lea.sflag [#allocation9], %s549
        %s551 = sand.u32 %s125, 1
        %s552 = smul.addr %s551, 512
        %s553 = scalar_lea.vmem [#allocation8], %s552
        %p554 = pneg %p138
        %p555 = pneg %p135
        %p556 = pneg %p159
        %p557 = pneg %p156
        %p558 = pneg %p180
        %p559 = pneg %p177
        %p560 = pneg %p201
        %p561 = pneg %p198
        %p562 = pneg %p222
        %p563 = pneg %p219
        %p564 = pneg %p243
        %p565 = pneg %p240
        %p566 = pneg %p269
        %p567 = pneg %p266
        %s568 = sand.u32 %s256, 1
        %s569 = scalar_lea.sflag [#allocation4], %s568
        %s570 = sand.u32 %s256, 1
        %s571 = smul.addr %s570, 128
        %s572 = scalar_lea.vmem [#allocation17], %s571
        %p573 = pneg %p295
        %p574 = pneg %p292
        %s575 = sand.u32 %s282, 1
        %s576 = scalar_lea.sflag [#allocation19], %s575
        %s577 = sand.u32 %s282, 1
        %s578 = smul.addr %s577, 128
        %s579 = scalar_lea.vmem [#allocation18], %s578
        %s580 = smul.u32 16, %s39
        %s581 = smul.u32 16, %s39
        %s582 = smul.u32 16, %s39
        %s583 = smul.u32 16, %s39
        %s584 = smul.u32 16, %s39
        %s585 = smul.u32 16, %s39
        %v586 = vld [vmem:[%s476] sm:$0xff]
        %v587 = vld [vmem:[%s476 + $0x8] sm:$0xff]
        %v588 = vld [vmem:[%s476 + $0x10] sm:$0xff]
        %v589 = vld [vmem:[%s476 + $0x18] sm:$0xff]
        %v590 = vld [vmem:[%s476 + $0x20] sm:$0xff]
        %v591 = vld [vmem:[%s476 + $0x28] sm:$0xff]
        %v592 = vld [vmem:[%s476 + $0x30] sm:$0xff]
        %v593 = vld [vmem:[%s476 + $0x38] sm:$0xff]
        %v594 = vld [vmem:[%s476 + $0x40] sm:$0xff]
        %v595 = vld [vmem:[%s476 + $0x48] sm:$0xff]
        %v596 = vld [vmem:[%s476 + $0x50] sm:$0xff]
        %v597 = vld [vmem:[%s476 + $0x58] sm:$0xff]
        %v598 = vld [vmem:[%s476 + $0x60] sm:$0xff]
        %v599 = vld [vmem:[%s476 + $0x68] sm:$0xff]
        %v600 = vld [vmem:[%s476 + $0x70] sm:$0xff]
        %v601 = vld [vmem:[%s476 + $0x78] sm:$0xff]
        %v602 = vld [vmem:[%s476 + $0x80] sm:$0xff]
        %v603 = vld [vmem:[%s476 + $0x88] sm:$0xff]
        %v604 = vld [vmem:[%s476 + $0x90] sm:$0xff]
        %v605 = vld [vmem:[%s476 + $0x98] sm:$0xff]
        %v606 = vld [vmem:[%s476 + $0xa0] sm:$0xff]
        %v607 = vld [vmem:[%s476 + $0xa8] sm:$0xff]
        %v608 = vld [vmem:[%s476 + $0xb0] sm:$0xff]
        %v609 = vld [vmem:[%s476 + $0xb8] sm:$0xff]
        %v610 = vld [vmem:[%s476 + $0xc0] sm:$0xff]
        %v611 = vld [vmem:[%s476 + $0xc8] sm:$0xff]
        %v612 = vld [vmem:[%s476 + $0xd0] sm:$0xff]
        %v613 = vld [vmem:[%s476 + $0xd8] sm:$0xff]
        %v614 = vld [vmem:[%s476 + $0xe0] sm:$0xff]
        %v615 = vld [vmem:[%s476 + $0xe8] sm:$0xff]
        %v616 = vld [vmem:[%s476 + $0xf0] sm:$0xff]
        %v617 = vld [vmem:[%s476 + $0xf8] sm:$0xff]
        %v618 = vld [vmem:[%s476 + $0x100] sm:$0xff]
        %v619 = vld [vmem:[%s476 + $0x108] sm:$0xff]
        %v620 = vld [vmem:[%s476 + $0x110] sm:$0xff]
        %v621 = vld [vmem:[%s476 + $0x118] sm:$0xff]
        %v622 = vld [vmem:[%s476 + $0x120] sm:$0xff]
        %v623 = vld [vmem:[%s476 + $0x128] sm:$0xff]
        %v624 = vld [vmem:[%s476 + $0x130] sm:$0xff]
        %v625 = vld [vmem:[%s476 + $0x138] sm:$0xff]
        %v626 = vld [vmem:[%s476 + $0x140] sm:$0xff]
        %v627 = vld [vmem:[%s476 + $0x148] sm:$0xff]
        %v628 = vld [vmem:[%s476 + $0x150] sm:$0xff]
        %v629 = vld [vmem:[%s476 + $0x158] sm:$0xff]
        %v630 = vld [vmem:[%s476 + $0x160] sm:$0xff]
        %v631 = vld [vmem:[%s476 + $0x168] sm:$0xff]
        %v632 = vld [vmem:[%s476 + $0x170] sm:$0xff]
        %v633 = vld [vmem:[%s476 + $0x178] sm:$0xff]
        %v634 = vld [vmem:[%s476 + $0x180] sm:$0xff]
        %v635 = vld [vmem:[%s476 + $0x188] sm:$0xff]
        %v636 = vld [vmem:[%s476 + $0x190] sm:$0xff]
        %v637 = vld [vmem:[%s476 + $0x198] sm:$0xff]
        %v638 = vld [vmem:[%s476 + $0x1a0] sm:$0xff]
        %v639 = vld [vmem:[%s476 + $0x1a8] sm:$0xff]
        %v640 = vld [vmem:[%s476 + $0x1b0] sm:$0xff]
        %v641 = vld [vmem:[%s476 + $0x1b8] sm:$0xff]
        %v642 = vld [vmem:[%s476 + $0x1c0] sm:$0xff]
        %v643 = vld [vmem:[%s476 + $0x1c8] sm:$0xff]
        %v644 = vld [vmem:[%s476 + $0x1d0] sm:$0xff]
        %v645 = vld [vmem:[%s476 + $0x1d8] sm:$0xff]
        %v646 = vld [vmem:[%s476 + $0x1e0] sm:$0xff]
        %v647 = vld [vmem:[%s476 + $0x1e8] sm:$0xff]
        %v648 = vld [vmem:[%s476 + $0x1f0] sm:$0xff]
        %v649 = vld [vmem:[%s476 + $0x1f8] sm:$0xff]
        %v650 = vld [vmem:[%s476 + $0x200] sm:$0xff]
        %v651 = vld [vmem:[%s476 + $0x208] sm:$0xff]
        %v652 = vld [vmem:[%s476 + $0x210] sm:$0xff]
        %v653 = vld [vmem:[%s476 + $0x218] sm:$0xff]
        %v654 = vld [vmem:[%s476 + $0x220] sm:$0xff]
        %v655 = vld [vmem:[%s476 + $0x228] sm:$0xff]
        %v656 = vld [vmem:[%s476 + $0x230] sm:$0xff]
        %v657 = vld [vmem:[%s476 + $0x238] sm:$0xff]
        %v658 = vld [vmem:[%s476 + $0x240] sm:$0xff]
        %v659 = vld [vmem:[%s476 + $0x248] sm:$0xff]
        %v660 = vld [vmem:[%s476 + $0x250] sm:$0xff]
        %v661 = vld [vmem:[%s476 + $0x258] sm:$0xff]
        %v662 = vld [vmem:[%s476 + $0x260] sm:$0xff]
        %v663 = vld [vmem:[%s476 + $0x268] sm:$0xff]
        %v664 = vld [vmem:[%s476 + $0x270] sm:$0xff]
        %v665 = vld [vmem:[%s476 + $0x278] sm:$0xff]
        %v666 = vld [vmem:[%s476 + $0x280] sm:$0xff]
        %v667 = vld [vmem:[%s476 + $0x288] sm:$0xff]
        %v668 = vld [vmem:[%s476 + $0x290] sm:$0xff]
        %v669 = vld [vmem:[%s476 + $0x298] sm:$0xff]
        %v670 = vld [vmem:[%s476 + $0x2a0] sm:$0xff]
        %v671 = vld [vmem:[%s476 + $0x2a8] sm:$0xff]
        %v672 = vld [vmem:[%s476 + $0x2b0] sm:$0xff]
        %v673 = vld [vmem:[%s476 + $0x2b8] sm:$0xff]
        %v674 = vld [vmem:[%s476 + $0x2c0] sm:$0xff]
        %v675 = vld [vmem:[%s476 + $0x2c8] sm:$0xff]
        %v676 = vld [vmem:[%s476 + $0x2d0] sm:$0xff]
        %v677 = vld [vmem:[%s476 + $0x2d8] sm:$0xff]
        %v678 = vld [vmem:[%s476 + $0x2e0] sm:$0xff]
        %v679 = vld [vmem:[%s476 + $0x2e8] sm:$0xff]
        %v680 = vld [vmem:[%s476 + $0x2f0] sm:$0xff]
        %v681 = vld [vmem:[%s476 + $0x2f8] sm:$0xff]
        %v682 = vld [vmem:[%s476 + $0x300] sm:$0xff]
        %v683 = vld [vmem:[%s476 + $0x308] sm:$0xff]
        %v684 = vld [vmem:[%s476 + $0x310] sm:$0xff]
        %v685 = vld [vmem:[%s476 + $0x318] sm:$0xff]
        %v686 = vld [vmem:[%s476 + $0x320] sm:$0xff]
        %v687 = vld [vmem:[%s476 + $0x328] sm:$0xff]
        %v688 = vld [vmem:[%s476 + $0x330] sm:$0xff]
        %v689 = vld [vmem:[%s476 + $0x338] sm:$0xff]
        %v690 = vld [vmem:[%s476 + $0x340] sm:$0xff]
        %v691 = vld [vmem:[%s476 + $0x348] sm:$0xff]
        %v692 = vld [vmem:[%s476 + $0x350] sm:$0xff]
        %v693 = vld [vmem:[%s476 + $0x358] sm:$0xff]
        %v694 = vld [vmem:[%s476 + $0x360] sm:$0xff]
        %v695 = vld [vmem:[%s476 + $0x368] sm:$0xff]
        %v696 = vld [vmem:[%s476 + $0x370] sm:$0xff]
        %v697 = vld [vmem:[%s476 + $0x378] sm:$0xff]
        %v698 = vld [vmem:[%s476 + $0x380] sm:$0xff]
        %v699 = vld [vmem:[%s476 + $0x388] sm:$0xff]
        %v700 = vld [vmem:[%s476 + $0x390] sm:$0xff]
        %v701 = vld [vmem:[%s476 + $0x398] sm:$0xff]
        %v702 = vld [vmem:[%s476 + $0x3a0] sm:$0xff]
        %v703 = vld [vmem:[%s476 + $0x3a8] sm:$0xff]
        %v704 = vld [vmem:[%s476 + $0x3b0] sm:$0xff]
        %v705 = vld [vmem:[%s476 + $0x3b8] sm:$0xff]
        %v706 = vld [vmem:[%s476 + $0x3c0] sm:$0xff]
        %v707 = vld [vmem:[%s476 + $0x3c8] sm:$0xff]
        %v708 = vld [vmem:[%s476 + $0x3d0] sm:$0xff]
        %v709 = vld [vmem:[%s476 + $0x3d8] sm:$0xff]
        %v710 = vld [vmem:[%s476 + $0x3e0] sm:$0xff]
        %v711 = vld [vmem:[%s476 + $0x3e8] sm:$0xff]
        %v712 = vld [vmem:[%s476 + $0x3f0] sm:$0xff]
        %v713 = vld [vmem:[%s476 + $0x3f8] sm:$0xff]
        %v714 = vld [vmem:[%s476 + $0x400] sm:$0xff]
        %v715 = vld [vmem:[%s476 + $0x408] sm:$0xff]
        %v716 = vld [vmem:[%s476 + $0x410] sm:$0xff]
        %v717 = vld [vmem:[%s476 + $0x418] sm:$0xff]
        %v718 = vld [vmem:[%s476 + $0x420] sm:$0xff]
        %v719 = vld [vmem:[%s476 + $0x428] sm:$0xff]
        %v720 = vld [vmem:[%s476 + $0x430] sm:$0xff]
        %v721 = vld [vmem:[%s476 + $0x438] sm:$0xff]
        %v722 = vld [vmem:[%s476 + $0x440] sm:$0xff]
        %v723 = vld [vmem:[%s476 + $0x448] sm:$0xff]
        %v724 = vld [vmem:[%s476 + $0x450] sm:$0xff]
        %v725 = vld [vmem:[%s476 + $0x458] sm:$0xff]
        %v726 = vld [vmem:[%s476 + $0x460] sm:$0xff]
        %v727 = vld [vmem:[%s476 + $0x468] sm:$0xff]
        %v728 = vld [vmem:[%s476 + $0x470] sm:$0xff]
        %v729 = vld [vmem:[%s476 + $0x478] sm:$0xff]
        %v730 = vld [vmem:[%s476 + $0x480] sm:$0xff]
        %v731 = vld [vmem:[%s476 + $0x488] sm:$0xff]
        %v732 = vld [vmem:[%s476 + $0x490] sm:$0xff]
        %v733 = vld [vmem:[%s476 + $0x498] sm:$0xff]
        %v734 = vld [vmem:[%s476 + $0x4a0] sm:$0xff]
        %v735 = vld [vmem:[%s476 + $0x4a8] sm:$0xff]
        %v736 = vld [vmem:[%s476 + $0x4b0] sm:$0xff]
        %v737 = vld [vmem:[%s476 + $0x4b8] sm:$0xff]
        %v738 = vld [vmem:[%s476 + $0x4c0] sm:$0xff]
        %v739 = vld [vmem:[%s476 + $0x4c8] sm:$0xff]
        %v740 = vld [vmem:[%s476 + $0x4d0] sm:$0xff]
        %v741 = vld [vmem:[%s476 + $0x4d8] sm:$0xff]
        %v742 = vld [vmem:[%s476 + $0x4e0] sm:$0xff]
        %v743 = vld [vmem:[%s476 + $0x4e8] sm:$0xff]
        %v744 = vld [vmem:[%s476 + $0x4f0] sm:$0xff]
        %v745 = vld [vmem:[%s476 + $0x4f8] sm:$0xff]
        %v746 = vld [vmem:[%s476 + $0x500] sm:$0xff]
        %v747 = vld [vmem:[%s476 + $0x508] sm:$0xff]
        %v748 = vld [vmem:[%s476 + $0x510] sm:$0xff]
        %v749 = vld [vmem:[%s476 + $0x518] sm:$0xff]
        %v750 = vld [vmem:[%s476 + $0x520] sm:$0xff]
        %v751 = vld [vmem:[%s476 + $0x528] sm:$0xff]
        %v752 = vld [vmem:[%s476 + $0x530] sm:$0xff]
        %v753 = vld [vmem:[%s476 + $0x538] sm:$0xff]
        %v754 = vld [vmem:[%s476 + $0x540] sm:$0xff]
        %v755 = vld [vmem:[%s476 + $0x548] sm:$0xff]
        %v756 = vld [vmem:[%s476 + $0x550] sm:$0xff]
        %v757 = vld [vmem:[%s476 + $0x558] sm:$0xff]
        %v758 = vld [vmem:[%s476 + $0x560] sm:$0xff]
        %v759 = vld [vmem:[%s476 + $0x568] sm:$0xff]
        %v760 = vld [vmem:[%s476 + $0x570] sm:$0xff]
        %v761 = vld [vmem:[%s476 + $0x578] sm:$0xff]
        %v762 = vld [vmem:[%s476 + $0x580] sm:$0xff]
        %v763 = vld [vmem:[%s476 + $0x588] sm:$0xff]
        %v764 = vld [vmem:[%s476 + $0x590] sm:$0xff]
        %v765 = vld [vmem:[%s476 + $0x598] sm:$0xff]
        %v766 = vld [vmem:[%s476 + $0x5a0] sm:$0xff]
        %v767 = vld [vmem:[%s476 + $0x5a8] sm:$0xff]
        %v768 = vld [vmem:[%s476 + $0x5b0] sm:$0xff]
        %v769 = vld [vmem:[%s476 + $0x5b8] sm:$0xff]
        %v770 = vld [vmem:[%s476 + $0x5c0] sm:$0xff]
        %v771 = vld [vmem:[%s476 + $0x5c8] sm:$0xff]
        %v772 = vld [vmem:[%s476 + $0x5d0] sm:$0xff]
        %v773 = vld [vmem:[%s476 + $0x5d8] sm:$0xff]
        %v774 = vld [vmem:[%s476 + $0x5e0] sm:$0xff]
        %v775 = vld [vmem:[%s476 + $0x5e8] sm:$0xff]
        %v776 = vld [vmem:[%s476 + $0x5f0] sm:$0xff]
        %v777 = vld [vmem:[%s476 + $0x5f8] sm:$0xff]
        %v778 = vld [vmem:[%s476 + $0x600] sm:$0xff]
        %v779 = vld [vmem:[%s476 + $0x608] sm:$0xff]
        %v780 = vld [vmem:[%s476 + $0x610] sm:$0xff]
        %v781 = vld [vmem:[%s476 + $0x618] sm:$0xff]
        %v782 = vld [vmem:[%s476 + $0x620] sm:$0xff]
        %v783 = vld [vmem:[%s476 + $0x628] sm:$0xff]
        %v784 = vld [vmem:[%s476 + $0x630] sm:$0xff]
        %v785 = vld [vmem:[%s476 + $0x638] sm:$0xff]
        %v786 = vld [vmem:[%s476 + $0x640] sm:$0xff]
        %v787 = vld [vmem:[%s476 + $0x648] sm:$0xff]
        %v788 = vld [vmem:[%s476 + $0x650] sm:$0xff]
        %v789 = vld [vmem:[%s476 + $0x658] sm:$0xff]
        %v790 = vld [vmem:[%s476 + $0x660] sm:$0xff]
        %v791 = vld [vmem:[%s476 + $0x668] sm:$0xff]
        %v792 = vld [vmem:[%s476 + $0x670] sm:$0xff]
        %v793 = vld [vmem:[%s476 + $0x678] sm:$0xff]
        %v794 = vld [vmem:[%s476 + $0x680] sm:$0xff]
        %v795 = vld [vmem:[%s476 + $0x688] sm:$0xff]
        %v796 = vld [vmem:[%s476 + $0x690] sm:$0xff]
        %v797 = vld [vmem:[%s476 + $0x698] sm:$0xff]
        %v798 = vld [vmem:[%s476 + $0x6a0] sm:$0xff]
        %v799 = vld [vmem:[%s476 + $0x6a8] sm:$0xff]
        %v800 = vld [vmem:[%s476 + $0x6b0] sm:$0xff]
        %v801 = vld [vmem:[%s476 + $0x6b8] sm:$0xff]
        %v802 = vld [vmem:[%s476 + $0x6c0] sm:$0xff]
        %v803 = vld [vmem:[%s476 + $0x6c8] sm:$0xff]
        %v804 = vld [vmem:[%s476 + $0x6d0] sm:$0xff]
        %v805 = vld [vmem:[%s476 + $0x6d8] sm:$0xff]
        %v806 = vld [vmem:[%s476 + $0x6e0] sm:$0xff]
        %v807 = vld [vmem:[%s476 + $0x6e8] sm:$0xff]
        %v808 = vld [vmem:[%s476 + $0x6f0] sm:$0xff]
        %v809 = vld [vmem:[%s476 + $0x6f8] sm:$0xff]
        %v810 = vld [vmem:[%s476 + $0x700] sm:$0xff]
        %v811 = vld [vmem:[%s476 + $0x708] sm:$0xff]
        %v812 = vld [vmem:[%s476 + $0x710] sm:$0xff]
        %v813 = vld [vmem:[%s476 + $0x718] sm:$0xff]
        %v814 = vld [vmem:[%s476 + $0x720] sm:$0xff]
        %v815 = vld [vmem:[%s476 + $0x728] sm:$0xff]
        %v816 = vld [vmem:[%s476 + $0x730] sm:$0xff]
        %v817 = vld [vmem:[%s476 + $0x738] sm:$0xff]
        %v818 = vld [vmem:[%s476 + $0x740] sm:$0xff]
        %v819 = vld [vmem:[%s476 + $0x748] sm:$0xff]
        %v820 = vld [vmem:[%s476 + $0x750] sm:$0xff]
        %v821 = vld [vmem:[%s476 + $0x758] sm:$0xff]
        %v822 = vld [vmem:[%s476 + $0x760] sm:$0xff]
        %v823 = vld [vmem:[%s476 + $0x768] sm:$0xff]
        %v824 = vld [vmem:[%s476 + $0x770] sm:$0xff]
        %v825 = vld [vmem:[%s476 + $0x778] sm:$0xff]
        %v826 = vld [vmem:[%s476 + $0x780] sm:$0xff]
        %v827 = vld [vmem:[%s476 + $0x788] sm:$0xff]
        %v828 = vld [vmem:[%s476 + $0x790] sm:$0xff]
        %v829 = vld [vmem:[%s476 + $0x798] sm:$0xff]
        %v830 = vld [vmem:[%s476 + $0x7a0] sm:$0xff]
        %v831 = vld [vmem:[%s476 + $0x7a8] sm:$0xff]
        %v832 = vld [vmem:[%s476 + $0x7b0] sm:$0xff]
        %v833 = vld [vmem:[%s476 + $0x7b8] sm:$0xff]
        %v834 = vld [vmem:[%s476 + $0x7c0] sm:$0xff]
        %v835 = vld [vmem:[%s476 + $0x7c8] sm:$0xff]
        %v836 = vld [vmem:[%s476 + $0x7d0] sm:$0xff]
        %v837 = vld [vmem:[%s476 + $0x7d8] sm:$0xff]
        %v838 = vld [vmem:[%s476 + $0x7e0] sm:$0xff]
        %v839 = vld [vmem:[%s476 + $0x7e8] sm:$0xff]
        %v840 = vld [vmem:[%s476 + $0x7f0] sm:$0xff]
        %v841 = vld [vmem:[%s476 + $0x7f8] sm:$0xff]
        %v842 = vld [vmem:[%s476 + $0x800] sm:$0xff]
        %v843 = vld [vmem:[%s476 + $0x808] sm:$0xff]
        %v844 = vld [vmem:[%s476 + $0x810] sm:$0xff]
        %v845 = vld [vmem:[%s476 + $0x818] sm:$0xff]
        %v846 = vld [vmem:[%s476 + $0x820] sm:$0xff]
        %v847 = vld [vmem:[%s476 + $0x828] sm:$0xff]
        %v848 = vld [vmem:[%s476 + $0x830] sm:$0xff]
        %v849 = vld [vmem:[%s476 + $0x838] sm:$0xff]
        %v850 = vld [vmem:[%s476 + $0x840] sm:$0xff]
        %v851 = vld [vmem:[%s476 + $0x848] sm:$0xff]
        %v852 = vld [vmem:[%s476 + $0x850] sm:$0xff]
        %v853 = vld [vmem:[%s476 + $0x858] sm:$0xff]
        %v854 = vld [vmem:[%s476 + $0x860] sm:$0xff]
        %v855 = vld [vmem:[%s476 + $0x868] sm:$0xff]
        %v856 = vld [vmem:[%s476 + $0x870] sm:$0xff]
        %v857 = vld [vmem:[%s476 + $0x878] sm:$0xff]
        %v858 = vld [vmem:[%s476 + $0x880] sm:$0xff]
        %v859 = vld [vmem:[%s476 + $0x888] sm:$0xff]
        %v860 = vld [vmem:[%s476 + $0x890] sm:$0xff]
        %v861 = vld [vmem:[%s476 + $0x898] sm:$0xff]
        %v862 = vld [vmem:[%s476 + $0x8a0] sm:$0xff]
        %v863 = vld [vmem:[%s476 + $0x8a8] sm:$0xff]
        %v864 = vld [vmem:[%s476 + $0x8b0] sm:$0xff]
        %v865 = vld [vmem:[%s476 + $0x8b8] sm:$0xff]
        %v866 = vld [vmem:[%s476 + $0x8c0] sm:$0xff]
        %v867 = vld [vmem:[%s476 + $0x8c8] sm:$0xff]
        %v868 = vld [vmem:[%s476 + $0x8d0] sm:$0xff]
        %v869 = vld [vmem:[%s476 + $0x8d8] sm:$0xff]
        %v870 = vld [vmem:[%s476 + $0x8e0] sm:$0xff]
        %v871 = vld [vmem:[%s476 + $0x8e8] sm:$0xff]
        %v872 = vld [vmem:[%s476 + $0x8f0] sm:$0xff]
        %v873 = vld [vmem:[%s476 + $0x8f8] sm:$0xff]
        %v874 = vld [vmem:[%s476 + $0x900] sm:$0xff]
        %v875 = vld [vmem:[%s476 + $0x908] sm:$0xff]
        %v876 = vld [vmem:[%s476 + $0x910] sm:$0xff]
        %v877 = vld [vmem:[%s476 + $0x918] sm:$0xff]
        %v878 = vld [vmem:[%s476 + $0x920] sm:$0xff]
        %v879 = vld [vmem:[%s476 + $0x928] sm:$0xff]
        %v880 = vld [vmem:[%s476 + $0x930] sm:$0xff]
        %v881 = vld [vmem:[%s476 + $0x938] sm:$0xff]
        %v882 = vld [vmem:[%s476 + $0x940] sm:$0xff]
        %v883 = vld [vmem:[%s476 + $0x948] sm:$0xff]
        %v884 = vld [vmem:[%s476 + $0x950] sm:$0xff]
        %v885 = vld [vmem:[%s476 + $0x958] sm:$0xff]
        %v886 = vld [vmem:[%s476 + $0x960] sm:$0xff]
        %v887 = vld [vmem:[%s476 + $0x968] sm:$0xff]
        %v888 = vld [vmem:[%s476 + $0x970] sm:$0xff]
        %v889 = vld [vmem:[%s476 + $0x978] sm:$0xff]
        %v890 = vld [vmem:[%s476 + $0x980] sm:$0xff]
        %v891 = vld [vmem:[%s476 + $0x988] sm:$0xff]
        %v892 = vld [vmem:[%s476 + $0x990] sm:$0xff]
        %v893 = vld [vmem:[%s476 + $0x998] sm:$0xff]
        %v894 = vld [vmem:[%s476 + $0x9a0] sm:$0xff]
        %v895 = vld [vmem:[%s476 + $0x9a8] sm:$0xff]
        %v896 = vld [vmem:[%s476 + $0x9b0] sm:$0xff]
        %v897 = vld [vmem:[%s476 + $0x9b8] sm:$0xff]
        %v898 = vld [vmem:[%s476 + $0x9c0] sm:$0xff]
        %v899 = vld [vmem:[%s476 + $0x9c8] sm:$0xff]
        %v900 = vld [vmem:[%s476 + $0x9d0] sm:$0xff]
        %v901 = vld [vmem:[%s476 + $0x9d8] sm:$0xff]
        %v902 = vld [vmem:[%s476 + $0x9e0] sm:$0xff]
        %v903 = vld [vmem:[%s476 + $0x9e8] sm:$0xff]
        %v904 = vld [vmem:[%s476 + $0x9f0] sm:$0xff]
        %v905 = vld [vmem:[%s476 + $0x9f8] sm:$0xff]
        %v906 = vld [vmem:[%s476 + $0xa00] sm:$0xff]
        %v907 = vld [vmem:[%s476 + $0xa08] sm:$0xff]
        %v908 = vld [vmem:[%s476 + $0xa10] sm:$0xff]
        %v909 = vld [vmem:[%s476 + $0xa18] sm:$0xff]
        %v910 = vld [vmem:[%s476 + $0xa20] sm:$0xff]
        %v911 = vld [vmem:[%s476 + $0xa28] sm:$0xff]
        %v912 = vld [vmem:[%s476 + $0xa30] sm:$0xff]
        %v913 = vld [vmem:[%s476 + $0xa38] sm:$0xff]
        %v914 = vld [vmem:[%s476 + $0xa40] sm:$0xff]
        %v915 = vld [vmem:[%s476 + $0xa48] sm:$0xff]
        %v916 = vld [vmem:[%s476 + $0xa50] sm:$0xff]
        %v917 = vld [vmem:[%s476 + $0xa58] sm:$0xff]
        %v918 = vld [vmem:[%s476 + $0xa60] sm:$0xff]
        %v919 = vld [vmem:[%s476 + $0xa68] sm:$0xff]
        %v920 = vld [vmem:[%s476 + $0xa70] sm:$0xff]
        %v921 = vld [vmem:[%s476 + $0xa78] sm:$0xff]
        %v922 = vld [vmem:[%s476 + $0xa80] sm:$0xff]
        %v923 = vld [vmem:[%s476 + $0xa88] sm:$0xff]
        %v924 = vld [vmem:[%s476 + $0xa90] sm:$0xff]
        %v925 = vld [vmem:[%s476 + $0xa98] sm:$0xff]
        %v926 = vld [vmem:[%s476 + $0xaa0] sm:$0xff]
        %v927 = vld [vmem:[%s476 + $0xaa8] sm:$0xff]
        %v928 = vld [vmem:[%s476 + $0xab0] sm:$0xff]
        %v929 = vld [vmem:[%s476 + $0xab8] sm:$0xff]
        %v930 = vld [vmem:[%s476 + $0xac0] sm:$0xff]
        %v931 = vld [vmem:[%s476 + $0xac8] sm:$0xff]
        %v932 = vld [vmem:[%s476 + $0xad0] sm:$0xff]
        %v933 = vld [vmem:[%s476 + $0xad8] sm:$0xff]
        %v934 = vld [vmem:[%s476 + $0xae0] sm:$0xff]
        %v935 = vld [vmem:[%s476 + $0xae8] sm:$0xff]
        %v936 = vld [vmem:[%s476 + $0xaf0] sm:$0xff]
        %v937 = vld [vmem:[%s476 + $0xaf8] sm:$0xff]
        %v938 = vld [vmem:[%s476 + $0xb00] sm:$0xff]
        %v939 = vld [vmem:[%s476 + $0xb08] sm:$0xff]
        %v940 = vld [vmem:[%s476 + $0xb10] sm:$0xff]
        %v941 = vld [vmem:[%s476 + $0xb18] sm:$0xff]
        %v942 = vld [vmem:[%s476 + $0xb20] sm:$0xff]
        %v943 = vld [vmem:[%s476 + $0xb28] sm:$0xff]
        %v944 = vld [vmem:[%s476 + $0xb30] sm:$0xff]
        %v945 = vld [vmem:[%s476 + $0xb38] sm:$0xff]
        %v946 = vld [vmem:[%s476 + $0xb40] sm:$0xff]
        %v947 = vld [vmem:[%s476 + $0xb48] sm:$0xff]
        %v948 = vld [vmem:[%s476 + $0xb50] sm:$0xff]
        %v949 = vld [vmem:[%s476 + $0xb58] sm:$0xff]
        %v950 = vld [vmem:[%s476 + $0xb60] sm:$0xff]
        %v951 = vld [vmem:[%s476 + $0xb68] sm:$0xff]
        %v952 = vld [vmem:[%s476 + $0xb70] sm:$0xff]
        %v953 = vld [vmem:[%s476 + $0xb78] sm:$0xff]
        %v954 = vld [vmem:[%s476 + $0xb80] sm:$0xff]
        %v955 = vld [vmem:[%s476 + $0xb88] sm:$0xff]
        %v956 = vld [vmem:[%s476 + $0xb90] sm:$0xff]
        %v957 = vld [vmem:[%s476 + $0xb98] sm:$0xff]
        %v958 = vld [vmem:[%s476 + $0xba0] sm:$0xff]
        %v959 = vld [vmem:[%s476 + $0xba8] sm:$0xff]
        %v960 = vld [vmem:[%s476 + $0xbb0] sm:$0xff]
        %v961 = vld [vmem:[%s476 + $0xbb8] sm:$0xff]
        %v962 = vld [vmem:[%s476 + $0xbc0] sm:$0xff]
        %v963 = vld [vmem:[%s476 + $0xbc8] sm:$0xff]
        %v964 = vld [vmem:[%s476 + $0xbd0] sm:$0xff]
        %v965 = vld [vmem:[%s476 + $0xbd8] sm:$0xff]
        %v966 = vld [vmem:[%s476 + $0xbe0] sm:$0xff]
        %v967 = vld [vmem:[%s476 + $0xbe8] sm:$0xff]
        %v968 = vld [vmem:[%s476 + $0xbf0] sm:$0xff]
        %v969 = vld [vmem:[%s476 + $0xbf8] sm:$0xff]
        %v970 = vld [vmem:[%s476 + $0xc00] sm:$0xff]
        %v971 = vld [vmem:[%s476 + $0xc08] sm:$0xff]
        %v972 = vld [vmem:[%s476 + $0xc10] sm:$0xff]
        %v973 = vld [vmem:[%s476 + $0xc18] sm:$0xff]
        %v974 = vld [vmem:[%s476 + $0xc20] sm:$0xff]
        %v975 = vld [vmem:[%s476 + $0xc28] sm:$0xff]
        %v976 = vld [vmem:[%s476 + $0xc30] sm:$0xff]
        %v977 = vld [vmem:[%s476 + $0xc38] sm:$0xff]
        %v978 = vld [vmem:[%s476 + $0xc40] sm:$0xff]
        %v979 = vld [vmem:[%s476 + $0xc48] sm:$0xff]
        %v980 = vld [vmem:[%s476 + $0xc50] sm:$0xff]
        %v981 = vld [vmem:[%s476 + $0xc58] sm:$0xff]
        %v982 = vld [vmem:[%s476 + $0xc60] sm:$0xff]
        %v983 = vld [vmem:[%s476 + $0xc68] sm:$0xff]
        %v984 = vld [vmem:[%s476 + $0xc70] sm:$0xff]
        %v985 = vld [vmem:[%s476 + $0xc78] sm:$0xff]
        %v986 = vld [vmem:[%s476 + $0xc80] sm:$0xff]
        %v987 = vld [vmem:[%s476 + $0xc88] sm:$0xff]
        %v988 = vld [vmem:[%s476 + $0xc90] sm:$0xff]
        %v989 = vld [vmem:[%s476 + $0xc98] sm:$0xff]
        %v990 = vld [vmem:[%s476 + $0xca0] sm:$0xff]
        %v991 = vld [vmem:[%s476 + $0xca8] sm:$0xff]
        %v992 = vld [vmem:[%s476 + $0xcb0] sm:$0xff]
        %v993 = vld [vmem:[%s476 + $0xcb8] sm:$0xff]
        %v994 = vld [vmem:[%s476 + $0xcc0] sm:$0xff]
        %v995 = vld [vmem:[%s476 + $0xcc8] sm:$0xff]
        %v996 = vld [vmem:[%s476 + $0xcd0] sm:$0xff]
        %v997 = vld [vmem:[%s476 + $0xcd8] sm:$0xff]
        %v998 = vld [vmem:[%s476 + $0xce0] sm:$0xff]
        %v999 = vld [vmem:[%s476 + $0xce8] sm:$0xff]
        %v1000 = vld [vmem:[%s476 + $0xcf0] sm:$0xff]
        %v1001 = vld [vmem:[%s476 + $0xcf8] sm:$0xff]
        %v1002 = vld [vmem:[%s476 + $0xd00] sm:$0xff]
        %v1003 = vld [vmem:[%s476 + $0xd08] sm:$0xff]
        %v1004 = vld [vmem:[%s476 + $0xd10] sm:$0xff]
        %v1005 = vld [vmem:[%s476 + $0xd18] sm:$0xff]
        %v1006 = vld [vmem:[%s476 + $0xd20] sm:$0xff]
        %v1007 = vld [vmem:[%s476 + $0xd28] sm:$0xff]
        %v1008 = vld [vmem:[%s476 + $0xd30] sm:$0xff]
        %v1009 = vld [vmem:[%s476 + $0xd38] sm:$0xff]
        %v1010 = vld [vmem:[%s476 + $0xd40] sm:$0xff]
        %v1011 = vld [vmem:[%s476 + $0xd48] sm:$0xff]
        %v1012 = vld [vmem:[%s476 + $0xd50] sm:$0xff]
        %v1013 = vld [vmem:[%s476 + $0xd58] sm:$0xff]
        %v1014 = vld [vmem:[%s476 + $0xd60] sm:$0xff]
        %v1015 = vld [vmem:[%s476 + $0xd68] sm:$0xff]
        %v1016 = vld [vmem:[%s476 + $0xd70] sm:$0xff]
        %v1017 = vld [vmem:[%s476 + $0xd78] sm:$0xff]
        %v1018 = vld [vmem:[%s476 + $0xd80] sm:$0xff]
        %v1019 = vld [vmem:[%s476 + $0xd88] sm:$0xff]
        %v1020 = vld [vmem:[%s476 + $0xd90] sm:$0xff]
        %v1021 = vld [vmem:[%s476 + $0xd98] sm:$0xff]
        %v1022 = vld [vmem:[%s476 + $0xda0] sm:$0xff]
        %v1023 = vld [vmem:[%s476 + $0xda8] sm:$0xff]
        %v1024 = vld [vmem:[%s476 + $0xdb0] sm:$0xff]
        %v1025 = vld [vmem:[%s476 + $0xdb8] sm:$0xff]
        %v1026 = vld [vmem:[%s476 + $0xdc0] sm:$0xff]
        %v1027 = vld [vmem:[%s476 + $0xdc8] sm:$0xff]
        %v1028 = vld [vmem:[%s476 + $0xdd0] sm:$0xff]
        %v1029 = vld [vmem:[%s476 + $0xdd8] sm:$0xff]
        %v1030 = vld [vmem:[%s476 + $0xde0] sm:$0xff]
        %v1031 = vld [vmem:[%s476 + $0xde8] sm:$0xff]
        %v1032 = vld [vmem:[%s476 + $0xdf0] sm:$0xff]
        %v1033 = vld [vmem:[%s476 + $0xdf8] sm:$0xff]
        %v1034 = vld [vmem:[%s476 + $0xe00] sm:$0xff]
        %v1035 = vld [vmem:[%s476 + $0xe08] sm:$0xff]
        %v1036 = vld [vmem:[%s476 + $0xe10] sm:$0xff]
        %v1037 = vld [vmem:[%s476 + $0xe18] sm:$0xff]
        %v1038 = vld [vmem:[%s476 + $0xe20] sm:$0xff]
        %v1039 = vld [vmem:[%s476 + $0xe28] sm:$0xff]
        %v1040 = vld [vmem:[%s476 + $0xe30] sm:$0xff]
        %v1041 = vld [vmem:[%s476 + $0xe38] sm:$0xff]
        %v1042 = vld [vmem:[%s476 + $0xe40] sm:$0xff]
        %v1043 = vld [vmem:[%s476 + $0xe48] sm:$0xff]
        %v1044 = vld [vmem:[%s476 + $0xe50] sm:$0xff]
        %v1045 = vld [vmem:[%s476 + $0xe58] sm:$0xff]
        %v1046 = vld [vmem:[%s476 + $0xe60] sm:$0xff]
        %v1047 = vld [vmem:[%s476 + $0xe68] sm:$0xff]
        %v1048 = vld [vmem:[%s476 + $0xe70] sm:$0xff]
        %v1049 = vld [vmem:[%s476 + $0xe78] sm:$0xff]
        %v1050 = vld [vmem:[%s476 + $0xe80] sm:$0xff]
        %v1051 = vld [vmem:[%s476 + $0xe88] sm:$0xff]
        %v1052 = vld [vmem:[%s476 + $0xe90] sm:$0xff]
        %v1053 = vld [vmem:[%s476 + $0xe98] sm:$0xff]
        %v1054 = vld [vmem:[%s476 + $0xea0] sm:$0xff]
        %v1055 = vld [vmem:[%s476 + $0xea8] sm:$0xff]
        %v1056 = vld [vmem:[%s476 + $0xeb0] sm:$0xff]
        %v1057 = vld [vmem:[%s476 + $0xeb8] sm:$0xff]
        %v1058 = vld [vmem:[%s476 + $0xec0] sm:$0xff]
        %v1059 = vld [vmem:[%s476 + $0xec8] sm:$0xff]
        %v1060 = vld [vmem:[%s476 + $0xed0] sm:$0xff]
        %v1061 = vld [vmem:[%s476 + $0xed8] sm:$0xff]
        %v1062 = vld [vmem:[%s476 + $0xee0] sm:$0xff]
        %v1063 = vld [vmem:[%s476 + $0xee8] sm:$0xff]
        %v1064 = vld [vmem:[%s476 + $0xef0] sm:$0xff]
        %v1065 = vld [vmem:[%s476 + $0xef8] sm:$0xff]
        %v1066 = vld [vmem:[%s476 + $0xf00] sm:$0xff]
        %v1067 = vld [vmem:[%s476 + $0xf08] sm:$0xff]
        %v1068 = vld [vmem:[%s476 + $0xf10] sm:$0xff]
        %v1069 = vld [vmem:[%s476 + $0xf18] sm:$0xff]
        %v1070 = vld [vmem:[%s476 + $0xf20] sm:$0xff]
        %v1071 = vld [vmem:[%s476 + $0xf28] sm:$0xff]
        %v1072 = vld [vmem:[%s476 + $0xf30] sm:$0xff]
        %v1073 = vld [vmem:[%s476 + $0xf38] sm:$0xff]
        %v1074 = vld [vmem:[%s476 + $0xf40] sm:$0xff]
        %v1075 = vld [vmem:[%s476 + $0xf48] sm:$0xff]
        %v1076 = vld [vmem:[%s476 + $0xf50] sm:$0xff]
        %v1077 = vld [vmem:[%s476 + $0xf58] sm:$0xff]
        %v1078 = vld [vmem:[%s476 + $0xf60] sm:$0xff]
        %v1079 = vld [vmem:[%s476 + $0xf68] sm:$0xff]
        %v1080 = vld [vmem:[%s476 + $0xf70] sm:$0xff]
        %v1081 = vld [vmem:[%s476 + $0xf78] sm:$0xff]
        %v1082 = vld [vmem:[%s476 + $0xf80] sm:$0xff]
        %v1083 = vld [vmem:[%s476 + $0xf88] sm:$0xff]
        %v1084 = vld [vmem:[%s476 + $0xf90] sm:$0xff]
        %v1085 = vld [vmem:[%s476 + $0xf98] sm:$0xff]
        %v1086 = vld [vmem:[%s476 + $0xfa0] sm:$0xff]
        %v1087 = vld [vmem:[%s476 + $0xfa8] sm:$0xff]
        %v1088 = vld [vmem:[%s476 + $0xfb0] sm:$0xff]
        %v1089 = vld [vmem:[%s476 + $0xfb8] sm:$0xff]
        %v1090 = vld [vmem:[%s476 + $0xfc0] sm:$0xff]
        %v1091 = vld [vmem:[%s476 + $0xfc8] sm:$0xff]
        %v1092 = vld [vmem:[%s476 + $0xfd0] sm:$0xff]
        %v1093 = vld [vmem:[%s476 + $0xfd8] sm:$0xff]
        %v1094 = vld [vmem:[%s476 + $0xfe0] sm:$0xff]
        %v1095 = vld [vmem:[%s476 + $0xfe8] sm:$0xff]
        %v1096 = vld [vmem:[%s476 + $0xff0] sm:$0xff]
        %v1097 = vld [vmem:[%s476 + $0xff8] sm:$0xff]
        %v1098 = vld [vmem:[#allocation10] sm:$0xff]
        %v1099 = vld [vmem:[#allocation10 + $0x8] sm:$0xff]
        %v1100 = vld [vmem:[#allocation10 + $0x10] sm:$0xff]
        %v1101 = vld [vmem:[#allocation10 + $0x18] sm:$0xff]
        %v1102 = vld [vmem:[#allocation10 + $0x20] sm:$0xff]
        %v1103 = vld [vmem:[#allocation10 + $0x28] sm:$0xff]
        %v1104 = vld [vmem:[#allocation10 + $0x30] sm:$0xff]
        %v1105 = vld [vmem:[#allocation10 + $0x38] sm:$0xff]
        %v1106 = vld [vmem:[#allocation10 + $0x40] sm:$0xff]
        %v1107 = vld [vmem:[#allocation10 + $0x48] sm:$0xff]
        %v1108 = vld [vmem:[#allocation10 + $0x50] sm:$0xff]
        %v1109 = vld [vmem:[#allocation10 + $0x58] sm:$0xff]
        %v1110 = vld [vmem:[#allocation10 + $0x60] sm:$0xff]
        %v1111 = vld [vmem:[#allocation10 + $0x68] sm:$0xff]
        %v1112 = vld [vmem:[#allocation10 + $0x70] sm:$0xff]
        %v1113 = vld [vmem:[#allocation10 + $0x78] sm:$0xff]
        %v1114 = vld [vmem:[#allocation10 + $0x80] sm:$0xff]
        %v1115 = vld [vmem:[#allocation10 + $0x88] sm:$0xff]
        %v1116 = vld [vmem:[#allocation10 + $0x90] sm:$0xff]
        %v1117 = vld [vmem:[#allocation10 + $0x98] sm:$0xff]
        %v1118 = vld [vmem:[#allocation10 + $0xa0] sm:$0xff]
        %v1119 = vld [vmem:[#allocation10 + $0xa8] sm:$0xff]
        %v1120 = vld [vmem:[#allocation10 + $0xb0] sm:$0xff]
        %v1121 = vld [vmem:[#allocation10 + $0xb8] sm:$0xff]
        %v1122 = vld [vmem:[#allocation10 + $0xc0] sm:$0xff]
        %v1123 = vld [vmem:[#allocation10 + $0xc8] sm:$0xff]
        %v1124 = vld [vmem:[#allocation10 + $0xd0] sm:$0xff]
        %v1125 = vld [vmem:[#allocation10 + $0xd8] sm:$0xff]
        %v1126 = vld [vmem:[#allocation10 + $0xe0] sm:$0xff]
        %v1127 = vld [vmem:[#allocation10 + $0xe8] sm:$0xff]
        %v1128 = vld [vmem:[#allocation10 + $0xf0] sm:$0xff]
        %v1129 = vld [vmem:[#allocation10 + $0xf8] sm:$0xff]
        %v1130 = vld [vmem:[#allocation10 + $0x100] sm:$0xff]
        %v1131 = vld [vmem:[#allocation10 + $0x108] sm:$0xff]
        %v1132 = vld [vmem:[#allocation10 + $0x110] sm:$0xff]
        %v1133 = vld [vmem:[#allocation10 + $0x118] sm:$0xff]
        %v1134 = vld [vmem:[#allocation10 + $0x120] sm:$0xff]
        %v1135 = vld [vmem:[#allocation10 + $0x128] sm:$0xff]
        %v1136 = vld [vmem:[#allocation10 + $0x130] sm:$0xff]
        %v1137 = vld [vmem:[#allocation10 + $0x138] sm:$0xff]
        %v1138 = vld [vmem:[#allocation10 + $0x140] sm:$0xff]
        %v1139 = vld [vmem:[#allocation10 + $0x148] sm:$0xff]
        %v1140 = vld [vmem:[#allocation10 + $0x150] sm:$0xff]
        %v1141 = vld [vmem:[#allocation10 + $0x158] sm:$0xff]
        %v1142 = vld [vmem:[#allocation10 + $0x160] sm:$0xff]
        %v1143 = vld [vmem:[#allocation10 + $0x168] sm:$0xff]
        %v1144 = vld [vmem:[#allocation10 + $0x170] sm:$0xff]
        %v1145 = vld [vmem:[#allocation10 + $0x178] sm:$0xff]
        %v1146 = vld [vmem:[#allocation10 + $0x180] sm:$0xff]
        %v1147 = vld [vmem:[#allocation10 + $0x188] sm:$0xff]
        %v1148 = vld [vmem:[#allocation10 + $0x190] sm:$0xff]
        %v1149 = vld [vmem:[#allocation10 + $0x198] sm:$0xff]
        %v1150 = vld [vmem:[#allocation10 + $0x1a0] sm:$0xff]
        %v1151 = vld [vmem:[#allocation10 + $0x1a8] sm:$0xff]
        %v1152 = vld [vmem:[#allocation10 + $0x1b0] sm:$0xff]
        %v1153 = vld [vmem:[#allocation10 + $0x1b8] sm:$0xff]
        %v1154 = vld [vmem:[#allocation10 + $0x1c0] sm:$0xff]
        %v1155 = vld [vmem:[#allocation10 + $0x1c8] sm:$0xff]
        %v1156 = vld [vmem:[#allocation10 + $0x1d0] sm:$0xff]
        %v1157 = vld [vmem:[#allocation10 + $0x1d8] sm:$0xff]
        %v1158 = vld [vmem:[#allocation10 + $0x1e0] sm:$0xff]
        %v1159 = vld [vmem:[#allocation10 + $0x1e8] sm:$0xff]
        %v1160 = vld [vmem:[#allocation10 + $0x1f0] sm:$0xff]
        %v1161 = vld [vmem:[#allocation10 + $0x1f8] sm:$0xff]
        %v1162 = vld [vmem:[#allocation10 + $0x200] sm:$0xff]
        %v1163 = vld [vmem:[#allocation10 + $0x208] sm:$0xff]
        %v1164 = vld [vmem:[#allocation10 + $0x210] sm:$0xff]
        %v1165 = vld [vmem:[#allocation10 + $0x218] sm:$0xff]
        %v1166 = vld [vmem:[#allocation10 + $0x220] sm:$0xff]
        %v1167 = vld [vmem:[#allocation10 + $0x228] sm:$0xff]
        %v1168 = vld [vmem:[#allocation10 + $0x230] sm:$0xff]
        %v1169 = vld [vmem:[#allocation10 + $0x238] sm:$0xff]
        %v1170 = vld [vmem:[#allocation10 + $0x240] sm:$0xff]
        %v1171 = vld [vmem:[#allocation10 + $0x248] sm:$0xff]
        %v1172 = vld [vmem:[#allocation10 + $0x250] sm:$0xff]
        %v1173 = vld [vmem:[#allocation10 + $0x258] sm:$0xff]
        %v1174 = vld [vmem:[#allocation10 + $0x260] sm:$0xff]
        %v1175 = vld [vmem:[#allocation10 + $0x268] sm:$0xff]
        %v1176 = vld [vmem:[#allocation10 + $0x270] sm:$0xff]
        %v1177 = vld [vmem:[#allocation10 + $0x278] sm:$0xff]
        %v1178 = vld [vmem:[#allocation10 + $0x280] sm:$0xff]
        %v1179 = vld [vmem:[#allocation10 + $0x288] sm:$0xff]
        %v1180 = vld [vmem:[#allocation10 + $0x290] sm:$0xff]
        %v1181 = vld [vmem:[#allocation10 + $0x298] sm:$0xff]
        %v1182 = vld [vmem:[#allocation10 + $0x2a0] sm:$0xff]
        %v1183 = vld [vmem:[#allocation10 + $0x2a8] sm:$0xff]
        %v1184 = vld [vmem:[#allocation10 + $0x2b0] sm:$0xff]
        %v1185 = vld [vmem:[#allocation10 + $0x2b8] sm:$0xff]
        %v1186 = vld [vmem:[#allocation10 + $0x2c0] sm:$0xff]
        %v1187 = vld [vmem:[#allocation10 + $0x2c8] sm:$0xff]
        %v1188 = vld [vmem:[#allocation10 + $0x2d0] sm:$0xff]
        %v1189 = vld [vmem:[#allocation10 + $0x2d8] sm:$0xff]
        %v1190 = vld [vmem:[#allocation10 + $0x2e0] sm:$0xff]
        %v1191 = vld [vmem:[#allocation10 + $0x2e8] sm:$0xff]
        %v1192 = vld [vmem:[#allocation10 + $0x2f0] sm:$0xff]
        %v1193 = vld [vmem:[#allocation10 + $0x2f8] sm:$0xff]
        %v1194 = vld [vmem:[#allocation10 + $0x300] sm:$0xff]
        %v1195 = vld [vmem:[#allocation10 + $0x308] sm:$0xff]
        %v1196 = vld [vmem:[#allocation10 + $0x310] sm:$0xff]
        %v1197 = vld [vmem:[#allocation10 + $0x318] sm:$0xff]
        %v1198 = vld [vmem:[#allocation10 + $0x320] sm:$0xff]
        %v1199 = vld [vmem:[#allocation10 + $0x328] sm:$0xff]
        %v1200 = vld [vmem:[#allocation10 + $0x330] sm:$0xff]
        %v1201 = vld [vmem:[#allocation10 + $0x338] sm:$0xff]
        %v1202 = vld [vmem:[#allocation10 + $0x340] sm:$0xff]
        %v1203 = vld [vmem:[#allocation10 + $0x348] sm:$0xff]
        %v1204 = vld [vmem:[#allocation10 + $0x350] sm:$0xff]
        %v1205 = vld [vmem:[#allocation10 + $0x358] sm:$0xff]
        %v1206 = vld [vmem:[#allocation10 + $0x360] sm:$0xff]
        %v1207 = vld [vmem:[#allocation10 + $0x368] sm:$0xff]
        %v1208 = vld [vmem:[#allocation10 + $0x370] sm:$0xff]
        %v1209 = vld [vmem:[#allocation10 + $0x378] sm:$0xff]
        %v1210 = vld [vmem:[#allocation10 + $0x380] sm:$0xff]
        %v1211 = vld [vmem:[#allocation10 + $0x388] sm:$0xff]
        %v1212 = vld [vmem:[#allocation10 + $0x390] sm:$0xff]
        %v1213 = vld [vmem:[#allocation10 + $0x398] sm:$0xff]
        %v1214 = vld [vmem:[#allocation10 + $0x3a0] sm:$0xff]
        %v1215 = vld [vmem:[#allocation10 + $0x3a8] sm:$0xff]
        %v1216 = vld [vmem:[#allocation10 + $0x3b0] sm:$0xff]
        %v1217 = vld [vmem:[#allocation10 + $0x3b8] sm:$0xff]
        %v1218 = vld [vmem:[#allocation10 + $0x3c0] sm:$0xff]
        %v1219 = vld [vmem:[#allocation10 + $0x3c8] sm:$0xff]
        %v1220 = vld [vmem:[#allocation10 + $0x3d0] sm:$0xff]
        %v1221 = vld [vmem:[#allocation10 + $0x3d8] sm:$0xff]
        %v1222 = vld [vmem:[#allocation10 + $0x3e0] sm:$0xff]
        %v1223 = vld [vmem:[#allocation10 + $0x3e8] sm:$0xff]
        %v1224 = vld [vmem:[#allocation10 + $0x3f0] sm:$0xff]
        %v1225 = vld [vmem:[#allocation10 + $0x3f8] sm:$0xff]
        %v1226 = vld [vmem:[#allocation10 + $0x400] sm:$0xff]
        %v1227 = vld [vmem:[#allocation10 + $0x408] sm:$0xff]
        %v1228 = vld [vmem:[#allocation10 + $0x410] sm:$0xff]
        %v1229 = vld [vmem:[#allocation10 + $0x418] sm:$0xff]
        %v1230 = vld [vmem:[#allocation10 + $0x420] sm:$0xff]
        %v1231 = vld [vmem:[#allocation10 + $0x428] sm:$0xff]
        %v1232 = vld [vmem:[#allocation10 + $0x430] sm:$0xff]
        %v1233 = vld [vmem:[#allocation10 + $0x438] sm:$0xff]
        %v1234 = vld [vmem:[#allocation10 + $0x440] sm:$0xff]
        %v1235 = vld [vmem:[#allocation10 + $0x448] sm:$0xff]
        %v1236 = vld [vmem:[#allocation10 + $0x450] sm:$0xff]
        %v1237 = vld [vmem:[#allocation10 + $0x458] sm:$0xff]
        %v1238 = vld [vmem:[#allocation10 + $0x460] sm:$0xff]
        %v1239 = vld [vmem:[#allocation10 + $0x468] sm:$0xff]
        %v1240 = vld [vmem:[#allocation10 + $0x470] sm:$0xff]
        %v1241 = vld [vmem:[#allocation10 + $0x478] sm:$0xff]
        %v1242 = vld [vmem:[#allocation10 + $0x480] sm:$0xff]
        %v1243 = vld [vmem:[#allocation10 + $0x488] sm:$0xff]
        %v1244 = vld [vmem:[#allocation10 + $0x490] sm:$0xff]
        %v1245 = vld [vmem:[#allocation10 + $0x498] sm:$0xff]
        %v1246 = vld [vmem:[#allocation10 + $0x4a0] sm:$0xff]
        %v1247 = vld [vmem:[#allocation10 + $0x4a8] sm:$0xff]
        %v1248 = vld [vmem:[#allocation10 + $0x4b0] sm:$0xff]
        %v1249 = vld [vmem:[#allocation10 + $0x4b8] sm:$0xff]
        %v1250 = vld [vmem:[#allocation10 + $0x4c0] sm:$0xff]
        %v1251 = vld [vmem:[#allocation10 + $0x4c8] sm:$0xff]
        %v1252 = vld [vmem:[#allocation10 + $0x4d0] sm:$0xff]
        %v1253 = vld [vmem:[#allocation10 + $0x4d8] sm:$0xff]
        %v1254 = vld [vmem:[#allocation10 + $0x4e0] sm:$0xff]
        %v1255 = vld [vmem:[#allocation10 + $0x4e8] sm:$0xff]
        %v1256 = vld [vmem:[#allocation10 + $0x4f0] sm:$0xff]
        %v1257 = vld [vmem:[#allocation10 + $0x4f8] sm:$0xff]
        %v1258 = vld [vmem:[#allocation10 + $0x500] sm:$0xff]
        %v1259 = vld [vmem:[#allocation10 + $0x508] sm:$0xff]
        %v1260 = vld [vmem:[#allocation10 + $0x510] sm:$0xff]
        %v1261 = vld [vmem:[#allocation10 + $0x518] sm:$0xff]
        %v1262 = vld [vmem:[#allocation10 + $0x520] sm:$0xff]
        %v1263 = vld [vmem:[#allocation10 + $0x528] sm:$0xff]
        %v1264 = vld [vmem:[#allocation10 + $0x530] sm:$0xff]
        %v1265 = vld [vmem:[#allocation10 + $0x538] sm:$0xff]
        %v1266 = vld [vmem:[#allocation10 + $0x540] sm:$0xff]
        %v1267 = vld [vmem:[#allocation10 + $0x548] sm:$0xff]
        %v1268 = vld [vmem:[#allocation10 + $0x550] sm:$0xff]
        %v1269 = vld [vmem:[#allocation10 + $0x558] sm:$0xff]
        %v1270 = vld [vmem:[#allocation10 + $0x560] sm:$0xff]
        %v1271 = vld [vmem:[#allocation10 + $0x568] sm:$0xff]
        %v1272 = vld [vmem:[#allocation10 + $0x570] sm:$0xff]
        %v1273 = vld [vmem:[#allocation10 + $0x578] sm:$0xff]
        %v1274 = vld [vmem:[#allocation10 + $0x580] sm:$0xff]
        %v1275 = vld [vmem:[#allocation10 + $0x588] sm:$0xff]
        %v1276 = vld [vmem:[#allocation10 + $0x590] sm:$0xff]
        %v1277 = vld [vmem:[#allocation10 + $0x598] sm:$0xff]
        %v1278 = vld [vmem:[#allocation10 + $0x5a0] sm:$0xff]
        %v1279 = vld [vmem:[#allocation10 + $0x5a8] sm:$0xff]
        %v1280 = vld [vmem:[#allocation10 + $0x5b0] sm:$0xff]
        %v1281 = vld [vmem:[#allocation10 + $0x5b8] sm:$0xff]
        %v1282 = vld [vmem:[#allocation10 + $0x5c0] sm:$0xff]
        %v1283 = vld [vmem:[#allocation10 + $0x5c8] sm:$0xff]
        %v1284 = vld [vmem:[#allocation10 + $0x5d0] sm:$0xff]
        %v1285 = vld [vmem:[#allocation10 + $0x5d8] sm:$0xff]
        %v1286 = vld [vmem:[#allocation10 + $0x5e0] sm:$0xff]
        %v1287 = vld [vmem:[#allocation10 + $0x5e8] sm:$0xff]
        %v1288 = vld [vmem:[#allocation10 + $0x5f0] sm:$0xff]
        %v1289 = vld [vmem:[#allocation10 + $0x5f8] sm:$0xff]
        %v1290 = vld [vmem:[#allocation10 + $0x600] sm:$0xff]
        %v1291 = vld [vmem:[#allocation10 + $0x608] sm:$0xff]
        %v1292 = vld [vmem:[#allocation10 + $0x610] sm:$0xff]
        %v1293 = vld [vmem:[#allocation10 + $0x618] sm:$0xff]
        %v1294 = vld [vmem:[#allocation10 + $0x620] sm:$0xff]
        %v1295 = vld [vmem:[#allocation10 + $0x628] sm:$0xff]
        %v1296 = vld [vmem:[#allocation10 + $0x630] sm:$0xff]
        %v1297 = vld [vmem:[#allocation10 + $0x638] sm:$0xff]
        %v1298 = vld [vmem:[#allocation10 + $0x640] sm:$0xff]
        %v1299 = vld [vmem:[#allocation10 + $0x648] sm:$0xff]
        %v1300 = vld [vmem:[#allocation10 + $0x650] sm:$0xff]
        %v1301 = vld [vmem:[#allocation10 + $0x658] sm:$0xff]
        %v1302 = vld [vmem:[#allocation10 + $0x660] sm:$0xff]
        %v1303 = vld [vmem:[#allocation10 + $0x668] sm:$0xff]
        %v1304 = vld [vmem:[#allocation10 + $0x670] sm:$0xff]
        %v1305 = vld [vmem:[#allocation10 + $0x678] sm:$0xff]
        %v1306 = vld [vmem:[#allocation10 + $0x680] sm:$0xff]
        %v1307 = vld [vmem:[#allocation10 + $0x688] sm:$0xff]
        %v1308 = vld [vmem:[#allocation10 + $0x690] sm:$0xff]
        %v1309 = vld [vmem:[#allocation10 + $0x698] sm:$0xff]
        %v1310 = vld [vmem:[#allocation10 + $0x6a0] sm:$0xff]
        %v1311 = vld [vmem:[#allocation10 + $0x6a8] sm:$0xff]
        %v1312 = vld [vmem:[#allocation10 + $0x6b0] sm:$0xff]
        %v1313 = vld [vmem:[#allocation10 + $0x6b8] sm:$0xff]
        %v1314 = vld [vmem:[#allocation10 + $0x6c0] sm:$0xff]
        %v1315 = vld [vmem:[#allocation10 + $0x6c8] sm:$0xff]
        %v1316 = vld [vmem:[#allocation10 + $0x6d0] sm:$0xff]
        %v1317 = vld [vmem:[#allocation10 + $0x6d8] sm:$0xff]
        %v1318 = vld [vmem:[#allocation10 + $0x6e0] sm:$0xff]
        %v1319 = vld [vmem:[#allocation10 + $0x6e8] sm:$0xff]
        %v1320 = vld [vmem:[#allocation10 + $0x6f0] sm:$0xff]
        %v1321 = vld [vmem:[#allocation10 + $0x6f8] sm:$0xff]
        %v1322 = vld [vmem:[#allocation10 + $0x700] sm:$0xff]
        %v1323 = vld [vmem:[#allocation10 + $0x708] sm:$0xff]
        %v1324 = vld [vmem:[#allocation10 + $0x710] sm:$0xff]
        %v1325 = vld [vmem:[#allocation10 + $0x718] sm:$0xff]
        %v1326 = vld [vmem:[#allocation10 + $0x720] sm:$0xff]
        %v1327 = vld [vmem:[#allocation10 + $0x728] sm:$0xff]
        %v1328 = vld [vmem:[#allocation10 + $0x730] sm:$0xff]
        %v1329 = vld [vmem:[#allocation10 + $0x738] sm:$0xff]
        %v1330 = vld [vmem:[#allocation10 + $0x740] sm:$0xff]
        %v1331 = vld [vmem:[#allocation10 + $0x748] sm:$0xff]
        %v1332 = vld [vmem:[#allocation10 + $0x750] sm:$0xff]
        %v1333 = vld [vmem:[#allocation10 + $0x758] sm:$0xff]
        %v1334 = vld [vmem:[#allocation10 + $0x760] sm:$0xff]
        %v1335 = vld [vmem:[#allocation10 + $0x768] sm:$0xff]
        %v1336 = vld [vmem:[#allocation10 + $0x770] sm:$0xff]
        %v1337 = vld [vmem:[#allocation10 + $0x778] sm:$0xff]
        %v1338 = vld [vmem:[#allocation10 + $0x780] sm:$0xff]
        %v1339 = vld [vmem:[#allocation10 + $0x788] sm:$0xff]
        %v1340 = vld [vmem:[#allocation10 + $0x790] sm:$0xff]
        %v1341 = vld [vmem:[#allocation10 + $0x798] sm:$0xff]
        %v1342 = vld [vmem:[#allocation10 + $0x7a0] sm:$0xff]
        %v1343 = vld [vmem:[#allocation10 + $0x7a8] sm:$0xff]
        %v1344 = vld [vmem:[#allocation10 + $0x7b0] sm:$0xff]
        %v1345 = vld [vmem:[#allocation10 + $0x7b8] sm:$0xff]
        %v1346 = vld [vmem:[#allocation10 + $0x7c0] sm:$0xff]
        %v1347 = vld [vmem:[#allocation10 + $0x7c8] sm:$0xff]
        %v1348 = vld [vmem:[#allocation10 + $0x7d0] sm:$0xff]
        %v1349 = vld [vmem:[#allocation10 + $0x7d8] sm:$0xff]
        %v1350 = vld [vmem:[#allocation10 + $0x7e0] sm:$0xff]
        %v1351 = vld [vmem:[#allocation10 + $0x7e8] sm:$0xff]
        %v1352 = vld [vmem:[#allocation10 + $0x7f0] sm:$0xff]
        %v1353 = vld [vmem:[#allocation10 + $0x7f8] sm:$0xff]
        %v1354 = vld [vmem:[#allocation10 + $0x800] sm:$0xff]
        %v1355 = vld [vmem:[#allocation10 + $0x808] sm:$0xff]
        %v1356 = vld [vmem:[#allocation10 + $0x810] sm:$0xff]
        %v1357 = vld [vmem:[#allocation10 + $0x818] sm:$0xff]
        %v1358 = vld [vmem:[#allocation10 + $0x820] sm:$0xff]
        %v1359 = vld [vmem:[#allocation10 + $0x828] sm:$0xff]
        %v1360 = vld [vmem:[#allocation10 + $0x830] sm:$0xff]
        %v1361 = vld [vmem:[#allocation10 + $0x838] sm:$0xff]
        %v1362 = vld [vmem:[#allocation10 + $0x840] sm:$0xff]
        %v1363 = vld [vmem:[#allocation10 + $0x848] sm:$0xff]
        %v1364 = vld [vmem:[#allocation10 + $0x850] sm:$0xff]
        %v1365 = vld [vmem:[#allocation10 + $0x858] sm:$0xff]
        %v1366 = vld [vmem:[#allocation10 + $0x860] sm:$0xff]
        %v1367 = vld [vmem:[#allocation10 + $0x868] sm:$0xff]
        %v1368 = vld [vmem:[#allocation10 + $0x870] sm:$0xff]
        %v1369 = vld [vmem:[#allocation10 + $0x878] sm:$0xff]
        %v1370 = vld [vmem:[#allocation10 + $0x880] sm:$0xff]
        %v1371 = vld [vmem:[#allocation10 + $0x888] sm:$0xff]
        %v1372 = vld [vmem:[#allocation10 + $0x890] sm:$0xff]
        %v1373 = vld [vmem:[#allocation10 + $0x898] sm:$0xff]
        %v1374 = vld [vmem:[#allocation10 + $0x8a0] sm:$0xff]
        %v1375 = vld [vmem:[#allocation10 + $0x8a8] sm:$0xff]
        %v1376 = vld [vmem:[#allocation10 + $0x8b0] sm:$0xff]
        %v1377 = vld [vmem:[#allocation10 + $0x8b8] sm:$0xff]
        %v1378 = vld [vmem:[#allocation10 + $0x8c0] sm:$0xff]
        %v1379 = vld [vmem:[#allocation10 + $0x8c8] sm:$0xff]
        %v1380 = vld [vmem:[#allocation10 + $0x8d0] sm:$0xff]
        %v1381 = vld [vmem:[#allocation10 + $0x8d8] sm:$0xff]
        %v1382 = vld [vmem:[#allocation10 + $0x8e0] sm:$0xff]
        %v1383 = vld [vmem:[#allocation10 + $0x8e8] sm:$0xff]
        %v1384 = vld [vmem:[#allocation10 + $0x8f0] sm:$0xff]
        %v1385 = vld [vmem:[#allocation10 + $0x8f8] sm:$0xff]
        %v1386 = vld [vmem:[#allocation10 + $0x900] sm:$0xff]
        %v1387 = vld [vmem:[#allocation10 + $0x908] sm:$0xff]
        %v1388 = vld [vmem:[#allocation10 + $0x910] sm:$0xff]
        %v1389 = vld [vmem:[#allocation10 + $0x918] sm:$0xff]
        %v1390 = vld [vmem:[#allocation10 + $0x920] sm:$0xff]
        %v1391 = vld [vmem:[#allocation10 + $0x928] sm:$0xff]
        %v1392 = vld [vmem:[#allocation10 + $0x930] sm:$0xff]
        %v1393 = vld [vmem:[#allocation10 + $0x938] sm:$0xff]
        %v1394 = vld [vmem:[#allocation10 + $0x940] sm:$0xff]
        %v1395 = vld [vmem:[#allocation10 + $0x948] sm:$0xff]
        %v1396 = vld [vmem:[#allocation10 + $0x950] sm:$0xff]
        %v1397 = vld [vmem:[#allocation10 + $0x958] sm:$0xff]
        %v1398 = vld [vmem:[#allocation10 + $0x960] sm:$0xff]
        %v1399 = vld [vmem:[#allocation10 + $0x968] sm:$0xff]
        %v1400 = vld [vmem:[#allocation10 + $0x970] sm:$0xff]
        %v1401 = vld [vmem:[#allocation10 + $0x978] sm:$0xff]
        %v1402 = vld [vmem:[#allocation10 + $0x980] sm:$0xff]
        %v1403 = vld [vmem:[#allocation10 + $0x988] sm:$0xff]
        %v1404 = vld [vmem:[#allocation10 + $0x990] sm:$0xff]
        %v1405 = vld [vmem:[#allocation10 + $0x998] sm:$0xff]
        %v1406 = vld [vmem:[#allocation10 + $0x9a0] sm:$0xff]
        %v1407 = vld [vmem:[#allocation10 + $0x9a8] sm:$0xff]
        %v1408 = vld [vmem:[#allocation10 + $0x9b0] sm:$0xff]
        %v1409 = vld [vmem:[#allocation10 + $0x9b8] sm:$0xff]
        %v1410 = vld [vmem:[#allocation10 + $0x9c0] sm:$0xff]
        %v1411 = vld [vmem:[#allocation10 + $0x9c8] sm:$0xff]
        %v1412 = vld [vmem:[#allocation10 + $0x9d0] sm:$0xff]
        %v1413 = vld [vmem:[#allocation10 + $0x9d8] sm:$0xff]
        %v1414 = vld [vmem:[#allocation10 + $0x9e0] sm:$0xff]
        %v1415 = vld [vmem:[#allocation10 + $0x9e8] sm:$0xff]
        %v1416 = vld [vmem:[#allocation10 + $0x9f0] sm:$0xff]
        %v1417 = vld [vmem:[#allocation10 + $0x9f8] sm:$0xff]
        %v1418 = vld [vmem:[#allocation10 + $0xa00] sm:$0xff]
        %v1419 = vld [vmem:[#allocation10 + $0xa08] sm:$0xff]
        %v1420 = vld [vmem:[#allocation10 + $0xa10] sm:$0xff]
        %v1421 = vld [vmem:[#allocation10 + $0xa18] sm:$0xff]
        %v1422 = vld [vmem:[#allocation10 + $0xa20] sm:$0xff]
        %v1423 = vld [vmem:[#allocation10 + $0xa28] sm:$0xff]
        %v1424 = vld [vmem:[#allocation10 + $0xa30] sm:$0xff]
        %v1425 = vld [vmem:[#allocation10 + $0xa38] sm:$0xff]
        %v1426 = vld [vmem:[#allocation10 + $0xa40] sm:$0xff]
        %v1427 = vld [vmem:[#allocation10 + $0xa48] sm:$0xff]
        %v1428 = vld [vmem:[#allocation10 + $0xa50] sm:$0xff]
        %v1429 = vld [vmem:[#allocation10 + $0xa58] sm:$0xff]
        %v1430 = vld [vmem:[#allocation10 + $0xa60] sm:$0xff]
        %v1431 = vld [vmem:[#allocation10 + $0xa68] sm:$0xff]
        %v1432 = vld [vmem:[#allocation10 + $0xa70] sm:$0xff]
        %v1433 = vld [vmem:[#allocation10 + $0xa78] sm:$0xff]
        %v1434 = vld [vmem:[#allocation10 + $0xa80] sm:$0xff]
        %v1435 = vld [vmem:[#allocation10 + $0xa88] sm:$0xff]
        %v1436 = vld [vmem:[#allocation10 + $0xa90] sm:$0xff]
        %v1437 = vld [vmem:[#allocation10 + $0xa98] sm:$0xff]
        %v1438 = vld [vmem:[#allocation10 + $0xaa0] sm:$0xff]
        %v1439 = vld [vmem:[#allocation10 + $0xaa8] sm:$0xff]
        %v1440 = vld [vmem:[#allocation10 + $0xab0] sm:$0xff]
        %v1441 = vld [vmem:[#allocation10 + $0xab8] sm:$0xff]
        %v1442 = vld [vmem:[#allocation10 + $0xac0] sm:$0xff]
        %v1443 = vld [vmem:[#allocation10 + $0xac8] sm:$0xff]
        %v1444 = vld [vmem:[#allocation10 + $0xad0] sm:$0xff]
        %v1445 = vld [vmem:[#allocation10 + $0xad8] sm:$0xff]
        %v1446 = vld [vmem:[#allocation10 + $0xae0] sm:$0xff]
        %v1447 = vld [vmem:[#allocation10 + $0xae8] sm:$0xff]
        %v1448 = vld [vmem:[#allocation10 + $0xaf0] sm:$0xff]
        %v1449 = vld [vmem:[#allocation10 + $0xaf8] sm:$0xff]
        %v1450 = vld [vmem:[#allocation10 + $0xb00] sm:$0xff]
        %v1451 = vld [vmem:[#allocation10 + $0xb08] sm:$0xff]
        %v1452 = vld [vmem:[#allocation10 + $0xb10] sm:$0xff]
        %v1453 = vld [vmem:[#allocation10 + $0xb18] sm:$0xff]
        %v1454 = vld [vmem:[#allocation10 + $0xb20] sm:$0xff]
        %v1455 = vld [vmem:[#allocation10 + $0xb28] sm:$0xff]
        %v1456 = vld [vmem:[#allocation10 + $0xb30] sm:$0xff]
        %v1457 = vld [vmem:[#allocation10 + $0xb38] sm:$0xff]
        %v1458 = vld [vmem:[#allocation10 + $0xb40] sm:$0xff]
        %v1459 = vld [vmem:[#allocation10 + $0xb48] sm:$0xff]
        %v1460 = vld [vmem:[#allocation10 + $0xb50] sm:$0xff]
        %v1461 = vld [vmem:[#allocation10 + $0xb58] sm:$0xff]
        %v1462 = vld [vmem:[#allocation10 + $0xb60] sm:$0xff]
        %v1463 = vld [vmem:[#allocation10 + $0xb68] sm:$0xff]
        %v1464 = vld [vmem:[#allocation10 + $0xb70] sm:$0xff]
        %v1465 = vld [vmem:[#allocation10 + $0xb78] sm:$0xff]
        %v1466 = vld [vmem:[#allocation10 + $0xb80] sm:$0xff]
        %v1467 = vld [vmem:[#allocation10 + $0xb88] sm:$0xff]
        %v1468 = vld [vmem:[#allocation10 + $0xb90] sm:$0xff]
        %v1469 = vld [vmem:[#allocation10 + $0xb98] sm:$0xff]
        %v1470 = vld [vmem:[#allocation10 + $0xba0] sm:$0xff]
        %v1471 = vld [vmem:[#allocation10 + $0xba8] sm:$0xff]
        %v1472 = vld [vmem:[#allocation10 + $0xbb0] sm:$0xff]
        %v1473 = vld [vmem:[#allocation10 + $0xbb8] sm:$0xff]
        %v1474 = vld [vmem:[#allocation10 + $0xbc0] sm:$0xff]
        %v1475 = vld [vmem:[#allocation10 + $0xbc8] sm:$0xff]
        %v1476 = vld [vmem:[#allocation10 + $0xbd0] sm:$0xff]
        %v1477 = vld [vmem:[#allocation10 + $0xbd8] sm:$0xff]
        %v1478 = vld [vmem:[#allocation10 + $0xbe0] sm:$0xff]
        %v1479 = vld [vmem:[#allocation10 + $0xbe8] sm:$0xff]
        %v1480 = vld [vmem:[#allocation10 + $0xbf0] sm:$0xff]
        %v1481 = vld [vmem:[#allocation10 + $0xbf8] sm:$0xff]
        %v1482 = vld [vmem:[#allocation10 + $0xc00] sm:$0xff]
        %v1483 = vld [vmem:[#allocation10 + $0xc08] sm:$0xff]
        %v1484 = vld [vmem:[#allocation10 + $0xc10] sm:$0xff]
        %v1485 = vld [vmem:[#allocation10 + $0xc18] sm:$0xff]
        %v1486 = vld [vmem:[#allocation10 + $0xc20] sm:$0xff]
        %v1487 = vld [vmem:[#allocation10 + $0xc28] sm:$0xff]
        %v1488 = vld [vmem:[#allocation10 + $0xc30] sm:$0xff]
        %v1489 = vld [vmem:[#allocation10 + $0xc38] sm:$0xff]
        %v1490 = vld [vmem:[#allocation10 + $0xc40] sm:$0xff]
        %v1491 = vld [vmem:[#allocation10 + $0xc48] sm:$0xff]
        %v1492 = vld [vmem:[#allocation10 + $0xc50] sm:$0xff]
        %v1493 = vld [vmem:[#allocation10 + $0xc58] sm:$0xff]
        %v1494 = vld [vmem:[#allocation10 + $0xc60] sm:$0xff]
        %v1495 = vld [vmem:[#allocation10 + $0xc68] sm:$0xff]
        %v1496 = vld [vmem:[#allocation10 + $0xc70] sm:$0xff]
        %v1497 = vld [vmem:[#allocation10 + $0xc78] sm:$0xff]
        %v1498 = vld [vmem:[#allocation10 + $0xc80] sm:$0xff]
        %v1499 = vld [vmem:[#allocation10 + $0xc88] sm:$0xff]
        %v1500 = vld [vmem:[#allocation10 + $0xc90] sm:$0xff]
        %v1501 = vld [vmem:[#allocation10 + $0xc98] sm:$0xff]
        %v1502 = vld [vmem:[#allocation10 + $0xca0] sm:$0xff]
        %v1503 = vld [vmem:[#allocation10 + $0xca8] sm:$0xff]
        %v1504 = vld [vmem:[#allocation10 + $0xcb0] sm:$0xff]
        %v1505 = vld [vmem:[#allocation10 + $0xcb8] sm:$0xff]
        %v1506 = vld [vmem:[#allocation10 + $0xcc0] sm:$0xff]
        %v1507 = vld [vmem:[#allocation10 + $0xcc8] sm:$0xff]
        %v1508 = vld [vmem:[#allocation10 + $0xcd0] sm:$0xff]
        %v1509 = vld [vmem:[#allocation10 + $0xcd8] sm:$0xff]
        %v1510 = vld [vmem:[#allocation10 + $0xce0] sm:$0xff]
        %v1511 = vld [vmem:[#allocation10 + $0xce8] sm:$0xff]
        %v1512 = vld [vmem:[#allocation10 + $0xcf0] sm:$0xff]
        %v1513 = vld [vmem:[#allocation10 + $0xcf8] sm:$0xff]
        %v1514 = vld [vmem:[#allocation10 + $0xd00] sm:$0xff]
        %v1515 = vld [vmem:[#allocation10 + $0xd08] sm:$0xff]
        %v1516 = vld [vmem:[#allocation10 + $0xd10] sm:$0xff]
        %v1517 = vld [vmem:[#allocation10 + $0xd18] sm:$0xff]
        %v1518 = vld [vmem:[#allocation10 + $0xd20] sm:$0xff]
        %v1519 = vld [vmem:[#allocation10 + $0xd28] sm:$0xff]
        %v1520 = vld [vmem:[#allocation10 + $0xd30] sm:$0xff]
        %v1521 = vld [vmem:[#allocation10 + $0xd38] sm:$0xff]
        %v1522 = vld [vmem:[#allocation10 + $0xd40] sm:$0xff]
        %v1523 = vld [vmem:[#allocation10 + $0xd48] sm:$0xff]
        %v1524 = vld [vmem:[#allocation10 + $0xd50] sm:$0xff]
        %v1525 = vld [vmem:[#allocation10 + $0xd58] sm:$0xff]
        %v1526 = vld [vmem:[#allocation10 + $0xd60] sm:$0xff]
        %v1527 = vld [vmem:[#allocation10 + $0xd68] sm:$0xff]
        %v1528 = vld [vmem:[#allocation10 + $0xd70] sm:$0xff]
        %v1529 = vld [vmem:[#allocation10 + $0xd78] sm:$0xff]
        %v1530 = vld [vmem:[#allocation10 + $0xd80] sm:$0xff]
        %v1531 = vld [vmem:[#allocation10 + $0xd88] sm:$0xff]
        %v1532 = vld [vmem:[#allocation10 + $0xd90] sm:$0xff]
        %v1533 = vld [vmem:[#allocation10 + $0xd98] sm:$0xff]
        %v1534 = vld [vmem:[#allocation10 + $0xda0] sm:$0xff]
        %v1535 = vld [vmem:[#allocation10 + $0xda8] sm:$0xff]
        %v1536 = vld [vmem:[#allocation10 + $0xdb0] sm:$0xff]
        %v1537 = vld [vmem:[#allocation10 + $0xdb8] sm:$0xff]
        %v1538 = vld [vmem:[#allocation10 + $0xdc0] sm:$0xff]
        %v1539 = vld [vmem:[#allocation10 + $0xdc8] sm:$0xff]
        %v1540 = vld [vmem:[#allocation10 + $0xdd0] sm:$0xff]
        %v1541 = vld [vmem:[#allocation10 + $0xdd8] sm:$0xff]
        %v1542 = vld [vmem:[#allocation10 + $0xde0] sm:$0xff]
        %v1543 = vld [vmem:[#allocation10 + $0xde8] sm:$0xff]
        %v1544 = vld [vmem:[#allocation10 + $0xdf0] sm:$0xff]
        %v1545 = vld [vmem:[#allocation10 + $0xdf8] sm:$0xff]
        %v1546 = vld [vmem:[#allocation10 + $0xe00] sm:$0xff]
        %v1547 = vld [vmem:[#allocation10 + $0xe08] sm:$0xff]
        %v1548 = vld [vmem:[#allocation10 + $0xe10] sm:$0xff]
        %v1549 = vld [vmem:[#allocation10 + $0xe18] sm:$0xff]
        %v1550 = vld [vmem:[#allocation10 + $0xe20] sm:$0xff]
        %v1551 = vld [vmem:[#allocation10 + $0xe28] sm:$0xff]
        %v1552 = vld [vmem:[#allocation10 + $0xe30] sm:$0xff]
        %v1553 = vld [vmem:[#allocation10 + $0xe38] sm:$0xff]
        %v1554 = vld [vmem:[#allocation10 + $0xe40] sm:$0xff]
        %v1555 = vld [vmem:[#allocation10 + $0xe48] sm:$0xff]
        %v1556 = vld [vmem:[#allocation10 + $0xe50] sm:$0xff]
        %v1557 = vld [vmem:[#allocation10 + $0xe58] sm:$0xff]
        %v1558 = vld [vmem:[#allocation10 + $0xe60] sm:$0xff]
        %v1559 = vld [vmem:[#allocation10 + $0xe68] sm:$0xff]
        %v1560 = vld [vmem:[#allocation10 + $0xe70] sm:$0xff]
        %v1561 = vld [vmem:[#allocation10 + $0xe78] sm:$0xff]
        %v1562 = vld [vmem:[#allocation10 + $0xe80] sm:$0xff]
        %v1563 = vld [vmem:[#allocation10 + $0xe88] sm:$0xff]
        %v1564 = vld [vmem:[#allocation10 + $0xe90] sm:$0xff]
        %v1565 = vld [vmem:[#allocation10 + $0xe98] sm:$0xff]
        %v1566 = vld [vmem:[#allocation10 + $0xea0] sm:$0xff]
        %v1567 = vld [vmem:[#allocation10 + $0xea8] sm:$0xff]
        %v1568 = vld [vmem:[#allocation10 + $0xeb0] sm:$0xff]
        %v1569 = vld [vmem:[#allocation10 + $0xeb8] sm:$0xff]
        %v1570 = vld [vmem:[#allocation10 + $0xec0] sm:$0xff]
        %v1571 = vld [vmem:[#allocation10 + $0xec8] sm:$0xff]
        %v1572 = vld [vmem:[#allocation10 + $0xed0] sm:$0xff]
        %v1573 = vld [vmem:[#allocation10 + $0xed8] sm:$0xff]
        %v1574 = vld [vmem:[#allocation10 + $0xee0] sm:$0xff]
        %v1575 = vld [vmem:[#allocation10 + $0xee8] sm:$0xff]
        %v1576 = vld [vmem:[#allocation10 + $0xef0] sm:$0xff]
        %v1577 = vld [vmem:[#allocation10 + $0xef8] sm:$0xff]
        %v1578 = vld [vmem:[#allocation10 + $0xf00] sm:$0xff]
        %v1579 = vld [vmem:[#allocation10 + $0xf08] sm:$0xff]
        %v1580 = vld [vmem:[#allocation10 + $0xf10] sm:$0xff]
        %v1581 = vld [vmem:[#allocation10 + $0xf18] sm:$0xff]
        %v1582 = vld [vmem:[#allocation10 + $0xf20] sm:$0xff]
        %v1583 = vld [vmem:[#allocation10 + $0xf28] sm:$0xff]
        %v1584 = vld [vmem:[#allocation10 + $0xf30] sm:$0xff]
        %v1585 = vld [vmem:[#allocation10 + $0xf38] sm:$0xff]
        %v1586 = vld [vmem:[#allocation10 + $0xf40] sm:$0xff]
        %v1587 = vld [vmem:[#allocation10 + $0xf48] sm:$0xff]
        %v1588 = vld [vmem:[#allocation10 + $0xf50] sm:$0xff]
        %v1589 = vld [vmem:[#allocation10 + $0xf58] sm:$0xff]
        %v1590 = vld [vmem:[#allocation10 + $0xf60] sm:$0xff]
        %v1591 = vld [vmem:[#allocation10 + $0xf68] sm:$0xff]
        %v1592 = vld [vmem:[#allocation10 + $0xf70] sm:$0xff]
        %v1593 = vld [vmem:[#allocation10 + $0xf78] sm:$0xff]
        %v1594 = vld [vmem:[#allocation10 + $0xf80] sm:$0xff]
        %v1595 = vld [vmem:[#allocation10 + $0xf88] sm:$0xff]
        %v1596 = vld [vmem:[#allocation10 + $0xf90] sm:$0xff]
        %v1597 = vld [vmem:[#allocation10 + $0xf98] sm:$0xff]
        %v1598 = vld [vmem:[#allocation10 + $0xfa0] sm:$0xff]
        %v1599 = vld [vmem:[#allocation10 + $0xfa8] sm:$0xff]
        %v1600 = vld [vmem:[#allocation10 + $0xfb0] sm:$0xff]
        %v1601 = vld [vmem:[#allocation10 + $0xfb8] sm:$0xff]
        %v1602 = vld [vmem:[#allocation10 + $0xfc0] sm:$0xff]
        %v1603 = vld [vmem:[#allocation10 + $0xfc8] sm:$0xff]
        %v1604 = vld [vmem:[#allocation10 + $0xfd0] sm:$0xff]
        %v1605 = vld [vmem:[#allocation10 + $0xfd8] sm:$0xff]
        %v1606 = vld [vmem:[#allocation10 + $0xfe0] sm:$0xff]
        %v1607 = vld [vmem:[#allocation10 + $0xfe8] sm:$0xff]
        %v1608 = vld [vmem:[#allocation10 + $0xff0] sm:$0xff]
        %v1609 = vld [vmem:[#allocation10 + $0xff8] sm:$0xff]
        %v1610 = vld [vmem:[%s485] sm:$0xff]
        %v1611 = vld [vmem:[%s485 + $0x8] sm:$0xff]
        %v1612 = vld [vmem:[%s485 + $0x10] sm:$0xff]
        %v1613 = vld [vmem:[%s485 + $0x18] sm:$0xff]
        %v1614 = vld [vmem:[%s485 + $0x20] sm:$0xff]
        %v1615 = vld [vmem:[%s485 + $0x28] sm:$0xff]
        %v1616 = vld [vmem:[%s485 + $0x30] sm:$0xff]
        %v1617 = vld [vmem:[%s485 + $0x38] sm:$0xff]
        %v1618 = vld [vmem:[%s485 + $0x40] sm:$0xff]
        %v1619 = vld [vmem:[%s485 + $0x48] sm:$0xff]
        %v1620 = vld [vmem:[%s485 + $0x50] sm:$0xff]
        %v1621 = vld [vmem:[%s485 + $0x58] sm:$0xff]
        %v1622 = vld [vmem:[%s485 + $0x60] sm:$0xff]
        %v1623 = vld [vmem:[%s485 + $0x68] sm:$0xff]
        %v1624 = vld [vmem:[%s485 + $0x70] sm:$0xff]
        %v1625 = vld [vmem:[%s485 + $0x78] sm:$0xff]
        %v1626 = vld [vmem:[%s485 + $0x80] sm:$0xff]
        %v1627 = vld [vmem:[%s485 + $0x88] sm:$0xff]
        %v1628 = vld [vmem:[%s485 + $0x90] sm:$0xff]
        %v1629 = vld [vmem:[%s485 + $0x98] sm:$0xff]
        %v1630 = vld [vmem:[%s485 + $0xa0] sm:$0xff]
        %v1631 = vld [vmem:[%s485 + $0xa8] sm:$0xff]
        %v1632 = vld [vmem:[%s485 + $0xb0] sm:$0xff]
        %v1633 = vld [vmem:[%s485 + $0xb8] sm:$0xff]
        %v1634 = vld [vmem:[%s485 + $0xc0] sm:$0xff]
        %v1635 = vld [vmem:[%s485 + $0xc8] sm:$0xff]
        %v1636 = vld [vmem:[%s485 + $0xd0] sm:$0xff]
        %v1637 = vld [vmem:[%s485 + $0xd8] sm:$0xff]
        %v1638 = vld [vmem:[%s485 + $0xe0] sm:$0xff]
        %v1639 = vld [vmem:[%s485 + $0xe8] sm:$0xff]
        %v1640 = vld [vmem:[%s485 + $0xf0] sm:$0xff]
        %v1641 = vld [vmem:[%s485 + $0xf8] sm:$0xff]
        %v1642 = vld [vmem:[%s485 + $0x100] sm:$0xff]
        %v1643 = vld [vmem:[%s485 + $0x108] sm:$0xff]
        %v1644 = vld [vmem:[%s485 + $0x110] sm:$0xff]
        %v1645 = vld [vmem:[%s485 + $0x118] sm:$0xff]
        %v1646 = vld [vmem:[%s485 + $0x120] sm:$0xff]
        %v1647 = vld [vmem:[%s485 + $0x128] sm:$0xff]
        %v1648 = vld [vmem:[%s485 + $0x130] sm:$0xff]
        %v1649 = vld [vmem:[%s485 + $0x138] sm:$0xff]
        %v1650 = vld [vmem:[%s485 + $0x140] sm:$0xff]
        %v1651 = vld [vmem:[%s485 + $0x148] sm:$0xff]
        %v1652 = vld [vmem:[%s485 + $0x150] sm:$0xff]
        %v1653 = vld [vmem:[%s485 + $0x158] sm:$0xff]
        %v1654 = vld [vmem:[%s485 + $0x160] sm:$0xff]
        %v1655 = vld [vmem:[%s485 + $0x168] sm:$0xff]
        %v1656 = vld [vmem:[%s485 + $0x170] sm:$0xff]
        %v1657 = vld [vmem:[%s485 + $0x178] sm:$0xff]
        %v1658 = vld [vmem:[%s485 + $0x180] sm:$0xff]
        %v1659 = vld [vmem:[%s485 + $0x188] sm:$0xff]
        %v1660 = vld [vmem:[%s485 + $0x190] sm:$0xff]
        %v1661 = vld [vmem:[%s485 + $0x198] sm:$0xff]
        %v1662 = vld [vmem:[%s485 + $0x1a0] sm:$0xff]
        %v1663 = vld [vmem:[%s485 + $0x1a8] sm:$0xff]
        %v1664 = vld [vmem:[%s485 + $0x1b0] sm:$0xff]
        %v1665 = vld [vmem:[%s485 + $0x1b8] sm:$0xff]
        %v1666 = vld [vmem:[%s485 + $0x1c0] sm:$0xff]
        %v1667 = vld [vmem:[%s485 + $0x1c8] sm:$0xff]
        %v1668 = vld [vmem:[%s485 + $0x1d0] sm:$0xff]
        %v1669 = vld [vmem:[%s485 + $0x1d8] sm:$0xff]
        %v1670 = vld [vmem:[%s485 + $0x1e0] sm:$0xff]
        %v1671 = vld [vmem:[%s485 + $0x1e8] sm:$0xff]
        %v1672 = vld [vmem:[%s485 + $0x1f0] sm:$0xff]
        %v1673 = vld [vmem:[%s485 + $0x1f8] sm:$0xff]
        %v1674 = vld [vmem:[%s485 + $0x200] sm:$0xff]
        %v1675 = vld [vmem:[%s485 + $0x208] sm:$0xff]
        %v1676 = vld [vmem:[%s485 + $0x210] sm:$0xff]
        %v1677 = vld [vmem:[%s485 + $0x218] sm:$0xff]
        %v1678 = vld [vmem:[%s485 + $0x220] sm:$0xff]
        %v1679 = vld [vmem:[%s485 + $0x228] sm:$0xff]
        %v1680 = vld [vmem:[%s485 + $0x230] sm:$0xff]
        %v1681 = vld [vmem:[%s485 + $0x238] sm:$0xff]
        %v1682 = vld [vmem:[%s485 + $0x240] sm:$0xff]
        %v1683 = vld [vmem:[%s485 + $0x248] sm:$0xff]
        %v1684 = vld [vmem:[%s485 + $0x250] sm:$0xff]
        %v1685 = vld [vmem:[%s485 + $0x258] sm:$0xff]
        %v1686 = vld [vmem:[%s485 + $0x260] sm:$0xff]
        %v1687 = vld [vmem:[%s485 + $0x268] sm:$0xff]
        %v1688 = vld [vmem:[%s485 + $0x270] sm:$0xff]
        %v1689 = vld [vmem:[%s485 + $0x278] sm:$0xff]
        %v1690 = vld [vmem:[%s485 + $0x280] sm:$0xff]
        %v1691 = vld [vmem:[%s485 + $0x288] sm:$0xff]
        %v1692 = vld [vmem:[%s485 + $0x290] sm:$0xff]
        %v1693 = vld [vmem:[%s485 + $0x298] sm:$0xff]
        %v1694 = vld [vmem:[%s485 + $0x2a0] sm:$0xff]
        %v1695 = vld [vmem:[%s485 + $0x2a8] sm:$0xff]
        %v1696 = vld [vmem:[%s485 + $0x2b0] sm:$0xff]
        %v1697 = vld [vmem:[%s485 + $0x2b8] sm:$0xff]
        %v1698 = vld [vmem:[%s485 + $0x2c0] sm:$0xff]
        %v1699 = vld [vmem:[%s485 + $0x2c8] sm:$0xff]
        %v1700 = vld [vmem:[%s485 + $0x2d0] sm:$0xff]
        %v1701 = vld [vmem:[%s485 + $0x2d8] sm:$0xff]
        %v1702 = vld [vmem:[%s485 + $0x2e0] sm:$0xff]
        %v1703 = vld [vmem:[%s485 + $0x2e8] sm:$0xff]
        %v1704 = vld [vmem:[%s485 + $0x2f0] sm:$0xff]
        %v1705 = vld [vmem:[%s485 + $0x2f8] sm:$0xff]
        %v1706 = vld [vmem:[%s485 + $0x300] sm:$0xff]
        %v1707 = vld [vmem:[%s485 + $0x308] sm:$0xff]
        %v1708 = vld [vmem:[%s485 + $0x310] sm:$0xff]
        %v1709 = vld [vmem:[%s485 + $0x318] sm:$0xff]
        %v1710 = vld [vmem:[%s485 + $0x320] sm:$0xff]
        %v1711 = vld [vmem:[%s485 + $0x328] sm:$0xff]
        %v1712 = vld [vmem:[%s485 + $0x330] sm:$0xff]
        %v1713 = vld [vmem:[%s485 + $0x338] sm:$0xff]
        %v1714 = vld [vmem:[%s485 + $0x340] sm:$0xff]
        %v1715 = vld [vmem:[%s485 + $0x348] sm:$0xff]
        %v1716 = vld [vmem:[%s485 + $0x350] sm:$0xff]
        %v1717 = vld [vmem:[%s485 + $0x358] sm:$0xff]
        %v1718 = vld [vmem:[%s485 + $0x360] sm:$0xff]
        %v1719 = vld [vmem:[%s485 + $0x368] sm:$0xff]
        %v1720 = vld [vmem:[%s485 + $0x370] sm:$0xff]
        %v1721 = vld [vmem:[%s485 + $0x378] sm:$0xff]
        %v1722 = vld [vmem:[%s485 + $0x380] sm:$0xff]
        %v1723 = vld [vmem:[%s485 + $0x388] sm:$0xff]
        %v1724 = vld [vmem:[%s485 + $0x390] sm:$0xff]
        %v1725 = vld [vmem:[%s485 + $0x398] sm:$0xff]
        %v1726 = vld [vmem:[%s485 + $0x3a0] sm:$0xff]
        %v1727 = vld [vmem:[%s485 + $0x3a8] sm:$0xff]
        %v1728 = vld [vmem:[%s485 + $0x3b0] sm:$0xff]
        %v1729 = vld [vmem:[%s485 + $0x3b8] sm:$0xff]
        %v1730 = vld [vmem:[%s485 + $0x3c0] sm:$0xff]
        %v1731 = vld [vmem:[%s485 + $0x3c8] sm:$0xff]
        %v1732 = vld [vmem:[%s485 + $0x3d0] sm:$0xff]
        %v1733 = vld [vmem:[%s485 + $0x3d8] sm:$0xff]
        %v1734 = vld [vmem:[%s485 + $0x3e0] sm:$0xff]
        %v1735 = vld [vmem:[%s485 + $0x3e8] sm:$0xff]
        %v1736 = vld [vmem:[%s485 + $0x3f0] sm:$0xff]
        %v1737 = vld [vmem:[%s485 + $0x3f8] sm:$0xff]
        %v1738 = vld [vmem:[%s485 + $0x400] sm:$0xff]
        %v1739 = vld [vmem:[%s485 + $0x408] sm:$0xff]
        %v1740 = vld [vmem:[%s485 + $0x410] sm:$0xff]
        %v1741 = vld [vmem:[%s485 + $0x418] sm:$0xff]
        %v1742 = vld [vmem:[%s485 + $0x420] sm:$0xff]
        %v1743 = vld [vmem:[%s485 + $0x428] sm:$0xff]
        %v1744 = vld [vmem:[%s485 + $0x430] sm:$0xff]
        %v1745 = vld [vmem:[%s485 + $0x438] sm:$0xff]
        %v1746 = vld [vmem:[%s485 + $0x440] sm:$0xff]
        %v1747 = vld [vmem:[%s485 + $0x448] sm:$0xff]
        %v1748 = vld [vmem:[%s485 + $0x450] sm:$0xff]
        %v1749 = vld [vmem:[%s485 + $0x458] sm:$0xff]
        %v1750 = vld [vmem:[%s485 + $0x460] sm:$0xff]
        %v1751 = vld [vmem:[%s485 + $0x468] sm:$0xff]
        %v1752 = vld [vmem:[%s485 + $0x470] sm:$0xff]
        %v1753 = vld [vmem:[%s485 + $0x478] sm:$0xff]
        %v1754 = vld [vmem:[%s485 + $0x480] sm:$0xff]
        %v1755 = vld [vmem:[%s485 + $0x488] sm:$0xff]
        %v1756 = vld [vmem:[%s485 + $0x490] sm:$0xff]
        %v1757 = vld [vmem:[%s485 + $0x498] sm:$0xff]
        %v1758 = vld [vmem:[%s485 + $0x4a0] sm:$0xff]
        %v1759 = vld [vmem:[%s485 + $0x4a8] sm:$0xff]
        %v1760 = vld [vmem:[%s485 + $0x4b0] sm:$0xff]
        %v1761 = vld [vmem:[%s485 + $0x4b8] sm:$0xff]
        %v1762 = vld [vmem:[%s485 + $0x4c0] sm:$0xff]
        %v1763 = vld [vmem:[%s485 + $0x4c8] sm:$0xff]
        %v1764 = vld [vmem:[%s485 + $0x4d0] sm:$0xff]
        %v1765 = vld [vmem:[%s485 + $0x4d8] sm:$0xff]
        %v1766 = vld [vmem:[%s485 + $0x4e0] sm:$0xff]
        %v1767 = vld [vmem:[%s485 + $0x4e8] sm:$0xff]
        %v1768 = vld [vmem:[%s485 + $0x4f0] sm:$0xff]
        %v1769 = vld [vmem:[%s485 + $0x4f8] sm:$0xff]
        %v1770 = vld [vmem:[%s485 + $0x500] sm:$0xff]
        %v1771 = vld [vmem:[%s485 + $0x508] sm:$0xff]
        %v1772 = vld [vmem:[%s485 + $0x510] sm:$0xff]
        %v1773 = vld [vmem:[%s485 + $0x518] sm:$0xff]
        %v1774 = vld [vmem:[%s485 + $0x520] sm:$0xff]
        %v1775 = vld [vmem:[%s485 + $0x528] sm:$0xff]
        %v1776 = vld [vmem:[%s485 + $0x530] sm:$0xff]
        %v1777 = vld [vmem:[%s485 + $0x538] sm:$0xff]
        %v1778 = vld [vmem:[%s485 + $0x540] sm:$0xff]
        %v1779 = vld [vmem:[%s485 + $0x548] sm:$0xff]
        %v1780 = vld [vmem:[%s485 + $0x550] sm:$0xff]
        %v1781 = vld [vmem:[%s485 + $0x558] sm:$0xff]
        %v1782 = vld [vmem:[%s485 + $0x560] sm:$0xff]
        %v1783 = vld [vmem:[%s485 + $0x568] sm:$0xff]
        %v1784 = vld [vmem:[%s485 + $0x570] sm:$0xff]
        %v1785 = vld [vmem:[%s485 + $0x578] sm:$0xff]
        %v1786 = vld [vmem:[%s485 + $0x580] sm:$0xff]
        %v1787 = vld [vmem:[%s485 + $0x588] sm:$0xff]
        %v1788 = vld [vmem:[%s485 + $0x590] sm:$0xff]
        %v1789 = vld [vmem:[%s485 + $0x598] sm:$0xff]
        %v1790 = vld [vmem:[%s485 + $0x5a0] sm:$0xff]
        %v1791 = vld [vmem:[%s485 + $0x5a8] sm:$0xff]
        %v1792 = vld [vmem:[%s485 + $0x5b0] sm:$0xff]
        %v1793 = vld [vmem:[%s485 + $0x5b8] sm:$0xff]
        %v1794 = vld [vmem:[%s485 + $0x5c0] sm:$0xff]
        %v1795 = vld [vmem:[%s485 + $0x5c8] sm:$0xff]
        %v1796 = vld [vmem:[%s485 + $0x5d0] sm:$0xff]
        %v1797 = vld [vmem:[%s485 + $0x5d8] sm:$0xff]
        %v1798 = vld [vmem:[%s485 + $0x5e0] sm:$0xff]
        %v1799 = vld [vmem:[%s485 + $0x5e8] sm:$0xff]
        %v1800 = vld [vmem:[%s485 + $0x5f0] sm:$0xff]
        %v1801 = vld [vmem:[%s485 + $0x5f8] sm:$0xff]
        %v1802 = vld [vmem:[%s485 + $0x600] sm:$0xff]
        %v1803 = vld [vmem:[%s485 + $0x608] sm:$0xff]
        %v1804 = vld [vmem:[%s485 + $0x610] sm:$0xff]
        %v1805 = vld [vmem:[%s485 + $0x618] sm:$0xff]
        %v1806 = vld [vmem:[%s485 + $0x620] sm:$0xff]
        %v1807 = vld [vmem:[%s485 + $0x628] sm:$0xff]
        %v1808 = vld [vmem:[%s485 + $0x630] sm:$0xff]
        %v1809 = vld [vmem:[%s485 + $0x638] sm:$0xff]
        %v1810 = vld [vmem:[%s485 + $0x640] sm:$0xff]
        %v1811 = vld [vmem:[%s485 + $0x648] sm:$0xff]
        %v1812 = vld [vmem:[%s485 + $0x650] sm:$0xff]
        %v1813 = vld [vmem:[%s485 + $0x658] sm:$0xff]
        %v1814 = vld [vmem:[%s485 + $0x660] sm:$0xff]
        %v1815 = vld [vmem:[%s485 + $0x668] sm:$0xff]
        %v1816 = vld [vmem:[%s485 + $0x670] sm:$0xff]
        %v1817 = vld [vmem:[%s485 + $0x678] sm:$0xff]
        %v1818 = vld [vmem:[%s485 + $0x680] sm:$0xff]
        %v1819 = vld [vmem:[%s485 + $0x688] sm:$0xff]
        %v1820 = vld [vmem:[%s485 + $0x690] sm:$0xff]
        %v1821 = vld [vmem:[%s485 + $0x698] sm:$0xff]
        %v1822 = vld [vmem:[%s485 + $0x6a0] sm:$0xff]
        %v1823 = vld [vmem:[%s485 + $0x6a8] sm:$0xff]
        %v1824 = vld [vmem:[%s485 + $0x6b0] sm:$0xff]
        %v1825 = vld [vmem:[%s485 + $0x6b8] sm:$0xff]
        %v1826 = vld [vmem:[%s485 + $0x6c0] sm:$0xff]
        %v1827 = vld [vmem:[%s485 + $0x6c8] sm:$0xff]
        %v1828 = vld [vmem:[%s485 + $0x6d0] sm:$0xff]
        %v1829 = vld [vmem:[%s485 + $0x6d8] sm:$0xff]
        %v1830 = vld [vmem:[%s485 + $0x6e0] sm:$0xff]
        %v1831 = vld [vmem:[%s485 + $0x6e8] sm:$0xff]
        %v1832 = vld [vmem:[%s485 + $0x6f0] sm:$0xff]
        %v1833 = vld [vmem:[%s485 + $0x6f8] sm:$0xff]
        %v1834 = vld [vmem:[%s485 + $0x700] sm:$0xff]
        %v1835 = vld [vmem:[%s485 + $0x708] sm:$0xff]
        %v1836 = vld [vmem:[%s485 + $0x710] sm:$0xff]
        %v1837 = vld [vmem:[%s485 + $0x718] sm:$0xff]
        %v1838 = vld [vmem:[%s485 + $0x720] sm:$0xff]
        %v1839 = vld [vmem:[%s485 + $0x728] sm:$0xff]
        %v1840 = vld [vmem:[%s485 + $0x730] sm:$0xff]
        %v1841 = vld [vmem:[%s485 + $0x738] sm:$0xff]
        %v1842 = vld [vmem:[%s485 + $0x740] sm:$0xff]
        %v1843 = vld [vmem:[%s485 + $0x748] sm:$0xff]
        %v1844 = vld [vmem:[%s485 + $0x750] sm:$0xff]
        %v1845 = vld [vmem:[%s485 + $0x758] sm:$0xff]
        %v1846 = vld [vmem:[%s485 + $0x760] sm:$0xff]
        %v1847 = vld [vmem:[%s485 + $0x768] sm:$0xff]
        %v1848 = vld [vmem:[%s485 + $0x770] sm:$0xff]
        %v1849 = vld [vmem:[%s485 + $0x778] sm:$0xff]
        %v1850 = vld [vmem:[%s485 + $0x780] sm:$0xff]
        %v1851 = vld [vmem:[%s485 + $0x788] sm:$0xff]
        %v1852 = vld [vmem:[%s485 + $0x790] sm:$0xff]
        %v1853 = vld [vmem:[%s485 + $0x798] sm:$0xff]
        %v1854 = vld [vmem:[%s485 + $0x7a0] sm:$0xff]
        %v1855 = vld [vmem:[%s485 + $0x7a8] sm:$0xff]
        %v1856 = vld [vmem:[%s485 + $0x7b0] sm:$0xff]
        %v1857 = vld [vmem:[%s485 + $0x7b8] sm:$0xff]
        %v1858 = vld [vmem:[%s485 + $0x7c0] sm:$0xff]
        %v1859 = vld [vmem:[%s485 + $0x7c8] sm:$0xff]
        %v1860 = vld [vmem:[%s485 + $0x7d0] sm:$0xff]
        %v1861 = vld [vmem:[%s485 + $0x7d8] sm:$0xff]
        %v1862 = vld [vmem:[%s485 + $0x7e0] sm:$0xff]
        %v1863 = vld [vmem:[%s485 + $0x7e8] sm:$0xff]
        %v1864 = vld [vmem:[%s485 + $0x7f0] sm:$0xff]
        %v1865 = vld [vmem:[%s485 + $0x7f8] sm:$0xff]
        %v1866 = vld [vmem:[#allocation11] sm:$0xff]
        %v1867 = vld [vmem:[#allocation11 + $0x8] sm:$0xff]
        %v1868 = vld [vmem:[#allocation11 + $0x10] sm:$0xff]
        %v1869 = vld [vmem:[#allocation11 + $0x18] sm:$0xff]
        %v1870 = vld [vmem:[#allocation11 + $0x20] sm:$0xff]
        %v1871 = vld [vmem:[#allocation11 + $0x28] sm:$0xff]
        %v1872 = vld [vmem:[#allocation11 + $0x30] sm:$0xff]
        %v1873 = vld [vmem:[#allocation11 + $0x38] sm:$0xff]
        %v1874 = vld [vmem:[#allocation11 + $0x40] sm:$0xff]
        %v1875 = vld [vmem:[#allocation11 + $0x48] sm:$0xff]
        %v1876 = vld [vmem:[#allocation11 + $0x50] sm:$0xff]
        %v1877 = vld [vmem:[#allocation11 + $0x58] sm:$0xff]
        %v1878 = vld [vmem:[#allocation11 + $0x60] sm:$0xff]
        %v1879 = vld [vmem:[#allocation11 + $0x68] sm:$0xff]
        %v1880 = vld [vmem:[#allocation11 + $0x70] sm:$0xff]
        %v1881 = vld [vmem:[#allocation11 + $0x78] sm:$0xff]
        %v1882 = vld [vmem:[#allocation11 + $0x80] sm:$0xff]
        %v1883 = vld [vmem:[#allocation11 + $0x88] sm:$0xff]
        %v1884 = vld [vmem:[#allocation11 + $0x90] sm:$0xff]
        %v1885 = vld [vmem:[#allocation11 + $0x98] sm:$0xff]
        %v1886 = vld [vmem:[#allocation11 + $0xa0] sm:$0xff]
        %v1887 = vld [vmem:[#allocation11 + $0xa8] sm:$0xff]
        %v1888 = vld [vmem:[#allocation11 + $0xb0] sm:$0xff]
        %v1889 = vld [vmem:[#allocation11 + $0xb8] sm:$0xff]
        %v1890 = vld [vmem:[#allocation11 + $0xc0] sm:$0xff]
        %v1891 = vld [vmem:[#allocation11 + $0xc8] sm:$0xff]
        %v1892 = vld [vmem:[#allocation11 + $0xd0] sm:$0xff]
        %v1893 = vld [vmem:[#allocation11 + $0xd8] sm:$0xff]
        %v1894 = vld [vmem:[#allocation11 + $0xe0] sm:$0xff]
        %v1895 = vld [vmem:[#allocation11 + $0xe8] sm:$0xff]
        %v1896 = vld [vmem:[#allocation11 + $0xf0] sm:$0xff]
        %v1897 = vld [vmem:[#allocation11 + $0xf8] sm:$0xff]
        %v1898 = vld [vmem:[#allocation11 + $0x100] sm:$0xff]
        %v1899 = vld [vmem:[#allocation11 + $0x108] sm:$0xff]
        %v1900 = vld [vmem:[#allocation11 + $0x110] sm:$0xff]
        %v1901 = vld [vmem:[#allocation11 + $0x118] sm:$0xff]
        %v1902 = vld [vmem:[#allocation11 + $0x120] sm:$0xff]
        %v1903 = vld [vmem:[#allocation11 + $0x128] sm:$0xff]
        %v1904 = vld [vmem:[#allocation11 + $0x130] sm:$0xff]
        %v1905 = vld [vmem:[#allocation11 + $0x138] sm:$0xff]
        %v1906 = vld [vmem:[#allocation11 + $0x140] sm:$0xff]
        %v1907 = vld [vmem:[#allocation11 + $0x148] sm:$0xff]
        %v1908 = vld [vmem:[#allocation11 + $0x150] sm:$0xff]
        %v1909 = vld [vmem:[#allocation11 + $0x158] sm:$0xff]
        %v1910 = vld [vmem:[#allocation11 + $0x160] sm:$0xff]
        %v1911 = vld [vmem:[#allocation11 + $0x168] sm:$0xff]
        %v1912 = vld [vmem:[#allocation11 + $0x170] sm:$0xff]
        %v1913 = vld [vmem:[#allocation11 + $0x178] sm:$0xff]
        %v1914 = vld [vmem:[#allocation11 + $0x180] sm:$0xff]
        %v1915 = vld [vmem:[#allocation11 + $0x188] sm:$0xff]
        %v1916 = vld [vmem:[#allocation11 + $0x190] sm:$0xff]
        %v1917 = vld [vmem:[#allocation11 + $0x198] sm:$0xff]
        %v1918 = vld [vmem:[#allocation11 + $0x1a0] sm:$0xff]
        %v1919 = vld [vmem:[#allocation11 + $0x1a8] sm:$0xff]
        %v1920 = vld [vmem:[#allocation11 + $0x1b0] sm:$0xff]
        %v1921 = vld [vmem:[#allocation11 + $0x1b8] sm:$0xff]
        %v1922 = vld [vmem:[#allocation11 + $0x1c0] sm:$0xff]
        %v1923 = vld [vmem:[#allocation11 + $0x1c8] sm:$0xff]
        %v1924 = vld [vmem:[#allocation11 + $0x1d0] sm:$0xff]
        %v1925 = vld [vmem:[#allocation11 + $0x1d8] sm:$0xff]
        %v1926 = vld [vmem:[#allocation11 + $0x1e0] sm:$0xff]
        %v1927 = vld [vmem:[#allocation11 + $0x1e8] sm:$0xff]
        %v1928 = vld [vmem:[#allocation11 + $0x1f0] sm:$0xff]
        %v1929 = vld [vmem:[#allocation11 + $0x1f8] sm:$0xff]
        %v1930 = vld [vmem:[#allocation11 + $0x200] sm:$0xff]
        %v1931 = vld [vmem:[#allocation11 + $0x208] sm:$0xff]
        %v1932 = vld [vmem:[#allocation11 + $0x210] sm:$0xff]
        %v1933 = vld [vmem:[#allocation11 + $0x218] sm:$0xff]
        %v1934 = vld [vmem:[#allocation11 + $0x220] sm:$0xff]
        %v1935 = vld [vmem:[#allocation11 + $0x228] sm:$0xff]
        %v1936 = vld [vmem:[#allocation11 + $0x230] sm:$0xff]
        %v1937 = vld [vmem:[#allocation11 + $0x238] sm:$0xff]
        %v1938 = vld [vmem:[#allocation11 + $0x240] sm:$0xff]
        %v1939 = vld [vmem:[#allocation11 + $0x248] sm:$0xff]
        %v1940 = vld [vmem:[#allocation11 + $0x250] sm:$0xff]
        %v1941 = vld [vmem:[#allocation11 + $0x258] sm:$0xff]
        %v1942 = vld [vmem:[#allocation11 + $0x260] sm:$0xff]
        %v1943 = vld [vmem:[#allocation11 + $0x268] sm:$0xff]
        %v1944 = vld [vmem:[#allocation11 + $0x270] sm:$0xff]
        %v1945 = vld [vmem:[#allocation11 + $0x278] sm:$0xff]
        %v1946 = vld [vmem:[#allocation11 + $0x280] sm:$0xff]
        %v1947 = vld [vmem:[#allocation11 + $0x288] sm:$0xff]
        %v1948 = vld [vmem:[#allocation11 + $0x290] sm:$0xff]
        %v1949 = vld [vmem:[#allocation11 + $0x298] sm:$0xff]
        %v1950 = vld [vmem:[#allocation11 + $0x2a0] sm:$0xff]
        %v1951 = vld [vmem:[#allocation11 + $0x2a8] sm:$0xff]
        %v1952 = vld [vmem:[#allocation11 + $0x2b0] sm:$0xff]
        %v1953 = vld [vmem:[#allocation11 + $0x2b8] sm:$0xff]
        %v1954 = vld [vmem:[#allocation11 + $0x2c0] sm:$0xff]
        %v1955 = vld [vmem:[#allocation11 + $0x2c8] sm:$0xff]
        %v1956 = vld [vmem:[#allocation11 + $0x2d0] sm:$0xff]
        %v1957 = vld [vmem:[#allocation11 + $0x2d8] sm:$0xff]
        %v1958 = vld [vmem:[#allocation11 + $0x2e0] sm:$0xff]
        %v1959 = vld [vmem:[#allocation11 + $0x2e8] sm:$0xff]
        %v1960 = vld [vmem:[#allocation11 + $0x2f0] sm:$0xff]
        %v1961 = vld [vmem:[#allocation11 + $0x2f8] sm:$0xff]
        %v1962 = vld [vmem:[#allocation11 + $0x300] sm:$0xff]
        %v1963 = vld [vmem:[#allocation11 + $0x308] sm:$0xff]
        %v1964 = vld [vmem:[#allocation11 + $0x310] sm:$0xff]
        %v1965 = vld [vmem:[#allocation11 + $0x318] sm:$0xff]
        %v1966 = vld [vmem:[#allocation11 + $0x320] sm:$0xff]
        %v1967 = vld [vmem:[#allocation11 + $0x328] sm:$0xff]
        %v1968 = vld [vmem:[#allocation11 + $0x330] sm:$0xff]
        %v1969 = vld [vmem:[#allocation11 + $0x338] sm:$0xff]
        %v1970 = vld [vmem:[#allocation11 + $0x340] sm:$0xff]
        %v1971 = vld [vmem:[#allocation11 + $0x348] sm:$0xff]
        %v1972 = vld [vmem:[#allocation11 + $0x350] sm:$0xff]
        %v1973 = vld [vmem:[#allocation11 + $0x358] sm:$0xff]
        %v1974 = vld [vmem:[#allocation11 + $0x360] sm:$0xff]
        %v1975 = vld [vmem:[#allocation11 + $0x368] sm:$0xff]
        %v1976 = vld [vmem:[#allocation11 + $0x370] sm:$0xff]
        %v1977 = vld [vmem:[#allocation11 + $0x378] sm:$0xff]
        %v1978 = vld [vmem:[#allocation11 + $0x380] sm:$0xff]
        %v1979 = vld [vmem:[#allocation11 + $0x388] sm:$0xff]
        %v1980 = vld [vmem:[#allocation11 + $0x390] sm:$0xff]
        %v1981 = vld [vmem:[#allocation11 + $0x398] sm:$0xff]
        %v1982 = vld [vmem:[#allocation11 + $0x3a0] sm:$0xff]
        %v1983 = vld [vmem:[#allocation11 + $0x3a8] sm:$0xff]
        %v1984 = vld [vmem:[#allocation11 + $0x3b0] sm:$0xff]
        %v1985 = vld [vmem:[#allocation11 + $0x3b8] sm:$0xff]
        %v1986 = vld [vmem:[#allocation11 + $0x3c0] sm:$0xff]
        %v1987 = vld [vmem:[#allocation11 + $0x3c8] sm:$0xff]
        %v1988 = vld [vmem:[#allocation11 + $0x3d0] sm:$0xff]
        %v1989 = vld [vmem:[#allocation11 + $0x3d8] sm:$0xff]
        %v1990 = vld [vmem:[#allocation11 + $0x3e0] sm:$0xff]
        %v1991 = vld [vmem:[#allocation11 + $0x3e8] sm:$0xff]
        %v1992 = vld [vmem:[#allocation11 + $0x3f0] sm:$0xff]
        %v1993 = vld [vmem:[#allocation11 + $0x3f8] sm:$0xff]
        %v1994 = vld [vmem:[#allocation11 + $0x400] sm:$0xff]
        %v1995 = vld [vmem:[#allocation11 + $0x408] sm:$0xff]
        %v1996 = vld [vmem:[#allocation11 + $0x410] sm:$0xff]
        %v1997 = vld [vmem:[#allocation11 + $0x418] sm:$0xff]
        %v1998 = vld [vmem:[#allocation11 + $0x420] sm:$0xff]
        %v1999 = vld [vmem:[#allocation11 + $0x428] sm:$0xff]
        %v2000 = vld [vmem:[#allocation11 + $0x430] sm:$0xff]
        %v2001 = vld [vmem:[#allocation11 + $0x438] sm:$0xff]
        %v2002 = vld [vmem:[#allocation11 + $0x440] sm:$0xff]
        %v2003 = vld [vmem:[#allocation11 + $0x448] sm:$0xff]
        %v2004 = vld [vmem:[#allocation11 + $0x450] sm:$0xff]
        %v2005 = vld [vmem:[#allocation11 + $0x458] sm:$0xff]
        %v2006 = vld [vmem:[#allocation11 + $0x460] sm:$0xff]
        %v2007 = vld [vmem:[#allocation11 + $0x468] sm:$0xff]
        %v2008 = vld [vmem:[#allocation11 + $0x470] sm:$0xff]
        %v2009 = vld [vmem:[#allocation11 + $0x478] sm:$0xff]
        %v2010 = vld [vmem:[#allocation11 + $0x480] sm:$0xff]
        %v2011 = vld [vmem:[#allocation11 + $0x488] sm:$0xff]
        %v2012 = vld [vmem:[#allocation11 + $0x490] sm:$0xff]
        %v2013 = vld [vmem:[#allocation11 + $0x498] sm:$0xff]
        %v2014 = vld [vmem:[#allocation11 + $0x4a0] sm:$0xff]
        %v2015 = vld [vmem:[#allocation11 + $0x4a8] sm:$0xff]
        %v2016 = vld [vmem:[#allocation11 + $0x4b0] sm:$0xff]
        %v2017 = vld [vmem:[#allocation11 + $0x4b8] sm:$0xff]
        %v2018 = vld [vmem:[#allocation11 + $0x4c0] sm:$0xff]
        %v2019 = vld [vmem:[#allocation11 + $0x4c8] sm:$0xff]
        %v2020 = vld [vmem:[#allocation11 + $0x4d0] sm:$0xff]
        %v2021 = vld [vmem:[#allocation11 + $0x4d8] sm:$0xff]
        %v2022 = vld [vmem:[#allocation11 + $0x4e0] sm:$0xff]
        %v2023 = vld [vmem:[#allocation11 + $0x4e8] sm:$0xff]
        %v2024 = vld [vmem:[#allocation11 + $0x4f0] sm:$0xff]
        %v2025 = vld [vmem:[#allocation11 + $0x4f8] sm:$0xff]
        %v2026 = vld [vmem:[#allocation11 + $0x500] sm:$0xff]
        %v2027 = vld [vmem:[#allocation11 + $0x508] sm:$0xff]
        %v2028 = vld [vmem:[#allocation11 + $0x510] sm:$0xff]
        %v2029 = vld [vmem:[#allocation11 + $0x518] sm:$0xff]
        %v2030 = vld [vmem:[#allocation11 + $0x520] sm:$0xff]
        %v2031 = vld [vmem:[#allocation11 + $0x528] sm:$0xff]
        %v2032 = vld [vmem:[#allocation11 + $0x530] sm:$0xff]
        %v2033 = vld [vmem:[#allocation11 + $0x538] sm:$0xff]
        %v2034 = vld [vmem:[#allocation11 + $0x540] sm:$0xff]
        %v2035 = vld [vmem:[#allocation11 + $0x548] sm:$0xff]
        %v2036 = vld [vmem:[#allocation11 + $0x550] sm:$0xff]
        %v2037 = vld [vmem:[#allocation11 + $0x558] sm:$0xff]
        %v2038 = vld [vmem:[#allocation11 + $0x560] sm:$0xff]
        %v2039 = vld [vmem:[#allocation11 + $0x568] sm:$0xff]
        %v2040 = vld [vmem:[#allocation11 + $0x570] sm:$0xff]
        %v2041 = vld [vmem:[#allocation11 + $0x578] sm:$0xff]
        %v2042 = vld [vmem:[#allocation11 + $0x580] sm:$0xff]
        %v2043 = vld [vmem:[#allocation11 + $0x588] sm:$0xff]
        %v2044 = vld [vmem:[#allocation11 + $0x590] sm:$0xff]
        %v2045 = vld [vmem:[#allocation11 + $0x598] sm:$0xff]
        %v2046 = vld [vmem:[#allocation11 + $0x5a0] sm:$0xff]
        %v2047 = vld [vmem:[#allocation11 + $0x5a8] sm:$0xff]
        %v2048 = vld [vmem:[#allocation11 + $0x5b0] sm:$0xff]
        %v2049 = vld [vmem:[#allocation11 + $0x5b8] sm:$0xff]
        %v2050 = vld [vmem:[#allocation11 + $0x5c0] sm:$0xff]
        %v2051 = vld [vmem:[#allocation11 + $0x5c8] sm:$0xff]
        %v2052 = vld [vmem:[#allocation11 + $0x5d0] sm:$0xff]
        %v2053 = vld [vmem:[#allocation11 + $0x5d8] sm:$0xff]
        %v2054 = vld [vmem:[#allocation11 + $0x5e0] sm:$0xff]
        %v2055 = vld [vmem:[#allocation11 + $0x5e8] sm:$0xff]
        %v2056 = vld [vmem:[#allocation11 + $0x5f0] sm:$0xff]
        %v2057 = vld [vmem:[#allocation11 + $0x5f8] sm:$0xff]
        %v2058 = vld [vmem:[#allocation11 + $0x600] sm:$0xff]
        %v2059 = vld [vmem:[#allocation11 + $0x608] sm:$0xff]
        %v2060 = vld [vmem:[#allocation11 + $0x610] sm:$0xff]
        %v2061 = vld [vmem:[#allocation11 + $0x618] sm:$0xff]
        %v2062 = vld [vmem:[#allocation11 + $0x620] sm:$0xff]
        %v2063 = vld [vmem:[#allocation11 + $0x628] sm:$0xff]
        %v2064 = vld [vmem:[#allocation11 + $0x630] sm:$0xff]
        %v2065 = vld [vmem:[#allocation11 + $0x638] sm:$0xff]
        %v2066 = vld [vmem:[#allocation11 + $0x640] sm:$0xff]
        %v2067 = vld [vmem:[#allocation11 + $0x648] sm:$0xff]
        %v2068 = vld [vmem:[#allocation11 + $0x650] sm:$0xff]
        %v2069 = vld [vmem:[#allocation11 + $0x658] sm:$0xff]
        %v2070 = vld [vmem:[#allocation11 + $0x660] sm:$0xff]
        %v2071 = vld [vmem:[#allocation11 + $0x668] sm:$0xff]
        %v2072 = vld [vmem:[#allocation11 + $0x670] sm:$0xff]
        %v2073 = vld [vmem:[#allocation11 + $0x678] sm:$0xff]
        %v2074 = vld [vmem:[#allocation11 + $0x680] sm:$0xff]
        %v2075 = vld [vmem:[#allocation11 + $0x688] sm:$0xff]
        %v2076 = vld [vmem:[#allocation11 + $0x690] sm:$0xff]
        %v2077 = vld [vmem:[#allocation11 + $0x698] sm:$0xff]
        %v2078 = vld [vmem:[#allocation11 + $0x6a0] sm:$0xff]
        %v2079 = vld [vmem:[#allocation11 + $0x6a8] sm:$0xff]
        %v2080 = vld [vmem:[#allocation11 + $0x6b0] sm:$0xff]
        %v2081 = vld [vmem:[#allocation11 + $0x6b8] sm:$0xff]
        %v2082 = vld [vmem:[#allocation11 + $0x6c0] sm:$0xff]
        %v2083 = vld [vmem:[#allocation11 + $0x6c8] sm:$0xff]
        %v2084 = vld [vmem:[#allocation11 + $0x6d0] sm:$0xff]
        %v2085 = vld [vmem:[#allocation11 + $0x6d8] sm:$0xff]
        %v2086 = vld [vmem:[#allocation11 + $0x6e0] sm:$0xff]
        %v2087 = vld [vmem:[#allocation11 + $0x6e8] sm:$0xff]
        %v2088 = vld [vmem:[#allocation11 + $0x6f0] sm:$0xff]
        %v2089 = vld [vmem:[#allocation11 + $0x6f8] sm:$0xff]
        %v2090 = vld [vmem:[#allocation11 + $0x700] sm:$0xff]
        %v2091 = vld [vmem:[#allocation11 + $0x708] sm:$0xff]
        %v2092 = vld [vmem:[#allocation11 + $0x710] sm:$0xff]
        %v2093 = vld [vmem:[#allocation11 + $0x718] sm:$0xff]
        %v2094 = vld [vmem:[#allocation11 + $0x720] sm:$0xff]
        %v2095 = vld [vmem:[#allocation11 + $0x728] sm:$0xff]
        %v2096 = vld [vmem:[#allocation11 + $0x730] sm:$0xff]
        %v2097 = vld [vmem:[#allocation11 + $0x738] sm:$0xff]
        %v2098 = vld [vmem:[#allocation11 + $0x740] sm:$0xff]
        %v2099 = vld [vmem:[#allocation11 + $0x748] sm:$0xff]
        %v2100 = vld [vmem:[#allocation11 + $0x750] sm:$0xff]
        %v2101 = vld [vmem:[#allocation11 + $0x758] sm:$0xff]
        %v2102 = vld [vmem:[#allocation11 + $0x760] sm:$0xff]
        %v2103 = vld [vmem:[#allocation11 + $0x768] sm:$0xff]
        %v2104 = vld [vmem:[#allocation11 + $0x770] sm:$0xff]
        %v2105 = vld [vmem:[#allocation11 + $0x778] sm:$0xff]
        %v2106 = vld [vmem:[#allocation11 + $0x780] sm:$0xff]
        %v2107 = vld [vmem:[#allocation11 + $0x788] sm:$0xff]
        %v2108 = vld [vmem:[#allocation11 + $0x790] sm:$0xff]
        %v2109 = vld [vmem:[#allocation11 + $0x798] sm:$0xff]
        %v2110 = vld [vmem:[#allocation11 + $0x7a0] sm:$0xff]
        %v2111 = vld [vmem:[#allocation11 + $0x7a8] sm:$0xff]
        %v2112 = vld [vmem:[#allocation11 + $0x7b0] sm:$0xff]
        %v2113 = vld [vmem:[#allocation11 + $0x7b8] sm:$0xff]
        %v2114 = vld [vmem:[#allocation11 + $0x7c0] sm:$0xff]
        %v2115 = vld [vmem:[#allocation11 + $0x7c8] sm:$0xff]
        %v2116 = vld [vmem:[#allocation11 + $0x7d0] sm:$0xff]
        %v2117 = vld [vmem:[#allocation11 + $0x7d8] sm:$0xff]
        %v2118 = vld [vmem:[#allocation11 + $0x7e0] sm:$0xff]
        %v2119 = vld [vmem:[#allocation11 + $0x7e8] sm:$0xff]
        %v2120 = vld [vmem:[#allocation11 + $0x7f0] sm:$0xff]
        %v2121 = vld [vmem:[#allocation11 + $0x7f8] sm:$0xff]
        %2122 = vmatprep.subr.mxu0 0.0
        %2123 = vmatpush1.msra.mxu0 %v1881
        %2124 = vmatprep.subr.mxu0 0.0
        %2125 = vmatpush1.msra.mxu0 %v1880
        %2126 = vmatprep.subr.mxu0 0.0
        %2127 = vmatpush1.msra.mxu0 %v1879
        %2128 = vmatprep.subr.mxu0 0.0
        %2129 = vmatpush1.msra.mxu0 %v1878
        %2130 = vmatprep.subr.mxu0 0.0
        %2131 = vmatpush1.msra.mxu0 %v1877
        %2132 = vmatprep.subr.mxu0 0.0
        %2133 = vmatpush1.msra.mxu0 %v1876
        %2134 = vmatprep.subr.mxu0 0.0
        %2135 = vmatpush1.msra.mxu0 %v1875
        %2136 = vmatprep.subr.mxu0 0.0
        %2137 = vmatpush1.msra.mxu0 %v1874
        %2138 = vmatprep.subr.mxu0 0.0
        %2139 = vmatpush1.msra.mxu0 %v1873
        %2140 = vmatprep.subr.mxu0 0.0
        %2141 = vmatpush1.msra.mxu0 %v1872
        %2142 = vmatprep.subr.mxu0 0.0
        %2143 = vmatpush1.msra.mxu0 %v1871
        %2144 = vmatprep.subr.mxu0 0.0
        %2145 = vmatpush1.msra.mxu0 %v1870
        %2146 = vmatprep.subr.mxu0 0.0
        %2147 = vmatpush1.msra.mxu0 %v1869
        %2148 = vmatprep.subr.mxu0 0.0
        %2149 = vmatpush1.msra.mxu0 %v1868
        %2150 = vmatprep.subr.mxu0 0.0
        %2151 = vmatpush1.msra.mxu0 %v1867
        %2152 = vmatprep.subr.mxu0 0.0
        %2153 = vmatpush1.msra.mxu0 %v1866
        %2154 = vmatprep.subr.mxu0 0.0
        %2155 = vmatpush2.msra.mxu0 %v1897
        %2156 = vmatprep.subr.mxu0 0.0
        %2157 = vmatpush2.msra.mxu0 %v1896
        %2158 = vmatprep.subr.mxu0 0.0
        %2159 = vmatpush2.msra.mxu0 %v1895
        %2160 = vmatprep.subr.mxu0 0.0
        %2161 = vmatpush2.msra.mxu0 %v1894
        %2162 = vmatprep.subr.mxu0 0.0
        %2163 = vmatpush2.msra.mxu0 %v1893
        %2164 = vmatprep.subr.mxu0 0.0
        %2165 = vmatpush2.msra.mxu0 %v1892
        %2166 = vmatprep.subr.mxu0 0.0
        %2167 = vmatpush2.msra.mxu0 %v1891
        %2168 = vmatprep.subr.mxu0 0.0
        %2169 = vmatpush2.msra.mxu0 %v1890
        %2170 = vmatprep.subr.mxu0 0.0
        %2171 = vmatpush2.msra.mxu0 %v1889
        %2172 = vmatprep.subr.mxu0 0.0
        %2173 = vmatpush2.msra.mxu0 %v1888
        %2174 = vmatprep.subr.mxu0 0.0
        %2175 = vmatpush2.msra.mxu0 %v1887
        %2176 = vmatprep.subr.mxu0 0.0
        %2177 = vmatpush2.msra.mxu0 %v1886
        %2178 = vmatprep.subr.mxu0 0.0
        %2179 = vmatpush2.msra.mxu0 %v1885
        %2180 = vmatprep.subr.mxu0 0.0
        %2181 = vmatpush2.msra.mxu0 %v1884
        %2182 = vmatprep.subr.mxu0 0.0
        %2183 = vmatpush2.msra.mxu0 %v1883
        %2184 = vmatprep.subr.mxu0 0.0
        %2185 = vmatpush2.msra.mxu0 %v1882
        %2186 = vmatprep.mubr.f32.mxu0 %v1611
        %2187 = vmatmul.mubr.f32.gmra.mxu0 %v1610
        %v2188 = vpop.f32.mrf.mxu0
        %v2189 = vadd.f32 0.0, %v2188
        %v2190 = vpop.f32.mrf.mxu0
        %2191 = vmatprep.mubr.f32.mxu0 %v1627
        %2192 = vmatmul.mubr.f32.gmra.mxu0 %v1626
        %v2193 = vpop.f32.mrf.mxu0
        %v2194 = vadd.f32 0.0, %v2193
        %v2195 = vpop.f32.mrf.mxu0
        %2196 = vmatprep.mubr.f32.mxu0 %v1643
        %2197 = vmatmul.mubr.f32.gmra.mxu0 %v1642
        %v2198 = vpop.f32.mrf.mxu0
        %v2199 = vadd.f32 0.0, %v2198
        %v2200 = vpop.f32.mrf.mxu0
        %2201 = vmatprep.mubr.f32.mxu0 %v1659
        %2202 = vmatmul.mubr.f32.gmra.mxu0 %v1658
        %v2203 = vpop.f32.mrf.mxu0
        %v2204 = vadd.f32 0.0, %v2203
        %v2205 = vpop.f32.mrf.mxu0
        %2206 = vmatprep.mubr.f32.mxu0 %v1675
        %2207 = vmatmul.mubr.f32.gmra.mxu0 %v1674
        %v2208 = vpop.f32.mrf.mxu0
        %v2209 = vadd.f32 0.0, %v2208
        %v2210 = vpop.f32.mrf.mxu0
        %2211 = vmatprep.mubr.f32.mxu0 %v1691
        %2212 = vmatmul.mubr.f32.gmra.mxu0 %v1690
        %v2213 = vpop.f32.mrf.mxu0
        %v2214 = vadd.f32 0.0, %v2213
        %v2215 = vpop.f32.mrf.mxu0
        %2216 = vmatprep.mubr.f32.mxu0 %v1707
        %2217 = vmatmul.mubr.f32.gmra.mxu0 %v1706
        %v2218 = vpop.f32.mrf.mxu0
        %v2219 = vadd.f32 0.0, %v2218
        %v2220 = vpop.f32.mrf.mxu0
        %2221 = vmatprep.mubr.f32.mxu0 %v1723
        %2222 = vmatmul.mubr.f32.gmra.mxu0 %v1722
        %v2223 = vpop.f32.mrf.mxu0
        %v2224 = vadd.f32 0.0, %v2223
        %v2225 = vpop.f32.mrf.mxu0
        %2226 = vmatprep.mubr.f32.mxu0 %v1739
        %2227 = vmatmul.mubr.f32.gmra.mxu0 %v1738
        %v2228 = vpop.f32.mrf.mxu0
        %v2229 = vadd.f32 0.0, %v2228
        %v2230 = vpop.f32.mrf.mxu0
        %2231 = vmatprep.mubr.f32.mxu0 %v1755
        %2232 = vmatmul.mubr.f32.gmra.mxu0 %v1754
        %v2233 = vpop.f32.mrf.mxu0
        %v2234 = vadd.f32 0.0, %v2233
        %v2235 = vpop.f32.mrf.mxu0
        %2236 = vmatprep.mubr.f32.mxu0 %v1771
        %2237 = vmatmul.mubr.f32.gmra.mxu0 %v1770
        %v2238 = vpop.f32.mrf.mxu0
        %v2239 = vadd.f32 0.0, %v2238
        %v2240 = vpop.f32.mrf.mxu0
        %2241 = vmatprep.mubr.f32.mxu0 %v1787
        %2242 = vmatmul.mubr.f32.gmra.mxu0 %v1786
        %v2243 = vpop.f32.mrf.mxu0
        %v2244 = vadd.f32 0.0, %v2243
        %v2245 = vpop.f32.mrf.mxu0
        %2246 = vmatprep.mubr.f32.mxu0 %v1803
        %2247 = vmatmul.mubr.f32.gmra.mxu0 %v1802
        %v2248 = vpop.f32.mrf.mxu0
        %v2249 = vadd.f32 0.0, %v2248
        %v2250 = vpop.f32.mrf.mxu0
        %2251 = vmatprep.mubr.f32.mxu0 %v1819
        %2252 = vmatmul.mubr.f32.gmra.mxu0 %v1818
        %v2253 = vpop.f32.mrf.mxu0
        %v2254 = vadd.f32 0.0, %v2253
        %v2255 = vpop.f32.mrf.mxu0
        %2256 = vmatprep.mubr.f32.mxu0 %v1835
        %2257 = vmatmul.mubr.f32.gmra.mxu0 %v1834
        %v2258 = vpop.f32.mrf.mxu0
        %v2259 = vadd.f32 0.0, %v2258
        %v2260 = vpop.f32.mrf.mxu0
        %2261 = vmatprep.mubr.f32.mxu0 %v1851
        %2262 = vmatmul.mubr.f32.gmra.mxu0 %v1850
        %v2263 = vpop.f32.mrf.mxu0
        %v2264 = vadd.f32 0.0, %v2263
        %v2265 = vpop.f32.mrf.mxu0
        %2266 = vdwg.mxu0
        %2267 = vmatprep.subr.mxu0 0.0
        %2268 = vmatpush1.msra.mxu0 %v1913
        %2269 = vmatprep.subr.mxu0 0.0
        %2270 = vmatpush1.msra.mxu0 %v1912
        %2271 = vmatprep.subr.mxu0 0.0
        %2272 = vmatpush1.msra.mxu0 %v1911
        %2273 = vmatprep.subr.mxu0 0.0
        %2274 = vmatpush1.msra.mxu0 %v1910
        %2275 = vmatprep.subr.mxu0 0.0
        %2276 = vmatpush1.msra.mxu0 %v1909
        %2277 = vmatprep.subr.mxu0 0.0
        %2278 = vmatpush1.msra.mxu0 %v1908
        %2279 = vmatprep.subr.mxu0 0.0
        %2280 = vmatpush1.msra.mxu0 %v1907
        %2281 = vmatprep.subr.mxu0 0.0
        %2282 = vmatpush1.msra.mxu0 %v1906
        %2283 = vmatprep.subr.mxu0 0.0
        %2284 = vmatpush1.msra.mxu0 %v1905
        %2285 = vmatprep.subr.mxu0 0.0
        %2286 = vmatpush1.msra.mxu0 %v1904
        %2287 = vmatprep.subr.mxu0 0.0
        %2288 = vmatpush1.msra.mxu0 %v1903
        %2289 = vmatprep.subr.mxu0 0.0
        %2290 = vmatpush1.msra.mxu0 %v1902
        %2291 = vmatprep.subr.mxu0 0.0
        %2292 = vmatpush1.msra.mxu0 %v1901
        %2293 = vmatprep.subr.mxu0 0.0
        %2294 = vmatpush1.msra.mxu0 %v1900
        %2295 = vmatprep.subr.mxu0 0.0
        %2296 = vmatpush1.msra.mxu0 %v1899
        %2297 = vmatprep.subr.mxu0 0.0
        %2298 = vmatpush1.msra.mxu0 %v1898
        %2299 = vmatprep.subr.mxu0 0.0
        %2300 = vmatpush2.msra.mxu0 %v1929
        %2301 = vmatprep.subr.mxu0 0.0
        %2302 = vmatpush2.msra.mxu0 %v1928
        %2303 = vmatprep.subr.mxu0 0.0
        %2304 = vmatpush2.msra.mxu0 %v1927
        %2305 = vmatprep.subr.mxu0 0.0
        %2306 = vmatpush2.msra.mxu0 %v1926
        %2307 = vmatprep.subr.mxu0 0.0
        %2308 = vmatpush2.msra.mxu0 %v1925
        %2309 = vmatprep.subr.mxu0 0.0
        %2310 = vmatpush2.msra.mxu0 %v1924
        %2311 = vmatprep.subr.mxu0 0.0
        %2312 = vmatpush2.msra.mxu0 %v1923
        %2313 = vmatprep.subr.mxu0 0.0
        %2314 = vmatpush2.msra.mxu0 %v1922
        %2315 = vmatprep.subr.mxu0 0.0
        %2316 = vmatpush2.msra.mxu0 %v1921
        %2317 = vmatprep.subr.mxu0 0.0
        %2318 = vmatpush2.msra.mxu0 %v1920
        %2319 = vmatprep.subr.mxu0 0.0
        %2320 = vmatpush2.msra.mxu0 %v1919
        %2321 = vmatprep.subr.mxu0 0.0
        %2322 = vmatpush2.msra.mxu0 %v1918
        %2323 = vmatprep.subr.mxu0 0.0
        %2324 = vmatpush2.msra.mxu0 %v1917
        %2325 = vmatprep.subr.mxu0 0.0
        %2326 = vmatpush2.msra.mxu0 %v1916
        %2327 = vmatprep.subr.mxu0 0.0
        %2328 = vmatpush2.msra.mxu0 %v1915
        %2329 = vmatprep.subr.mxu0 0.0
        %2330 = vmatpush2.msra.mxu0 %v1914
        %2331 = vmatprep.mubr.f32.mxu0 %v1613
        %2332 = vmatmul.mubr.f32.gmra.mxu0 %v1612
        %v2333 = vpop.f32.mrf.mxu0
        %v2334 = vadd.f32 %v2189, %v2333
        %v2335 = vpop.f32.mrf.mxu0
        %2336 = vmatprep.mubr.f32.mxu0 %v1629
        %2337 = vmatmul.mubr.f32.gmra.mxu0 %v1628
        %v2338 = vpop.f32.mrf.mxu0
        %v2339 = vadd.f32 %v2194, %v2338
        %v2340 = vpop.f32.mrf.mxu0
        %2341 = vmatprep.mubr.f32.mxu0 %v1645
        %2342 = vmatmul.mubr.f32.gmra.mxu0 %v1644
        %v2343 = vpop.f32.mrf.mxu0
        %v2344 = vadd.f32 %v2199, %v2343
        %v2345 = vpop.f32.mrf.mxu0
        %2346 = vmatprep.mubr.f32.mxu0 %v1661
        %2347 = vmatmul.mubr.f32.gmra.mxu0 %v1660
        %v2348 = vpop.f32.mrf.mxu0
        %v2349 = vadd.f32 %v2204, %v2348
        %v2350 = vpop.f32.mrf.mxu0
        %2351 = vmatprep.mubr.f32.mxu0 %v1677
        %2352 = vmatmul.mubr.f32.gmra.mxu0 %v1676
        %v2353 = vpop.f32.mrf.mxu0
        %v2354 = vadd.f32 %v2209, %v2353
        %v2355 = vpop.f32.mrf.mxu0
        %2356 = vmatprep.mubr.f32.mxu0 %v1693
        %2357 = vmatmul.mubr.f32.gmra.mxu0 %v1692
        %v2358 = vpop.f32.mrf.mxu0
        %v2359 = vadd.f32 %v2214, %v2358
        %v2360 = vpop.f32.mrf.mxu0
        %2361 = vmatprep.mubr.f32.mxu0 %v1709
        %2362 = vmatmul.mubr.f32.gmra.mxu0 %v1708
        %v2363 = vpop.f32.mrf.mxu0
        %v2364 = vadd.f32 %v2219, %v2363
        %v2365 = vpop.f32.mrf.mxu0
        %2366 = vmatprep.mubr.f32.mxu0 %v1725
        %2367 = vmatmul.mubr.f32.gmra.mxu0 %v1724
        %v2368 = vpop.f32.mrf.mxu0
        %v2369 = vadd.f32 %v2224, %v2368
        %v2370 = vpop.f32.mrf.mxu0
        %2371 = vmatprep.mubr.f32.mxu0 %v1741
        %2372 = vmatmul.mubr.f32.gmra.mxu0 %v1740
        %v2373 = vpop.f32.mrf.mxu0
        %v2374 = vadd.f32 %v2229, %v2373
        %v2375 = vpop.f32.mrf.mxu0
        %2376 = vmatprep.mubr.f32.mxu0 %v1757
        %2377 = vmatmul.mubr.f32.gmra.mxu0 %v1756
        %v2378 = vpop.f32.mrf.mxu0
        %v2379 = vadd.f32 %v2234, %v2378
        %v2380 = vpop.f32.mrf.mxu0
        %2381 = vmatprep.mubr.f32.mxu0 %v1773
        %2382 = vmatmul.mubr.f32.gmra.mxu0 %v1772
        %v2383 = vpop.f32.mrf.mxu0
        %v2384 = vadd.f32 %v2239, %v2383
        %v2385 = vpop.f32.mrf.mxu0
        %2386 = vmatprep.mubr.f32.mxu0 %v1789
        %2387 = vmatmul.mubr.f32.gmra.mxu0 %v1788
        %v2388 = vpop.f32.mrf.mxu0
        %v2389 = vadd.f32 %v2244, %v2388
        %v2390 = vpop.f32.mrf.mxu0
        %2391 = vmatprep.mubr.f32.mxu0 %v1805
        %2392 = vmatmul.mubr.f32.gmra.mxu0 %v1804
        %v2393 = vpop.f32.mrf.mxu0
        %v2394 = vadd.f32 %v2249, %v2393
        %v2395 = vpop.f32.mrf.mxu0
        %2396 = vmatprep.mubr.f32.mxu0 %v1821
        %2397 = vmatmul.mubr.f32.gmra.mxu0 %v1820
        %v2398 = vpop.f32.mrf.mxu0
        %v2399 = vadd.f32 %v2254, %v2398
        %v2400 = vpop.f32.mrf.mxu0
        %2401 = vmatprep.mubr.f32.mxu0 %v1837
        %2402 = vmatmul.mubr.f32.gmra.mxu0 %v1836
        %v2403 = vpop.f32.mrf.mxu0
        %v2404 = vadd.f32 %v2259, %v2403
        %v2405 = vpop.f32.mrf.mxu0
        %2406 = vmatprep.mubr.f32.mxu0 %v1853
        %2407 = vmatmul.mubr.f32.gmra.mxu0 %v1852
        %v2408 = vpop.f32.mrf.mxu0
        %v2409 = vadd.f32 %v2264, %v2408
        %v2410 = vpop.f32.mrf.mxu0
        %2411 = vdwg.mxu0
        %2412 = vmatprep.subr.mxu0 0.0
        %2413 = vmatpush1.msra.mxu0 %v1945
        %2414 = vmatprep.subr.mxu0 0.0
        %2415 = vmatpush1.msra.mxu0 %v1944
        %2416 = vmatprep.subr.mxu0 0.0
        %2417 = vmatpush1.msra.mxu0 %v1943
        %2418 = vmatprep.subr.mxu0 0.0
        %2419 = vmatpush1.msra.mxu0 %v1942
        %2420 = vmatprep.subr.mxu0 0.0
        %2421 = vmatpush1.msra.mxu0 %v1941
        %2422 = vmatprep.subr.mxu0 0.0
        %2423 = vmatpush1.msra.mxu0 %v1940
        %2424 = vmatprep.subr.mxu0 0.0
        %2425 = vmatpush1.msra.mxu0 %v1939
        %2426 = vmatprep.subr.mxu0 0.0
        %2427 = vmatpush1.msra.mxu0 %v1938
        %2428 = vmatprep.subr.mxu0 0.0
        %2429 = vmatpush1.msra.mxu0 %v1937
        %2430 = vmatprep.subr.mxu0 0.0
        %2431 = vmatpush1.msra.mxu0 %v1936
        %2432 = vmatprep.subr.mxu0 0.0
        %2433 = vmatpush1.msra.mxu0 %v1935
        %2434 = vmatprep.subr.mxu0 0.0
        %2435 = vmatpush1.msra.mxu0 %v1934
        %2436 = vmatprep.subr.mxu0 0.0
        %2437 = vmatpush1.msra.mxu0 %v1933
        %2438 = vmatprep.subr.mxu0 0.0
        %2439 = vmatpush1.msra.mxu0 %v1932
        %2440 = vmatprep.subr.mxu0 0.0
        %2441 = vmatpush1.msra.mxu0 %v1931
        %2442 = vmatprep.subr.mxu0 0.0
        %2443 = vmatpush1.msra.mxu0 %v1930
        %2444 = vmatprep.subr.mxu0 0.0
        %2445 = vmatpush2.msra.mxu0 %v1961
        %2446 = vmatprep.subr.mxu0 0.0
        %2447 = vmatpush2.msra.mxu0 %v1960
        %2448 = vmatprep.subr.mxu0 0.0
        %2449 = vmatpush2.msra.mxu0 %v1959
        %2450 = vmatprep.subr.mxu0 0.0
        %2451 = vmatpush2.msra.mxu0 %v1958
        %2452 = vmatprep.subr.mxu0 0.0
        %2453 = vmatpush2.msra.mxu0 %v1957
        %2454 = vmatprep.subr.mxu0 0.0
        %2455 = vmatpush2.msra.mxu0 %v1956
        %2456 = vmatprep.subr.mxu0 0.0
        %2457 = vmatpush2.msra.mxu0 %v1955
        %2458 = vmatprep.subr.mxu0 0.0
        %2459 = vmatpush2.msra.mxu0 %v1954
        %2460 = vmatprep.subr.mxu0 0.0
        %2461 = vmatpush2.msra.mxu0 %v1953
        %2462 = vmatprep.subr.mxu0 0.0
        %2463 = vmatpush2.msra.mxu0 %v1952
        %2464 = vmatprep.subr.mxu0 0.0
        %2465 = vmatpush2.msra.mxu0 %v1951
        %2466 = vmatprep.subr.mxu0 0.0
        %2467 = vmatpush2.msra.mxu0 %v1950
        %2468 = vmatprep.subr.mxu0 0.0
        %2469 = vmatpush2.msra.mxu0 %v1949
        %2470 = vmatprep.subr.mxu0 0.0
        %2471 = vmatpush2.msra.mxu0 %v1948
        %2472 = vmatprep.subr.mxu0 0.0
        %2473 = vmatpush2.msra.mxu0 %v1947
        %2474 = vmatprep.subr.mxu0 0.0
        %2475 = vmatpush2.msra.mxu0 %v1946
        %2476 = vmatprep.mubr.f32.mxu0 %v1615
        %2477 = vmatmul.mubr.f32.gmra.mxu0 %v1614
        %v2478 = vpop.f32.mrf.mxu0
        %v2479 = vadd.f32 %v2334, %v2478
        %v2480 = vpop.f32.mrf.mxu0
        %2481 = vmatprep.mubr.f32.mxu0 %v1631
        %2482 = vmatmul.mubr.f32.gmra.mxu0 %v1630
        %v2483 = vpop.f32.mrf.mxu0
        %v2484 = vadd.f32 %v2339, %v2483
        %v2485 = vpop.f32.mrf.mxu0
        %2486 = vmatprep.mubr.f32.mxu0 %v1647
        %2487 = vmatmul.mubr.f32.gmra.mxu0 %v1646
        %v2488 = vpop.f32.mrf.mxu0
        %v2489 = vadd.f32 %v2344, %v2488
        %v2490 = vpop.f32.mrf.mxu0
        %2491 = vmatprep.mubr.f32.mxu0 %v1663
        %2492 = vmatmul.mubr.f32.gmra.mxu0 %v1662
        %v2493 = vpop.f32.mrf.mxu0
        %v2494 = vadd.f32 %v2349, %v2493
        %v2495 = vpop.f32.mrf.mxu0
        %2496 = vmatprep.mubr.f32.mxu0 %v1679
        %2497 = vmatmul.mubr.f32.gmra.mxu0 %v1678
        %v2498 = vpop.f32.mrf.mxu0
        %v2499 = vadd.f32 %v2354, %v2498
        %v2500 = vpop.f32.mrf.mxu0
        %2501 = vmatprep.mubr.f32.mxu0 %v1695
        %2502 = vmatmul.mubr.f32.gmra.mxu0 %v1694
        %v2503 = vpop.f32.mrf.mxu0
        %v2504 = vadd.f32 %v2359, %v2503
        %v2505 = vpop.f32.mrf.mxu0
        %2506 = vmatprep.mubr.f32.mxu0 %v1711
        %2507 = vmatmul.mubr.f32.gmra.mxu0 %v1710
        %v2508 = vpop.f32.mrf.mxu0
        %v2509 = vadd.f32 %v2364, %v2508
        %v2510 = vpop.f32.mrf.mxu0
        %2511 = vmatprep.mubr.f32.mxu0 %v1727
        %2512 = vmatmul.mubr.f32.gmra.mxu0 %v1726
        %v2513 = vpop.f32.mrf.mxu0
        %v2514 = vadd.f32 %v2369, %v2513
        %v2515 = vpop.f32.mrf.mxu0
        %2516 = vmatprep.mubr.f32.mxu0 %v1743
        %2517 = vmatmul.mubr.f32.gmra.mxu0 %v1742
        %v2518 = vpop.f32.mrf.mxu0
        %v2519 = vadd.f32 %v2374, %v2518
        %v2520 = vpop.f32.mrf.mxu0
        %2521 = vmatprep.mubr.f32.mxu0 %v1759
        %2522 = vmatmul.mubr.f32.gmra.mxu0 %v1758
        %v2523 = vpop.f32.mrf.mxu0
        %v2524 = vadd.f32 %v2379, %v2523
        %v2525 = vpop.f32.mrf.mxu0
        %2526 = vmatprep.mubr.f32.mxu0 %v1775
        %2527 = vmatmul.mubr.f32.gmra.mxu0 %v1774
        %v2528 = vpop.f32.mrf.mxu0
        %v2529 = vadd.f32 %v2384, %v2528
        %v2530 = vpop.f32.mrf.mxu0
        %2531 = vmatprep.mubr.f32.mxu0 %v1791
        %2532 = vmatmul.mubr.f32.gmra.mxu0 %v1790
        %v2533 = vpop.f32.mrf.mxu0
        %v2534 = vadd.f32 %v2389, %v2533
        %v2535 = vpop.f32.mrf.mxu0
        %2536 = vmatprep.mubr.f32.mxu0 %v1807
        %2537 = vmatmul.mubr.f32.gmra.mxu0 %v1806
        %v2538 = vpop.f32.mrf.mxu0
        %v2539 = vadd.f32 %v2394, %v2538
        %v2540 = vpop.f32.mrf.mxu0
        %2541 = vmatprep.mubr.f32.mxu0 %v1823
        %2542 = vmatmul.mubr.f32.gmra.mxu0 %v1822
        %v2543 = vpop.f32.mrf.mxu0
        %v2544 = vadd.f32 %v2399, %v2543
        %v2545 = vpop.f32.mrf.mxu0
        %2546 = vmatprep.mubr.f32.mxu0 %v1839
        %2547 = vmatmul.mubr.f32.gmra.mxu0 %v1838
        %v2548 = vpop.f32.mrf.mxu0
        %v2549 = vadd.f32 %v2404, %v2548
        %v2550 = vpop.f32.mrf.mxu0
        %2551 = vmatprep.mubr.f32.mxu0 %v1855
        %2552 = vmatmul.mubr.f32.gmra.mxu0 %v1854
        %v2553 = vpop.f32.mrf.mxu0
        %v2554 = vadd.f32 %v2409, %v2553
        %v2555 = vpop.f32.mrf.mxu0
        %2556 = vdwg.mxu0
        %2557 = vmatprep.subr.mxu0 0.0
        %2558 = vmatpush1.msra.mxu0 %v1977
        %2559 = vmatprep.subr.mxu0 0.0
        %2560 = vmatpush1.msra.mxu0 %v1976
        %2561 = vmatprep.subr.mxu0 0.0
        %2562 = vmatpush1.msra.mxu0 %v1975
        %2563 = vmatprep.subr.mxu0 0.0
        %2564 = vmatpush1.msra.mxu0 %v1974
        %2565 = vmatprep.subr.mxu0 0.0
        %2566 = vmatpush1.msra.mxu0 %v1973
        %2567 = vmatprep.subr.mxu0 0.0
        %2568 = vmatpush1.msra.mxu0 %v1972
        %2569 = vmatprep.subr.mxu0 0.0
        %2570 = vmatpush1.msra.mxu0 %v1971
        %2571 = vmatprep.subr.mxu0 0.0
        %2572 = vmatpush1.msra.mxu0 %v1970
        %2573 = vmatprep.subr.mxu0 0.0
        %2574 = vmatpush1.msra.mxu0 %v1969
        %2575 = vmatprep.subr.mxu0 0.0
        %2576 = vmatpush1.msra.mxu0 %v1968
        %2577 = vmatprep.subr.mxu0 0.0
        %2578 = vmatpush1.msra.mxu0 %v1967
        %2579 = vmatprep.subr.mxu0 0.0
        %2580 = vmatpush1.msra.mxu0 %v1966
        %2581 = vmatprep.subr.mxu0 0.0
        %2582 = vmatpush1.msra.mxu0 %v1965
        %2583 = vmatprep.subr.mxu0 0.0
        %2584 = vmatpush1.msra.mxu0 %v1964
        %2585 = vmatprep.subr.mxu0 0.0
        %2586 = vmatpush1.msra.mxu0 %v1963
        %2587 = vmatprep.subr.mxu0 0.0
        %2588 = vmatpush1.msra.mxu0 %v1962
        %2589 = vmatprep.subr.mxu0 0.0
        %2590 = vmatpush2.msra.mxu0 %v1993
        %2591 = vmatprep.subr.mxu0 0.0
        %2592 = vmatpush2.msra.mxu0 %v1992
        %2593 = vmatprep.subr.mxu0 0.0
        %2594 = vmatpush2.msra.mxu0 %v1991
        %2595 = vmatprep.subr.mxu0 0.0
        %2596 = vmatpush2.msra.mxu0 %v1990
        %2597 = vmatprep.subr.mxu0 0.0
        %2598 = vmatpush2.msra.mxu0 %v1989
        %2599 = vmatprep.subr.mxu0 0.0
        %2600 = vmatpush2.msra.mxu0 %v1988
        %2601 = vmatprep.subr.mxu0 0.0
        %2602 = vmatpush2.msra.mxu0 %v1987
        %2603 = vmatprep.subr.mxu0 0.0
        %2604 = vmatpush2.msra.mxu0 %v1986
        %2605 = vmatprep.subr.mxu0 0.0
        %2606 = vmatpush2.msra.mxu0 %v1985
        %2607 = vmatprep.subr.mxu0 0.0
        %2608 = vmatpush2.msra.mxu0 %v1984
        %2609 = vmatprep.subr.mxu0 0.0
        %2610 = vmatpush2.msra.mxu0 %v1983
        %2611 = vmatprep.subr.mxu0 0.0
        %2612 = vmatpush2.msra.mxu0 %v1982
        %2613 = vmatprep.subr.mxu0 0.0
        %2614 = vmatpush2.msra.mxu0 %v1981
        %2615 = vmatprep.subr.mxu0 0.0
        %2616 = vmatpush2.msra.mxu0 %v1980
        %2617 = vmatprep.subr.mxu0 0.0
        %2618 = vmatpush2.msra.mxu0 %v1979
        %2619 = vmatprep.subr.mxu0 0.0
        %2620 = vmatpush2.msra.mxu0 %v1978
        %2621 = vmatprep.mubr.f32.mxu0 %v1617
        %2622 = vmatmul.mubr.f32.gmra.mxu0 %v1616
        %v2623 = vpop.f32.mrf.mxu0
        %v2624 = vadd.f32 %v2479, %v2623
        %v2625 = vpop.f32.mrf.mxu0
        %2626 = vmatprep.mubr.f32.mxu0 %v1633
        %2627 = vmatmul.mubr.f32.gmra.mxu0 %v1632
        %v2628 = vpop.f32.mrf.mxu0
        %v2629 = vadd.f32 %v2484, %v2628
        %v2630 = vpop.f32.mrf.mxu0
        %2631 = vmatprep.mubr.f32.mxu0 %v1649
        %2632 = vmatmul.mubr.f32.gmra.mxu0 %v1648
        %v2633 = vpop.f32.mrf.mxu0
        %v2634 = vadd.f32 %v2489, %v2633
        %v2635 = vpop.f32.mrf.mxu0
        %2636 = vmatprep.mubr.f32.mxu0 %v1665
        %2637 = vmatmul.mubr.f32.gmra.mxu0 %v1664
        %v2638 = vpop.f32.mrf.mxu0
        %v2639 = vadd.f32 %v2494, %v2638
        %v2640 = vpop.f32.mrf.mxu0
        %2641 = vmatprep.mubr.f32.mxu0 %v1681
        %2642 = vmatmul.mubr.f32.gmra.mxu0 %v1680
        %v2643 = vpop.f32.mrf.mxu0
        %v2644 = vadd.f32 %v2499, %v2643
        %v2645 = vpop.f32.mrf.mxu0
        %2646 = vmatprep.mubr.f32.mxu0 %v1697
        %2647 = vmatmul.mubr.f32.gmra.mxu0 %v1696
        %v2648 = vpop.f32.mrf.mxu0
        %v2649 = vadd.f32 %v2504, %v2648
        %v2650 = vpop.f32.mrf.mxu0
        %2651 = vmatprep.mubr.f32.mxu0 %v1713
        %2652 = vmatmul.mubr.f32.gmra.mxu0 %v1712
        %v2653 = vpop.f32.mrf.mxu0
        %v2654 = vadd.f32 %v2509, %v2653
        %v2655 = vpop.f32.mrf.mxu0
        %2656 = vmatprep.mubr.f32.mxu0 %v1729
        %2657 = vmatmul.mubr.f32.gmra.mxu0 %v1728
        %v2658 = vpop.f32.mrf.mxu0
        %v2659 = vadd.f32 %v2514, %v2658
        %v2660 = vpop.f32.mrf.mxu0
        %2661 = vmatprep.mubr.f32.mxu0 %v1745
        %2662 = vmatmul.mubr.f32.gmra.mxu0 %v1744
        %v2663 = vpop.f32.mrf.mxu0
        %v2664 = vadd.f32 %v2519, %v2663
        %v2665 = vpop.f32.mrf.mxu0
        %2666 = vmatprep.mubr.f32.mxu0 %v1761
        %2667 = vmatmul.mubr.f32.gmra.mxu0 %v1760
        %v2668 = vpop.f32.mrf.mxu0
        %v2669 = vadd.f32 %v2524, %v2668
        %v2670 = vpop.f32.mrf.mxu0
        %2671 = vmatprep.mubr.f32.mxu0 %v1777
        %2672 = vmatmul.mubr.f32.gmra.mxu0 %v1776
        %v2673 = vpop.f32.mrf.mxu0
        %v2674 = vadd.f32 %v2529, %v2673
        %v2675 = vpop.f32.mrf.mxu0
        %2676 = vmatprep.mubr.f32.mxu0 %v1793
        %2677 = vmatmul.mubr.f32.gmra.mxu0 %v1792
        %v2678 = vpop.f32.mrf.mxu0
        %v2679 = vadd.f32 %v2534, %v2678
        %v2680 = vpop.f32.mrf.mxu0
        %2681 = vmatprep.mubr.f32.mxu0 %v1809
        %2682 = vmatmul.mubr.f32.gmra.mxu0 %v1808
        %v2683 = vpop.f32.mrf.mxu0
        %v2684 = vadd.f32 %v2539, %v2683
        %v2685 = vpop.f32.mrf.mxu0
        %2686 = vmatprep.mubr.f32.mxu0 %v1825
        %2687 = vmatmul.mubr.f32.gmra.mxu0 %v1824
        %v2688 = vpop.f32.mrf.mxu0
        %v2689 = vadd.f32 %v2544, %v2688
        %v2690 = vpop.f32.mrf.mxu0
        %2691 = vmatprep.mubr.f32.mxu0 %v1841
        %2692 = vmatmul.mubr.f32.gmra.mxu0 %v1840
        %v2693 = vpop.f32.mrf.mxu0
        %v2694 = vadd.f32 %v2549, %v2693
        %v2695 = vpop.f32.mrf.mxu0
        %2696 = vmatprep.mubr.f32.mxu0 %v1857
        %2697 = vmatmul.mubr.f32.gmra.mxu0 %v1856
        %v2698 = vpop.f32.mrf.mxu0
        %v2699 = vadd.f32 %v2554, %v2698
        %v2700 = vpop.f32.mrf.mxu0
        %2701 = vdwg.mxu0
        %2702 = vmatprep.subr.mxu0 0.0
        %2703 = vmatpush1.msra.mxu0 %v2009
        %2704 = vmatprep.subr.mxu0 0.0
        %2705 = vmatpush1.msra.mxu0 %v2008
        %2706 = vmatprep.subr.mxu0 0.0
        %2707 = vmatpush1.msra.mxu0 %v2007
        %2708 = vmatprep.subr.mxu0 0.0
        %2709 = vmatpush1.msra.mxu0 %v2006
        %2710 = vmatprep.subr.mxu0 0.0
        %2711 = vmatpush1.msra.mxu0 %v2005
        %2712 = vmatprep.subr.mxu0 0.0
        %2713 = vmatpush1.msra.mxu0 %v2004
        %2714 = vmatprep.subr.mxu0 0.0
        %2715 = vmatpush1.msra.mxu0 %v2003
        %2716 = vmatprep.subr.mxu0 0.0
        %2717 = vmatpush1.msra.mxu0 %v2002
        %2718 = vmatprep.subr.mxu0 0.0
        %2719 = vmatpush1.msra.mxu0 %v2001
        %2720 = vmatprep.subr.mxu0 0.0
        %2721 = vmatpush1.msra.mxu0 %v2000
        %2722 = vmatprep.subr.mxu0 0.0
        %2723 = vmatpush1.msra.mxu0 %v1999
        %2724 = vmatprep.subr.mxu0 0.0
        %2725 = vmatpush1.msra.mxu0 %v1998
        %2726 = vmatprep.subr.mxu0 0.0
        %2727 = vmatpush1.msra.mxu0 %v1997
        %2728 = vmatprep.subr.mxu0 0.0
        %2729 = vmatpush1.msra.mxu0 %v1996
        %2730 = vmatprep.subr.mxu0 0.0
        %2731 = vmatpush1.msra.mxu0 %v1995
        %2732 = vmatprep.subr.mxu0 0.0
        %2733 = vmatpush1.msra.mxu0 %v1994
        %2734 = vmatprep.subr.mxu0 0.0
        %2735 = vmatpush2.msra.mxu0 %v2025
        %2736 = vmatprep.subr.mxu0 0.0
        %2737 = vmatpush2.msra.mxu0 %v2024
        %2738 = vmatprep.subr.mxu0 0.0
        %2739 = vmatpush2.msra.mxu0 %v2023
        %2740 = vmatprep.subr.mxu0 0.0
        %2741 = vmatpush2.msra.mxu0 %v2022
        %2742 = vmatprep.subr.mxu0 0.0
        %2743 = vmatpush2.msra.mxu0 %v2021
        %2744 = vmatprep.subr.mxu0 0.0
        %2745 = vmatpush2.msra.mxu0 %v2020
        %2746 = vmatprep.subr.mxu0 0.0
        %2747 = vmatpush2.msra.mxu0 %v2019
        %2748 = vmatprep.subr.mxu0 0.0
        %2749 = vmatpush2.msra.mxu0 %v2018
        %2750 = vmatprep.subr.mxu0 0.0
        %2751 = vmatpush2.msra.mxu0 %v2017
        %2752 = vmatprep.subr.mxu0 0.0
        %2753 = vmatpush2.msra.mxu0 %v2016
        %2754 = vmatprep.subr.mxu0 0.0
        %2755 = vmatpush2.msra.mxu0 %v2015
        %2756 = vmatprep.subr.mxu0 0.0
        %2757 = vmatpush2.msra.mxu0 %v2014
        %2758 = vmatprep.subr.mxu0 0.0
        %2759 = vmatpush2.msra.mxu0 %v2013
        %2760 = vmatprep.subr.mxu0 0.0
        %2761 = vmatpush2.msra.mxu0 %v2012
        %2762 = vmatprep.subr.mxu0 0.0
        %2763 = vmatpush2.msra.mxu0 %v2011
        %2764 = vmatprep.subr.mxu0 0.0
        %2765 = vmatpush2.msra.mxu0 %v2010
        %2766 = vmatprep.mubr.f32.mxu0 %v1619
        %2767 = vmatmul.mubr.f32.gmra.mxu0 %v1618
        %v2768 = vpop.f32.mrf.mxu0
        %v2769 = vadd.f32 %v2624, %v2768
        %v2770 = vpop.f32.mrf.mxu0
        %2771 = vmatprep.mubr.f32.mxu0 %v1635
        %2772 = vmatmul.mubr.f32.gmra.mxu0 %v1634
        %v2773 = vpop.f32.mrf.mxu0
        %v2774 = vadd.f32 %v2629, %v2773
        %v2775 = vpop.f32.mrf.mxu0
        %2776 = vmatprep.mubr.f32.mxu0 %v1651
        %2777 = vmatmul.mubr.f32.gmra.mxu0 %v1650
        %v2778 = vpop.f32.mrf.mxu0
        %v2779 = vadd.f32 %v2634, %v2778
        %v2780 = vpop.f32.mrf.mxu0
        %2781 = vmatprep.mubr.f32.mxu0 %v1667
        %2782 = vmatmul.mubr.f32.gmra.mxu0 %v1666
        %v2783 = vpop.f32.mrf.mxu0
        %v2784 = vadd.f32 %v2639, %v2783
        %v2785 = vpop.f32.mrf.mxu0
        %2786 = vmatprep.mubr.f32.mxu0 %v1683
        %2787 = vmatmul.mubr.f32.gmra.mxu0 %v1682
        %v2788 = vpop.f32.mrf.mxu0
        %v2789 = vadd.f32 %v2644, %v2788
        %v2790 = vpop.f32.mrf.mxu0
        %2791 = vmatprep.mubr.f32.mxu0 %v1699
        %2792 = vmatmul.mubr.f32.gmra.mxu0 %v1698
        %v2793 = vpop.f32.mrf.mxu0
        %v2794 = vadd.f32 %v2649, %v2793
        %v2795 = vpop.f32.mrf.mxu0
        %2796 = vmatprep.mubr.f32.mxu0 %v1715
        %2797 = vmatmul.mubr.f32.gmra.mxu0 %v1714
        %v2798 = vpop.f32.mrf.mxu0
        %v2799 = vadd.f32 %v2654, %v2798
        %v2800 = vpop.f32.mrf.mxu0
        %2801 = vmatprep.mubr.f32.mxu0 %v1731
        %2802 = vmatmul.mubr.f32.gmra.mxu0 %v1730
        %v2803 = vpop.f32.mrf.mxu0
        %v2804 = vadd.f32 %v2659, %v2803
        %v2805 = vpop.f32.mrf.mxu0
        %2806 = vmatprep.mubr.f32.mxu0 %v1747
        %2807 = vmatmul.mubr.f32.gmra.mxu0 %v1746
        %v2808 = vpop.f32.mrf.mxu0
        %v2809 = vadd.f32 %v2664, %v2808
        %v2810 = vpop.f32.mrf.mxu0
        %2811 = vmatprep.mubr.f32.mxu0 %v1763
        %2812 = vmatmul.mubr.f32.gmra.mxu0 %v1762
        %v2813 = vpop.f32.mrf.mxu0
        %v2814 = vadd.f32 %v2669, %v2813
        %v2815 = vpop.f32.mrf.mxu0
        %2816 = vmatprep.mubr.f32.mxu0 %v1779
        %2817 = vmatmul.mubr.f32.gmra.mxu0 %v1778
        %v2818 = vpop.f32.mrf.mxu0
        %v2819 = vadd.f32 %v2674, %v2818
        %v2820 = vpop.f32.mrf.mxu0
        %2821 = vmatprep.mubr.f32.mxu0 %v1795
        %2822 = vmatmul.mubr.f32.gmra.mxu0 %v1794
        %v2823 = vpop.f32.mrf.mxu0
        %v2824 = vadd.f32 %v2679, %v2823
        %v2825 = vpop.f32.mrf.mxu0
        %2826 = vmatprep.mubr.f32.mxu0 %v1811
        %2827 = vmatmul.mubr.f32.gmra.mxu0 %v1810
        %v2828 = vpop.f32.mrf.mxu0
        %v2829 = vadd.f32 %v2684, %v2828
        %v2830 = vpop.f32.mrf.mxu0
        %2831 = vmatprep.mubr.f32.mxu0 %v1827
        %2832 = vmatmul.mubr.f32.gmra.mxu0 %v1826
        %v2833 = vpop.f32.mrf.mxu0
        %v2834 = vadd.f32 %v2689, %v2833
        %v2835 = vpop.f32.mrf.mxu0
        %2836 = vmatprep.mubr.f32.mxu0 %v1843
        %2837 = vmatmul.mubr.f32.gmra.mxu0 %v1842
        %v2838 = vpop.f32.mrf.mxu0
        %v2839 = vadd.f32 %v2694, %v2838
        %v2840 = vpop.f32.mrf.mxu0
        %2841 = vmatprep.mubr.f32.mxu0 %v1859
        %2842 = vmatmul.mubr.f32.gmra.mxu0 %v1858
        %v2843 = vpop.f32.mrf.mxu0
        %v2844 = vadd.f32 %v2699, %v2843
        %v2845 = vpop.f32.mrf.mxu0
        %2846 = vdwg.mxu0
        %2847 = vmatprep.subr.mxu0 0.0
        %2848 = vmatpush1.msra.mxu0 %v2041
        %2849 = vmatprep.subr.mxu0 0.0
        %2850 = vmatpush1.msra.mxu0 %v2040
        %2851 = vmatprep.subr.mxu0 0.0
        %2852 = vmatpush1.msra.mxu0 %v2039
        %2853 = vmatprep.subr.mxu0 0.0
        %2854 = vmatpush1.msra.mxu0 %v2038
        %2855 = vmatprep.subr.mxu0 0.0
        %2856 = vmatpush1.msra.mxu0 %v2037
        %2857 = vmatprep.subr.mxu0 0.0
        %2858 = vmatpush1.msra.mxu0 %v2036
        %2859 = vmatprep.subr.mxu0 0.0
        %2860 = vmatpush1.msra.mxu0 %v2035
        %2861 = vmatprep.subr.mxu0 0.0
        %2862 = vmatpush1.msra.mxu0 %v2034
        %2863 = vmatprep.subr.mxu0 0.0
        %2864 = vmatpush1.msra.mxu0 %v2033
        %2865 = vmatprep.subr.mxu0 0.0
        %2866 = vmatpush1.msra.mxu0 %v2032
        %2867 = vmatprep.subr.mxu0 0.0
        %2868 = vmatpush1.msra.mxu0 %v2031
        %2869 = vmatprep.subr.mxu0 0.0
        %2870 = vmatpush1.msra.mxu0 %v2030
        %2871 = vmatprep.subr.mxu0 0.0
        %2872 = vmatpush1.msra.mxu0 %v2029
        %2873 = vmatprep.subr.mxu0 0.0
        %2874 = vmatpush1.msra.mxu0 %v2028
        %2875 = vmatprep.subr.mxu0 0.0
        %2876 = vmatpush1.msra.mxu0 %v2027
        %2877 = vmatprep.subr.mxu0 0.0
        %2878 = vmatpush1.msra.mxu0 %v2026
        %2879 = vmatprep.subr.mxu0 0.0
        %2880 = vmatpush2.msra.mxu0 %v2057
        %2881 = vmatprep.subr.mxu0 0.0
        %2882 = vmatpush2.msra.mxu0 %v2056
        %2883 = vmatprep.subr.mxu0 0.0
        %2884 = vmatpush2.msra.mxu0 %v2055
        %2885 = vmatprep.subr.mxu0 0.0
        %2886 = vmatpush2.msra.mxu0 %v2054
        %2887 = vmatprep.subr.mxu0 0.0
        %2888 = vmatpush2.msra.mxu0 %v2053
        %2889 = vmatprep.subr.mxu0 0.0
        %2890 = vmatpush2.msra.mxu0 %v2052
        %2891 = vmatprep.subr.mxu0 0.0
        %2892 = vmatpush2.msra.mxu0 %v2051
        %2893 = vmatprep.subr.mxu0 0.0
        %2894 = vmatpush2.msra.mxu0 %v2050
        %2895 = vmatprep.subr.mxu0 0.0
        %2896 = vmatpush2.msra.mxu0 %v2049
        %2897 = vmatprep.subr.mxu0 0.0
        %2898 = vmatpush2.msra.mxu0 %v2048
        %2899 = vmatprep.subr.mxu0 0.0
        %2900 = vmatpush2.msra.mxu0 %v2047
        %2901 = vmatprep.subr.mxu0 0.0
        %2902 = vmatpush2.msra.mxu0 %v2046
        %2903 = vmatprep.subr.mxu0 0.0
        %2904 = vmatpush2.msra.mxu0 %v2045
        %2905 = vmatprep.subr.mxu0 0.0
        %2906 = vmatpush2.msra.mxu0 %v2044
        %2907 = vmatprep.subr.mxu0 0.0
        %2908 = vmatpush2.msra.mxu0 %v2043
        %2909 = vmatprep.subr.mxu0 0.0
        %2910 = vmatpush2.msra.mxu0 %v2042
        %2911 = vmatprep.mubr.f32.mxu0 %v1621
        %2912 = vmatmul.mubr.f32.gmra.mxu0 %v1620
        %v2913 = vpop.f32.mrf.mxu0
        %v2914 = vadd.f32 %v2769, %v2913
        %v2915 = vpop.f32.mrf.mxu0
        %2916 = vmatprep.mubr.f32.mxu0 %v1637
        %2917 = vmatmul.mubr.f32.gmra.mxu0 %v1636
        %v2918 = vpop.f32.mrf.mxu0
        %v2919 = vadd.f32 %v2774, %v2918
        %v2920 = vpop.f32.mrf.mxu0
        %2921 = vmatprep.mubr.f32.mxu0 %v1653
        %2922 = vmatmul.mubr.f32.gmra.mxu0 %v1652
        %v2923 = vpop.f32.mrf.mxu0
        %v2924 = vadd.f32 %v2779, %v2923
        %v2925 = vpop.f32.mrf.mxu0
        %2926 = vmatprep.mubr.f32.mxu0 %v1669
        %2927 = vmatmul.mubr.f32.gmra.mxu0 %v1668
        %v2928 = vpop.f32.mrf.mxu0
        %v2929 = vadd.f32 %v2784, %v2928
        %v2930 = vpop.f32.mrf.mxu0
        %2931 = vmatprep.mubr.f32.mxu0 %v1685
        %2932 = vmatmul.mubr.f32.gmra.mxu0 %v1684
        %v2933 = vpop.f32.mrf.mxu0
        %v2934 = vadd.f32 %v2789, %v2933
        %v2935 = vpop.f32.mrf.mxu0
        %2936 = vmatprep.mubr.f32.mxu0 %v1701
        %2937 = vmatmul.mubr.f32.gmra.mxu0 %v1700
        %v2938 = vpop.f32.mrf.mxu0
        %v2939 = vadd.f32 %v2794, %v2938
        %v2940 = vpop.f32.mrf.mxu0
        %2941 = vmatprep.mubr.f32.mxu0 %v1717
        %2942 = vmatmul.mubr.f32.gmra.mxu0 %v1716
        %v2943 = vpop.f32.mrf.mxu0
        %v2944 = vadd.f32 %v2799, %v2943
        %v2945 = vpop.f32.mrf.mxu0
        %2946 = vmatprep.mubr.f32.mxu0 %v1733
        %2947 = vmatmul.mubr.f32.gmra.mxu0 %v1732
        %v2948 = vpop.f32.mrf.mxu0
        %v2949 = vadd.f32 %v2804, %v2948
        %v2950 = vpop.f32.mrf.mxu0
        %2951 = vmatprep.mubr.f32.mxu0 %v1749
        %2952 = vmatmul.mubr.f32.gmra.mxu0 %v1748
        %v2953 = vpop.f32.mrf.mxu0
        %v2954 = vadd.f32 %v2809, %v2953
        %v2955 = vpop.f32.mrf.mxu0
        %2956 = vmatprep.mubr.f32.mxu0 %v1765
        %2957 = vmatmul.mubr.f32.gmra.mxu0 %v1764
        %v2958 = vpop.f32.mrf.mxu0
        %v2959 = vadd.f32 %v2814, %v2958
        %v2960 = vpop.f32.mrf.mxu0
        %2961 = vmatprep.mubr.f32.mxu0 %v1781
        %2962 = vmatmul.mubr.f32.gmra.mxu0 %v1780
        %v2963 = vpop.f32.mrf.mxu0
        %v2964 = vadd.f32 %v2819, %v2963
        %v2965 = vpop.f32.mrf.mxu0
        %2966 = vmatprep.mubr.f32.mxu0 %v1797
        %2967 = vmatmul.mubr.f32.gmra.mxu0 %v1796
        %v2968 = vpop.f32.mrf.mxu0
        %v2969 = vadd.f32 %v2824, %v2968
        %v2970 = vpop.f32.mrf.mxu0
        %2971 = vmatprep.mubr.f32.mxu0 %v1813
        %2972 = vmatmul.mubr.f32.gmra.mxu0 %v1812
        %v2973 = vpop.f32.mrf.mxu0
        %v2974 = vadd.f32 %v2829, %v2973
        %v2975 = vpop.f32.mrf.mxu0
        %2976 = vmatprep.mubr.f32.mxu0 %v1829
        %2977 = vmatmul.mubr.f32.gmra.mxu0 %v1828
        %v2978 = vpop.f32.mrf.mxu0
        %v2979 = vadd.f32 %v2834, %v2978
        %v2980 = vpop.f32.mrf.mxu0
        %2981 = vmatprep.mubr.f32.mxu0 %v1845
        %2982 = vmatmul.mubr.f32.gmra.mxu0 %v1844
        %v2983 = vpop.f32.mrf.mxu0
        %v2984 = vadd.f32 %v2839, %v2983
        %v2985 = vpop.f32.mrf.mxu0
        %2986 = vmatprep.mubr.f32.mxu0 %v1861
        %2987 = vmatmul.mubr.f32.gmra.mxu0 %v1860
        %v2988 = vpop.f32.mrf.mxu0
        %v2989 = vadd.f32 %v2844, %v2988
        %v2990 = vpop.f32.mrf.mxu0
        %2991 = vdwg.mxu0
        %2992 = vmatprep.subr.mxu0 0.0
        %2993 = vmatpush1.msra.mxu0 %v2073
        %2994 = vmatprep.subr.mxu0 0.0
        %2995 = vmatpush1.msra.mxu0 %v2072
        %2996 = vmatprep.subr.mxu0 0.0
        %2997 = vmatpush1.msra.mxu0 %v2071
        %2998 = vmatprep.subr.mxu0 0.0
        %2999 = vmatpush1.msra.mxu0 %v2070
        %3000 = vmatprep.subr.mxu0 0.0
        %3001 = vmatpush1.msra.mxu0 %v2069
        %3002 = vmatprep.subr.mxu0 0.0
        %3003 = vmatpush1.msra.mxu0 %v2068
        %3004 = vmatprep.subr.mxu0 0.0
        %3005 = vmatpush1.msra.mxu0 %v2067
        %3006 = vmatprep.subr.mxu0 0.0
        %3007 = vmatpush1.msra.mxu0 %v2066
        %3008 = vmatprep.subr.mxu0 0.0
        %3009 = vmatpush1.msra.mxu0 %v2065
        %3010 = vmatprep.subr.mxu0 0.0
        %3011 = vmatpush1.msra.mxu0 %v2064
        %3012 = vmatprep.subr.mxu0 0.0
        %3013 = vmatpush1.msra.mxu0 %v2063
        %3014 = vmatprep.subr.mxu0 0.0
        %3015 = vmatpush1.msra.mxu0 %v2062
        %3016 = vmatprep.subr.mxu0 0.0
        %3017 = vmatpush1.msra.mxu0 %v2061
        %3018 = vmatprep.subr.mxu0 0.0
        %3019 = vmatpush1.msra.mxu0 %v2060
        %3020 = vmatprep.subr.mxu0 0.0
        %3021 = vmatpush1.msra.mxu0 %v2059
        %3022 = vmatprep.subr.mxu0 0.0
        %3023 = vmatpush1.msra.mxu0 %v2058
        %3024 = vmatprep.subr.mxu0 0.0
        %3025 = vmatpush2.msra.mxu0 %v2089
        %3026 = vmatprep.subr.mxu0 0.0
        %3027 = vmatpush2.msra.mxu0 %v2088
        %3028 = vmatprep.subr.mxu0 0.0
        %3029 = vmatpush2.msra.mxu0 %v2087
        %3030 = vmatprep.subr.mxu0 0.0
        %3031 = vmatpush2.msra.mxu0 %v2086
        %3032 = vmatprep.subr.mxu0 0.0
        %3033 = vmatpush2.msra.mxu0 %v2085
        %3034 = vmatprep.subr.mxu0 0.0
        %3035 = vmatpush2.msra.mxu0 %v2084
        %3036 = vmatprep.subr.mxu0 0.0
        %3037 = vmatpush2.msra.mxu0 %v2083
        %3038 = vmatprep.subr.mxu0 0.0
        %3039 = vmatpush2.msra.mxu0 %v2082
        %3040 = vmatprep.subr.mxu0 0.0
        %3041 = vmatpush2.msra.mxu0 %v2081
        %3042 = vmatprep.subr.mxu0 0.0
        %3043 = vmatpush2.msra.mxu0 %v2080
        %3044 = vmatprep.subr.mxu0 0.0
        %3045 = vmatpush2.msra.mxu0 %v2079
        %3046 = vmatprep.subr.mxu0 0.0
        %3047 = vmatpush2.msra.mxu0 %v2078
        %3048 = vmatprep.subr.mxu0 0.0
        %3049 = vmatpush2.msra.mxu0 %v2077
        %3050 = vmatprep.subr.mxu0 0.0
        %3051 = vmatpush2.msra.mxu0 %v2076
        %3052 = vmatprep.subr.mxu0 0.0
        %3053 = vmatpush2.msra.mxu0 %v2075
        %3054 = vmatprep.subr.mxu0 0.0
        %3055 = vmatpush2.msra.mxu0 %v2074
        %3056 = vmatprep.mubr.f32.mxu0 %v1623
        %3057 = vmatmul.mubr.f32.gmra.mxu0 %v1622
        %v3058 = vpop.f32.mrf.mxu0
        %v3059 = vadd.f32 %v2914, %v3058
        %v3060 = vpop.f32.mrf.mxu0
        %3061 = vmatprep.mubr.f32.mxu0 %v1639
        %3062 = vmatmul.mubr.f32.gmra.mxu0 %v1638
        %v3063 = vpop.f32.mrf.mxu0
        %v3064 = vadd.f32 %v2919, %v3063
        %v3065 = vpop.f32.mrf.mxu0
        %3066 = vmatprep.mubr.f32.mxu0 %v1655
        %3067 = vmatmul.mubr.f32.gmra.mxu0 %v1654
        %v3068 = vpop.f32.mrf.mxu0
        %v3069 = vadd.f32 %v2924, %v3068
        %v3070 = vpop.f32.mrf.mxu0
        %3071 = vmatprep.mubr.f32.mxu0 %v1671
        %3072 = vmatmul.mubr.f32.gmra.mxu0 %v1670
        %v3073 = vpop.f32.mrf.mxu0
        %v3074 = vadd.f32 %v2929, %v3073
        %v3075 = vpop.f32.mrf.mxu0
        %3076 = vmatprep.mubr.f32.mxu0 %v1687
        %3077 = vmatmul.mubr.f32.gmra.mxu0 %v1686
        %v3078 = vpop.f32.mrf.mxu0
        %v3079 = vadd.f32 %v2934, %v3078
        %v3080 = vpop.f32.mrf.mxu0
        %3081 = vmatprep.mubr.f32.mxu0 %v1703
        %3082 = vmatmul.mubr.f32.gmra.mxu0 %v1702
        %v3083 = vpop.f32.mrf.mxu0
        %v3084 = vadd.f32 %v2939, %v3083
        %v3085 = vpop.f32.mrf.mxu0
        %3086 = vmatprep.mubr.f32.mxu0 %v1719
        %3087 = vmatmul.mubr.f32.gmra.mxu0 %v1718
        %v3088 = vpop.f32.mrf.mxu0
        %v3089 = vadd.f32 %v2944, %v3088
        %v3090 = vpop.f32.mrf.mxu0
        %3091 = vmatprep.mubr.f32.mxu0 %v1735
        %3092 = vmatmul.mubr.f32.gmra.mxu0 %v1734
        %v3093 = vpop.f32.mrf.mxu0
        %v3094 = vadd.f32 %v2949, %v3093
        %v3095 = vpop.f32.mrf.mxu0
        %3096 = vmatprep.mubr.f32.mxu0 %v1751
        %3097 = vmatmul.mubr.f32.gmra.mxu0 %v1750
        %v3098 = vpop.f32.mrf.mxu0
        %v3099 = vadd.f32 %v2954, %v3098
        %v3100 = vpop.f32.mrf.mxu0
        %3101 = vmatprep.mubr.f32.mxu0 %v1767
        %3102 = vmatmul.mubr.f32.gmra.mxu0 %v1766
        %v3103 = vpop.f32.mrf.mxu0
        %v3104 = vadd.f32 %v2959, %v3103
        %v3105 = vpop.f32.mrf.mxu0
        %3106 = vmatprep.mubr.f32.mxu0 %v1783
        %3107 = vmatmul.mubr.f32.gmra.mxu0 %v1782
        %v3108 = vpop.f32.mrf.mxu0
        %v3109 = vadd.f32 %v2964, %v3108
        %v3110 = vpop.f32.mrf.mxu0
        %3111 = vmatprep.mubr.f32.mxu0 %v1799
        %3112 = vmatmul.mubr.f32.gmra.mxu0 %v1798
        %v3113 = vpop.f32.mrf.mxu0
        %v3114 = vadd.f32 %v2969, %v3113
        %v3115 = vpop.f32.mrf.mxu0
        %3116 = vmatprep.mubr.f32.mxu0 %v1815
        %3117 = vmatmul.mubr.f32.gmra.mxu0 %v1814
        %v3118 = vpop.f32.mrf.mxu0
        %v3119 = vadd.f32 %v2974, %v3118
        %v3120 = vpop.f32.mrf.mxu0
        %3121 = vmatprep.mubr.f32.mxu0 %v1831
        %3122 = vmatmul.mubr.f32.gmra.mxu0 %v1830
        %v3123 = vpop.f32.mrf.mxu0
        %v3124 = vadd.f32 %v2979, %v3123
        %v3125 = vpop.f32.mrf.mxu0
        %3126 = vmatprep.mubr.f32.mxu0 %v1847
        %3127 = vmatmul.mubr.f32.gmra.mxu0 %v1846
        %v3128 = vpop.f32.mrf.mxu0
        %v3129 = vadd.f32 %v2984, %v3128
        %v3130 = vpop.f32.mrf.mxu0
        %3131 = vmatprep.mubr.f32.mxu0 %v1863
        %3132 = vmatmul.mubr.f32.gmra.mxu0 %v1862
        %v3133 = vpop.f32.mrf.mxu0
        %v3134 = vadd.f32 %v2989, %v3133
        %v3135 = vpop.f32.mrf.mxu0
        %3136 = vdwg.mxu0
        %3137 = vmatprep.subr.mxu0 0.0
        %3138 = vmatpush1.msra.mxu0 %v2105
        %3139 = vmatprep.subr.mxu0 0.0
        %3140 = vmatpush1.msra.mxu0 %v2104
        %3141 = vmatprep.subr.mxu0 0.0
        %3142 = vmatpush1.msra.mxu0 %v2103
        %3143 = vmatprep.subr.mxu0 0.0
        %3144 = vmatpush1.msra.mxu0 %v2102
        %3145 = vmatprep.subr.mxu0 0.0
        %3146 = vmatpush1.msra.mxu0 %v2101
        %3147 = vmatprep.subr.mxu0 0.0
        %3148 = vmatpush1.msra.mxu0 %v2100
        %3149 = vmatprep.subr.mxu0 0.0
        %3150 = vmatpush1.msra.mxu0 %v2099
        %3151 = vmatprep.subr.mxu0 0.0
        %3152 = vmatpush1.msra.mxu0 %v2098
        %3153 = vmatprep.subr.mxu0 0.0
        %3154 = vmatpush1.msra.mxu0 %v2097
        %3155 = vmatprep.subr.mxu0 0.0
        %3156 = vmatpush1.msra.mxu0 %v2096
        %3157 = vmatprep.subr.mxu0 0.0
        %3158 = vmatpush1.msra.mxu0 %v2095
        %3159 = vmatprep.subr.mxu0 0.0
        %3160 = vmatpush1.msra.mxu0 %v2094
        %3161 = vmatprep.subr.mxu0 0.0
        %3162 = vmatpush1.msra.mxu0 %v2093
        %3163 = vmatprep.subr.mxu0 0.0
        %3164 = vmatpush1.msra.mxu0 %v2092
        %3165 = vmatprep.subr.mxu0 0.0
        %3166 = vmatpush1.msra.mxu0 %v2091
        %3167 = vmatprep.subr.mxu0 0.0
        %3168 = vmatpush1.msra.mxu0 %v2090
        %3169 = vmatprep.subr.mxu0 0.0
        %3170 = vmatpush2.msra.mxu0 %v2121
        %3171 = vmatprep.subr.mxu0 0.0
        %3172 = vmatpush2.msra.mxu0 %v2120
        %3173 = vmatprep.subr.mxu0 0.0
        %3174 = vmatpush2.msra.mxu0 %v2119
        %3175 = vmatprep.subr.mxu0 0.0
        %3176 = vmatpush2.msra.mxu0 %v2118
        %3177 = vmatprep.subr.mxu0 0.0
        %3178 = vmatpush2.msra.mxu0 %v2117
        %3179 = vmatprep.subr.mxu0 0.0
        %3180 = vmatpush2.msra.mxu0 %v2116
        %3181 = vmatprep.subr.mxu0 0.0
        %3182 = vmatpush2.msra.mxu0 %v2115
        %3183 = vmatprep.subr.mxu0 0.0
        %3184 = vmatpush2.msra.mxu0 %v2114
        %3185 = vmatprep.subr.mxu0 0.0
        %3186 = vmatpush2.msra.mxu0 %v2113
        %3187 = vmatprep.subr.mxu0 0.0
        %3188 = vmatpush2.msra.mxu0 %v2112
        %3189 = vmatprep.subr.mxu0 0.0
        %3190 = vmatpush2.msra.mxu0 %v2111
        %3191 = vmatprep.subr.mxu0 0.0
        %3192 = vmatpush2.msra.mxu0 %v2110
        %3193 = vmatprep.subr.mxu0 0.0
        %3194 = vmatpush2.msra.mxu0 %v2109
        %3195 = vmatprep.subr.mxu0 0.0
        %3196 = vmatpush2.msra.mxu0 %v2108
        %3197 = vmatprep.subr.mxu0 0.0
        %3198 = vmatpush2.msra.mxu0 %v2107
        %3199 = vmatprep.subr.mxu0 0.0
        %3200 = vmatpush2.msra.mxu0 %v2106
        %3201 = vmatprep.mubr.f32.mxu0 %v1625
        %3202 = vmatmul.mubr.f32.gmra.mxu0 %v1624
        %v3203 = vpop.f32.mrf.mxu0
        %v3204 = vadd.f32 %v3059, %v3203
        %v3205 = vpop.f32.mrf.mxu0
        %3206 = vmatprep.mubr.f32.mxu0 %v1641
        %3207 = vmatmul.mubr.f32.gmra.mxu0 %v1640
        %v3208 = vpop.f32.mrf.mxu0
        %v3209 = vadd.f32 %v3064, %v3208
        %v3210 = vpop.f32.mrf.mxu0
        %3211 = vmatprep.mubr.f32.mxu0 %v1657
        %3212 = vmatmul.mubr.f32.gmra.mxu0 %v1656
        %v3213 = vpop.f32.mrf.mxu0
        %v3214 = vadd.f32 %v3069, %v3213
        %v3215 = vpop.f32.mrf.mxu0
        %3216 = vmatprep.mubr.f32.mxu0 %v1673
        %3217 = vmatmul.mubr.f32.gmra.mxu0 %v1672
        %v3218 = vpop.f32.mrf.mxu0
        %v3219 = vadd.f32 %v3074, %v3218
        %v3220 = vpop.f32.mrf.mxu0
        %3221 = vmatprep.mubr.f32.mxu0 %v1689
        %3222 = vmatmul.mubr.f32.gmra.mxu0 %v1688
        %v3223 = vpop.f32.mrf.mxu0
        %v3224 = vadd.f32 %v3079, %v3223
        %v3225 = vpop.f32.mrf.mxu0
        %3226 = vmatprep.mubr.f32.mxu0 %v1705
        %3227 = vmatmul.mubr.f32.gmra.mxu0 %v1704
        %v3228 = vpop.f32.mrf.mxu0
        %v3229 = vadd.f32 %v3084, %v3228
        %v3230 = vpop.f32.mrf.mxu0
        %3231 = vmatprep.mubr.f32.mxu0 %v1721
        %3232 = vmatmul.mubr.f32.gmra.mxu0 %v1720
        %v3233 = vpop.f32.mrf.mxu0
        %v3234 = vadd.f32 %v3089, %v3233
        %v3235 = vpop.f32.mrf.mxu0
        %3236 = vmatprep.mubr.f32.mxu0 %v1737
        %3237 = vmatmul.mubr.f32.gmra.mxu0 %v1736
        %v3238 = vpop.f32.mrf.mxu0
        %v3239 = vadd.f32 %v3094, %v3238
        %v3240 = vpop.f32.mrf.mxu0
        %3241 = vmatprep.mubr.f32.mxu0 %v1753
        %3242 = vmatmul.mubr.f32.gmra.mxu0 %v1752
        %v3243 = vpop.f32.mrf.mxu0
        %v3244 = vadd.f32 %v3099, %v3243
        %v3245 = vpop.f32.mrf.mxu0
        %3246 = vmatprep.mubr.f32.mxu0 %v1769
        %3247 = vmatmul.mubr.f32.gmra.mxu0 %v1768
        %v3248 = vpop.f32.mrf.mxu0
        %v3249 = vadd.f32 %v3104, %v3248
        %v3250 = vpop.f32.mrf.mxu0
        %3251 = vmatprep.mubr.f32.mxu0 %v1785
        %3252 = vmatmul.mubr.f32.gmra.mxu0 %v1784
        %v3253 = vpop.f32.mrf.mxu0
        %v3254 = vadd.f32 %v3109, %v3253
        %v3255 = vpop.f32.mrf.mxu0
        %3256 = vmatprep.mubr.f32.mxu0 %v1801
        %3257 = vmatmul.mubr.f32.gmra.mxu0 %v1800
        %v3258 = vpop.f32.mrf.mxu0
        %v3259 = vadd.f32 %v3114, %v3258
        %v3260 = vpop.f32.mrf.mxu0
        %3261 = vmatprep.mubr.f32.mxu0 %v1817
        %3262 = vmatmul.mubr.f32.gmra.mxu0 %v1816
        %v3263 = vpop.f32.mrf.mxu0
        %v3264 = vadd.f32 %v3119, %v3263
        %v3265 = vpop.f32.mrf.mxu0
        %3266 = vmatprep.mubr.f32.mxu0 %v1833
        %3267 = vmatmul.mubr.f32.gmra.mxu0 %v1832
        %v3268 = vpop.f32.mrf.mxu0
        %v3269 = vadd.f32 %v3124, %v3268
        %v3270 = vpop.f32.mrf.mxu0
        %3271 = vmatprep.mubr.f32.mxu0 %v1849
        %3272 = vmatmul.mubr.f32.gmra.mxu0 %v1848
        %v3273 = vpop.f32.mrf.mxu0
        %v3274 = vadd.f32 %v3129, %v3273
        %v3275 = vpop.f32.mrf.mxu0
        %3276 = vmatprep.mubr.f32.mxu0 %v1865
        %3277 = vmatmul.mubr.f32.gmra.mxu0 %v1864
        %v3278 = vpop.f32.mrf.mxu0
        %v3279 = vadd.f32 %v3134, %v3278
        %v3280 = vpop.f32.mrf.mxu0
        %3281 = vdwg.mxu0
        %3282 = vmatprep.subr.mxu0 0.0
        %3283 = vmatpush1.msra.mxu0 %v1113
        %3284 = vmatprep.subr.mxu0 0.0
        %3285 = vmatpush1.msra.mxu0 %v1112
        %3286 = vmatprep.subr.mxu0 0.0
        %3287 = vmatpush1.msra.mxu0 %v1111
        %3288 = vmatprep.subr.mxu0 0.0
        %3289 = vmatpush1.msra.mxu0 %v1110
        %3290 = vmatprep.subr.mxu0 0.0
        %3291 = vmatpush1.msra.mxu0 %v1109
        %3292 = vmatprep.subr.mxu0 0.0
        %3293 = vmatpush1.msra.mxu0 %v1108
        %3294 = vmatprep.subr.mxu0 0.0
        %3295 = vmatpush1.msra.mxu0 %v1107
        %3296 = vmatprep.subr.mxu0 0.0
        %3297 = vmatpush1.msra.mxu0 %v1106
        %3298 = vmatprep.subr.mxu0 0.0
        %3299 = vmatpush1.msra.mxu0 %v1105
        %3300 = vmatprep.subr.mxu0 0.0
        %3301 = vmatpush1.msra.mxu0 %v1104
        %3302 = vmatprep.subr.mxu0 0.0
        %3303 = vmatpush1.msra.mxu0 %v1103
        %3304 = vmatprep.subr.mxu0 0.0
        %3305 = vmatpush1.msra.mxu0 %v1102
        %3306 = vmatprep.subr.mxu0 0.0
        %3307 = vmatpush1.msra.mxu0 %v1101
        %3308 = vmatprep.subr.mxu0 0.0
        %3309 = vmatpush1.msra.mxu0 %v1100
        %3310 = vmatprep.subr.mxu0 0.0
        %3311 = vmatpush1.msra.mxu0 %v1099
        %3312 = vmatprep.subr.mxu0 0.0
        %3313 = vmatpush1.msra.mxu0 %v1098
        %3314 = vmatprep.subr.mxu0 0.0
        %3315 = vmatpush2.msra.mxu0 %v1129
        %3316 = vmatprep.subr.mxu0 0.0
        %3317 = vmatpush2.msra.mxu0 %v1128
        %3318 = vmatprep.subr.mxu0 0.0
        %3319 = vmatpush2.msra.mxu0 %v1127
        %3320 = vmatprep.subr.mxu0 0.0
        %3321 = vmatpush2.msra.mxu0 %v1126
        %3322 = vmatprep.subr.mxu0 0.0
        %3323 = vmatpush2.msra.mxu0 %v1125
        %3324 = vmatprep.subr.mxu0 0.0
        %3325 = vmatpush2.msra.mxu0 %v1124
        %3326 = vmatprep.subr.mxu0 0.0
        %3327 = vmatpush2.msra.mxu0 %v1123
        %3328 = vmatprep.subr.mxu0 0.0
        %3329 = vmatpush2.msra.mxu0 %v1122
        %3330 = vmatprep.subr.mxu0 0.0
        %3331 = vmatpush2.msra.mxu0 %v1121
        %3332 = vmatprep.subr.mxu0 0.0
        %3333 = vmatpush2.msra.mxu0 %v1120
        %3334 = vmatprep.subr.mxu0 0.0
        %3335 = vmatpush2.msra.mxu0 %v1119
        %3336 = vmatprep.subr.mxu0 0.0
        %3337 = vmatpush2.msra.mxu0 %v1118
        %3338 = vmatprep.subr.mxu0 0.0
        %3339 = vmatpush2.msra.mxu0 %v1117
        %3340 = vmatprep.subr.mxu0 0.0
        %3341 = vmatpush2.msra.mxu0 %v1116
        %3342 = vmatprep.subr.mxu0 0.0
        %3343 = vmatpush2.msra.mxu0 %v1115
        %3344 = vmatprep.subr.mxu0 0.0
        %3345 = vmatpush2.msra.mxu0 %v1114
        %3346 = vmatprep.mubr.f32.mxu0 %v587
        %3347 = vmatmul.mubr.f32.gmra.mxu0 %v586
        %v3348 = vpop.f32.mrf.mxu0
        %v3349 = vadd.f32 %v3204, %v3348
        %v3350 = vpop.f32.mrf.mxu0
        %3351 = vmatprep.mubr.f32.mxu0 %v619
        %3352 = vmatmul.mubr.f32.gmra.mxu0 %v618
        %v3353 = vpop.f32.mrf.mxu0
        %v3354 = vadd.f32 %v3209, %v3353
        %v3355 = vpop.f32.mrf.mxu0
        %3356 = vmatprep.mubr.f32.mxu0 %v651
        %3357 = vmatmul.mubr.f32.gmra.mxu0 %v650
        %v3358 = vpop.f32.mrf.mxu0
        %v3359 = vadd.f32 %v3214, %v3358
        %v3360 = vpop.f32.mrf.mxu0
        %3361 = vmatprep.mubr.f32.mxu0 %v683
        %3362 = vmatmul.mubr.f32.gmra.mxu0 %v682
        %v3363 = vpop.f32.mrf.mxu0
        %v3364 = vadd.f32 %v3219, %v3363
        %v3365 = vpop.f32.mrf.mxu0
        %3366 = vmatprep.mubr.f32.mxu0 %v715
        %3367 = vmatmul.mubr.f32.gmra.mxu0 %v714
        %v3368 = vpop.f32.mrf.mxu0
        %v3369 = vadd.f32 %v3224, %v3368
        %v3370 = vpop.f32.mrf.mxu0
        %3371 = vmatprep.mubr.f32.mxu0 %v747
        %3372 = vmatmul.mubr.f32.gmra.mxu0 %v746
        %v3373 = vpop.f32.mrf.mxu0
        %v3374 = vadd.f32 %v3229, %v3373
        %v3375 = vpop.f32.mrf.mxu0
        %3376 = vmatprep.mubr.f32.mxu0 %v779
        %3377 = vmatmul.mubr.f32.gmra.mxu0 %v778
        %v3378 = vpop.f32.mrf.mxu0
        %v3379 = vadd.f32 %v3234, %v3378
        %v3380 = vpop.f32.mrf.mxu0
        %3381 = vmatprep.mubr.f32.mxu0 %v811
        %3382 = vmatmul.mubr.f32.gmra.mxu0 %v810
        %v3383 = vpop.f32.mrf.mxu0
        %v3384 = vadd.f32 %v3239, %v3383
        %v3385 = vpop.f32.mrf.mxu0
        %3386 = vmatprep.mubr.f32.mxu0 %v843
        %3387 = vmatmul.mubr.f32.gmra.mxu0 %v842
        %v3388 = vpop.f32.mrf.mxu0
        %v3389 = vadd.f32 %v3244, %v3388
        %v3390 = vpop.f32.mrf.mxu0
        %3391 = vmatprep.mubr.f32.mxu0 %v875
        %3392 = vmatmul.mubr.f32.gmra.mxu0 %v874
        %v3393 = vpop.f32.mrf.mxu0
        %v3394 = vadd.f32 %v3249, %v3393
        %v3395 = vpop.f32.mrf.mxu0
        %3396 = vmatprep.mubr.f32.mxu0 %v907
        %3397 = vmatmul.mubr.f32.gmra.mxu0 %v906
        %v3398 = vpop.f32.mrf.mxu0
        %v3399 = vadd.f32 %v3254, %v3398
        %v3400 = vpop.f32.mrf.mxu0
        %3401 = vmatprep.mubr.f32.mxu0 %v939
        %3402 = vmatmul.mubr.f32.gmra.mxu0 %v938
        %v3403 = vpop.f32.mrf.mxu0
        %v3404 = vadd.f32 %v3259, %v3403
        %v3405 = vpop.f32.mrf.mxu0
        %3406 = vmatprep.mubr.f32.mxu0 %v971
        %3407 = vmatmul.mubr.f32.gmra.mxu0 %v970
        %v3408 = vpop.f32.mrf.mxu0
        %v3409 = vadd.f32 %v3264, %v3408
        %v3410 = vpop.f32.mrf.mxu0
        %3411 = vmatprep.mubr.f32.mxu0 %v1003
        %3412 = vmatmul.mubr.f32.gmra.mxu0 %v1002
        %v3413 = vpop.f32.mrf.mxu0
        %v3414 = vadd.f32 %v3269, %v3413
        %v3415 = vpop.f32.mrf.mxu0
        %3416 = vmatprep.mubr.f32.mxu0 %v1035
        %3417 = vmatmul.mubr.f32.gmra.mxu0 %v1034
        %v3418 = vpop.f32.mrf.mxu0
        %v3419 = vadd.f32 %v3274, %v3418
        %v3420 = vpop.f32.mrf.mxu0
        %3421 = vmatprep.mubr.f32.mxu0 %v1067
        %3422 = vmatmul.mubr.f32.gmra.mxu0 %v1066
        %v3423 = vpop.f32.mrf.mxu0
        %v3424 = vadd.f32 %v3279, %v3423
        %v3425 = vpop.f32.mrf.mxu0
        %3426 = vdwg.mxu0
        %3427 = vmatprep.subr.mxu0 0.0
        %3428 = vmatpush1.msra.mxu0 %v1145
        %3429 = vmatprep.subr.mxu0 0.0
        %3430 = vmatpush1.msra.mxu0 %v1144
        %3431 = vmatprep.subr.mxu0 0.0
        %3432 = vmatpush1.msra.mxu0 %v1143
        %3433 = vmatprep.subr.mxu0 0.0
        %3434 = vmatpush1.msra.mxu0 %v1142
        %3435 = vmatprep.subr.mxu0 0.0
        %3436 = vmatpush1.msra.mxu0 %v1141
        %3437 = vmatprep.subr.mxu0 0.0
        %3438 = vmatpush1.msra.mxu0 %v1140
        %3439 = vmatprep.subr.mxu0 0.0
        %3440 = vmatpush1.msra.mxu0 %v1139
        %3441 = vmatprep.subr.mxu0 0.0
        %3442 = vmatpush1.msra.mxu0 %v1138
        %3443 = vmatprep.subr.mxu0 0.0
        %3444 = vmatpush1.msra.mxu0 %v1137
        %3445 = vmatprep.subr.mxu0 0.0
        %3446 = vmatpush1.msra.mxu0 %v1136
        %3447 = vmatprep.subr.mxu0 0.0
        %3448 = vmatpush1.msra.mxu0 %v1135
        %3449 = vmatprep.subr.mxu0 0.0
        %3450 = vmatpush1.msra.mxu0 %v1134
        %3451 = vmatprep.subr.mxu0 0.0
        %3452 = vmatpush1.msra.mxu0 %v1133
        %3453 = vmatprep.subr.mxu0 0.0
        %3454 = vmatpush1.msra.mxu0 %v1132
        %3455 = vmatprep.subr.mxu0 0.0
        %3456 = vmatpush1.msra.mxu0 %v1131
        %3457 = vmatprep.subr.mxu0 0.0
        %3458 = vmatpush1.msra.mxu0 %v1130
        %3459 = vmatprep.subr.mxu0 0.0
        %3460 = vmatpush2.msra.mxu0 %v1161
        %3461 = vmatprep.subr.mxu0 0.0
        %3462 = vmatpush2.msra.mxu0 %v1160
        %3463 = vmatprep.subr.mxu0 0.0
        %3464 = vmatpush2.msra.mxu0 %v1159
        %3465 = vmatprep.subr.mxu0 0.0
        %3466 = vmatpush2.msra.mxu0 %v1158
        %3467 = vmatprep.subr.mxu0 0.0
        %3468 = vmatpush2.msra.mxu0 %v1157
        %3469 = vmatprep.subr.mxu0 0.0
        %3470 = vmatpush2.msra.mxu0 %v1156
        %3471 = vmatprep.subr.mxu0 0.0
        %3472 = vmatpush2.msra.mxu0 %v1155
        %3473 = vmatprep.subr.mxu0 0.0
        %3474 = vmatpush2.msra.mxu0 %v1154
        %3475 = vmatprep.subr.mxu0 0.0
        %3476 = vmatpush2.msra.mxu0 %v1153
        %3477 = vmatprep.subr.mxu0 0.0
        %3478 = vmatpush2.msra.mxu0 %v1152
        %3479 = vmatprep.subr.mxu0 0.0
        %3480 = vmatpush2.msra.mxu0 %v1151
        %3481 = vmatprep.subr.mxu0 0.0
        %3482 = vmatpush2.msra.mxu0 %v1150
        %3483 = vmatprep.subr.mxu0 0.0
        %3484 = vmatpush2.msra.mxu0 %v1149
        %3485 = vmatprep.subr.mxu0 0.0
        %3486 = vmatpush2.msra.mxu0 %v1148
        %3487 = vmatprep.subr.mxu0 0.0
        %3488 = vmatpush2.msra.mxu0 %v1147
        %3489 = vmatprep.subr.mxu0 0.0
        %3490 = vmatpush2.msra.mxu0 %v1146
        %3491 = vmatprep.mubr.f32.mxu0 %v589
        %3492 = vmatmul.mubr.f32.gmra.mxu0 %v588
        %v3493 = vpop.f32.mrf.mxu0
        %v3494 = vadd.f32 %v3349, %v3493
        %v3495 = vpop.f32.mrf.mxu0
        %3496 = vmatprep.mubr.f32.mxu0 %v621
        %3497 = vmatmul.mubr.f32.gmra.mxu0 %v620
        %v3498 = vpop.f32.mrf.mxu0
        %v3499 = vadd.f32 %v3354, %v3498
        %v3500 = vpop.f32.mrf.mxu0
        %3501 = vmatprep.mubr.f32.mxu0 %v653
        %3502 = vmatmul.mubr.f32.gmra.mxu0 %v652
        %v3503 = vpop.f32.mrf.mxu0
        %v3504 = vadd.f32 %v3359, %v3503
        %v3505 = vpop.f32.mrf.mxu0
        %3506 = vmatprep.mubr.f32.mxu0 %v685
        %3507 = vmatmul.mubr.f32.gmra.mxu0 %v684
        %v3508 = vpop.f32.mrf.mxu0
        %v3509 = vadd.f32 %v3364, %v3508
        %v3510 = vpop.f32.mrf.mxu0
        %3511 = vmatprep.mubr.f32.mxu0 %v717
        %3512 = vmatmul.mubr.f32.gmra.mxu0 %v716
        %v3513 = vpop.f32.mrf.mxu0
        %v3514 = vadd.f32 %v3369, %v3513
        %v3515 = vpop.f32.mrf.mxu0
        %3516 = vmatprep.mubr.f32.mxu0 %v749
        %3517 = vmatmul.mubr.f32.gmra.mxu0 %v748
        %v3518 = vpop.f32.mrf.mxu0
        %v3519 = vadd.f32 %v3374, %v3518
        %v3520 = vpop.f32.mrf.mxu0
        %3521 = vmatprep.mubr.f32.mxu0 %v781
        %3522 = vmatmul.mubr.f32.gmra.mxu0 %v780
        %v3523 = vpop.f32.mrf.mxu0
        %v3524 = vadd.f32 %v3379, %v3523
        %v3525 = vpop.f32.mrf.mxu0
        %3526 = vmatprep.mubr.f32.mxu0 %v813
        %3527 = vmatmul.mubr.f32.gmra.mxu0 %v812
        %v3528 = vpop.f32.mrf.mxu0
        %v3529 = vadd.f32 %v3384, %v3528
        %v3530 = vpop.f32.mrf.mxu0
        %3531 = vmatprep.mubr.f32.mxu0 %v845
        %3532 = vmatmul.mubr.f32.gmra.mxu0 %v844
        %v3533 = vpop.f32.mrf.mxu0
        %v3534 = vadd.f32 %v3389, %v3533
        %v3535 = vpop.f32.mrf.mxu0
        %3536 = vmatprep.mubr.f32.mxu0 %v877
        %3537 = vmatmul.mubr.f32.gmra.mxu0 %v876
        %v3538 = vpop.f32.mrf.mxu0
        %v3539 = vadd.f32 %v3394, %v3538
        %v3540 = vpop.f32.mrf.mxu0
        %3541 = vmatprep.mubr.f32.mxu0 %v909
        %3542 = vmatmul.mubr.f32.gmra.mxu0 %v908
        %v3543 = vpop.f32.mrf.mxu0
        %v3544 = vadd.f32 %v3399, %v3543
        %v3545 = vpop.f32.mrf.mxu0
        %3546 = vmatprep.mubr.f32.mxu0 %v941
        %3547 = vmatmul.mubr.f32.gmra.mxu0 %v940
        %v3548 = vpop.f32.mrf.mxu0
        %v3549 = vadd.f32 %v3404, %v3548
        %v3550 = vpop.f32.mrf.mxu0
        %3551 = vmatprep.mubr.f32.mxu0 %v973
        %3552 = vmatmul.mubr.f32.gmra.mxu0 %v972
        %v3553 = vpop.f32.mrf.mxu0
        %v3554 = vadd.f32 %v3409, %v3553
        %v3555 = vpop.f32.mrf.mxu0
        %3556 = vmatprep.mubr.f32.mxu0 %v1005
        %3557 = vmatmul.mubr.f32.gmra.mxu0 %v1004
        %v3558 = vpop.f32.mrf.mxu0
        %v3559 = vadd.f32 %v3414, %v3558
        %v3560 = vpop.f32.mrf.mxu0
        %3561 = vmatprep.mubr.f32.mxu0 %v1037
        %3562 = vmatmul.mubr.f32.gmra.mxu0 %v1036
        %v3563 = vpop.f32.mrf.mxu0
        %v3564 = vadd.f32 %v3419, %v3563
        %v3565 = vpop.f32.mrf.mxu0
        %3566 = vmatprep.mubr.f32.mxu0 %v1069
        %3567 = vmatmul.mubr.f32.gmra.mxu0 %v1068
        %v3568 = vpop.f32.mrf.mxu0
        %v3569 = vadd.f32 %v3424, %v3568
        %v3570 = vpop.f32.mrf.mxu0
        %3571 = vdwg.mxu0
        %3572 = vmatprep.subr.mxu0 0.0
        %3573 = vmatpush1.msra.mxu0 %v1177
        %3574 = vmatprep.subr.mxu0 0.0
        %3575 = vmatpush1.msra.mxu0 %v1176
        %3576 = vmatprep.subr.mxu0 0.0
        %3577 = vmatpush1.msra.mxu0 %v1175
        %3578 = vmatprep.subr.mxu0 0.0
        %3579 = vmatpush1.msra.mxu0 %v1174
        %3580 = vmatprep.subr.mxu0 0.0
        %3581 = vmatpush1.msra.mxu0 %v1173
        %3582 = vmatprep.subr.mxu0 0.0
        %3583 = vmatpush1.msra.mxu0 %v1172
        %3584 = vmatprep.subr.mxu0 0.0
        %3585 = vmatpush1.msra.mxu0 %v1171
        %3586 = vmatprep.subr.mxu0 0.0
        %3587 = vmatpush1.msra.mxu0 %v1170
        %3588 = vmatprep.subr.mxu0 0.0
        %3589 = vmatpush1.msra.mxu0 %v1169
        %3590 = vmatprep.subr.mxu0 0.0
        %3591 = vmatpush1.msra.mxu0 %v1168
        %3592 = vmatprep.subr.mxu0 0.0
        %3593 = vmatpush1.msra.mxu0 %v1167
        %3594 = vmatprep.subr.mxu0 0.0
        %3595 = vmatpush1.msra.mxu0 %v1166
        %3596 = vmatprep.subr.mxu0 0.0
        %3597 = vmatpush1.msra.mxu0 %v1165
        %3598 = vmatprep.subr.mxu0 0.0
        %3599 = vmatpush1.msra.mxu0 %v1164
        %3600 = vmatprep.subr.mxu0 0.0
        %3601 = vmatpush1.msra.mxu0 %v1163
        %3602 = vmatprep.subr.mxu0 0.0
        %3603 = vmatpush1.msra.mxu0 %v1162
        %3604 = vmatprep.subr.mxu0 0.0
        %3605 = vmatpush2.msra.mxu0 %v1193
        %3606 = vmatprep.subr.mxu0 0.0
        %3607 = vmatpush2.msra.mxu0 %v1192
        %3608 = vmatprep.subr.mxu0 0.0
        %3609 = vmatpush2.msra.mxu0 %v1191
        %3610 = vmatprep.subr.mxu0 0.0
        %3611 = vmatpush2.msra.mxu0 %v1190
        %3612 = vmatprep.subr.mxu0 0.0
        %3613 = vmatpush2.msra.mxu0 %v1189
        %3614 = vmatprep.subr.mxu0 0.0
        %3615 = vmatpush2.msra.mxu0 %v1188
        %3616 = vmatprep.subr.mxu0 0.0
        %3617 = vmatpush2.msra.mxu0 %v1187
        %3618 = vmatprep.subr.mxu0 0.0
        %3619 = vmatpush2.msra.mxu0 %v1186
        %3620 = vmatprep.subr.mxu0 0.0
        %3621 = vmatpush2.msra.mxu0 %v1185
        %3622 = vmatprep.subr.mxu0 0.0
        %3623 = vmatpush2.msra.mxu0 %v1184
        %3624 = vmatprep.subr.mxu0 0.0
        %3625 = vmatpush2.msra.mxu0 %v1183
        %3626 = vmatprep.subr.mxu0 0.0
        %3627 = vmatpush2.msra.mxu0 %v1182
        %3628 = vmatprep.subr.mxu0 0.0
        %3629 = vmatpush2.msra.mxu0 %v1181
        %3630 = vmatprep.subr.mxu0 0.0
        %3631 = vmatpush2.msra.mxu0 %v1180
        %3632 = vmatprep.subr.mxu0 0.0
        %3633 = vmatpush2.msra.mxu0 %v1179
        %3634 = vmatprep.subr.mxu0 0.0
        %3635 = vmatpush2.msra.mxu0 %v1178
        %3636 = vmatprep.mubr.f32.mxu0 %v591
        %3637 = vmatmul.mubr.f32.gmra.mxu0 %v590
        %v3638 = vpop.f32.mrf.mxu0
        %v3639 = vadd.f32 %v3494, %v3638
        %v3640 = vpop.f32.mrf.mxu0
        %3641 = vmatprep.mubr.f32.mxu0 %v623
        %3642 = vmatmul.mubr.f32.gmra.mxu0 %v622
        %v3643 = vpop.f32.mrf.mxu0
        %v3644 = vadd.f32 %v3499, %v3643
        %v3645 = vpop.f32.mrf.mxu0
        %3646 = vmatprep.mubr.f32.mxu0 %v655
        %3647 = vmatmul.mubr.f32.gmra.mxu0 %v654
        %v3648 = vpop.f32.mrf.mxu0
        %v3649 = vadd.f32 %v3504, %v3648
        %v3650 = vpop.f32.mrf.mxu0
        %3651 = vmatprep.mubr.f32.mxu0 %v687
        %3652 = vmatmul.mubr.f32.gmra.mxu0 %v686
        %v3653 = vpop.f32.mrf.mxu0
        %v3654 = vadd.f32 %v3509, %v3653
        %v3655 = vpop.f32.mrf.mxu0
        %3656 = vmatprep.mubr.f32.mxu0 %v719
        %3657 = vmatmul.mubr.f32.gmra.mxu0 %v718
        %v3658 = vpop.f32.mrf.mxu0
        %v3659 = vadd.f32 %v3514, %v3658
        %v3660 = vpop.f32.mrf.mxu0
        %3661 = vmatprep.mubr.f32.mxu0 %v751
        %3662 = vmatmul.mubr.f32.gmra.mxu0 %v750
        %v3663 = vpop.f32.mrf.mxu0
        %v3664 = vadd.f32 %v3519, %v3663
        %v3665 = vpop.f32.mrf.mxu0
        %3666 = vmatprep.mubr.f32.mxu0 %v783
        %3667 = vmatmul.mubr.f32.gmra.mxu0 %v782
        %v3668 = vpop.f32.mrf.mxu0
        %v3669 = vadd.f32 %v3524, %v3668
        %v3670 = vpop.f32.mrf.mxu0
        %3671 = vmatprep.mubr.f32.mxu0 %v815
        %3672 = vmatmul.mubr.f32.gmra.mxu0 %v814
        %v3673 = vpop.f32.mrf.mxu0
        %v3674 = vadd.f32 %v3529, %v3673
        %v3675 = vpop.f32.mrf.mxu0
        %3676 = vmatprep.mubr.f32.mxu0 %v847
        %3677 = vmatmul.mubr.f32.gmra.mxu0 %v846
        %v3678 = vpop.f32.mrf.mxu0
        %v3679 = vadd.f32 %v3534, %v3678
        %v3680 = vpop.f32.mrf.mxu0
        %3681 = vmatprep.mubr.f32.mxu0 %v879
        %3682 = vmatmul.mubr.f32.gmra.mxu0 %v878
        %v3683 = vpop.f32.mrf.mxu0
        %v3684 = vadd.f32 %v3539, %v3683
        %v3685 = vpop.f32.mrf.mxu0
        %3686 = vmatprep.mubr.f32.mxu0 %v911
        %3687 = vmatmul.mubr.f32.gmra.mxu0 %v910
        %v3688 = vpop.f32.mrf.mxu0
        %v3689 = vadd.f32 %v3544, %v3688
        %v3690 = vpop.f32.mrf.mxu0
        %3691 = vmatprep.mubr.f32.mxu0 %v943
        %3692 = vmatmul.mubr.f32.gmra.mxu0 %v942
        %v3693 = vpop.f32.mrf.mxu0
        %v3694 = vadd.f32 %v3549, %v3693
        %v3695 = vpop.f32.mrf.mxu0
        %3696 = vmatprep.mubr.f32.mxu0 %v975
        %3697 = vmatmul.mubr.f32.gmra.mxu0 %v974
        %v3698 = vpop.f32.mrf.mxu0
        %v3699 = vadd.f32 %v3554, %v3698
        %v3700 = vpop.f32.mrf.mxu0
        %3701 = vmatprep.mubr.f32.mxu0 %v1007
        %3702 = vmatmul.mubr.f32.gmra.mxu0 %v1006
        %v3703 = vpop.f32.mrf.mxu0
        %v3704 = vadd.f32 %v3559, %v3703
        %v3705 = vpop.f32.mrf.mxu0
        %3706 = vmatprep.mubr.f32.mxu0 %v1039
        %3707 = vmatmul.mubr.f32.gmra.mxu0 %v1038
        %v3708 = vpop.f32.mrf.mxu0
        %v3709 = vadd.f32 %v3564, %v3708
        %v3710 = vpop.f32.mrf.mxu0
        %3711 = vmatprep.mubr.f32.mxu0 %v1071
        %3712 = vmatmul.mubr.f32.gmra.mxu0 %v1070
        %v3713 = vpop.f32.mrf.mxu0
        %v3714 = vadd.f32 %v3569, %v3713
        %v3715 = vpop.f32.mrf.mxu0
        %3716 = vdwg.mxu0
        %3717 = vmatprep.subr.mxu0 0.0
        %3718 = vmatpush1.msra.mxu0 %v1209
        %3719 = vmatprep.subr.mxu0 0.0
        %3720 = vmatpush1.msra.mxu0 %v1208
        %3721 = vmatprep.subr.mxu0 0.0
        %3722 = vmatpush1.msra.mxu0 %v1207
        %3723 = vmatprep.subr.mxu0 0.0
        %3724 = vmatpush1.msra.mxu0 %v1206
        %3725 = vmatprep.subr.mxu0 0.0
        %3726 = vmatpush1.msra.mxu0 %v1205
        %3727 = vmatprep.subr.mxu0 0.0
        %3728 = vmatpush1.msra.mxu0 %v1204
        %3729 = vmatprep.subr.mxu0 0.0
        %3730 = vmatpush1.msra.mxu0 %v1203
        %3731 = vmatprep.subr.mxu0 0.0
        %3732 = vmatpush1.msra.mxu0 %v1202
        %3733 = vmatprep.subr.mxu0 0.0
        %3734 = vmatpush1.msra.mxu0 %v1201
        %3735 = vmatprep.subr.mxu0 0.0
        %3736 = vmatpush1.msra.mxu0 %v1200
        %3737 = vmatprep.subr.mxu0 0.0
        %3738 = vmatpush1.msra.mxu0 %v1199
        %3739 = vmatprep.subr.mxu0 0.0
        %3740 = vmatpush1.msra.mxu0 %v1198
        %3741 = vmatprep.subr.mxu0 0.0
        %3742 = vmatpush1.msra.mxu0 %v1197
        %3743 = vmatprep.subr.mxu0 0.0
        %3744 = vmatpush1.msra.mxu0 %v1196
        %3745 = vmatprep.subr.mxu0 0.0
        %3746 = vmatpush1.msra.mxu0 %v1195
        %3747 = vmatprep.subr.mxu0 0.0
        %3748 = vmatpush1.msra.mxu0 %v1194
        %3749 = vmatprep.subr.mxu0 0.0
        %3750 = vmatpush2.msra.mxu0 %v1225
        %3751 = vmatprep.subr.mxu0 0.0
        %3752 = vmatpush2.msra.mxu0 %v1224
        %3753 = vmatprep.subr.mxu0 0.0
        %3754 = vmatpush2.msra.mxu0 %v1223
        %3755 = vmatprep.subr.mxu0 0.0
        %3756 = vmatpush2.msra.mxu0 %v1222
        %3757 = vmatprep.subr.mxu0 0.0
        %3758 = vmatpush2.msra.mxu0 %v1221
        %3759 = vmatprep.subr.mxu0 0.0
        %3760 = vmatpush2.msra.mxu0 %v1220
        %3761 = vmatprep.subr.mxu0 0.0
        %3762 = vmatpush2.msra.mxu0 %v1219
        %3763 = vmatprep.subr.mxu0 0.0
        %3764 = vmatpush2.msra.mxu0 %v1218
        %3765 = vmatprep.subr.mxu0 0.0
        %3766 = vmatpush2.msra.mxu0 %v1217
        %3767 = vmatprep.subr.mxu0 0.0
        %3768 = vmatpush2.msra.mxu0 %v1216
        %3769 = vmatprep.subr.mxu0 0.0
        %3770 = vmatpush2.msra.mxu0 %v1215
        %3771 = vmatprep.subr.mxu0 0.0
        %3772 = vmatpush2.msra.mxu0 %v1214
        %3773 = vmatprep.subr.mxu0 0.0
        %3774 = vmatpush2.msra.mxu0 %v1213
        %3775 = vmatprep.subr.mxu0 0.0
        %3776 = vmatpush2.msra.mxu0 %v1212
        %3777 = vmatprep.subr.mxu0 0.0
        %3778 = vmatpush2.msra.mxu0 %v1211
        %3779 = vmatprep.subr.mxu0 0.0
        %3780 = vmatpush2.msra.mxu0 %v1210
        %3781 = vmatprep.mubr.f32.mxu0 %v593
        %3782 = vmatmul.mubr.f32.gmra.mxu0 %v592
        %v3783 = vpop.f32.mrf.mxu0
        %v3784 = vadd.f32 %v3639, %v3783
        %v3785 = vpop.f32.mrf.mxu0
        %3786 = vmatprep.mubr.f32.mxu0 %v625
        %3787 = vmatmul.mubr.f32.gmra.mxu0 %v624
        %v3788 = vpop.f32.mrf.mxu0
        %v3789 = vadd.f32 %v3644, %v3788
        %v3790 = vpop.f32.mrf.mxu0
        %3791 = vmatprep.mubr.f32.mxu0 %v657
        %3792 = vmatmul.mubr.f32.gmra.mxu0 %v656
        %v3793 = vpop.f32.mrf.mxu0
        %v3794 = vadd.f32 %v3649, %v3793
        %v3795 = vpop.f32.mrf.mxu0
        %3796 = vmatprep.mubr.f32.mxu0 %v689
        %3797 = vmatmul.mubr.f32.gmra.mxu0 %v688
        %v3798 = vpop.f32.mrf.mxu0
        %v3799 = vadd.f32 %v3654, %v3798
        %v3800 = vpop.f32.mrf.mxu0
        %3801 = vmatprep.mubr.f32.mxu0 %v721
        %3802 = vmatmul.mubr.f32.gmra.mxu0 %v720
        %v3803 = vpop.f32.mrf.mxu0
        %v3804 = vadd.f32 %v3659, %v3803
        %v3805 = vpop.f32.mrf.mxu0
        %3806 = vmatprep.mubr.f32.mxu0 %v753
        %3807 = vmatmul.mubr.f32.gmra.mxu0 %v752
        %v3808 = vpop.f32.mrf.mxu0
        %v3809 = vadd.f32 %v3664, %v3808
        %v3810 = vpop.f32.mrf.mxu0
        %3811 = vmatprep.mubr.f32.mxu0 %v785
        %3812 = vmatmul.mubr.f32.gmra.mxu0 %v784
        %v3813 = vpop.f32.mrf.mxu0
        %v3814 = vadd.f32 %v3669, %v3813
        %v3815 = vpop.f32.mrf.mxu0
        %3816 = vmatprep.mubr.f32.mxu0 %v817
        %3817 = vmatmul.mubr.f32.gmra.mxu0 %v816
        %v3818 = vpop.f32.mrf.mxu0
        %v3819 = vadd.f32 %v3674, %v3818
        %v3820 = vpop.f32.mrf.mxu0
        %3821 = vmatprep.mubr.f32.mxu0 %v849
        %3822 = vmatmul.mubr.f32.gmra.mxu0 %v848
        %v3823 = vpop.f32.mrf.mxu0
        %v3824 = vadd.f32 %v3679, %v3823
        %v3825 = vpop.f32.mrf.mxu0
        %3826 = vmatprep.mubr.f32.mxu0 %v881
        %3827 = vmatmul.mubr.f32.gmra.mxu0 %v880
        %v3828 = vpop.f32.mrf.mxu0
        %v3829 = vadd.f32 %v3684, %v3828
        %v3830 = vpop.f32.mrf.mxu0
        %3831 = vmatprep.mubr.f32.mxu0 %v913
        %3832 = vmatmul.mubr.f32.gmra.mxu0 %v912
        %v3833 = vpop.f32.mrf.mxu0
        %v3834 = vadd.f32 %v3689, %v3833
        %v3835 = vpop.f32.mrf.mxu0
        %3836 = vmatprep.mubr.f32.mxu0 %v945
        %3837 = vmatmul.mubr.f32.gmra.mxu0 %v944
        %v3838 = vpop.f32.mrf.mxu0
        %v3839 = vadd.f32 %v3694, %v3838
        %v3840 = vpop.f32.mrf.mxu0
        %3841 = vmatprep.mubr.f32.mxu0 %v977
        %3842 = vmatmul.mubr.f32.gmra.mxu0 %v976
        %v3843 = vpop.f32.mrf.mxu0
        %v3844 = vadd.f32 %v3699, %v3843
        %v3845 = vpop.f32.mrf.mxu0
        %3846 = vmatprep.mubr.f32.mxu0 %v1009
        %3847 = vmatmul.mubr.f32.gmra.mxu0 %v1008
        %v3848 = vpop.f32.mrf.mxu0
        %v3849 = vadd.f32 %v3704, %v3848
        %v3850 = vpop.f32.mrf.mxu0
        %3851 = vmatprep.mubr.f32.mxu0 %v1041
        %3852 = vmatmul.mubr.f32.gmra.mxu0 %v1040
        %v3853 = vpop.f32.mrf.mxu0
        %v3854 = vadd.f32 %v3709, %v3853
        %v3855 = vpop.f32.mrf.mxu0
        %3856 = vmatprep.mubr.f32.mxu0 %v1073
        %3857 = vmatmul.mubr.f32.gmra.mxu0 %v1072
        %v3858 = vpop.f32.mrf.mxu0
        %v3859 = vadd.f32 %v3714, %v3858
        %v3860 = vpop.f32.mrf.mxu0
        %3861 = vdwg.mxu0
        %3862 = vmatprep.subr.mxu0 0.0
        %3863 = vmatpush1.msra.mxu0 %v1241
        %3864 = vmatprep.subr.mxu0 0.0
        %3865 = vmatpush1.msra.mxu0 %v1240
        %3866 = vmatprep.subr.mxu0 0.0
        %3867 = vmatpush1.msra.mxu0 %v1239
        %3868 = vmatprep.subr.mxu0 0.0
        %3869 = vmatpush1.msra.mxu0 %v1238
        %3870 = vmatprep.subr.mxu0 0.0
        %3871 = vmatpush1.msra.mxu0 %v1237
        %3872 = vmatprep.subr.mxu0 0.0
        %3873 = vmatpush1.msra.mxu0 %v1236
        %3874 = vmatprep.subr.mxu0 0.0
        %3875 = vmatpush1.msra.mxu0 %v1235
        %3876 = vmatprep.subr.mxu0 0.0
        %3877 = vmatpush1.msra.mxu0 %v1234
        %3878 = vmatprep.subr.mxu0 0.0
        %3879 = vmatpush1.msra.mxu0 %v1233
        %3880 = vmatprep.subr.mxu0 0.0
        %3881 = vmatpush1.msra.mxu0 %v1232
        %3882 = vmatprep.subr.mxu0 0.0
        %3883 = vmatpush1.msra.mxu0 %v1231
        %3884 = vmatprep.subr.mxu0 0.0
        %3885 = vmatpush1.msra.mxu0 %v1230
        %3886 = vmatprep.subr.mxu0 0.0
        %3887 = vmatpush1.msra.mxu0 %v1229
        %3888 = vmatprep.subr.mxu0 0.0
        %3889 = vmatpush1.msra.mxu0 %v1228
        %3890 = vmatprep.subr.mxu0 0.0
        %3891 = vmatpush1.msra.mxu0 %v1227
        %3892 = vmatprep.subr.mxu0 0.0
        %3893 = vmatpush1.msra.mxu0 %v1226
        %3894 = vmatprep.subr.mxu0 0.0
        %3895 = vmatpush2.msra.mxu0 %v1257
        %3896 = vmatprep.subr.mxu0 0.0
        %3897 = vmatpush2.msra.mxu0 %v1256
        %3898 = vmatprep.subr.mxu0 0.0
        %3899 = vmatpush2.msra.mxu0 %v1255
        %3900 = vmatprep.subr.mxu0 0.0
        %3901 = vmatpush2.msra.mxu0 %v1254
        %3902 = vmatprep.subr.mxu0 0.0
        %3903 = vmatpush2.msra.mxu0 %v1253
        %3904 = vmatprep.subr.mxu0 0.0
        %3905 = vmatpush2.msra.mxu0 %v1252
        %3906 = vmatprep.subr.mxu0 0.0
        %3907 = vmatpush2.msra.mxu0 %v1251
        %3908 = vmatprep.subr.mxu0 0.0
        %3909 = vmatpush2.msra.mxu0 %v1250
        %3910 = vmatprep.subr.mxu0 0.0
        %3911 = vmatpush2.msra.mxu0 %v1249
        %3912 = vmatprep.subr.mxu0 0.0
        %3913 = vmatpush2.msra.mxu0 %v1248
        %3914 = vmatprep.subr.mxu0 0.0
        %3915 = vmatpush2.msra.mxu0 %v1247
        %3916 = vmatprep.subr.mxu0 0.0
        %3917 = vmatpush2.msra.mxu0 %v1246
        %3918 = vmatprep.subr.mxu0 0.0
        %3919 = vmatpush2.msra.mxu0 %v1245
        %3920 = vmatprep.subr.mxu0 0.0
        %3921 = vmatpush2.msra.mxu0 %v1244
        %3922 = vmatprep.subr.mxu0 0.0
        %3923 = vmatpush2.msra.mxu0 %v1243
        %3924 = vmatprep.subr.mxu0 0.0
        %3925 = vmatpush2.msra.mxu0 %v1242
        %3926 = vmatprep.mubr.f32.mxu0 %v595
        %3927 = vmatmul.mubr.f32.gmra.mxu0 %v594
        %v3928 = vpop.f32.mrf.mxu0
        %v3929 = vadd.f32 %v3784, %v3928
        %v3930 = vpop.f32.mrf.mxu0
        %3931 = vmatprep.mubr.f32.mxu0 %v627
        %3932 = vmatmul.mubr.f32.gmra.mxu0 %v626
        %v3933 = vpop.f32.mrf.mxu0
        %v3934 = vadd.f32 %v3789, %v3933
        %v3935 = vpop.f32.mrf.mxu0
        %3936 = vmatprep.mubr.f32.mxu0 %v659
        %3937 = vmatmul.mubr.f32.gmra.mxu0 %v658
        %v3938 = vpop.f32.mrf.mxu0
        %v3939 = vadd.f32 %v3794, %v3938
        %v3940 = vpop.f32.mrf.mxu0
        %3941 = vmatprep.mubr.f32.mxu0 %v691
        %3942 = vmatmul.mubr.f32.gmra.mxu0 %v690
        %v3943 = vpop.f32.mrf.mxu0
        %v3944 = vadd.f32 %v3799, %v3943
        %v3945 = vpop.f32.mrf.mxu0
        %3946 = vmatprep.mubr.f32.mxu0 %v723
        %3947 = vmatmul.mubr.f32.gmra.mxu0 %v722
        %v3948 = vpop.f32.mrf.mxu0
        %v3949 = vadd.f32 %v3804, %v3948
        %v3950 = vpop.f32.mrf.mxu0
        %3951 = vmatprep.mubr.f32.mxu0 %v755
        %3952 = vmatmul.mubr.f32.gmra.mxu0 %v754
        %v3953 = vpop.f32.mrf.mxu0
        %v3954 = vadd.f32 %v3809, %v3953
        %v3955 = vpop.f32.mrf.mxu0
        %3956 = vmatprep.mubr.f32.mxu0 %v787
        %3957 = vmatmul.mubr.f32.gmra.mxu0 %v786
        %v3958 = vpop.f32.mrf.mxu0
        %v3959 = vadd.f32 %v3814, %v3958
        %v3960 = vpop.f32.mrf.mxu0
        %3961 = vmatprep.mubr.f32.mxu0 %v819
        %3962 = vmatmul.mubr.f32.gmra.mxu0 %v818
        %v3963 = vpop.f32.mrf.mxu0
        %v3964 = vadd.f32 %v3819, %v3963
        %v3965 = vpop.f32.mrf.mxu0
        %3966 = vmatprep.mubr.f32.mxu0 %v851
        %3967 = vmatmul.mubr.f32.gmra.mxu0 %v850
        %v3968 = vpop.f32.mrf.mxu0
        %v3969 = vadd.f32 %v3824, %v3968
        %v3970 = vpop.f32.mrf.mxu0
        %3971 = vmatprep.mubr.f32.mxu0 %v883
        %3972 = vmatmul.mubr.f32.gmra.mxu0 %v882
        %v3973 = vpop.f32.mrf.mxu0
        %v3974 = vadd.f32 %v3829, %v3973
        %v3975 = vpop.f32.mrf.mxu0
        %3976 = vmatprep.mubr.f32.mxu0 %v915
        %3977 = vmatmul.mubr.f32.gmra.mxu0 %v914
        %v3978 = vpop.f32.mrf.mxu0
        %v3979 = vadd.f32 %v3834, %v3978
        %v3980 = vpop.f32.mrf.mxu0
        %3981 = vmatprep.mubr.f32.mxu0 %v947
        %3982 = vmatmul.mubr.f32.gmra.mxu0 %v946
        %v3983 = vpop.f32.mrf.mxu0
        %v3984 = vadd.f32 %v3839, %v3983
        %v3985 = vpop.f32.mrf.mxu0
        %3986 = vmatprep.mubr.f32.mxu0 %v979
        %3987 = vmatmul.mubr.f32.gmra.mxu0 %v978
        %v3988 = vpop.f32.mrf.mxu0
        %v3989 = vadd.f32 %v3844, %v3988
        %v3990 = vpop.f32.mrf.mxu0
        %3991 = vmatprep.mubr.f32.mxu0 %v1011
        %3992 = vmatmul.mubr.f32.gmra.mxu0 %v1010
        %v3993 = vpop.f32.mrf.mxu0
        %v3994 = vadd.f32 %v3849, %v3993
        %v3995 = vpop.f32.mrf.mxu0
        %3996 = vmatprep.mubr.f32.mxu0 %v1043
        %3997 = vmatmul.mubr.f32.gmra.mxu0 %v1042
        %v3998 = vpop.f32.mrf.mxu0
        %v3999 = vadd.f32 %v3854, %v3998
        %v4000 = vpop.f32.mrf.mxu0
        %4001 = vmatprep.mubr.f32.mxu0 %v1075
        %4002 = vmatmul.mubr.f32.gmra.mxu0 %v1074
        %v4003 = vpop.f32.mrf.mxu0
        %v4004 = vadd.f32 %v3859, %v4003
        %v4005 = vpop.f32.mrf.mxu0
        %4006 = vdwg.mxu0
        %4007 = vmatprep.subr.mxu0 0.0
        %4008 = vmatpush1.msra.mxu0 %v1273
        %4009 = vmatprep.subr.mxu0 0.0
        %4010 = vmatpush1.msra.mxu0 %v1272
        %4011 = vmatprep.subr.mxu0 0.0
        %4012 = vmatpush1.msra.mxu0 %v1271
        %4013 = vmatprep.subr.mxu0 0.0
        %4014 = vmatpush1.msra.mxu0 %v1270
        %4015 = vmatprep.subr.mxu0 0.0
        %4016 = vmatpush1.msra.mxu0 %v1269
        %4017 = vmatprep.subr.mxu0 0.0
        %4018 = vmatpush1.msra.mxu0 %v1268
        %4019 = vmatprep.subr.mxu0 0.0
        %4020 = vmatpush1.msra.mxu0 %v1267
        %4021 = vmatprep.subr.mxu0 0.0
        %4022 = vmatpush1.msra.mxu0 %v1266
        %4023 = vmatprep.subr.mxu0 0.0
        %4024 = vmatpush1.msra.mxu0 %v1265
        %4025 = vmatprep.subr.mxu0 0.0
        %4026 = vmatpush1.msra.mxu0 %v1264
        %4027 = vmatprep.subr.mxu0 0.0
        %4028 = vmatpush1.msra.mxu0 %v1263
        %4029 = vmatprep.subr.mxu0 0.0
        %4030 = vmatpush1.msra.mxu0 %v1262
        %4031 = vmatprep.subr.mxu0 0.0
        %4032 = vmatpush1.msra.mxu0 %v1261
        %4033 = vmatprep.subr.mxu0 0.0
        %4034 = vmatpush1.msra.mxu0 %v1260
        %4035 = vmatprep.subr.mxu0 0.0
        %4036 = vmatpush1.msra.mxu0 %v1259
        %4037 = vmatprep.subr.mxu0 0.0
        %4038 = vmatpush1.msra.mxu0 %v1258
        %4039 = vmatprep.subr.mxu0 0.0
        %4040 = vmatpush2.msra.mxu0 %v1289
        %4041 = vmatprep.subr.mxu0 0.0
        %4042 = vmatpush2.msra.mxu0 %v1288
        %4043 = vmatprep.subr.mxu0 0.0
        %4044 = vmatpush2.msra.mxu0 %v1287
        %4045 = vmatprep.subr.mxu0 0.0
        %4046 = vmatpush2.msra.mxu0 %v1286
        %4047 = vmatprep.subr.mxu0 0.0
        %4048 = vmatpush2.msra.mxu0 %v1285
        %4049 = vmatprep.subr.mxu0 0.0
        %4050 = vmatpush2.msra.mxu0 %v1284
        %4051 = vmatprep.subr.mxu0 0.0
        %4052 = vmatpush2.msra.mxu0 %v1283
        %4053 = vmatprep.subr.mxu0 0.0
        %4054 = vmatpush2.msra.mxu0 %v1282
        %4055 = vmatprep.subr.mxu0 0.0
        %4056 = vmatpush2.msra.mxu0 %v1281
        %4057 = vmatprep.subr.mxu0 0.0
        %4058 = vmatpush2.msra.mxu0 %v1280
        %4059 = vmatprep.subr.mxu0 0.0
        %4060 = vmatpush2.msra.mxu0 %v1279
        %4061 = vmatprep.subr.mxu0 0.0
        %4062 = vmatpush2.msra.mxu0 %v1278
        %4063 = vmatprep.subr.mxu0 0.0
        %4064 = vmatpush2.msra.mxu0 %v1277
        %4065 = vmatprep.subr.mxu0 0.0
        %4066 = vmatpush2.msra.mxu0 %v1276
        %4067 = vmatprep.subr.mxu0 0.0
        %4068 = vmatpush2.msra.mxu0 %v1275
        %4069 = vmatprep.subr.mxu0 0.0
        %4070 = vmatpush2.msra.mxu0 %v1274
        %4071 = vmatprep.mubr.f32.mxu0 %v597
        %4072 = vmatmul.mubr.f32.gmra.mxu0 %v596
        %v4073 = vpop.f32.mrf.mxu0
        %v4074 = vadd.f32 %v3929, %v4073
        %v4075 = vpop.f32.mrf.mxu0
        %4076 = vmatprep.mubr.f32.mxu0 %v629
        %4077 = vmatmul.mubr.f32.gmra.mxu0 %v628
        %v4078 = vpop.f32.mrf.mxu0
        %v4079 = vadd.f32 %v3934, %v4078
        %v4080 = vpop.f32.mrf.mxu0
        %4081 = vmatprep.mubr.f32.mxu0 %v661
        %4082 = vmatmul.mubr.f32.gmra.mxu0 %v660
        %v4083 = vpop.f32.mrf.mxu0
        %v4084 = vadd.f32 %v3939, %v4083
        %v4085 = vpop.f32.mrf.mxu0
        %4086 = vmatprep.mubr.f32.mxu0 %v693
        %4087 = vmatmul.mubr.f32.gmra.mxu0 %v692
        %v4088 = vpop.f32.mrf.mxu0
        %v4089 = vadd.f32 %v3944, %v4088
        %v4090 = vpop.f32.mrf.mxu0
        %4091 = vmatprep.mubr.f32.mxu0 %v725
        %4092 = vmatmul.mubr.f32.gmra.mxu0 %v724
        %v4093 = vpop.f32.mrf.mxu0
        %v4094 = vadd.f32 %v3949, %v4093
        %v4095 = vpop.f32.mrf.mxu0
        %4096 = vmatprep.mubr.f32.mxu0 %v757
        %4097 = vmatmul.mubr.f32.gmra.mxu0 %v756
        %v4098 = vpop.f32.mrf.mxu0
        %v4099 = vadd.f32 %v3954, %v4098
        %v4100 = vpop.f32.mrf.mxu0
        %4101 = vmatprep.mubr.f32.mxu0 %v789
        %4102 = vmatmul.mubr.f32.gmra.mxu0 %v788
        %v4103 = vpop.f32.mrf.mxu0
        %v4104 = vadd.f32 %v3959, %v4103
        %v4105 = vpop.f32.mrf.mxu0
        %4106 = vmatprep.mubr.f32.mxu0 %v821
        %4107 = vmatmul.mubr.f32.gmra.mxu0 %v820
        %v4108 = vpop.f32.mrf.mxu0
        %v4109 = vadd.f32 %v3964, %v4108
        %v4110 = vpop.f32.mrf.mxu0
        %4111 = vmatprep.mubr.f32.mxu0 %v853
        %4112 = vmatmul.mubr.f32.gmra.mxu0 %v852
        %v4113 = vpop.f32.mrf.mxu0
        %v4114 = vadd.f32 %v3969, %v4113
        %v4115 = vpop.f32.mrf.mxu0
        %4116 = vmatprep.mubr.f32.mxu0 %v885
        %4117 = vmatmul.mubr.f32.gmra.mxu0 %v884
        %v4118 = vpop.f32.mrf.mxu0
        %v4119 = vadd.f32 %v3974, %v4118
        %v4120 = vpop.f32.mrf.mxu0
        %4121 = vmatprep.mubr.f32.mxu0 %v917
        %4122 = vmatmul.mubr.f32.gmra.mxu0 %v916
        %v4123 = vpop.f32.mrf.mxu0
        %v4124 = vadd.f32 %v3979, %v4123
        %v4125 = vpop.f32.mrf.mxu0
        %4126 = vmatprep.mubr.f32.mxu0 %v949
        %4127 = vmatmul.mubr.f32.gmra.mxu0 %v948
        %v4128 = vpop.f32.mrf.mxu0
        %v4129 = vadd.f32 %v3984, %v4128
        %v4130 = vpop.f32.mrf.mxu0
        %4131 = vmatprep.mubr.f32.mxu0 %v981
        %4132 = vmatmul.mubr.f32.gmra.mxu0 %v980
        %v4133 = vpop.f32.mrf.mxu0
        %v4134 = vadd.f32 %v3989, %v4133
        %v4135 = vpop.f32.mrf.mxu0
        %4136 = vmatprep.mubr.f32.mxu0 %v1013
        %4137 = vmatmul.mubr.f32.gmra.mxu0 %v1012
        %v4138 = vpop.f32.mrf.mxu0
        %v4139 = vadd.f32 %v3994, %v4138
        %v4140 = vpop.f32.mrf.mxu0
        %4141 = vmatprep.mubr.f32.mxu0 %v1045
        %4142 = vmatmul.mubr.f32.gmra.mxu0 %v1044
        %v4143 = vpop.f32.mrf.mxu0
        %v4144 = vadd.f32 %v3999, %v4143
        %v4145 = vpop.f32.mrf.mxu0
        %4146 = vmatprep.mubr.f32.mxu0 %v1077
        %4147 = vmatmul.mubr.f32.gmra.mxu0 %v1076
        %v4148 = vpop.f32.mrf.mxu0
        %v4149 = vadd.f32 %v4004, %v4148
        %v4150 = vpop.f32.mrf.mxu0
        %4151 = vdwg.mxu0
        %4152 = vmatprep.subr.mxu0 0.0
        %4153 = vmatpush1.msra.mxu0 %v1305
        %4154 = vmatprep.subr.mxu0 0.0
        %4155 = vmatpush1.msra.mxu0 %v1304
        %4156 = vmatprep.subr.mxu0 0.0
        %4157 = vmatpush1.msra.mxu0 %v1303
        %4158 = vmatprep.subr.mxu0 0.0
        %4159 = vmatpush1.msra.mxu0 %v1302
        %4160 = vmatprep.subr.mxu0 0.0
        %4161 = vmatpush1.msra.mxu0 %v1301
        %4162 = vmatprep.subr.mxu0 0.0
        %4163 = vmatpush1.msra.mxu0 %v1300
        %4164 = vmatprep.subr.mxu0 0.0
        %4165 = vmatpush1.msra.mxu0 %v1299
        %4166 = vmatprep.subr.mxu0 0.0
        %4167 = vmatpush1.msra.mxu0 %v1298
        %4168 = vmatprep.subr.mxu0 0.0
        %4169 = vmatpush1.msra.mxu0 %v1297
        %4170 = vmatprep.subr.mxu0 0.0
        %4171 = vmatpush1.msra.mxu0 %v1296
        %4172 = vmatprep.subr.mxu0 0.0
        %4173 = vmatpush1.msra.mxu0 %v1295
        %4174 = vmatprep.subr.mxu0 0.0
        %4175 = vmatpush1.msra.mxu0 %v1294
        %4176 = vmatprep.subr.mxu0 0.0
        %4177 = vmatpush1.msra.mxu0 %v1293
        %4178 = vmatprep.subr.mxu0 0.0
        %4179 = vmatpush1.msra.mxu0 %v1292
        %4180 = vmatprep.subr.mxu0 0.0
        %4181 = vmatpush1.msra.mxu0 %v1291
        %4182 = vmatprep.subr.mxu0 0.0
        %4183 = vmatpush1.msra.mxu0 %v1290
        %4184 = vmatprep.subr.mxu0 0.0
        %4185 = vmatpush2.msra.mxu0 %v1321
        %4186 = vmatprep.subr.mxu0 0.0
        %4187 = vmatpush2.msra.mxu0 %v1320
        %4188 = vmatprep.subr.mxu0 0.0
        %4189 = vmatpush2.msra.mxu0 %v1319
        %4190 = vmatprep.subr.mxu0 0.0
        %4191 = vmatpush2.msra.mxu0 %v1318
        %4192 = vmatprep.subr.mxu0 0.0
        %4193 = vmatpush2.msra.mxu0 %v1317
        %4194 = vmatprep.subr.mxu0 0.0
        %4195 = vmatpush2.msra.mxu0 %v1316
        %4196 = vmatprep.subr.mxu0 0.0
        %4197 = vmatpush2.msra.mxu0 %v1315
        %4198 = vmatprep.subr.mxu0 0.0
        %4199 = vmatpush2.msra.mxu0 %v1314
        %4200 = vmatprep.subr.mxu0 0.0
        %4201 = vmatpush2.msra.mxu0 %v1313
        %4202 = vmatprep.subr.mxu0 0.0
        %4203 = vmatpush2.msra.mxu0 %v1312
        %4204 = vmatprep.subr.mxu0 0.0
        %4205 = vmatpush2.msra.mxu0 %v1311
        %4206 = vmatprep.subr.mxu0 0.0
        %4207 = vmatpush2.msra.mxu0 %v1310
        %4208 = vmatprep.subr.mxu0 0.0
        %4209 = vmatpush2.msra.mxu0 %v1309
        %4210 = vmatprep.subr.mxu0 0.0
        %4211 = vmatpush2.msra.mxu0 %v1308
        %4212 = vmatprep.subr.mxu0 0.0
        %4213 = vmatpush2.msra.mxu0 %v1307
        %4214 = vmatprep.subr.mxu0 0.0
        %4215 = vmatpush2.msra.mxu0 %v1306
        %4216 = vmatprep.mubr.f32.mxu0 %v599
        %4217 = vmatmul.mubr.f32.gmra.mxu0 %v598
        %v4218 = vpop.f32.mrf.mxu0
        %v4219 = vadd.f32 %v4074, %v4218
        %v4220 = vpop.f32.mrf.mxu0
        %4221 = vmatprep.mubr.f32.mxu0 %v631
        %4222 = vmatmul.mubr.f32.gmra.mxu0 %v630
        %v4223 = vpop.f32.mrf.mxu0
        %v4224 = vadd.f32 %v4079, %v4223
        %v4225 = vpop.f32.mrf.mxu0
        %4226 = vmatprep.mubr.f32.mxu0 %v663
        %4227 = vmatmul.mubr.f32.gmra.mxu0 %v662
        %v4228 = vpop.f32.mrf.mxu0
        %v4229 = vadd.f32 %v4084, %v4228
        %v4230 = vpop.f32.mrf.mxu0
        %4231 = vmatprep.mubr.f32.mxu0 %v695
        %4232 = vmatmul.mubr.f32.gmra.mxu0 %v694
        %v4233 = vpop.f32.mrf.mxu0
        %v4234 = vadd.f32 %v4089, %v4233
        %v4235 = vpop.f32.mrf.mxu0
        %4236 = vmatprep.mubr.f32.mxu0 %v727
        %4237 = vmatmul.mubr.f32.gmra.mxu0 %v726
        %v4238 = vpop.f32.mrf.mxu0
        %v4239 = vadd.f32 %v4094, %v4238
        %v4240 = vpop.f32.mrf.mxu0
        %4241 = vmatprep.mubr.f32.mxu0 %v759
        %4242 = vmatmul.mubr.f32.gmra.mxu0 %v758
        %v4243 = vpop.f32.mrf.mxu0
        %v4244 = vadd.f32 %v4099, %v4243
        %v4245 = vpop.f32.mrf.mxu0
        %4246 = vmatprep.mubr.f32.mxu0 %v791
        %4247 = vmatmul.mubr.f32.gmra.mxu0 %v790
        %v4248 = vpop.f32.mrf.mxu0
        %v4249 = vadd.f32 %v4104, %v4248
        %v4250 = vpop.f32.mrf.mxu0
        %4251 = vmatprep.mubr.f32.mxu0 %v823
        %4252 = vmatmul.mubr.f32.gmra.mxu0 %v822
        %v4253 = vpop.f32.mrf.mxu0
        %v4254 = vadd.f32 %v4109, %v4253
        %v4255 = vpop.f32.mrf.mxu0
        %4256 = vmatprep.mubr.f32.mxu0 %v855
        %4257 = vmatmul.mubr.f32.gmra.mxu0 %v854
        %v4258 = vpop.f32.mrf.mxu0
        %v4259 = vadd.f32 %v4114, %v4258
        %v4260 = vpop.f32.mrf.mxu0
        %4261 = vmatprep.mubr.f32.mxu0 %v887
        %4262 = vmatmul.mubr.f32.gmra.mxu0 %v886
        %v4263 = vpop.f32.mrf.mxu0
        %v4264 = vadd.f32 %v4119, %v4263
        %v4265 = vpop.f32.mrf.mxu0
        %4266 = vmatprep.mubr.f32.mxu0 %v919
        %4267 = vmatmul.mubr.f32.gmra.mxu0 %v918
        %v4268 = vpop.f32.mrf.mxu0
        %v4269 = vadd.f32 %v4124, %v4268
        %v4270 = vpop.f32.mrf.mxu0
        %4271 = vmatprep.mubr.f32.mxu0 %v951
        %4272 = vmatmul.mubr.f32.gmra.mxu0 %v950
        %v4273 = vpop.f32.mrf.mxu0
        %v4274 = vadd.f32 %v4129, %v4273
        %v4275 = vpop.f32.mrf.mxu0
        %4276 = vmatprep.mubr.f32.mxu0 %v983
        %4277 = vmatmul.mubr.f32.gmra.mxu0 %v982
        %v4278 = vpop.f32.mrf.mxu0
        %v4279 = vadd.f32 %v4134, %v4278
        %v4280 = vpop.f32.mrf.mxu0
        %4281 = vmatprep.mubr.f32.mxu0 %v1015
        %4282 = vmatmul.mubr.f32.gmra.mxu0 %v1014
        %v4283 = vpop.f32.mrf.mxu0
        %v4284 = vadd.f32 %v4139, %v4283
        %v4285 = vpop.f32.mrf.mxu0
        %4286 = vmatprep.mubr.f32.mxu0 %v1047
        %4287 = vmatmul.mubr.f32.gmra.mxu0 %v1046
        %v4288 = vpop.f32.mrf.mxu0
        %v4289 = vadd.f32 %v4144, %v4288
        %v4290 = vpop.f32.mrf.mxu0
        %4291 = vmatprep.mubr.f32.mxu0 %v1079
        %4292 = vmatmul.mubr.f32.gmra.mxu0 %v1078
        %v4293 = vpop.f32.mrf.mxu0
        %v4294 = vadd.f32 %v4149, %v4293
        %v4295 = vpop.f32.mrf.mxu0
        %4296 = vdwg.mxu0
        %4297 = vmatprep.subr.mxu0 0.0
        %4298 = vmatpush1.msra.mxu0 %v1337
        %4299 = vmatprep.subr.mxu0 0.0
        %4300 = vmatpush1.msra.mxu0 %v1336
        %4301 = vmatprep.subr.mxu0 0.0
        %4302 = vmatpush1.msra.mxu0 %v1335
        %4303 = vmatprep.subr.mxu0 0.0
        %4304 = vmatpush1.msra.mxu0 %v1334
        %4305 = vmatprep.subr.mxu0 0.0
        %4306 = vmatpush1.msra.mxu0 %v1333
        %4307 = vmatprep.subr.mxu0 0.0
        %4308 = vmatpush1.msra.mxu0 %v1332
        %4309 = vmatprep.subr.mxu0 0.0
        %4310 = vmatpush1.msra.mxu0 %v1331
        %4311 = vmatprep.subr.mxu0 0.0
        %4312 = vmatpush1.msra.mxu0 %v1330
        %4313 = vmatprep.subr.mxu0 0.0
        %4314 = vmatpush1.msra.mxu0 %v1329
        %4315 = vmatprep.subr.mxu0 0.0
        %4316 = vmatpush1.msra.mxu0 %v1328
        %4317 = vmatprep.subr.mxu0 0.0
        %4318 = vmatpush1.msra.mxu0 %v1327
        %4319 = vmatprep.subr.mxu0 0.0
        %4320 = vmatpush1.msra.mxu0 %v1326
        %4321 = vmatprep.subr.mxu0 0.0
        %4322 = vmatpush1.msra.mxu0 %v1325
        %4323 = vmatprep.subr.mxu0 0.0
        %4324 = vmatpush1.msra.mxu0 %v1324
        %4325 = vmatprep.subr.mxu0 0.0
        %4326 = vmatpush1.msra.mxu0 %v1323
        %4327 = vmatprep.subr.mxu0 0.0
        %4328 = vmatpush1.msra.mxu0 %v1322
        %4329 = vmatprep.subr.mxu0 0.0
        %4330 = vmatpush2.msra.mxu0 %v1353
        %4331 = vmatprep.subr.mxu0 0.0
        %4332 = vmatpush2.msra.mxu0 %v1352
        %4333 = vmatprep.subr.mxu0 0.0
        %4334 = vmatpush2.msra.mxu0 %v1351
        %4335 = vmatprep.subr.mxu0 0.0
        %4336 = vmatpush2.msra.mxu0 %v1350
        %4337 = vmatprep.subr.mxu0 0.0
        %4338 = vmatpush2.msra.mxu0 %v1349
        %4339 = vmatprep.subr.mxu0 0.0
        %4340 = vmatpush2.msra.mxu0 %v1348
        %4341 = vmatprep.subr.mxu0 0.0
        %4342 = vmatpush2.msra.mxu0 %v1347
        %4343 = vmatprep.subr.mxu0 0.0
        %4344 = vmatpush2.msra.mxu0 %v1346
        %4345 = vmatprep.subr.mxu0 0.0
        %4346 = vmatpush2.msra.mxu0 %v1345
        %4347 = vmatprep.subr.mxu0 0.0
        %4348 = vmatpush2.msra.mxu0 %v1344
        %4349 = vmatprep.subr.mxu0 0.0
        %4350 = vmatpush2.msra.mxu0 %v1343
        %4351 = vmatprep.subr.mxu0 0.0
        %4352 = vmatpush2.msra.mxu0 %v1342
        %4353 = vmatprep.subr.mxu0 0.0
        %4354 = vmatpush2.msra.mxu0 %v1341
        %4355 = vmatprep.subr.mxu0 0.0
        %4356 = vmatpush2.msra.mxu0 %v1340
        %4357 = vmatprep.subr.mxu0 0.0
        %4358 = vmatpush2.msra.mxu0 %v1339
        %4359 = vmatprep.subr.mxu0 0.0
        %4360 = vmatpush2.msra.mxu0 %v1338
        %4361 = vmatprep.mubr.f32.mxu0 %v601
        %4362 = vmatmul.mubr.f32.gmra.mxu0 %v600
        %v4363 = vpop.f32.mrf.mxu0
        %v4364 = vadd.f32 %v4219, %v4363
        %v4365 = vpop.f32.mrf.mxu0
        %4366 = vmatprep.mubr.f32.mxu0 %v633
        %4367 = vmatmul.mubr.f32.gmra.mxu0 %v632
        %v4368 = vpop.f32.mrf.mxu0
        %v4369 = vadd.f32 %v4224, %v4368
        %v4370 = vpop.f32.mrf.mxu0
        %4371 = vmatprep.mubr.f32.mxu0 %v665
        %4372 = vmatmul.mubr.f32.gmra.mxu0 %v664
        %v4373 = vpop.f32.mrf.mxu0
        %v4374 = vadd.f32 %v4229, %v4373
        %v4375 = vpop.f32.mrf.mxu0
        %4376 = vmatprep.mubr.f32.mxu0 %v697
        %4377 = vmatmul.mubr.f32.gmra.mxu0 %v696
        %v4378 = vpop.f32.mrf.mxu0
        %v4379 = vadd.f32 %v4234, %v4378
        %v4380 = vpop.f32.mrf.mxu0
        %4381 = vmatprep.mubr.f32.mxu0 %v729
        %4382 = vmatmul.mubr.f32.gmra.mxu0 %v728
        %v4383 = vpop.f32.mrf.mxu0
        %v4384 = vadd.f32 %v4239, %v4383
        %v4385 = vpop.f32.mrf.mxu0
        %4386 = vmatprep.mubr.f32.mxu0 %v761
        %4387 = vmatmul.mubr.f32.gmra.mxu0 %v760
        %v4388 = vpop.f32.mrf.mxu0
        %v4389 = vadd.f32 %v4244, %v4388
        %v4390 = vpop.f32.mrf.mxu0
        %4391 = vmatprep.mubr.f32.mxu0 %v793
        %4392 = vmatmul.mubr.f32.gmra.mxu0 %v792
        %v4393 = vpop.f32.mrf.mxu0
        %v4394 = vadd.f32 %v4249, %v4393
        %v4395 = vpop.f32.mrf.mxu0
        %4396 = vmatprep.mubr.f32.mxu0 %v825
        %4397 = vmatmul.mubr.f32.gmra.mxu0 %v824
        %v4398 = vpop.f32.mrf.mxu0
        %v4399 = vadd.f32 %v4254, %v4398
        %v4400 = vpop.f32.mrf.mxu0
        %4401 = vmatprep.mubr.f32.mxu0 %v857
        %4402 = vmatmul.mubr.f32.gmra.mxu0 %v856
        %v4403 = vpop.f32.mrf.mxu0
        %v4404 = vadd.f32 %v4259, %v4403
        %v4405 = vpop.f32.mrf.mxu0
        %4406 = vmatprep.mubr.f32.mxu0 %v889
        %4407 = vmatmul.mubr.f32.gmra.mxu0 %v888
        %v4408 = vpop.f32.mrf.mxu0
        %v4409 = vadd.f32 %v4264, %v4408
        %v4410 = vpop.f32.mrf.mxu0
        %4411 = vmatprep.mubr.f32.mxu0 %v921
        %4412 = vmatmul.mubr.f32.gmra.mxu0 %v920
        %v4413 = vpop.f32.mrf.mxu0
        %v4414 = vadd.f32 %v4269, %v4413
        %v4415 = vpop.f32.mrf.mxu0
        %4416 = vmatprep.mubr.f32.mxu0 %v953
        %4417 = vmatmul.mubr.f32.gmra.mxu0 %v952
        %v4418 = vpop.f32.mrf.mxu0
        %v4419 = vadd.f32 %v4274, %v4418
        %v4420 = vpop.f32.mrf.mxu0
        %4421 = vmatprep.mubr.f32.mxu0 %v985
        %4422 = vmatmul.mubr.f32.gmra.mxu0 %v984
        %v4423 = vpop.f32.mrf.mxu0
        %v4424 = vadd.f32 %v4279, %v4423
        %v4425 = vpop.f32.mrf.mxu0
        %4426 = vmatprep.mubr.f32.mxu0 %v1017
        %4427 = vmatmul.mubr.f32.gmra.mxu0 %v1016
        %v4428 = vpop.f32.mrf.mxu0
        %v4429 = vadd.f32 %v4284, %v4428
        %v4430 = vpop.f32.mrf.mxu0
        %4431 = vmatprep.mubr.f32.mxu0 %v1049
        %4432 = vmatmul.mubr.f32.gmra.mxu0 %v1048
        %v4433 = vpop.f32.mrf.mxu0
        %v4434 = vadd.f32 %v4289, %v4433
        %v4435 = vpop.f32.mrf.mxu0
        %4436 = vmatprep.mubr.f32.mxu0 %v1081
        %4437 = vmatmul.mubr.f32.gmra.mxu0 %v1080
        %v4438 = vpop.f32.mrf.mxu0
        %v4439 = vadd.f32 %v4294, %v4438
        %v4440 = vpop.f32.mrf.mxu0
        %4441 = vdwg.mxu0
        %4442 = vmatprep.subr.mxu0 0.0
        %4443 = vmatpush1.msra.mxu0 %v1369
        %4444 = vmatprep.subr.mxu0 0.0
        %4445 = vmatpush1.msra.mxu0 %v1368
        %4446 = vmatprep.subr.mxu0 0.0
        %4447 = vmatpush1.msra.mxu0 %v1367
        %4448 = vmatprep.subr.mxu0 0.0
        %4449 = vmatpush1.msra.mxu0 %v1366
        %4450 = vmatprep.subr.mxu0 0.0
        %4451 = vmatpush1.msra.mxu0 %v1365
        %4452 = vmatprep.subr.mxu0 0.0
        %4453 = vmatpush1.msra.mxu0 %v1364
        %4454 = vmatprep.subr.mxu0 0.0
        %4455 = vmatpush1.msra.mxu0 %v1363
        %4456 = vmatprep.subr.mxu0 0.0
        %4457 = vmatpush1.msra.mxu0 %v1362
        %4458 = vmatprep.subr.mxu0 0.0
        %4459 = vmatpush1.msra.mxu0 %v1361
        %4460 = vmatprep.subr.mxu0 0.0
        %4461 = vmatpush1.msra.mxu0 %v1360
        %4462 = vmatprep.subr.mxu0 0.0
        %4463 = vmatpush1.msra.mxu0 %v1359
        %4464 = vmatprep.subr.mxu0 0.0
        %4465 = vmatpush1.msra.mxu0 %v1358
        %4466 = vmatprep.subr.mxu0 0.0
        %4467 = vmatpush1.msra.mxu0 %v1357
        %4468 = vmatprep.subr.mxu0 0.0
        %4469 = vmatpush1.msra.mxu0 %v1356
        %4470 = vmatprep.subr.mxu0 0.0
        %4471 = vmatpush1.msra.mxu0 %v1355
        %4472 = vmatprep.subr.mxu0 0.0
        %4473 = vmatpush1.msra.mxu0 %v1354
        %4474 = vmatprep.subr.mxu0 0.0
        %4475 = vmatpush2.msra.mxu0 %v1385
        %4476 = vmatprep.subr.mxu0 0.0
        %4477 = vmatpush2.msra.mxu0 %v1384
        %4478 = vmatprep.subr.mxu0 0.0
        %4479 = vmatpush2.msra.mxu0 %v1383
        %4480 = vmatprep.subr.mxu0 0.0
        %4481 = vmatpush2.msra.mxu0 %v1382
        %4482 = vmatprep.subr.mxu0 0.0
        %4483 = vmatpush2.msra.mxu0 %v1381
        %4484 = vmatprep.subr.mxu0 0.0
        %4485 = vmatpush2.msra.mxu0 %v1380
        %4486 = vmatprep.subr.mxu0 0.0
        %4487 = vmatpush2.msra.mxu0 %v1379
        %4488 = vmatprep.subr.mxu0 0.0
        %4489 = vmatpush2.msra.mxu0 %v1378
        %4490 = vmatprep.subr.mxu0 0.0
        %4491 = vmatpush2.msra.mxu0 %v1377
        %4492 = vmatprep.subr.mxu0 0.0
        %4493 = vmatpush2.msra.mxu0 %v1376
        %4494 = vmatprep.subr.mxu0 0.0
        %4495 = vmatpush2.msra.mxu0 %v1375
        %4496 = vmatprep.subr.mxu0 0.0
        %4497 = vmatpush2.msra.mxu0 %v1374
        %4498 = vmatprep.subr.mxu0 0.0
        %4499 = vmatpush2.msra.mxu0 %v1373
        %4500 = vmatprep.subr.mxu0 0.0
        %4501 = vmatpush2.msra.mxu0 %v1372
        %4502 = vmatprep.subr.mxu0 0.0
        %4503 = vmatpush2.msra.mxu0 %v1371
        %4504 = vmatprep.subr.mxu0 0.0
        %4505 = vmatpush2.msra.mxu0 %v1370
        %4506 = vmatprep.mubr.f32.mxu0 %v603
        %4507 = vmatmul.mubr.f32.gmra.mxu0 %v602
        %v4508 = vpop.f32.mrf.mxu0
        %v4509 = vadd.f32 %v4364, %v4508
        %v4510 = vpop.f32.mrf.mxu0
        %4511 = vmatprep.mubr.f32.mxu0 %v635
        %4512 = vmatmul.mubr.f32.gmra.mxu0 %v634
        %v4513 = vpop.f32.mrf.mxu0
        %v4514 = vadd.f32 %v4369, %v4513
        %v4515 = vpop.f32.mrf.mxu0
        %4516 = vmatprep.mubr.f32.mxu0 %v667
        %4517 = vmatmul.mubr.f32.gmra.mxu0 %v666
        %v4518 = vpop.f32.mrf.mxu0
        %v4519 = vadd.f32 %v4374, %v4518
        %v4520 = vpop.f32.mrf.mxu0
        %4521 = vmatprep.mubr.f32.mxu0 %v699
        %4522 = vmatmul.mubr.f32.gmra.mxu0 %v698
        %v4523 = vpop.f32.mrf.mxu0
        %v4524 = vadd.f32 %v4379, %v4523
        %v4525 = vpop.f32.mrf.mxu0
        %4526 = vmatprep.mubr.f32.mxu0 %v731
        %4527 = vmatmul.mubr.f32.gmra.mxu0 %v730
        %v4528 = vpop.f32.mrf.mxu0
        %v4529 = vadd.f32 %v4384, %v4528
        %v4530 = vpop.f32.mrf.mxu0
        %4531 = vmatprep.mubr.f32.mxu0 %v763
        %4532 = vmatmul.mubr.f32.gmra.mxu0 %v762
        %v4533 = vpop.f32.mrf.mxu0
        %v4534 = vadd.f32 %v4389, %v4533
        %v4535 = vpop.f32.mrf.mxu0
        %4536 = vmatprep.mubr.f32.mxu0 %v795
        %4537 = vmatmul.mubr.f32.gmra.mxu0 %v794
        %v4538 = vpop.f32.mrf.mxu0
        %v4539 = vadd.f32 %v4394, %v4538
        %v4540 = vpop.f32.mrf.mxu0
        %4541 = vmatprep.mubr.f32.mxu0 %v827
        %4542 = vmatmul.mubr.f32.gmra.mxu0 %v826
        %v4543 = vpop.f32.mrf.mxu0
        %v4544 = vadd.f32 %v4399, %v4543
        %v4545 = vpop.f32.mrf.mxu0
        %4546 = vmatprep.mubr.f32.mxu0 %v859
        %4547 = vmatmul.mubr.f32.gmra.mxu0 %v858
        %v4548 = vpop.f32.mrf.mxu0
        %v4549 = vadd.f32 %v4404, %v4548
        %v4550 = vpop.f32.mrf.mxu0
        %4551 = vmatprep.mubr.f32.mxu0 %v891
        %4552 = vmatmul.mubr.f32.gmra.mxu0 %v890
        %v4553 = vpop.f32.mrf.mxu0
        %v4554 = vadd.f32 %v4409, %v4553
        %v4555 = vpop.f32.mrf.mxu0
        %4556 = vmatprep.mubr.f32.mxu0 %v923
        %4557 = vmatmul.mubr.f32.gmra.mxu0 %v922
        %v4558 = vpop.f32.mrf.mxu0
        %v4559 = vadd.f32 %v4414, %v4558
        %v4560 = vpop.f32.mrf.mxu0
        %4561 = vmatprep.mubr.f32.mxu0 %v955
        %4562 = vmatmul.mubr.f32.gmra.mxu0 %v954
        %v4563 = vpop.f32.mrf.mxu0
        %v4564 = vadd.f32 %v4419, %v4563
        %v4565 = vpop.f32.mrf.mxu0
        %4566 = vmatprep.mubr.f32.mxu0 %v987
        %4567 = vmatmul.mubr.f32.gmra.mxu0 %v986
        %v4568 = vpop.f32.mrf.mxu0
        %v4569 = vadd.f32 %v4424, %v4568
        %v4570 = vpop.f32.mrf.mxu0
        %4571 = vmatprep.mubr.f32.mxu0 %v1019
        %4572 = vmatmul.mubr.f32.gmra.mxu0 %v1018
        %v4573 = vpop.f32.mrf.mxu0
        %v4574 = vadd.f32 %v4429, %v4573
        %v4575 = vpop.f32.mrf.mxu0
        %4576 = vmatprep.mubr.f32.mxu0 %v1051
        %4577 = vmatmul.mubr.f32.gmra.mxu0 %v1050
        %v4578 = vpop.f32.mrf.mxu0
        %v4579 = vadd.f32 %v4434, %v4578
        %v4580 = vpop.f32.mrf.mxu0
        %4581 = vmatprep.mubr.f32.mxu0 %v1083
        %4582 = vmatmul.mubr.f32.gmra.mxu0 %v1082
        %v4583 = vpop.f32.mrf.mxu0
        %v4584 = vadd.f32 %v4439, %v4583
        %v4585 = vpop.f32.mrf.mxu0
        %4586 = vdwg.mxu0
        %4587 = vmatprep.subr.mxu0 0.0
        %4588 = vmatpush1.msra.mxu0 %v1401
        %4589 = vmatprep.subr.mxu0 0.0
        %4590 = vmatpush1.msra.mxu0 %v1400
        %4591 = vmatprep.subr.mxu0 0.0
        %4592 = vmatpush1.msra.mxu0 %v1399
        %4593 = vmatprep.subr.mxu0 0.0
        %4594 = vmatpush1.msra.mxu0 %v1398
        %4595 = vmatprep.subr.mxu0 0.0
        %4596 = vmatpush1.msra.mxu0 %v1397
        %4597 = vmatprep.subr.mxu0 0.0
        %4598 = vmatpush1.msra.mxu0 %v1396
        %4599 = vmatprep.subr.mxu0 0.0
        %4600 = vmatpush1.msra.mxu0 %v1395
        %4601 = vmatprep.subr.mxu0 0.0
        %4602 = vmatpush1.msra.mxu0 %v1394
        %4603 = vmatprep.subr.mxu0 0.0
        %4604 = vmatpush1.msra.mxu0 %v1393
        %4605 = vmatprep.subr.mxu0 0.0
        %4606 = vmatpush1.msra.mxu0 %v1392
        %4607 = vmatprep.subr.mxu0 0.0
        %4608 = vmatpush1.msra.mxu0 %v1391
        %4609 = vmatprep.subr.mxu0 0.0
        %4610 = vmatpush1.msra.mxu0 %v1390
        %4611 = vmatprep.subr.mxu0 0.0
        %4612 = vmatpush1.msra.mxu0 %v1389
        %4613 = vmatprep.subr.mxu0 0.0
        %4614 = vmatpush1.msra.mxu0 %v1388
        %4615 = vmatprep.subr.mxu0 0.0
        %4616 = vmatpush1.msra.mxu0 %v1387
        %4617 = vmatprep.subr.mxu0 0.0
        %4618 = vmatpush1.msra.mxu0 %v1386
        %4619 = vmatprep.subr.mxu0 0.0
        %4620 = vmatpush2.msra.mxu0 %v1417
        %4621 = vmatprep.subr.mxu0 0.0
        %4622 = vmatpush2.msra.mxu0 %v1416
        %4623 = vmatprep.subr.mxu0 0.0
        %4624 = vmatpush2.msra.mxu0 %v1415
        %4625 = vmatprep.subr.mxu0 0.0
        %4626 = vmatpush2.msra.mxu0 %v1414
        %4627 = vmatprep.subr.mxu0 0.0
        %4628 = vmatpush2.msra.mxu0 %v1413
        %4629 = vmatprep.subr.mxu0 0.0
        %4630 = vmatpush2.msra.mxu0 %v1412
        %4631 = vmatprep.subr.mxu0 0.0
        %4632 = vmatpush2.msra.mxu0 %v1411
        %4633 = vmatprep.subr.mxu0 0.0
        %4634 = vmatpush2.msra.mxu0 %v1410
        %4635 = vmatprep.subr.mxu0 0.0
        %4636 = vmatpush2.msra.mxu0 %v1409
        %4637 = vmatprep.subr.mxu0 0.0
        %4638 = vmatpush2.msra.mxu0 %v1408
        %4639 = vmatprep.subr.mxu0 0.0
        %4640 = vmatpush2.msra.mxu0 %v1407
        %4641 = vmatprep.subr.mxu0 0.0
        %4642 = vmatpush2.msra.mxu0 %v1406
        %4643 = vmatprep.subr.mxu0 0.0
        %4644 = vmatpush2.msra.mxu0 %v1405
        %4645 = vmatprep.subr.mxu0 0.0
        %4646 = vmatpush2.msra.mxu0 %v1404
        %4647 = vmatprep.subr.mxu0 0.0
        %4648 = vmatpush2.msra.mxu0 %v1403
        %4649 = vmatprep.subr.mxu0 0.0
        %4650 = vmatpush2.msra.mxu0 %v1402
        %4651 = vmatprep.mubr.f32.mxu0 %v605
        %4652 = vmatmul.mubr.f32.gmra.mxu0 %v604
        %v4653 = vpop.f32.mrf.mxu0
        %v4654 = vadd.f32 %v4509, %v4653
        %v4655 = vpop.f32.mrf.mxu0
        %4656 = vmatprep.mubr.f32.mxu0 %v637
        %4657 = vmatmul.mubr.f32.gmra.mxu0 %v636
        %v4658 = vpop.f32.mrf.mxu0
        %v4659 = vadd.f32 %v4514, %v4658
        %v4660 = vpop.f32.mrf.mxu0
        %4661 = vmatprep.mubr.f32.mxu0 %v669
        %4662 = vmatmul.mubr.f32.gmra.mxu0 %v668
        %v4663 = vpop.f32.mrf.mxu0
        %v4664 = vadd.f32 %v4519, %v4663
        %v4665 = vpop.f32.mrf.mxu0
        %4666 = vmatprep.mubr.f32.mxu0 %v701
        %4667 = vmatmul.mubr.f32.gmra.mxu0 %v700
        %v4668 = vpop.f32.mrf.mxu0
        %v4669 = vadd.f32 %v4524, %v4668
        %v4670 = vpop.f32.mrf.mxu0
        %4671 = vmatprep.mubr.f32.mxu0 %v733
        %4672 = vmatmul.mubr.f32.gmra.mxu0 %v732
        %v4673 = vpop.f32.mrf.mxu0
        %v4674 = vadd.f32 %v4529, %v4673
        %v4675 = vpop.f32.mrf.mxu0
        %4676 = vmatprep.mubr.f32.mxu0 %v765
        %4677 = vmatmul.mubr.f32.gmra.mxu0 %v764
        %v4678 = vpop.f32.mrf.mxu0
        %v4679 = vadd.f32 %v4534, %v4678
        %v4680 = vpop.f32.mrf.mxu0
        %4681 = vmatprep.mubr.f32.mxu0 %v797
        %4682 = vmatmul.mubr.f32.gmra.mxu0 %v796
        %v4683 = vpop.f32.mrf.mxu0
        %v4684 = vadd.f32 %v4539, %v4683
        %v4685 = vpop.f32.mrf.mxu0
        %4686 = vmatprep.mubr.f32.mxu0 %v829
        %4687 = vmatmul.mubr.f32.gmra.mxu0 %v828
        %v4688 = vpop.f32.mrf.mxu0
        %v4689 = vadd.f32 %v4544, %v4688
        %v4690 = vpop.f32.mrf.mxu0
        %4691 = vmatprep.mubr.f32.mxu0 %v861
        %4692 = vmatmul.mubr.f32.gmra.mxu0 %v860
        %v4693 = vpop.f32.mrf.mxu0
        %v4694 = vadd.f32 %v4549, %v4693
        %v4695 = vpop.f32.mrf.mxu0
        %4696 = vmatprep.mubr.f32.mxu0 %v893
        %4697 = vmatmul.mubr.f32.gmra.mxu0 %v892
        %v4698 = vpop.f32.mrf.mxu0
        %v4699 = vadd.f32 %v4554, %v4698
        %v4700 = vpop.f32.mrf.mxu0
        %4701 = vmatprep.mubr.f32.mxu0 %v925
        %4702 = vmatmul.mubr.f32.gmra.mxu0 %v924
        %v4703 = vpop.f32.mrf.mxu0
        %v4704 = vadd.f32 %v4559, %v4703
        %v4705 = vpop.f32.mrf.mxu0
        %4706 = vmatprep.mubr.f32.mxu0 %v957
        %4707 = vmatmul.mubr.f32.gmra.mxu0 %v956
        %v4708 = vpop.f32.mrf.mxu0
        %v4709 = vadd.f32 %v4564, %v4708
        %v4710 = vpop.f32.mrf.mxu0
        %4711 = vmatprep.mubr.f32.mxu0 %v989
        %4712 = vmatmul.mubr.f32.gmra.mxu0 %v988
        %v4713 = vpop.f32.mrf.mxu0
        %v4714 = vadd.f32 %v4569, %v4713
        %v4715 = vpop.f32.mrf.mxu0
        %4716 = vmatprep.mubr.f32.mxu0 %v1021
        %4717 = vmatmul.mubr.f32.gmra.mxu0 %v1020
        %v4718 = vpop.f32.mrf.mxu0
        %v4719 = vadd.f32 %v4574, %v4718
        %v4720 = vpop.f32.mrf.mxu0
        %4721 = vmatprep.mubr.f32.mxu0 %v1053
        %4722 = vmatmul.mubr.f32.gmra.mxu0 %v1052
        %v4723 = vpop.f32.mrf.mxu0
        %v4724 = vadd.f32 %v4579, %v4723
        %v4725 = vpop.f32.mrf.mxu0
        %4726 = vmatprep.mubr.f32.mxu0 %v1085
        %4727 = vmatmul.mubr.f32.gmra.mxu0 %v1084
        %v4728 = vpop.f32.mrf.mxu0
        %v4729 = vadd.f32 %v4584, %v4728
        %v4730 = vpop.f32.mrf.mxu0
        %4731 = vdwg.mxu0
        %4732 = vmatprep.subr.mxu0 0.0
        %4733 = vmatpush1.msra.mxu0 %v1433
        %4734 = vmatprep.subr.mxu0 0.0
        %4735 = vmatpush1.msra.mxu0 %v1432
        %4736 = vmatprep.subr.mxu0 0.0
        %4737 = vmatpush1.msra.mxu0 %v1431
        %4738 = vmatprep.subr.mxu0 0.0
        %4739 = vmatpush1.msra.mxu0 %v1430
        %4740 = vmatprep.subr.mxu0 0.0
        %4741 = vmatpush1.msra.mxu0 %v1429
        %4742 = vmatprep.subr.mxu0 0.0
        %4743 = vmatpush1.msra.mxu0 %v1428
        %4744 = vmatprep.subr.mxu0 0.0
        %4745 = vmatpush1.msra.mxu0 %v1427
        %4746 = vmatprep.subr.mxu0 0.0
        %4747 = vmatpush1.msra.mxu0 %v1426
        %4748 = vmatprep.subr.mxu0 0.0
        %4749 = vmatpush1.msra.mxu0 %v1425
        %4750 = vmatprep.subr.mxu0 0.0
        %4751 = vmatpush1.msra.mxu0 %v1424
        %4752 = vmatprep.subr.mxu0 0.0
        %4753 = vmatpush1.msra.mxu0 %v1423
        %4754 = vmatprep.subr.mxu0 0.0
        %4755 = vmatpush1.msra.mxu0 %v1422
        %4756 = vmatprep.subr.mxu0 0.0
        %4757 = vmatpush1.msra.mxu0 %v1421
        %4758 = vmatprep.subr.mxu0 0.0
        %4759 = vmatpush1.msra.mxu0 %v1420
        %4760 = vmatprep.subr.mxu0 0.0
        %4761 = vmatpush1.msra.mxu0 %v1419
        %4762 = vmatprep.subr.mxu0 0.0
        %4763 = vmatpush1.msra.mxu0 %v1418
        %4764 = vmatprep.subr.mxu0 0.0
        %4765 = vmatpush2.msra.mxu0 %v1449
        %4766 = vmatprep.subr.mxu0 0.0
        %4767 = vmatpush2.msra.mxu0 %v1448
        %4768 = vmatprep.subr.mxu0 0.0
        %4769 = vmatpush2.msra.mxu0 %v1447
        %4770 = vmatprep.subr.mxu0 0.0
        %4771 = vmatpush2.msra.mxu0 %v1446
        %4772 = vmatprep.subr.mxu0 0.0
        %4773 = vmatpush2.msra.mxu0 %v1445
        %4774 = vmatprep.subr.mxu0 0.0
        %4775 = vmatpush2.msra.mxu0 %v1444
        %4776 = vmatprep.subr.mxu0 0.0
        %4777 = vmatpush2.msra.mxu0 %v1443
        %4778 = vmatprep.subr.mxu0 0.0
        %4779 = vmatpush2.msra.mxu0 %v1442
        %4780 = vmatprep.subr.mxu0 0.0
        %4781 = vmatpush2.msra.mxu0 %v1441
        %4782 = vmatprep.subr.mxu0 0.0
        %4783 = vmatpush2.msra.mxu0 %v1440
        %4784 = vmatprep.subr.mxu0 0.0
        %4785 = vmatpush2.msra.mxu0 %v1439
        %4786 = vmatprep.subr.mxu0 0.0
        %4787 = vmatpush2.msra.mxu0 %v1438
        %4788 = vmatprep.subr.mxu0 0.0
        %4789 = vmatpush2.msra.mxu0 %v1437
        %4790 = vmatprep.subr.mxu0 0.0
        %4791 = vmatpush2.msra.mxu0 %v1436
        %4792 = vmatprep.subr.mxu0 0.0
        %4793 = vmatpush2.msra.mxu0 %v1435
        %4794 = vmatprep.subr.mxu0 0.0
        %4795 = vmatpush2.msra.mxu0 %v1434
        %4796 = vmatprep.mubr.f32.mxu0 %v607
        %4797 = vmatmul.mubr.f32.gmra.mxu0 %v606
        %v4798 = vpop.f32.mrf.mxu0
        %v4799 = vadd.f32 %v4654, %v4798
        %v4800 = vpop.f32.mrf.mxu0
        %4801 = vmatprep.mubr.f32.mxu0 %v639
        %4802 = vmatmul.mubr.f32.gmra.mxu0 %v638
        %v4803 = vpop.f32.mrf.mxu0
        %v4804 = vadd.f32 %v4659, %v4803
        %v4805 = vpop.f32.mrf.mxu0
        %4806 = vmatprep.mubr.f32.mxu0 %v671
        %4807 = vmatmul.mubr.f32.gmra.mxu0 %v670
        %v4808 = vpop.f32.mrf.mxu0
        %v4809 = vadd.f32 %v4664, %v4808
        %v4810 = vpop.f32.mrf.mxu0
        %4811 = vmatprep.mubr.f32.mxu0 %v703
        %4812 = vmatmul.mubr.f32.gmra.mxu0 %v702
        %v4813 = vpop.f32.mrf.mxu0
        %v4814 = vadd.f32 %v4669, %v4813
        %v4815 = vpop.f32.mrf.mxu0
        %4816 = vmatprep.mubr.f32.mxu0 %v735
        %4817 = vmatmul.mubr.f32.gmra.mxu0 %v734
        %v4818 = vpop.f32.mrf.mxu0
        %v4819 = vadd.f32 %v4674, %v4818
        %v4820 = vpop.f32.mrf.mxu0
        %4821 = vmatprep.mubr.f32.mxu0 %v767
        %4822 = vmatmul.mubr.f32.gmra.mxu0 %v766
        %v4823 = vpop.f32.mrf.mxu0
        %v4824 = vadd.f32 %v4679, %v4823
        %v4825 = vpop.f32.mrf.mxu0
        %4826 = vmatprep.mubr.f32.mxu0 %v799
        %4827 = vmatmul.mubr.f32.gmra.mxu0 %v798
        %v4828 = vpop.f32.mrf.mxu0
        %v4829 = vadd.f32 %v4684, %v4828
        %v4830 = vpop.f32.mrf.mxu0
        %4831 = vmatprep.mubr.f32.mxu0 %v831
        %4832 = vmatmul.mubr.f32.gmra.mxu0 %v830
        %v4833 = vpop.f32.mrf.mxu0
        %v4834 = vadd.f32 %v4689, %v4833
        %v4835 = vpop.f32.mrf.mxu0
        %4836 = vmatprep.mubr.f32.mxu0 %v863
        %4837 = vmatmul.mubr.f32.gmra.mxu0 %v862
        %v4838 = vpop.f32.mrf.mxu0
        %v4839 = vadd.f32 %v4694, %v4838
        %v4840 = vpop.f32.mrf.mxu0
        %4841 = vmatprep.mubr.f32.mxu0 %v895
        %4842 = vmatmul.mubr.f32.gmra.mxu0 %v894
        %v4843 = vpop.f32.mrf.mxu0
        %v4844 = vadd.f32 %v4699, %v4843
        %v4845 = vpop.f32.mrf.mxu0
        %4846 = vmatprep.mubr.f32.mxu0 %v927
        %4847 = vmatmul.mubr.f32.gmra.mxu0 %v926
        %v4848 = vpop.f32.mrf.mxu0
        %v4849 = vadd.f32 %v4704, %v4848
        %v4850 = vpop.f32.mrf.mxu0
        %4851 = vmatprep.mubr.f32.mxu0 %v959
        %4852 = vmatmul.mubr.f32.gmra.mxu0 %v958
        %v4853 = vpop.f32.mrf.mxu0
        %v4854 = vadd.f32 %v4709, %v4853
        %v4855 = vpop.f32.mrf.mxu0
        %4856 = vmatprep.mubr.f32.mxu0 %v991
        %4857 = vmatmul.mubr.f32.gmra.mxu0 %v990
        %v4858 = vpop.f32.mrf.mxu0
        %v4859 = vadd.f32 %v4714, %v4858
        %v4860 = vpop.f32.mrf.mxu0
        %4861 = vmatprep.mubr.f32.mxu0 %v1023
        %4862 = vmatmul.mubr.f32.gmra.mxu0 %v1022
        %v4863 = vpop.f32.mrf.mxu0
        %v4864 = vadd.f32 %v4719, %v4863
        %v4865 = vpop.f32.mrf.mxu0
        %4866 = vmatprep.mubr.f32.mxu0 %v1055
        %4867 = vmatmul.mubr.f32.gmra.mxu0 %v1054
        %v4868 = vpop.f32.mrf.mxu0
        %v4869 = vadd.f32 %v4724, %v4868
        %v4870 = vpop.f32.mrf.mxu0
        %4871 = vmatprep.mubr.f32.mxu0 %v1087
        %4872 = vmatmul.mubr.f32.gmra.mxu0 %v1086
        %v4873 = vpop.f32.mrf.mxu0
        %v4874 = vadd.f32 %v4729, %v4873
        %v4875 = vpop.f32.mrf.mxu0
        %4876 = vdwg.mxu0
        %4877 = vmatprep.subr.mxu0 0.0
        %4878 = vmatpush1.msra.mxu0 %v1465
        %4879 = vmatprep.subr.mxu0 0.0
        %4880 = vmatpush1.msra.mxu0 %v1464
        %4881 = vmatprep.subr.mxu0 0.0
        %4882 = vmatpush1.msra.mxu0 %v1463
        %4883 = vmatprep.subr.mxu0 0.0
        %4884 = vmatpush1.msra.mxu0 %v1462
        %4885 = vmatprep.subr.mxu0 0.0
        %4886 = vmatpush1.msra.mxu0 %v1461
        %4887 = vmatprep.subr.mxu0 0.0
        %4888 = vmatpush1.msra.mxu0 %v1460
        %4889 = vmatprep.subr.mxu0 0.0
        %4890 = vmatpush1.msra.mxu0 %v1459
        %4891 = vmatprep.subr.mxu0 0.0
        %4892 = vmatpush1.msra.mxu0 %v1458
        %4893 = vmatprep.subr.mxu0 0.0
        %4894 = vmatpush1.msra.mxu0 %v1457
        %4895 = vmatprep.subr.mxu0 0.0
        %4896 = vmatpush1.msra.mxu0 %v1456
        %4897 = vmatprep.subr.mxu0 0.0
        %4898 = vmatpush1.msra.mxu0 %v1455
        %4899 = vmatprep.subr.mxu0 0.0
        %4900 = vmatpush1.msra.mxu0 %v1454
        %4901 = vmatprep.subr.mxu0 0.0
        %4902 = vmatpush1.msra.mxu0 %v1453
        %4903 = vmatprep.subr.mxu0 0.0
        %4904 = vmatpush1.msra.mxu0 %v1452
        %4905 = vmatprep.subr.mxu0 0.0
        %4906 = vmatpush1.msra.mxu0 %v1451
        %4907 = vmatprep.subr.mxu0 0.0
        %4908 = vmatpush1.msra.mxu0 %v1450
        %4909 = vmatprep.subr.mxu0 0.0
        %4910 = vmatpush2.msra.mxu0 %v1481
        %4911 = vmatprep.subr.mxu0 0.0
        %4912 = vmatpush2.msra.mxu0 %v1480
        %4913 = vmatprep.subr.mxu0 0.0
        %4914 = vmatpush2.msra.mxu0 %v1479
        %4915 = vmatprep.subr.mxu0 0.0
        %4916 = vmatpush2.msra.mxu0 %v1478
        %4917 = vmatprep.subr.mxu0 0.0
        %4918 = vmatpush2.msra.mxu0 %v1477
        %4919 = vmatprep.subr.mxu0 0.0
        %4920 = vmatpush2.msra.mxu0 %v1476
        %4921 = vmatprep.subr.mxu0 0.0
        %4922 = vmatpush2.msra.mxu0 %v1475
        %4923 = vmatprep.subr.mxu0 0.0
        %4924 = vmatpush2.msra.mxu0 %v1474
        %4925 = vmatprep.subr.mxu0 0.0
        %4926 = vmatpush2.msra.mxu0 %v1473
        %4927 = vmatprep.subr.mxu0 0.0
        %4928 = vmatpush2.msra.mxu0 %v1472
        %4929 = vmatprep.subr.mxu0 0.0
        %4930 = vmatpush2.msra.mxu0 %v1471
        %4931 = vmatprep.subr.mxu0 0.0
        %4932 = vmatpush2.msra.mxu0 %v1470
        %4933 = vmatprep.subr.mxu0 0.0
        %4934 = vmatpush2.msra.mxu0 %v1469
        %4935 = vmatprep.subr.mxu0 0.0
        %4936 = vmatpush2.msra.mxu0 %v1468
        %4937 = vmatprep.subr.mxu0 0.0
        %4938 = vmatpush2.msra.mxu0 %v1467
        %4939 = vmatprep.subr.mxu0 0.0
        %4940 = vmatpush2.msra.mxu0 %v1466
        %4941 = vmatprep.mubr.f32.mxu0 %v609
        %4942 = vmatmul.mubr.f32.gmra.mxu0 %v608
        %v4943 = vpop.f32.mrf.mxu0
        %v4944 = vadd.f32 %v4799, %v4943
        %v4945 = vpop.f32.mrf.mxu0
        %4946 = vmatprep.mubr.f32.mxu0 %v641
        %4947 = vmatmul.mubr.f32.gmra.mxu0 %v640
        %v4948 = vpop.f32.mrf.mxu0
        %v4949 = vadd.f32 %v4804, %v4948
        %v4950 = vpop.f32.mrf.mxu0
        %4951 = vmatprep.mubr.f32.mxu0 %v673
        %4952 = vmatmul.mubr.f32.gmra.mxu0 %v672
        %v4953 = vpop.f32.mrf.mxu0
        %v4954 = vadd.f32 %v4809, %v4953
        %v4955 = vpop.f32.mrf.mxu0
        %4956 = vmatprep.mubr.f32.mxu0 %v705
        %4957 = vmatmul.mubr.f32.gmra.mxu0 %v704
        %v4958 = vpop.f32.mrf.mxu0
        %v4959 = vadd.f32 %v4814, %v4958
        %v4960 = vpop.f32.mrf.mxu0
        %4961 = vmatprep.mubr.f32.mxu0 %v737
        %4962 = vmatmul.mubr.f32.gmra.mxu0 %v736
        %v4963 = vpop.f32.mrf.mxu0
        %v4964 = vadd.f32 %v4819, %v4963
        %v4965 = vpop.f32.mrf.mxu0
        %4966 = vmatprep.mubr.f32.mxu0 %v769
        %4967 = vmatmul.mubr.f32.gmra.mxu0 %v768
        %v4968 = vpop.f32.mrf.mxu0
        %v4969 = vadd.f32 %v4824, %v4968
        %v4970 = vpop.f32.mrf.mxu0
        %4971 = vmatprep.mubr.f32.mxu0 %v801
        %4972 = vmatmul.mubr.f32.gmra.mxu0 %v800
        %v4973 = vpop.f32.mrf.mxu0
        %v4974 = vadd.f32 %v4829, %v4973
        %v4975 = vpop.f32.mrf.mxu0
        %4976 = vmatprep.mubr.f32.mxu0 %v833
        %4977 = vmatmul.mubr.f32.gmra.mxu0 %v832
        %v4978 = vpop.f32.mrf.mxu0
        %v4979 = vadd.f32 %v4834, %v4978
        %v4980 = vpop.f32.mrf.mxu0
        %4981 = vmatprep.mubr.f32.mxu0 %v865
        %4982 = vmatmul.mubr.f32.gmra.mxu0 %v864
        %v4983 = vpop.f32.mrf.mxu0
        %v4984 = vadd.f32 %v4839, %v4983
        %v4985 = vpop.f32.mrf.mxu0
        %4986 = vmatprep.mubr.f32.mxu0 %v897
        %4987 = vmatmul.mubr.f32.gmra.mxu0 %v896
        %v4988 = vpop.f32.mrf.mxu0
        %v4989 = vadd.f32 %v4844, %v4988
        %v4990 = vpop.f32.mrf.mxu0
        %4991 = vmatprep.mubr.f32.mxu0 %v929
        %4992 = vmatmul.mubr.f32.gmra.mxu0 %v928
        %v4993 = vpop.f32.mrf.mxu0
        %v4994 = vadd.f32 %v4849, %v4993
        %v4995 = vpop.f32.mrf.mxu0
        %4996 = vmatprep.mubr.f32.mxu0 %v961
        %4997 = vmatmul.mubr.f32.gmra.mxu0 %v960
        %v4998 = vpop.f32.mrf.mxu0
        %v4999 = vadd.f32 %v4854, %v4998
        %v5000 = vpop.f32.mrf.mxu0
        %5001 = vmatprep.mubr.f32.mxu0 %v993
        %5002 = vmatmul.mubr.f32.gmra.mxu0 %v992
        %v5003 = vpop.f32.mrf.mxu0
        %v5004 = vadd.f32 %v4859, %v5003
        %v5005 = vpop.f32.mrf.mxu0
        %5006 = vmatprep.mubr.f32.mxu0 %v1025
        %5007 = vmatmul.mubr.f32.gmra.mxu0 %v1024
        %v5008 = vpop.f32.mrf.mxu0
        %v5009 = vadd.f32 %v4864, %v5008
        %v5010 = vpop.f32.mrf.mxu0
        %5011 = vmatprep.mubr.f32.mxu0 %v1057
        %5012 = vmatmul.mubr.f32.gmra.mxu0 %v1056
        %v5013 = vpop.f32.mrf.mxu0
        %v5014 = vadd.f32 %v4869, %v5013
        %v5015 = vpop.f32.mrf.mxu0
        %5016 = vmatprep.mubr.f32.mxu0 %v1089
        %5017 = vmatmul.mubr.f32.gmra.mxu0 %v1088
        %v5018 = vpop.f32.mrf.mxu0
        %v5019 = vadd.f32 %v4874, %v5018
        %v5020 = vpop.f32.mrf.mxu0
        %5021 = vdwg.mxu0
        %5022 = vmatprep.subr.mxu0 0.0
        %5023 = vmatpush1.msra.mxu0 %v1497
        %5024 = vmatprep.subr.mxu0 0.0
        %5025 = vmatpush1.msra.mxu0 %v1496
        %5026 = vmatprep.subr.mxu0 0.0
        %5027 = vmatpush1.msra.mxu0 %v1495
        %5028 = vmatprep.subr.mxu0 0.0
        %5029 = vmatpush1.msra.mxu0 %v1494
        %5030 = vmatprep.subr.mxu0 0.0
        %5031 = vmatpush1.msra.mxu0 %v1493
        %5032 = vmatprep.subr.mxu0 0.0
        %5033 = vmatpush1.msra.mxu0 %v1492
        %5034 = vmatprep.subr.mxu0 0.0
        %5035 = vmatpush1.msra.mxu0 %v1491
        %5036 = vmatprep.subr.mxu0 0.0
        %5037 = vmatpush1.msra.mxu0 %v1490
        %5038 = vmatprep.subr.mxu0 0.0
        %5039 = vmatpush1.msra.mxu0 %v1489
        %5040 = vmatprep.subr.mxu0 0.0
        %5041 = vmatpush1.msra.mxu0 %v1488
        %5042 = vmatprep.subr.mxu0 0.0
        %5043 = vmatpush1.msra.mxu0 %v1487
        %5044 = vmatprep.subr.mxu0 0.0
        %5045 = vmatpush1.msra.mxu0 %v1486
        %5046 = vmatprep.subr.mxu0 0.0
        %5047 = vmatpush1.msra.mxu0 %v1485
        %5048 = vmatprep.subr.mxu0 0.0
        %5049 = vmatpush1.msra.mxu0 %v1484
        %5050 = vmatprep.subr.mxu0 0.0
        %5051 = vmatpush1.msra.mxu0 %v1483
        %5052 = vmatprep.subr.mxu0 0.0
        %5053 = vmatpush1.msra.mxu0 %v1482
        %5054 = vmatprep.subr.mxu0 0.0
        %5055 = vmatpush2.msra.mxu0 %v1513
        %5056 = vmatprep.subr.mxu0 0.0
        %5057 = vmatpush2.msra.mxu0 %v1512
        %5058 = vmatprep.subr.mxu0 0.0
        %5059 = vmatpush2.msra.mxu0 %v1511
        %5060 = vmatprep.subr.mxu0 0.0
        %5061 = vmatpush2.msra.mxu0 %v1510
        %5062 = vmatprep.subr.mxu0 0.0
        %5063 = vmatpush2.msra.mxu0 %v1509
        %5064 = vmatprep.subr.mxu0 0.0
        %5065 = vmatpush2.msra.mxu0 %v1508
        %5066 = vmatprep.subr.mxu0 0.0
        %5067 = vmatpush2.msra.mxu0 %v1507
        %5068 = vmatprep.subr.mxu0 0.0
        %5069 = vmatpush2.msra.mxu0 %v1506
        %5070 = vmatprep.subr.mxu0 0.0
        %5071 = vmatpush2.msra.mxu0 %v1505
        %5072 = vmatprep.subr.mxu0 0.0
        %5073 = vmatpush2.msra.mxu0 %v1504
        %5074 = vmatprep.subr.mxu0 0.0
        %5075 = vmatpush2.msra.mxu0 %v1503
        %5076 = vmatprep.subr.mxu0 0.0
        %5077 = vmatpush2.msra.mxu0 %v1502
        %5078 = vmatprep.subr.mxu0 0.0
        %5079 = vmatpush2.msra.mxu0 %v1501
        %5080 = vmatprep.subr.mxu0 0.0
        %5081 = vmatpush2.msra.mxu0 %v1500
        %5082 = vmatprep.subr.mxu0 0.0
        %5083 = vmatpush2.msra.mxu0 %v1499
        %5084 = vmatprep.subr.mxu0 0.0
        %5085 = vmatpush2.msra.mxu0 %v1498
        %5086 = vmatprep.mubr.f32.mxu0 %v611
        %5087 = vmatmul.mubr.f32.gmra.mxu0 %v610
        %v5088 = vpop.f32.mrf.mxu0
        %v5089 = vadd.f32 %v4944, %v5088
        %v5090 = vpop.f32.mrf.mxu0
        %5091 = vmatprep.mubr.f32.mxu0 %v643
        %5092 = vmatmul.mubr.f32.gmra.mxu0 %v642
        %v5093 = vpop.f32.mrf.mxu0
        %v5094 = vadd.f32 %v4949, %v5093
        %v5095 = vpop.f32.mrf.mxu0
        %5096 = vmatprep.mubr.f32.mxu0 %v675
        %5097 = vmatmul.mubr.f32.gmra.mxu0 %v674
        %v5098 = vpop.f32.mrf.mxu0
        %v5099 = vadd.f32 %v4954, %v5098
        %v5100 = vpop.f32.mrf.mxu0
        %5101 = vmatprep.mubr.f32.mxu0 %v707
        %5102 = vmatmul.mubr.f32.gmra.mxu0 %v706
        %v5103 = vpop.f32.mrf.mxu0
        %v5104 = vadd.f32 %v4959, %v5103
        %v5105 = vpop.f32.mrf.mxu0
        %5106 = vmatprep.mubr.f32.mxu0 %v739
        %5107 = vmatmul.mubr.f32.gmra.mxu0 %v738
        %v5108 = vpop.f32.mrf.mxu0
        %v5109 = vadd.f32 %v4964, %v5108
        %v5110 = vpop.f32.mrf.mxu0
        %5111 = vmatprep.mubr.f32.mxu0 %v771
        %5112 = vmatmul.mubr.f32.gmra.mxu0 %v770
        %v5113 = vpop.f32.mrf.mxu0
        %v5114 = vadd.f32 %v4969, %v5113
        %v5115 = vpop.f32.mrf.mxu0
        %5116 = vmatprep.mubr.f32.mxu0 %v803
        %5117 = vmatmul.mubr.f32.gmra.mxu0 %v802
        %v5118 = vpop.f32.mrf.mxu0
        %v5119 = vadd.f32 %v4974, %v5118
        %v5120 = vpop.f32.mrf.mxu0
        %5121 = vmatprep.mubr.f32.mxu0 %v835
        %5122 = vmatmul.mubr.f32.gmra.mxu0 %v834
        %v5123 = vpop.f32.mrf.mxu0
        %v5124 = vadd.f32 %v4979, %v5123
        %v5125 = vpop.f32.mrf.mxu0
        %5126 = vmatprep.mubr.f32.mxu0 %v867
        %5127 = vmatmul.mubr.f32.gmra.mxu0 %v866
        %v5128 = vpop.f32.mrf.mxu0
        %v5129 = vadd.f32 %v4984, %v5128
        %v5130 = vpop.f32.mrf.mxu0
        %5131 = vmatprep.mubr.f32.mxu0 %v899
        %5132 = vmatmul.mubr.f32.gmra.mxu0 %v898
        %v5133 = vpop.f32.mrf.mxu0
        %v5134 = vadd.f32 %v4989, %v5133
        %v5135 = vpop.f32.mrf.mxu0
        %5136 = vmatprep.mubr.f32.mxu0 %v931
        %5137 = vmatmul.mubr.f32.gmra.mxu0 %v930
        %v5138 = vpop.f32.mrf.mxu0
        %v5139 = vadd.f32 %v4994, %v5138
        %v5140 = vpop.f32.mrf.mxu0
        %5141 = vmatprep.mubr.f32.mxu0 %v963
        %5142 = vmatmul.mubr.f32.gmra.mxu0 %v962
        %v5143 = vpop.f32.mrf.mxu0
        %v5144 = vadd.f32 %v4999, %v5143
        %v5145 = vpop.f32.mrf.mxu0
        %5146 = vmatprep.mubr.f32.mxu0 %v995
        %5147 = vmatmul.mubr.f32.gmra.mxu0 %v994
        %v5148 = vpop.f32.mrf.mxu0
        %v5149 = vadd.f32 %v5004, %v5148
        %v5150 = vpop.f32.mrf.mxu0
        %5151 = vmatprep.mubr.f32.mxu0 %v1027
        %5152 = vmatmul.mubr.f32.gmra.mxu0 %v1026
        %v5153 = vpop.f32.mrf.mxu0
        %v5154 = vadd.f32 %v5009, %v5153
        %v5155 = vpop.f32.mrf.mxu0
        %5156 = vmatprep.mubr.f32.mxu0 %v1059
        %5157 = vmatmul.mubr.f32.gmra.mxu0 %v1058
        %v5158 = vpop.f32.mrf.mxu0
        %v5159 = vadd.f32 %v5014, %v5158
        %v5160 = vpop.f32.mrf.mxu0
        %5161 = vmatprep.mubr.f32.mxu0 %v1091
        %5162 = vmatmul.mubr.f32.gmra.mxu0 %v1090
        %v5163 = vpop.f32.mrf.mxu0
        %v5164 = vadd.f32 %v5019, %v5163
        %v5165 = vpop.f32.mrf.mxu0
        %5166 = vdwg.mxu0
        %5167 = vmatprep.subr.mxu0 0.0
        %5168 = vmatpush1.msra.mxu0 %v1529
        %5169 = vmatprep.subr.mxu0 0.0
        %5170 = vmatpush1.msra.mxu0 %v1528
        %5171 = vmatprep.subr.mxu0 0.0
        %5172 = vmatpush1.msra.mxu0 %v1527
        %5173 = vmatprep.subr.mxu0 0.0
        %5174 = vmatpush1.msra.mxu0 %v1526
        %5175 = vmatprep.subr.mxu0 0.0
        %5176 = vmatpush1.msra.mxu0 %v1525
        %5177 = vmatprep.subr.mxu0 0.0
        %5178 = vmatpush1.msra.mxu0 %v1524
        %5179 = vmatprep.subr.mxu0 0.0
        %5180 = vmatpush1.msra.mxu0 %v1523
        %5181 = vmatprep.subr.mxu0 0.0
        %5182 = vmatpush1.msra.mxu0 %v1522
        %5183 = vmatprep.subr.mxu0 0.0
        %5184 = vmatpush1.msra.mxu0 %v1521
        %5185 = vmatprep.subr.mxu0 0.0
        %5186 = vmatpush1.msra.mxu0 %v1520
        %5187 = vmatprep.subr.mxu0 0.0
        %5188 = vmatpush1.msra.mxu0 %v1519
        %5189 = vmatprep.subr.mxu0 0.0
        %5190 = vmatpush1.msra.mxu0 %v1518
        %5191 = vmatprep.subr.mxu0 0.0
        %5192 = vmatpush1.msra.mxu0 %v1517
        %5193 = vmatprep.subr.mxu0 0.0
        %5194 = vmatpush1.msra.mxu0 %v1516
        %5195 = vmatprep.subr.mxu0 0.0
        %5196 = vmatpush1.msra.mxu0 %v1515
        %5197 = vmatprep.subr.mxu0 0.0
        %5198 = vmatpush1.msra.mxu0 %v1514
        %5199 = vmatprep.subr.mxu0 0.0
        %5200 = vmatpush2.msra.mxu0 %v1545
        %5201 = vmatprep.subr.mxu0 0.0
        %5202 = vmatpush2.msra.mxu0 %v1544
        %5203 = vmatprep.subr.mxu0 0.0
        %5204 = vmatpush2.msra.mxu0 %v1543
        %5205 = vmatprep.subr.mxu0 0.0
        %5206 = vmatpush2.msra.mxu0 %v1542
        %5207 = vmatprep.subr.mxu0 0.0
        %5208 = vmatpush2.msra.mxu0 %v1541
        %5209 = vmatprep.subr.mxu0 0.0
        %5210 = vmatpush2.msra.mxu0 %v1540
        %5211 = vmatprep.subr.mxu0 0.0
        %5212 = vmatpush2.msra.mxu0 %v1539
        %5213 = vmatprep.subr.mxu0 0.0
        %5214 = vmatpush2.msra.mxu0 %v1538
        %5215 = vmatprep.subr.mxu0 0.0
        %5216 = vmatpush2.msra.mxu0 %v1537
        %5217 = vmatprep.subr.mxu0 0.0
        %5218 = vmatpush2.msra.mxu0 %v1536
        %5219 = vmatprep.subr.mxu0 0.0
        %5220 = vmatpush2.msra.mxu0 %v1535
        %5221 = vmatprep.subr.mxu0 0.0
        %5222 = vmatpush2.msra.mxu0 %v1534
        %5223 = vmatprep.subr.mxu0 0.0
        %5224 = vmatpush2.msra.mxu0 %v1533
        %5225 = vmatprep.subr.mxu0 0.0
        %5226 = vmatpush2.msra.mxu0 %v1532
        %5227 = vmatprep.subr.mxu0 0.0
        %5228 = vmatpush2.msra.mxu0 %v1531
        %5229 = vmatprep.subr.mxu0 0.0
        %5230 = vmatpush2.msra.mxu0 %v1530
        %5231 = vmatprep.mubr.f32.mxu0 %v613
        %5232 = vmatmul.mubr.f32.gmra.mxu0 %v612
        %v5233 = vpop.f32.mrf.mxu0
        %v5234 = vadd.f32 %v5089, %v5233
        %v5235 = vpop.f32.mrf.mxu0
        %5236 = vmatprep.mubr.f32.mxu0 %v645
        %5237 = vmatmul.mubr.f32.gmra.mxu0 %v644
        %v5238 = vpop.f32.mrf.mxu0
        %v5239 = vadd.f32 %v5094, %v5238
        %v5240 = vpop.f32.mrf.mxu0
        %5241 = vmatprep.mubr.f32.mxu0 %v677
        %5242 = vmatmul.mubr.f32.gmra.mxu0 %v676
        %v5243 = vpop.f32.mrf.mxu0
        %v5244 = vadd.f32 %v5099, %v5243
        %v5245 = vpop.f32.mrf.mxu0
        %5246 = vmatprep.mubr.f32.mxu0 %v709
        %5247 = vmatmul.mubr.f32.gmra.mxu0 %v708
        %v5248 = vpop.f32.mrf.mxu0
        %v5249 = vadd.f32 %v5104, %v5248
        %v5250 = vpop.f32.mrf.mxu0
        %5251 = vmatprep.mubr.f32.mxu0 %v741
        %5252 = vmatmul.mubr.f32.gmra.mxu0 %v740
        %v5253 = vpop.f32.mrf.mxu0
        %v5254 = vadd.f32 %v5109, %v5253
        %v5255 = vpop.f32.mrf.mxu0
        %5256 = vmatprep.mubr.f32.mxu0 %v773
        %5257 = vmatmul.mubr.f32.gmra.mxu0 %v772
        %v5258 = vpop.f32.mrf.mxu0
        %v5259 = vadd.f32 %v5114, %v5258
        %v5260 = vpop.f32.mrf.mxu0
        %5261 = vmatprep.mubr.f32.mxu0 %v805
        %5262 = vmatmul.mubr.f32.gmra.mxu0 %v804
        %v5263 = vpop.f32.mrf.mxu0
        %v5264 = vadd.f32 %v5119, %v5263
        %v5265 = vpop.f32.mrf.mxu0
        %5266 = vmatprep.mubr.f32.mxu0 %v837
        %5267 = vmatmul.mubr.f32.gmra.mxu0 %v836
        %v5268 = vpop.f32.mrf.mxu0
        %v5269 = vadd.f32 %v5124, %v5268
        %v5270 = vpop.f32.mrf.mxu0
        %5271 = vmatprep.mubr.f32.mxu0 %v869
        %5272 = vmatmul.mubr.f32.gmra.mxu0 %v868
        %v5273 = vpop.f32.mrf.mxu0
        %v5274 = vadd.f32 %v5129, %v5273
        %v5275 = vpop.f32.mrf.mxu0
        %5276 = vmatprep.mubr.f32.mxu0 %v901
        %5277 = vmatmul.mubr.f32.gmra.mxu0 %v900
        %v5278 = vpop.f32.mrf.mxu0
        %v5279 = vadd.f32 %v5134, %v5278
        %v5280 = vpop.f32.mrf.mxu0
        %5281 = vmatprep.mubr.f32.mxu0 %v933
        %5282 = vmatmul.mubr.f32.gmra.mxu0 %v932
        %v5283 = vpop.f32.mrf.mxu0
        %v5284 = vadd.f32 %v5139, %v5283
        %v5285 = vpop.f32.mrf.mxu0
        %5286 = vmatprep.mubr.f32.mxu0 %v965
        %5287 = vmatmul.mubr.f32.gmra.mxu0 %v964
        %v5288 = vpop.f32.mrf.mxu0
        %v5289 = vadd.f32 %v5144, %v5288
        %v5290 = vpop.f32.mrf.mxu0
        %5291 = vmatprep.mubr.f32.mxu0 %v997
        %5292 = vmatmul.mubr.f32.gmra.mxu0 %v996
        %v5293 = vpop.f32.mrf.mxu0
        %v5294 = vadd.f32 %v5149, %v5293
        %v5295 = vpop.f32.mrf.mxu0
        %5296 = vmatprep.mubr.f32.mxu0 %v1029
        %5297 = vmatmul.mubr.f32.gmra.mxu0 %v1028
        %v5298 = vpop.f32.mrf.mxu0
        %v5299 = vadd.f32 %v5154, %v5298
        %v5300 = vpop.f32.mrf.mxu0
        %5301 = vmatprep.mubr.f32.mxu0 %v1061
        %5302 = vmatmul.mubr.f32.gmra.mxu0 %v1060
        %v5303 = vpop.f32.mrf.mxu0
        %v5304 = vadd.f32 %v5159, %v5303
        %v5305 = vpop.f32.mrf.mxu0
        %5306 = vmatprep.mubr.f32.mxu0 %v1093
        %5307 = vmatmul.mubr.f32.gmra.mxu0 %v1092
        %v5308 = vpop.f32.mrf.mxu0
        %v5309 = vadd.f32 %v5164, %v5308
        %v5310 = vpop.f32.mrf.mxu0
        %5311 = vdwg.mxu0
        %5312 = vmatprep.subr.mxu0 0.0
        %5313 = vmatpush1.msra.mxu0 %v1561
        %5314 = vmatprep.subr.mxu0 0.0
        %5315 = vmatpush1.msra.mxu0 %v1560
        %5316 = vmatprep.subr.mxu0 0.0
        %5317 = vmatpush1.msra.mxu0 %v1559
        %5318 = vmatprep.subr.mxu0 0.0
        %5319 = vmatpush1.msra.mxu0 %v1558
        %5320 = vmatprep.subr.mxu0 0.0
        %5321 = vmatpush1.msra.mxu0 %v1557
        %5322 = vmatprep.subr.mxu0 0.0
        %5323 = vmatpush1.msra.mxu0 %v1556
        %5324 = vmatprep.subr.mxu0 0.0
        %5325 = vmatpush1.msra.mxu0 %v1555
        %5326 = vmatprep.subr.mxu0 0.0
        %5327 = vmatpush1.msra.mxu0 %v1554
        %5328 = vmatprep.subr.mxu0 0.0
        %5329 = vmatpush1.msra.mxu0 %v1553
        %5330 = vmatprep.subr.mxu0 0.0
        %5331 = vmatpush1.msra.mxu0 %v1552
        %5332 = vmatprep.subr.mxu0 0.0
        %5333 = vmatpush1.msra.mxu0 %v1551
        %5334 = vmatprep.subr.mxu0 0.0
        %5335 = vmatpush1.msra.mxu0 %v1550
        %5336 = vmatprep.subr.mxu0 0.0
        %5337 = vmatpush1.msra.mxu0 %v1549
        %5338 = vmatprep.subr.mxu0 0.0
        %5339 = vmatpush1.msra.mxu0 %v1548
        %5340 = vmatprep.subr.mxu0 0.0
        %5341 = vmatpush1.msra.mxu0 %v1547
        %5342 = vmatprep.subr.mxu0 0.0
        %5343 = vmatpush1.msra.mxu0 %v1546
        %5344 = vmatprep.subr.mxu0 0.0
        %5345 = vmatpush2.msra.mxu0 %v1577
        %5346 = vmatprep.subr.mxu0 0.0
        %5347 = vmatpush2.msra.mxu0 %v1576
        %5348 = vmatprep.subr.mxu0 0.0
        %5349 = vmatpush2.msra.mxu0 %v1575
        %5350 = vmatprep.subr.mxu0 0.0
        %5351 = vmatpush2.msra.mxu0 %v1574
        %5352 = vmatprep.subr.mxu0 0.0
        %5353 = vmatpush2.msra.mxu0 %v1573
        %5354 = vmatprep.subr.mxu0 0.0
        %5355 = vmatpush2.msra.mxu0 %v1572
        %5356 = vmatprep.subr.mxu0 0.0
        %5357 = vmatpush2.msra.mxu0 %v1571
        %5358 = vmatprep.subr.mxu0 0.0
        %5359 = vmatpush2.msra.mxu0 %v1570
        %5360 = vmatprep.subr.mxu0 0.0
        %5361 = vmatpush2.msra.mxu0 %v1569
        %5362 = vmatprep.subr.mxu0 0.0
        %5363 = vmatpush2.msra.mxu0 %v1568
        %5364 = vmatprep.subr.mxu0 0.0
        %5365 = vmatpush2.msra.mxu0 %v1567
        %5366 = vmatprep.subr.mxu0 0.0
        %5367 = vmatpush2.msra.mxu0 %v1566
        %5368 = vmatprep.subr.mxu0 0.0
        %5369 = vmatpush2.msra.mxu0 %v1565
        %5370 = vmatprep.subr.mxu0 0.0
        %5371 = vmatpush2.msra.mxu0 %v1564
        %5372 = vmatprep.subr.mxu0 0.0
        %5373 = vmatpush2.msra.mxu0 %v1563
        %5374 = vmatprep.subr.mxu0 0.0
        %5375 = vmatpush2.msra.mxu0 %v1562
        %5376 = vmatprep.mubr.f32.mxu0 %v615
        %5377 = vmatmul.mubr.f32.gmra.mxu0 %v614
        %v5378 = vpop.f32.mrf.mxu0
        %v5379 = vadd.f32 %v5234, %v5378
        %v5380 = vpop.f32.mrf.mxu0
        %5381 = vmatprep.mubr.f32.mxu0 %v647
        %5382 = vmatmul.mubr.f32.gmra.mxu0 %v646
        %v5383 = vpop.f32.mrf.mxu0
        %v5384 = vadd.f32 %v5239, %v5383
        %v5385 = vpop.f32.mrf.mxu0
        %5386 = vmatprep.mubr.f32.mxu0 %v679
        %5387 = vmatmul.mubr.f32.gmra.mxu0 %v678
        %v5388 = vpop.f32.mrf.mxu0
        %v5389 = vadd.f32 %v5244, %v5388
        %v5390 = vpop.f32.mrf.mxu0
        %5391 = vmatprep.mubr.f32.mxu0 %v711
        %5392 = vmatmul.mubr.f32.gmra.mxu0 %v710
        %v5393 = vpop.f32.mrf.mxu0
        %v5394 = vadd.f32 %v5249, %v5393
        %v5395 = vpop.f32.mrf.mxu0
        %5396 = vmatprep.mubr.f32.mxu0 %v743
        %5397 = vmatmul.mubr.f32.gmra.mxu0 %v742
        %v5398 = vpop.f32.mrf.mxu0
        %v5399 = vadd.f32 %v5254, %v5398
        %v5400 = vpop.f32.mrf.mxu0
        %5401 = vmatprep.mubr.f32.mxu0 %v775
        %5402 = vmatmul.mubr.f32.gmra.mxu0 %v774
        %v5403 = vpop.f32.mrf.mxu0
        %v5404 = vadd.f32 %v5259, %v5403
        %v5405 = vpop.f32.mrf.mxu0
        %5406 = vmatprep.mubr.f32.mxu0 %v807
        %5407 = vmatmul.mubr.f32.gmra.mxu0 %v806
        %v5408 = vpop.f32.mrf.mxu0
        %v5409 = vadd.f32 %v5264, %v5408
        %v5410 = vpop.f32.mrf.mxu0
        %5411 = vmatprep.mubr.f32.mxu0 %v839
        %5412 = vmatmul.mubr.f32.gmra.mxu0 %v838
        %v5413 = vpop.f32.mrf.mxu0
        %v5414 = vadd.f32 %v5269, %v5413
        %v5415 = vpop.f32.mrf.mxu0
        %5416 = vmatprep.mubr.f32.mxu0 %v871
        %5417 = vmatmul.mubr.f32.gmra.mxu0 %v870
        %v5418 = vpop.f32.mrf.mxu0
        %v5419 = vadd.f32 %v5274, %v5418
        %v5420 = vpop.f32.mrf.mxu0
        %5421 = vmatprep.mubr.f32.mxu0 %v903
        %5422 = vmatmul.mubr.f32.gmra.mxu0 %v902
        %v5423 = vpop.f32.mrf.mxu0
        %v5424 = vadd.f32 %v5279, %v5423
        %v5425 = vpop.f32.mrf.mxu0
        %5426 = vmatprep.mubr.f32.mxu0 %v935
        %5427 = vmatmul.mubr.f32.gmra.mxu0 %v934
        %v5428 = vpop.f32.mrf.mxu0
        %v5429 = vadd.f32 %v5284, %v5428
        %v5430 = vpop.f32.mrf.mxu0
        %5431 = vmatprep.mubr.f32.mxu0 %v967
        %5432 = vmatmul.mubr.f32.gmra.mxu0 %v966
        %v5433 = vpop.f32.mrf.mxu0
        %v5434 = vadd.f32 %v5289, %v5433
        %v5435 = vpop.f32.mrf.mxu0
        %5436 = vmatprep.mubr.f32.mxu0 %v999
        %5437 = vmatmul.mubr.f32.gmra.mxu0 %v998
        %v5438 = vpop.f32.mrf.mxu0
        %v5439 = vadd.f32 %v5294, %v5438
        %v5440 = vpop.f32.mrf.mxu0
        %5441 = vmatprep.mubr.f32.mxu0 %v1031
        %5442 = vmatmul.mubr.f32.gmra.mxu0 %v1030
        %v5443 = vpop.f32.mrf.mxu0
        %v5444 = vadd.f32 %v5299, %v5443
        %v5445 = vpop.f32.mrf.mxu0
        %5446 = vmatprep.mubr.f32.mxu0 %v1063
        %5447 = vmatmul.mubr.f32.gmra.mxu0 %v1062
        %v5448 = vpop.f32.mrf.mxu0
        %v5449 = vadd.f32 %v5304, %v5448
        %v5450 = vpop.f32.mrf.mxu0
        %5451 = vmatprep.mubr.f32.mxu0 %v1095
        %5452 = vmatmul.mubr.f32.gmra.mxu0 %v1094
        %v5453 = vpop.f32.mrf.mxu0
        %v5454 = vadd.f32 %v5309, %v5453
        %v5455 = vpop.f32.mrf.mxu0
        %5456 = vdwg.mxu0
        %5457 = vmatprep.subr.mxu0 0.0
        %5458 = vmatpush1.msra.mxu0 %v1593
        %5459 = vmatprep.subr.mxu0 0.0
        %5460 = vmatpush1.msra.mxu0 %v1592
        %5461 = vmatprep.subr.mxu0 0.0
        %5462 = vmatpush1.msra.mxu0 %v1591
        %5463 = vmatprep.subr.mxu0 0.0
        %5464 = vmatpush1.msra.mxu0 %v1590
        %5465 = vmatprep.subr.mxu0 0.0
        %5466 = vmatpush1.msra.mxu0 %v1589
        %5467 = vmatprep.subr.mxu0 0.0
        %5468 = vmatpush1.msra.mxu0 %v1588
        %5469 = vmatprep.subr.mxu0 0.0
        %5470 = vmatpush1.msra.mxu0 %v1587
        %5471 = vmatprep.subr.mxu0 0.0
        %5472 = vmatpush1.msra.mxu0 %v1586
        %5473 = vmatprep.subr.mxu0 0.0
        %5474 = vmatpush1.msra.mxu0 %v1585
        %5475 = vmatprep.subr.mxu0 0.0
        %5476 = vmatpush1.msra.mxu0 %v1584
        %5477 = vmatprep.subr.mxu0 0.0
        %5478 = vmatpush1.msra.mxu0 %v1583
        %5479 = vmatprep.subr.mxu0 0.0
        %5480 = vmatpush1.msra.mxu0 %v1582
        %5481 = vmatprep.subr.mxu0 0.0
        %5482 = vmatpush1.msra.mxu0 %v1581
        %5483 = vmatprep.subr.mxu0 0.0
        %5484 = vmatpush1.msra.mxu0 %v1580
        %5485 = vmatprep.subr.mxu0 0.0
        %5486 = vmatpush1.msra.mxu0 %v1579
        %5487 = vmatprep.subr.mxu0 0.0
        %5488 = vmatpush1.msra.mxu0 %v1578
        %5489 = vmatprep.subr.mxu0 0.0
        %5490 = vmatpush2.msra.mxu0 %v1609
        %5491 = vmatprep.subr.mxu0 0.0
        %5492 = vmatpush2.msra.mxu0 %v1608
        %5493 = vmatprep.subr.mxu0 0.0
        %5494 = vmatpush2.msra.mxu0 %v1607
        %5495 = vmatprep.subr.mxu0 0.0
        %5496 = vmatpush2.msra.mxu0 %v1606
        %5497 = vmatprep.subr.mxu0 0.0
        %5498 = vmatpush2.msra.mxu0 %v1605
        %5499 = vmatprep.subr.mxu0 0.0
        %5500 = vmatpush2.msra.mxu0 %v1604
        %5501 = vmatprep.subr.mxu0 0.0
        %5502 = vmatpush2.msra.mxu0 %v1603
        %5503 = vmatprep.subr.mxu0 0.0
        %5504 = vmatpush2.msra.mxu0 %v1602
        %5505 = vmatprep.subr.mxu0 0.0
        %5506 = vmatpush2.msra.mxu0 %v1601
        %5507 = vmatprep.subr.mxu0 0.0
        %5508 = vmatpush2.msra.mxu0 %v1600
        %5509 = vmatprep.subr.mxu0 0.0
        %5510 = vmatpush2.msra.mxu0 %v1599
        %5511 = vmatprep.subr.mxu0 0.0
        %5512 = vmatpush2.msra.mxu0 %v1598
        %5513 = vmatprep.subr.mxu0 0.0
        %5514 = vmatpush2.msra.mxu0 %v1597
        %5515 = vmatprep.subr.mxu0 0.0
        %5516 = vmatpush2.msra.mxu0 %v1596
        %5517 = vmatprep.subr.mxu0 0.0
        %5518 = vmatpush2.msra.mxu0 %v1595
        %5519 = vmatprep.subr.mxu0 0.0
        %5520 = vmatpush2.msra.mxu0 %v1594
        %5521 = vmatprep.mubr.f32.mxu0 %v617
        %5522 = vmatmul.mubr.f32.gmra.mxu0 %v616
        %v5523 = vpop.f32.mrf.mxu0
        %v5524 = vadd.f32 %v5379, %v5523
        %v5525 = vpop.f32.mrf.mxu0
        %5526 = vmatprep.mubr.f32.mxu0 %v649
        %5527 = vmatmul.mubr.f32.gmra.mxu0 %v648
        %v5528 = vpop.f32.mrf.mxu0
        %v5529 = vadd.f32 %v5384, %v5528
        %v5530 = vpop.f32.mrf.mxu0
        %5531 = vmatprep.mubr.f32.mxu0 %v681
        %5532 = vmatmul.mubr.f32.gmra.mxu0 %v680
        %v5533 = vpop.f32.mrf.mxu0
        %v5534 = vadd.f32 %v5389, %v5533
        %v5535 = vpop.f32.mrf.mxu0
        %5536 = vmatprep.mubr.f32.mxu0 %v713
        %5537 = vmatmul.mubr.f32.gmra.mxu0 %v712
        %v5538 = vpop.f32.mrf.mxu0
        %v5539 = vadd.f32 %v5394, %v5538
        %v5540 = vpop.f32.mrf.mxu0
        %5541 = vmatprep.mubr.f32.mxu0 %v745
        %5542 = vmatmul.mubr.f32.gmra.mxu0 %v744
        %v5543 = vpop.f32.mrf.mxu0
        %v5544 = vadd.f32 %v5399, %v5543
        %v5545 = vpop.f32.mrf.mxu0
        %5546 = vmatprep.mubr.f32.mxu0 %v777
        %5547 = vmatmul.mubr.f32.gmra.mxu0 %v776
        %v5548 = vpop.f32.mrf.mxu0
        %v5549 = vadd.f32 %v5404, %v5548
        %v5550 = vpop.f32.mrf.mxu0
        %5551 = vmatprep.mubr.f32.mxu0 %v809
        %5552 = vmatmul.mubr.f32.gmra.mxu0 %v808
        %v5553 = vpop.f32.mrf.mxu0
        %v5554 = vadd.f32 %v5409, %v5553
        %v5555 = vpop.f32.mrf.mxu0
        %5556 = vmatprep.mubr.f32.mxu0 %v841
        %5557 = vmatmul.mubr.f32.gmra.mxu0 %v840
        %v5558 = vpop.f32.mrf.mxu0
        %v5559 = vadd.f32 %v5414, %v5558
        %v5560 = vpop.f32.mrf.mxu0
        %5561 = vmatprep.mubr.f32.mxu0 %v873
        %5562 = vmatmul.mubr.f32.gmra.mxu0 %v872
        %v5563 = vpop.f32.mrf.mxu0
        %v5564 = vadd.f32 %v5419, %v5563
        %v5565 = vpop.f32.mrf.mxu0
        %5566 = vmatprep.mubr.f32.mxu0 %v905
        %5567 = vmatmul.mubr.f32.gmra.mxu0 %v904
        %v5568 = vpop.f32.mrf.mxu0
        %v5569 = vadd.f32 %v5424, %v5568
        %v5570 = vpop.f32.mrf.mxu0
        %5571 = vmatprep.mubr.f32.mxu0 %v937
        %5572 = vmatmul.mubr.f32.gmra.mxu0 %v936
        %v5573 = vpop.f32.mrf.mxu0
        %v5574 = vadd.f32 %v5429, %v5573
        %v5575 = vpop.f32.mrf.mxu0
        %5576 = vmatprep.mubr.f32.mxu0 %v969
        %5577 = vmatmul.mubr.f32.gmra.mxu0 %v968
        %v5578 = vpop.f32.mrf.mxu0
        %v5579 = vadd.f32 %v5434, %v5578
        %v5580 = vpop.f32.mrf.mxu0
        %5581 = vmatprep.mubr.f32.mxu0 %v1001
        %5582 = vmatmul.mubr.f32.gmra.mxu0 %v1000
        %v5583 = vpop.f32.mrf.mxu0
        %v5584 = vadd.f32 %v5439, %v5583
        %v5585 = vpop.f32.mrf.mxu0
        %5586 = vmatprep.mubr.f32.mxu0 %v1033
        %5587 = vmatmul.mubr.f32.gmra.mxu0 %v1032
        %v5588 = vpop.f32.mrf.mxu0
        %v5589 = vadd.f32 %v5444, %v5588
        %v5590 = vpop.f32.mrf.mxu0
        %5591 = vmatprep.mubr.f32.mxu0 %v1065
        %5592 = vmatmul.mubr.f32.gmra.mxu0 %v1064
        %v5593 = vpop.f32.mrf.mxu0
        %v5594 = vadd.f32 %v5449, %v5593
        %v5595 = vpop.f32.mrf.mxu0
        %5596 = vmatprep.mubr.f32.mxu0 %v1097
        %5597 = vmatmul.mubr.f32.gmra.mxu0 %v1096
        %v5598 = vpop.f32.mrf.mxu0
        %v5599 = vadd.f32 %v5454, %v5598
        %v5600 = vpop.f32.mrf.mxu0
        %5601 = vdwg.mxu0
        %v5602 = vld [vmem:[%s494] sm:$0xff]
        %v5603 = vld [vmem:[%s494 + $0x8] sm:$0xff]
        %v5604 = vld [vmem:[%s494 + $0x10] sm:$0xff]
        %v5605 = vld [vmem:[%s494 + $0x18] sm:$0xff]
        %v5606 = vld [vmem:[%s494 + $0x20] sm:$0xff]
        %v5607 = vld [vmem:[%s494 + $0x28] sm:$0xff]
        %v5608 = vld [vmem:[%s494 + $0x30] sm:$0xff]
        %v5609 = vld [vmem:[%s494 + $0x38] sm:$0xff]
        %v5610 = vld [vmem:[%s494 + $0x40] sm:$0xff]
        %v5611 = vld [vmem:[%s494 + $0x48] sm:$0xff]
        %v5612 = vld [vmem:[%s494 + $0x50] sm:$0xff]
        %v5613 = vld [vmem:[%s494 + $0x58] sm:$0xff]
        %v5614 = vld [vmem:[%s494 + $0x60] sm:$0xff]
        %v5615 = vld [vmem:[%s494 + $0x68] sm:$0xff]
        %v5616 = vld [vmem:[%s494 + $0x70] sm:$0xff]
        %v5617 = vld [vmem:[%s494 + $0x78] sm:$0xff]
        %v5618 = vld [vmem:[%s494 + $0x80] sm:$0xff]
        %v5619 = vld [vmem:[%s494 + $0x88] sm:$0xff]
        %v5620 = vld [vmem:[%s494 + $0x90] sm:$0xff]
        %v5621 = vld [vmem:[%s494 + $0x98] sm:$0xff]
        %v5622 = vld [vmem:[%s494 + $0xa0] sm:$0xff]
        %v5623 = vld [vmem:[%s494 + $0xa8] sm:$0xff]
        %v5624 = vld [vmem:[%s494 + $0xb0] sm:$0xff]
        %v5625 = vld [vmem:[%s494 + $0xb8] sm:$0xff]
        %v5626 = vld [vmem:[%s494 + $0xc0] sm:$0xff]
        %v5627 = vld [vmem:[%s494 + $0xc8] sm:$0xff]
        %v5628 = vld [vmem:[%s494 + $0xd0] sm:$0xff]
        %v5629 = vld [vmem:[%s494 + $0xd8] sm:$0xff]
        %v5630 = vld [vmem:[%s494 + $0xe0] sm:$0xff]
        %v5631 = vld [vmem:[%s494 + $0xe8] sm:$0xff]
        %v5632 = vld [vmem:[%s494 + $0xf0] sm:$0xff]
        %v5633 = vld [vmem:[%s494 + $0xf8] sm:$0xff]
        %v5634 = vld [vmem:[%s494 + $0x100] sm:$0xff]
        %v5635 = vld [vmem:[%s494 + $0x108] sm:$0xff]
        %v5636 = vld [vmem:[%s494 + $0x110] sm:$0xff]
        %v5637 = vld [vmem:[%s494 + $0x118] sm:$0xff]
        %v5638 = vld [vmem:[%s494 + $0x120] sm:$0xff]
        %v5639 = vld [vmem:[%s494 + $0x128] sm:$0xff]
        %v5640 = vld [vmem:[%s494 + $0x130] sm:$0xff]
        %v5641 = vld [vmem:[%s494 + $0x138] sm:$0xff]
        %v5642 = vld [vmem:[%s494 + $0x140] sm:$0xff]
        %v5643 = vld [vmem:[%s494 + $0x148] sm:$0xff]
        %v5644 = vld [vmem:[%s494 + $0x150] sm:$0xff]
        %v5645 = vld [vmem:[%s494 + $0x158] sm:$0xff]
        %v5646 = vld [vmem:[%s494 + $0x160] sm:$0xff]
        %v5647 = vld [vmem:[%s494 + $0x168] sm:$0xff]
        %v5648 = vld [vmem:[%s494 + $0x170] sm:$0xff]
        %v5649 = vld [vmem:[%s494 + $0x178] sm:$0xff]
        %v5650 = vld [vmem:[%s494 + $0x180] sm:$0xff]
        %v5651 = vld [vmem:[%s494 + $0x188] sm:$0xff]
        %v5652 = vld [vmem:[%s494 + $0x190] sm:$0xff]
        %v5653 = vld [vmem:[%s494 + $0x198] sm:$0xff]
        %v5654 = vld [vmem:[%s494 + $0x1a0] sm:$0xff]
        %v5655 = vld [vmem:[%s494 + $0x1a8] sm:$0xff]
        %v5656 = vld [vmem:[%s494 + $0x1b0] sm:$0xff]
        %v5657 = vld [vmem:[%s494 + $0x1b8] sm:$0xff]
        %v5658 = vld [vmem:[%s494 + $0x1c0] sm:$0xff]
        %v5659 = vld [vmem:[%s494 + $0x1c8] sm:$0xff]
        %v5660 = vld [vmem:[%s494 + $0x1d0] sm:$0xff]
        %v5661 = vld [vmem:[%s494 + $0x1d8] sm:$0xff]
        %v5662 = vld [vmem:[%s494 + $0x1e0] sm:$0xff]
        %v5663 = vld [vmem:[%s494 + $0x1e8] sm:$0xff]
        %v5664 = vld [vmem:[%s494 + $0x1f0] sm:$0xff]
        %v5665 = vld [vmem:[%s494 + $0x1f8] sm:$0xff]
        %v5666 = vld [vmem:[%s494 + $0x200] sm:$0xff]
        %v5667 = vld [vmem:[%s494 + $0x208] sm:$0xff]
        %v5668 = vld [vmem:[%s494 + $0x210] sm:$0xff]
        %v5669 = vld [vmem:[%s494 + $0x218] sm:$0xff]
        %v5670 = vld [vmem:[%s494 + $0x220] sm:$0xff]
        %v5671 = vld [vmem:[%s494 + $0x228] sm:$0xff]
        %v5672 = vld [vmem:[%s494 + $0x230] sm:$0xff]
        %v5673 = vld [vmem:[%s494 + $0x238] sm:$0xff]
        %v5674 = vld [vmem:[%s494 + $0x240] sm:$0xff]
        %v5675 = vld [vmem:[%s494 + $0x248] sm:$0xff]
        %v5676 = vld [vmem:[%s494 + $0x250] sm:$0xff]
        %v5677 = vld [vmem:[%s494 + $0x258] sm:$0xff]
        %v5678 = vld [vmem:[%s494 + $0x260] sm:$0xff]
        %v5679 = vld [vmem:[%s494 + $0x268] sm:$0xff]
        %v5680 = vld [vmem:[%s494 + $0x270] sm:$0xff]
        %v5681 = vld [vmem:[%s494 + $0x278] sm:$0xff]
        %v5682 = vld [vmem:[%s494 + $0x280] sm:$0xff]
        %v5683 = vld [vmem:[%s494 + $0x288] sm:$0xff]
        %v5684 = vld [vmem:[%s494 + $0x290] sm:$0xff]
        %v5685 = vld [vmem:[%s494 + $0x298] sm:$0xff]
        %v5686 = vld [vmem:[%s494 + $0x2a0] sm:$0xff]
        %v5687 = vld [vmem:[%s494 + $0x2a8] sm:$0xff]
        %v5688 = vld [vmem:[%s494 + $0x2b0] sm:$0xff]
        %v5689 = vld [vmem:[%s494 + $0x2b8] sm:$0xff]
        %v5690 = vld [vmem:[%s494 + $0x2c0] sm:$0xff]
        %v5691 = vld [vmem:[%s494 + $0x2c8] sm:$0xff]
        %v5692 = vld [vmem:[%s494 + $0x2d0] sm:$0xff]
        %v5693 = vld [vmem:[%s494 + $0x2d8] sm:$0xff]
        %v5694 = vld [vmem:[%s494 + $0x2e0] sm:$0xff]
        %v5695 = vld [vmem:[%s494 + $0x2e8] sm:$0xff]
        %v5696 = vld [vmem:[%s494 + $0x2f0] sm:$0xff]
        %v5697 = vld [vmem:[%s494 + $0x2f8] sm:$0xff]
        %v5698 = vld [vmem:[%s494 + $0x300] sm:$0xff]
        %v5699 = vld [vmem:[%s494 + $0x308] sm:$0xff]
        %v5700 = vld [vmem:[%s494 + $0x310] sm:$0xff]
        %v5701 = vld [vmem:[%s494 + $0x318] sm:$0xff]
        %v5702 = vld [vmem:[%s494 + $0x320] sm:$0xff]
        %v5703 = vld [vmem:[%s494 + $0x328] sm:$0xff]
        %v5704 = vld [vmem:[%s494 + $0x330] sm:$0xff]
        %v5705 = vld [vmem:[%s494 + $0x338] sm:$0xff]
        %v5706 = vld [vmem:[%s494 + $0x340] sm:$0xff]
        %v5707 = vld [vmem:[%s494 + $0x348] sm:$0xff]
        %v5708 = vld [vmem:[%s494 + $0x350] sm:$0xff]
        %v5709 = vld [vmem:[%s494 + $0x358] sm:$0xff]
        %v5710 = vld [vmem:[%s494 + $0x360] sm:$0xff]
        %v5711 = vld [vmem:[%s494 + $0x368] sm:$0xff]
        %v5712 = vld [vmem:[%s494 + $0x370] sm:$0xff]
        %v5713 = vld [vmem:[%s494 + $0x378] sm:$0xff]
        %v5714 = vld [vmem:[%s494 + $0x380] sm:$0xff]
        %v5715 = vld [vmem:[%s494 + $0x388] sm:$0xff]
        %v5716 = vld [vmem:[%s494 + $0x390] sm:$0xff]
        %v5717 = vld [vmem:[%s494 + $0x398] sm:$0xff]
        %v5718 = vld [vmem:[%s494 + $0x3a0] sm:$0xff]
        %v5719 = vld [vmem:[%s494 + $0x3a8] sm:$0xff]
        %v5720 = vld [vmem:[%s494 + $0x3b0] sm:$0xff]
        %v5721 = vld [vmem:[%s494 + $0x3b8] sm:$0xff]
        %v5722 = vld [vmem:[%s494 + $0x3c0] sm:$0xff]
        %v5723 = vld [vmem:[%s494 + $0x3c8] sm:$0xff]
        %v5724 = vld [vmem:[%s494 + $0x3d0] sm:$0xff]
        %v5725 = vld [vmem:[%s494 + $0x3d8] sm:$0xff]
        %v5726 = vld [vmem:[%s494 + $0x3e0] sm:$0xff]
        %v5727 = vld [vmem:[%s494 + $0x3e8] sm:$0xff]
        %v5728 = vld [vmem:[%s494 + $0x3f0] sm:$0xff]
        %v5729 = vld [vmem:[%s494 + $0x3f8] sm:$0xff]
        %v5730 = vld [vmem:[#allocation13] sm:$0xff]
        %v5731 = vld [vmem:[#allocation13 + $0x8] sm:$0xff]
        %v5732 = vld [vmem:[#allocation13 + $0x10] sm:$0xff]
        %v5733 = vld [vmem:[#allocation13 + $0x18] sm:$0xff]
        %v5734 = vld [vmem:[#allocation13 + $0x20] sm:$0xff]
        %v5735 = vld [vmem:[#allocation13 + $0x28] sm:$0xff]
        %v5736 = vld [vmem:[#allocation13 + $0x30] sm:$0xff]
        %v5737 = vld [vmem:[#allocation13 + $0x38] sm:$0xff]
        %v5738 = vld [vmem:[#allocation13 + $0x40] sm:$0xff]
        %v5739 = vld [vmem:[#allocation13 + $0x48] sm:$0xff]
        %v5740 = vld [vmem:[#allocation13 + $0x50] sm:$0xff]
        %v5741 = vld [vmem:[#allocation13 + $0x58] sm:$0xff]
        %v5742 = vld [vmem:[#allocation13 + $0x60] sm:$0xff]
        %v5743 = vld [vmem:[#allocation13 + $0x68] sm:$0xff]
        %v5744 = vld [vmem:[#allocation13 + $0x70] sm:$0xff]
        %v5745 = vld [vmem:[#allocation13 + $0x78] sm:$0xff]
        %v5746 = vld [vmem:[#allocation13 + $0x80] sm:$0xff]
        %v5747 = vld [vmem:[#allocation13 + $0x88] sm:$0xff]
        %v5748 = vld [vmem:[#allocation13 + $0x90] sm:$0xff]
        %v5749 = vld [vmem:[#allocation13 + $0x98] sm:$0xff]
        %v5750 = vld [vmem:[#allocation13 + $0xa0] sm:$0xff]
        %v5751 = vld [vmem:[#allocation13 + $0xa8] sm:$0xff]
        %v5752 = vld [vmem:[#allocation13 + $0xb0] sm:$0xff]
        %v5753 = vld [vmem:[#allocation13 + $0xb8] sm:$0xff]
        %v5754 = vld [vmem:[#allocation13 + $0xc0] sm:$0xff]
        %v5755 = vld [vmem:[#allocation13 + $0xc8] sm:$0xff]
        %v5756 = vld [vmem:[#allocation13 + $0xd0] sm:$0xff]
        %v5757 = vld [vmem:[#allocation13 + $0xd8] sm:$0xff]
        %v5758 = vld [vmem:[#allocation13 + $0xe0] sm:$0xff]
        %v5759 = vld [vmem:[#allocation13 + $0xe8] sm:$0xff]
        %v5760 = vld [vmem:[#allocation13 + $0xf0] sm:$0xff]
        %v5761 = vld [vmem:[#allocation13 + $0xf8] sm:$0xff]
        %v5762 = vld [vmem:[#allocation13 + $0x100] sm:$0xff]
        %v5763 = vld [vmem:[#allocation13 + $0x108] sm:$0xff]
        %v5764 = vld [vmem:[#allocation13 + $0x110] sm:$0xff]
        %v5765 = vld [vmem:[#allocation13 + $0x118] sm:$0xff]
        %v5766 = vld [vmem:[#allocation13 + $0x120] sm:$0xff]
        %v5767 = vld [vmem:[#allocation13 + $0x128] sm:$0xff]
        %v5768 = vld [vmem:[#allocation13 + $0x130] sm:$0xff]
        %v5769 = vld [vmem:[#allocation13 + $0x138] sm:$0xff]
        %v5770 = vld [vmem:[#allocation13 + $0x140] sm:$0xff]
        %v5771 = vld [vmem:[#allocation13 + $0x148] sm:$0xff]
        %v5772 = vld [vmem:[#allocation13 + $0x150] sm:$0xff]
        %v5773 = vld [vmem:[#allocation13 + $0x158] sm:$0xff]
        %v5774 = vld [vmem:[#allocation13 + $0x160] sm:$0xff]
        %v5775 = vld [vmem:[#allocation13 + $0x168] sm:$0xff]
        %v5776 = vld [vmem:[#allocation13 + $0x170] sm:$0xff]
        %v5777 = vld [vmem:[#allocation13 + $0x178] sm:$0xff]
        %v5778 = vld [vmem:[#allocation13 + $0x180] sm:$0xff]
        %v5779 = vld [vmem:[#allocation13 + $0x188] sm:$0xff]
        %v5780 = vld [vmem:[#allocation13 + $0x190] sm:$0xff]
        %v5781 = vld [vmem:[#allocation13 + $0x198] sm:$0xff]
        %v5782 = vld [vmem:[#allocation13 + $0x1a0] sm:$0xff]
        %v5783 = vld [vmem:[#allocation13 + $0x1a8] sm:$0xff]
        %v5784 = vld [vmem:[#allocation13 + $0x1b0] sm:$0xff]
        %v5785 = vld [vmem:[#allocation13 + $0x1b8] sm:$0xff]
        %v5786 = vld [vmem:[#allocation13 + $0x1c0] sm:$0xff]
        %v5787 = vld [vmem:[#allocation13 + $0x1c8] sm:$0xff]
        %v5788 = vld [vmem:[#allocation13 + $0x1d0] sm:$0xff]
        %v5789 = vld [vmem:[#allocation13 + $0x1d8] sm:$0xff]
        %v5790 = vld [vmem:[#allocation13 + $0x1e0] sm:$0xff]
        %v5791 = vld [vmem:[#allocation13 + $0x1e8] sm:$0xff]
        %v5792 = vld [vmem:[#allocation13 + $0x1f0] sm:$0xff]
        %v5793 = vld [vmem:[#allocation13 + $0x1f8] sm:$0xff]
        %v5794 = vld [vmem:[#allocation13 + $0x200] sm:$0xff]
        %v5795 = vld [vmem:[#allocation13 + $0x208] sm:$0xff]
        %v5796 = vld [vmem:[#allocation13 + $0x210] sm:$0xff]
        %v5797 = vld [vmem:[#allocation13 + $0x218] sm:$0xff]
        %v5798 = vld [vmem:[#allocation13 + $0x220] sm:$0xff]
        %v5799 = vld [vmem:[#allocation13 + $0x228] sm:$0xff]
        %v5800 = vld [vmem:[#allocation13 + $0x230] sm:$0xff]
        %v5801 = vld [vmem:[#allocation13 + $0x238] sm:$0xff]
        %v5802 = vld [vmem:[#allocation13 + $0x240] sm:$0xff]
        %v5803 = vld [vmem:[#allocation13 + $0x248] sm:$0xff]
        %v5804 = vld [vmem:[#allocation13 + $0x250] sm:$0xff]
        %v5805 = vld [vmem:[#allocation13 + $0x258] sm:$0xff]
        %v5806 = vld [vmem:[#allocation13 + $0x260] sm:$0xff]
        %v5807 = vld [vmem:[#allocation13 + $0x268] sm:$0xff]
        %v5808 = vld [vmem:[#allocation13 + $0x270] sm:$0xff]
        %v5809 = vld [vmem:[#allocation13 + $0x278] sm:$0xff]
        %v5810 = vld [vmem:[#allocation13 + $0x280] sm:$0xff]
        %v5811 = vld [vmem:[#allocation13 + $0x288] sm:$0xff]
        %v5812 = vld [vmem:[#allocation13 + $0x290] sm:$0xff]
        %v5813 = vld [vmem:[#allocation13 + $0x298] sm:$0xff]
        %v5814 = vld [vmem:[#allocation13 + $0x2a0] sm:$0xff]
        %v5815 = vld [vmem:[#allocation13 + $0x2a8] sm:$0xff]
        %v5816 = vld [vmem:[#allocation13 + $0x2b0] sm:$0xff]
        %v5817 = vld [vmem:[#allocation13 + $0x2b8] sm:$0xff]
        %v5818 = vld [vmem:[#allocation13 + $0x2c0] sm:$0xff]
        %v5819 = vld [vmem:[#allocation13 + $0x2c8] sm:$0xff]
        %v5820 = vld [vmem:[#allocation13 + $0x2d0] sm:$0xff]
        %v5821 = vld [vmem:[#allocation13 + $0x2d8] sm:$0xff]
        %v5822 = vld [vmem:[#allocation13 + $0x2e0] sm:$0xff]
        %v5823 = vld [vmem:[#allocation13 + $0x2e8] sm:$0xff]
        %v5824 = vld [vmem:[#allocation13 + $0x2f0] sm:$0xff]
        %v5825 = vld [vmem:[#allocation13 + $0x2f8] sm:$0xff]
        %v5826 = vld [vmem:[#allocation13 + $0x300] sm:$0xff]
        %v5827 = vld [vmem:[#allocation13 + $0x308] sm:$0xff]
        %v5828 = vld [vmem:[#allocation13 + $0x310] sm:$0xff]
        %v5829 = vld [vmem:[#allocation13 + $0x318] sm:$0xff]
        %v5830 = vld [vmem:[#allocation13 + $0x320] sm:$0xff]
        %v5831 = vld [vmem:[#allocation13 + $0x328] sm:$0xff]
        %v5832 = vld [vmem:[#allocation13 + $0x330] sm:$0xff]
        %v5833 = vld [vmem:[#allocation13 + $0x338] sm:$0xff]
        %v5834 = vld [vmem:[#allocation13 + $0x340] sm:$0xff]
        %v5835 = vld [vmem:[#allocation13 + $0x348] sm:$0xff]
        %v5836 = vld [vmem:[#allocation13 + $0x350] sm:$0xff]
        %v5837 = vld [vmem:[#allocation13 + $0x358] sm:$0xff]
        %v5838 = vld [vmem:[#allocation13 + $0x360] sm:$0xff]
        %v5839 = vld [vmem:[#allocation13 + $0x368] sm:$0xff]
        %v5840 = vld [vmem:[#allocation13 + $0x370] sm:$0xff]
        %v5841 = vld [vmem:[#allocation13 + $0x378] sm:$0xff]
        %v5842 = vld [vmem:[#allocation13 + $0x380] sm:$0xff]
        %v5843 = vld [vmem:[#allocation13 + $0x388] sm:$0xff]
        %v5844 = vld [vmem:[#allocation13 + $0x390] sm:$0xff]
        %v5845 = vld [vmem:[#allocation13 + $0x398] sm:$0xff]
        %v5846 = vld [vmem:[#allocation13 + $0x3a0] sm:$0xff]
        %v5847 = vld [vmem:[#allocation13 + $0x3a8] sm:$0xff]
        %v5848 = vld [vmem:[#allocation13 + $0x3b0] sm:$0xff]
        %v5849 = vld [vmem:[#allocation13 + $0x3b8] sm:$0xff]
        %v5850 = vld [vmem:[#allocation13 + $0x3c0] sm:$0xff]
        %v5851 = vld [vmem:[#allocation13 + $0x3c8] sm:$0xff]
        %v5852 = vld [vmem:[#allocation13 + $0x3d0] sm:$0xff]
        %v5853 = vld [vmem:[#allocation13 + $0x3d8] sm:$0xff]
        %v5854 = vld [vmem:[#allocation13 + $0x3e0] sm:$0xff]
        %v5855 = vld [vmem:[#allocation13 + $0x3e8] sm:$0xff]
        %v5856 = vld [vmem:[#allocation13 + $0x3f0] sm:$0xff]
        %v5857 = vld [vmem:[#allocation13 + $0x3f8] sm:$0xff]
        %5858 = vmatprep.subr.mxu0 0.0
        %5859 = vmatpush1.msra.mxu0 %v5745
        %5860 = vmatprep.subr.mxu0 0.0
        %5861 = vmatpush1.msra.mxu0 %v5744
        %5862 = vmatprep.subr.mxu0 0.0
        %5863 = vmatpush1.msra.mxu0 %v5743
        %5864 = vmatprep.subr.mxu0 0.0
        %5865 = vmatpush1.msra.mxu0 %v5742
        %5866 = vmatprep.subr.mxu0 0.0
        %5867 = vmatpush1.msra.mxu0 %v5741
        %5868 = vmatprep.subr.mxu0 0.0
        %5869 = vmatpush1.msra.mxu0 %v5740
        %5870 = vmatprep.subr.mxu0 0.0
        %5871 = vmatpush1.msra.mxu0 %v5739
        %5872 = vmatprep.subr.mxu0 0.0
        %5873 = vmatpush1.msra.mxu0 %v5738
        %5874 = vmatprep.subr.mxu0 0.0
        %5875 = vmatpush1.msra.mxu0 %v5737
        %5876 = vmatprep.subr.mxu0 0.0
        %5877 = vmatpush1.msra.mxu0 %v5736
        %5878 = vmatprep.subr.mxu0 0.0
        %5879 = vmatpush1.msra.mxu0 %v5735
        %5880 = vmatprep.subr.mxu0 0.0
        %5881 = vmatpush1.msra.mxu0 %v5734
        %5882 = vmatprep.subr.mxu0 0.0
        %5883 = vmatpush1.msra.mxu0 %v5733
        %5884 = vmatprep.subr.mxu0 0.0
        %5885 = vmatpush1.msra.mxu0 %v5732
        %5886 = vmatprep.subr.mxu0 0.0
        %5887 = vmatpush1.msra.mxu0 %v5731
        %5888 = vmatprep.subr.mxu0 0.0
        %5889 = vmatpush1.msra.mxu0 %v5730
        %5890 = vmatprep.subr.mxu0 0.0
        %5891 = vmatpush2.msra.mxu0 %v5761
        %5892 = vmatprep.subr.mxu0 0.0
        %5893 = vmatpush2.msra.mxu0 %v5760
        %5894 = vmatprep.subr.mxu0 0.0
        %5895 = vmatpush2.msra.mxu0 %v5759
        %5896 = vmatprep.subr.mxu0 0.0
        %5897 = vmatpush2.msra.mxu0 %v5758
        %5898 = vmatprep.subr.mxu0 0.0
        %5899 = vmatpush2.msra.mxu0 %v5757
        %5900 = vmatprep.subr.mxu0 0.0
        %5901 = vmatpush2.msra.mxu0 %v5756
        %5902 = vmatprep.subr.mxu0 0.0
        %5903 = vmatpush2.msra.mxu0 %v5755
        %5904 = vmatprep.subr.mxu0 0.0
        %5905 = vmatpush2.msra.mxu0 %v5754
        %5906 = vmatprep.subr.mxu0 0.0
        %5907 = vmatpush2.msra.mxu0 %v5753
        %5908 = vmatprep.subr.mxu0 0.0
        %5909 = vmatpush2.msra.mxu0 %v5752
        %5910 = vmatprep.subr.mxu0 0.0
        %5911 = vmatpush2.msra.mxu0 %v5751
        %5912 = vmatprep.subr.mxu0 0.0
        %5913 = vmatpush2.msra.mxu0 %v5750
        %5914 = vmatprep.subr.mxu0 0.0
        %5915 = vmatpush2.msra.mxu0 %v5749
        %5916 = vmatprep.subr.mxu0 0.0
        %5917 = vmatpush2.msra.mxu0 %v5748
        %5918 = vmatprep.subr.mxu0 0.0
        %5919 = vmatpush2.msra.mxu0 %v5747
        %5920 = vmatprep.subr.mxu0 0.0
        %5921 = vmatpush2.msra.mxu0 %v5746
        %5922 = vmatprep.mubr.f32.mxu0 %v5603
        %5923 = vmatmul.mubr.f32.gmra.mxu0 %v5602
        %v5924 = vpop.f32.mrf.mxu0
        %v5925 = vadd.f32 0.0, %v5924
        %v5926 = vpop.f32.mrf.mxu0
        %5927 = vmatprep.mubr.f32.mxu0 %v5611
        %5928 = vmatmul.mubr.f32.gmra.mxu0 %v5610
        %v5929 = vpop.f32.mrf.mxu0
        %v5930 = vadd.f32 0.0, %v5929
        %v5931 = vpop.f32.mrf.mxu0
        %5932 = vmatprep.mubr.f32.mxu0 %v5619
        %5933 = vmatmul.mubr.f32.gmra.mxu0 %v5618
        %v5934 = vpop.f32.mrf.mxu0
        %v5935 = vadd.f32 0.0, %v5934
        %v5936 = vpop.f32.mrf.mxu0
        %5937 = vmatprep.mubr.f32.mxu0 %v5627
        %5938 = vmatmul.mubr.f32.gmra.mxu0 %v5626
        %v5939 = vpop.f32.mrf.mxu0
        %v5940 = vadd.f32 0.0, %v5939
        %v5941 = vpop.f32.mrf.mxu0
        %5942 = vmatprep.mubr.f32.mxu0 %v5635
        %5943 = vmatmul.mubr.f32.gmra.mxu0 %v5634
        %v5944 = vpop.f32.mrf.mxu0
        %v5945 = vadd.f32 0.0, %v5944
        %v5946 = vpop.f32.mrf.mxu0
        %5947 = vmatprep.mubr.f32.mxu0 %v5643
        %5948 = vmatmul.mubr.f32.gmra.mxu0 %v5642
        %v5949 = vpop.f32.mrf.mxu0
        %v5950 = vadd.f32 0.0, %v5949
        %v5951 = vpop.f32.mrf.mxu0
        %5952 = vmatprep.mubr.f32.mxu0 %v5651
        %5953 = vmatmul.mubr.f32.gmra.mxu0 %v5650
        %v5954 = vpop.f32.mrf.mxu0
        %v5955 = vadd.f32 0.0, %v5954
        %v5956 = vpop.f32.mrf.mxu0
        %5957 = vmatprep.mubr.f32.mxu0 %v5659
        %5958 = vmatmul.mubr.f32.gmra.mxu0 %v5658
        %v5959 = vpop.f32.mrf.mxu0
        %v5960 = vadd.f32 0.0, %v5959
        %v5961 = vpop.f32.mrf.mxu0
        %5962 = vmatprep.mubr.f32.mxu0 %v5667
        %5963 = vmatmul.mubr.f32.gmra.mxu0 %v5666
        %v5964 = vpop.f32.mrf.mxu0
        %v5965 = vadd.f32 0.0, %v5964
        %v5966 = vpop.f32.mrf.mxu0
        %5967 = vmatprep.mubr.f32.mxu0 %v5675
        %5968 = vmatmul.mubr.f32.gmra.mxu0 %v5674
        %v5969 = vpop.f32.mrf.mxu0
        %v5970 = vadd.f32 0.0, %v5969
        %v5971 = vpop.f32.mrf.mxu0
        %5972 = vmatprep.mubr.f32.mxu0 %v5683
        %5973 = vmatmul.mubr.f32.gmra.mxu0 %v5682
        %v5974 = vpop.f32.mrf.mxu0
        %v5975 = vadd.f32 0.0, %v5974
        %v5976 = vpop.f32.mrf.mxu0
        %5977 = vmatprep.mubr.f32.mxu0 %v5691
        %5978 = vmatmul.mubr.f32.gmra.mxu0 %v5690
        %v5979 = vpop.f32.mrf.mxu0
        %v5980 = vadd.f32 0.0, %v5979
        %v5981 = vpop.f32.mrf.mxu0
        %5982 = vmatprep.mubr.f32.mxu0 %v5699
        %5983 = vmatmul.mubr.f32.gmra.mxu0 %v5698
        %v5984 = vpop.f32.mrf.mxu0
        %v5985 = vadd.f32 0.0, %v5984
        %v5986 = vpop.f32.mrf.mxu0
        %5987 = vmatprep.mubr.f32.mxu0 %v5707
        %5988 = vmatmul.mubr.f32.gmra.mxu0 %v5706
        %v5989 = vpop.f32.mrf.mxu0
        %v5990 = vadd.f32 0.0, %v5989
        %v5991 = vpop.f32.mrf.mxu0
        %5992 = vmatprep.mubr.f32.mxu0 %v5715
        %5993 = vmatmul.mubr.f32.gmra.mxu0 %v5714
        %v5994 = vpop.f32.mrf.mxu0
        %v5995 = vadd.f32 0.0, %v5994
        %v5996 = vpop.f32.mrf.mxu0
        %5997 = vmatprep.mubr.f32.mxu0 %v5723
        %5998 = vmatmul.mubr.f32.gmra.mxu0 %v5722
        %v5999 = vpop.f32.mrf.mxu0
        %v6000 = vadd.f32 0.0, %v5999
        %v6001 = vpop.f32.mrf.mxu0
        %6002 = vdwg.mxu0
        %6003 = vmatprep.subr.mxu0 0.0
        %6004 = vmatpush1.msra.mxu0 %v5777
        %6005 = vmatprep.subr.mxu0 0.0
        %6006 = vmatpush1.msra.mxu0 %v5776
        %6007 = vmatprep.subr.mxu0 0.0
        %6008 = vmatpush1.msra.mxu0 %v5775
        %6009 = vmatprep.subr.mxu0 0.0
        %6010 = vmatpush1.msra.mxu0 %v5774
        %6011 = vmatprep.subr.mxu0 0.0
        %6012 = vmatpush1.msra.mxu0 %v5773
        %6013 = vmatprep.subr.mxu0 0.0
        %6014 = vmatpush1.msra.mxu0 %v5772
        %6015 = vmatprep.subr.mxu0 0.0
        %6016 = vmatpush1.msra.mxu0 %v5771
        %6017 = vmatprep.subr.mxu0 0.0
        %6018 = vmatpush1.msra.mxu0 %v5770
        %6019 = vmatprep.subr.mxu0 0.0
        %6020 = vmatpush1.msra.mxu0 %v5769
        %6021 = vmatprep.subr.mxu0 0.0
        %6022 = vmatpush1.msra.mxu0 %v5768
        %6023 = vmatprep.subr.mxu0 0.0
        %6024 = vmatpush1.msra.mxu0 %v5767
        %6025 = vmatprep.subr.mxu0 0.0
        %6026 = vmatpush1.msra.mxu0 %v5766
        %6027 = vmatprep.subr.mxu0 0.0
        %6028 = vmatpush1.msra.mxu0 %v5765
        %6029 = vmatprep.subr.mxu0 0.0
        %6030 = vmatpush1.msra.mxu0 %v5764
        %6031 = vmatprep.subr.mxu0 0.0
        %6032 = vmatpush1.msra.mxu0 %v5763
        %6033 = vmatprep.subr.mxu0 0.0
        %6034 = vmatpush1.msra.mxu0 %v5762
        %6035 = vmatprep.subr.mxu0 0.0
        %6036 = vmatpush2.msra.mxu0 %v5793
        %6037 = vmatprep.subr.mxu0 0.0
        %6038 = vmatpush2.msra.mxu0 %v5792
        %6039 = vmatprep.subr.mxu0 0.0
        %6040 = vmatpush2.msra.mxu0 %v5791
        %6041 = vmatprep.subr.mxu0 0.0
        %6042 = vmatpush2.msra.mxu0 %v5790
        %6043 = vmatprep.subr.mxu0 0.0
        %6044 = vmatpush2.msra.mxu0 %v5789
        %6045 = vmatprep.subr.mxu0 0.0
        %6046 = vmatpush2.msra.mxu0 %v5788
        %6047 = vmatprep.subr.mxu0 0.0
        %6048 = vmatpush2.msra.mxu0 %v5787
        %6049 = vmatprep.subr.mxu0 0.0
        %6050 = vmatpush2.msra.mxu0 %v5786
        %6051 = vmatprep.subr.mxu0 0.0
        %6052 = vmatpush2.msra.mxu0 %v5785
        %6053 = vmatprep.subr.mxu0 0.0
        %6054 = vmatpush2.msra.mxu0 %v5784
        %6055 = vmatprep.subr.mxu0 0.0
        %6056 = vmatpush2.msra.mxu0 %v5783
        %6057 = vmatprep.subr.mxu0 0.0
        %6058 = vmatpush2.msra.mxu0 %v5782
        %6059 = vmatprep.subr.mxu0 0.0
        %6060 = vmatpush2.msra.mxu0 %v5781
        %6061 = vmatprep.subr.mxu0 0.0
        %6062 = vmatpush2.msra.mxu0 %v5780
        %6063 = vmatprep.subr.mxu0 0.0
        %6064 = vmatpush2.msra.mxu0 %v5779
        %6065 = vmatprep.subr.mxu0 0.0
        %6066 = vmatpush2.msra.mxu0 %v5778
        %6067 = vmatprep.mubr.f32.mxu0 %v5605
        %6068 = vmatmul.mubr.f32.gmra.mxu0 %v5604
        %v6069 = vpop.f32.mrf.mxu0
        %v6070 = vadd.f32 %v5925, %v6069
        %v6071 = vpop.f32.mrf.mxu0
        %6072 = vmatprep.mubr.f32.mxu0 %v5613
        %6073 = vmatmul.mubr.f32.gmra.mxu0 %v5612
        %v6074 = vpop.f32.mrf.mxu0
        %v6075 = vadd.f32 %v5930, %v6074
        %v6076 = vpop.f32.mrf.mxu0
        %6077 = vmatprep.mubr.f32.mxu0 %v5621
        %6078 = vmatmul.mubr.f32.gmra.mxu0 %v5620
        %v6079 = vpop.f32.mrf.mxu0
        %v6080 = vadd.f32 %v5935, %v6079
        %v6081 = vpop.f32.mrf.mxu0
        %6082 = vmatprep.mubr.f32.mxu0 %v5629
        %6083 = vmatmul.mubr.f32.gmra.mxu0 %v5628
        %v6084 = vpop.f32.mrf.mxu0
        %v6085 = vadd.f32 %v5940, %v6084
        %v6086 = vpop.f32.mrf.mxu0
        %6087 = vmatprep.mubr.f32.mxu0 %v5637
        %6088 = vmatmul.mubr.f32.gmra.mxu0 %v5636
        %v6089 = vpop.f32.mrf.mxu0
        %v6090 = vadd.f32 %v5945, %v6089
        %v6091 = vpop.f32.mrf.mxu0
        %6092 = vmatprep.mubr.f32.mxu0 %v5645
        %6093 = vmatmul.mubr.f32.gmra.mxu0 %v5644
        %v6094 = vpop.f32.mrf.mxu0
        %v6095 = vadd.f32 %v5950, %v6094
        %v6096 = vpop.f32.mrf.mxu0
        %6097 = vmatprep.mubr.f32.mxu0 %v5653
        %6098 = vmatmul.mubr.f32.gmra.mxu0 %v5652
        %v6099 = vpop.f32.mrf.mxu0
        %v6100 = vadd.f32 %v5955, %v6099
        %v6101 = vpop.f32.mrf.mxu0
        %6102 = vmatprep.mubr.f32.mxu0 %v5661
        %6103 = vmatmul.mubr.f32.gmra.mxu0 %v5660
        %v6104 = vpop.f32.mrf.mxu0
        %v6105 = vadd.f32 %v5960, %v6104
        %v6106 = vpop.f32.mrf.mxu0
        %6107 = vmatprep.mubr.f32.mxu0 %v5669
        %6108 = vmatmul.mubr.f32.gmra.mxu0 %v5668
        %v6109 = vpop.f32.mrf.mxu0
        %v6110 = vadd.f32 %v5965, %v6109
        %v6111 = vpop.f32.mrf.mxu0
        %6112 = vmatprep.mubr.f32.mxu0 %v5677
        %6113 = vmatmul.mubr.f32.gmra.mxu0 %v5676
        %v6114 = vpop.f32.mrf.mxu0
        %v6115 = vadd.f32 %v5970, %v6114
        %v6116 = vpop.f32.mrf.mxu0
        %6117 = vmatprep.mubr.f32.mxu0 %v5685
        %6118 = vmatmul.mubr.f32.gmra.mxu0 %v5684
        %v6119 = vpop.f32.mrf.mxu0
        %v6120 = vadd.f32 %v5975, %v6119
        %v6121 = vpop.f32.mrf.mxu0
        %6122 = vmatprep.mubr.f32.mxu0 %v5693
        %6123 = vmatmul.mubr.f32.gmra.mxu0 %v5692
        %v6124 = vpop.f32.mrf.mxu0
        %v6125 = vadd.f32 %v5980, %v6124
        %v6126 = vpop.f32.mrf.mxu0
        %6127 = vmatprep.mubr.f32.mxu0 %v5701
        %6128 = vmatmul.mubr.f32.gmra.mxu0 %v5700
        %v6129 = vpop.f32.mrf.mxu0
        %v6130 = vadd.f32 %v5985, %v6129
        %v6131 = vpop.f32.mrf.mxu0
        %6132 = vmatprep.mubr.f32.mxu0 %v5709
        %6133 = vmatmul.mubr.f32.gmra.mxu0 %v5708
        %v6134 = vpop.f32.mrf.mxu0
        %v6135 = vadd.f32 %v5990, %v6134
        %v6136 = vpop.f32.mrf.mxu0
        %6137 = vmatprep.mubr.f32.mxu0 %v5717
        %6138 = vmatmul.mubr.f32.gmra.mxu0 %v5716
        %v6139 = vpop.f32.mrf.mxu0
        %v6140 = vadd.f32 %v5995, %v6139
        %v6141 = vpop.f32.mrf.mxu0
        %6142 = vmatprep.mubr.f32.mxu0 %v5725
        %6143 = vmatmul.mubr.f32.gmra.mxu0 %v5724
        %v6144 = vpop.f32.mrf.mxu0
        %v6145 = vadd.f32 %v6000, %v6144
        %v6146 = vpop.f32.mrf.mxu0
        %6147 = vdwg.mxu0
        %6148 = vmatprep.subr.mxu0 0.0
        %6149 = vmatpush1.msra.mxu0 %v5809
        %6150 = vmatprep.subr.mxu0 0.0
        %6151 = vmatpush1.msra.mxu0 %v5808
        %6152 = vmatprep.subr.mxu0 0.0
        %6153 = vmatpush1.msra.mxu0 %v5807
        %6154 = vmatprep.subr.mxu0 0.0
        %6155 = vmatpush1.msra.mxu0 %v5806
        %6156 = vmatprep.subr.mxu0 0.0
        %6157 = vmatpush1.msra.mxu0 %v5805
        %6158 = vmatprep.subr.mxu0 0.0
        %6159 = vmatpush1.msra.mxu0 %v5804
        %6160 = vmatprep.subr.mxu0 0.0
        %6161 = vmatpush1.msra.mxu0 %v5803
        %6162 = vmatprep.subr.mxu0 0.0
        %6163 = vmatpush1.msra.mxu0 %v5802
        %6164 = vmatprep.subr.mxu0 0.0
        %6165 = vmatpush1.msra.mxu0 %v5801
        %6166 = vmatprep.subr.mxu0 0.0
        %6167 = vmatpush1.msra.mxu0 %v5800
        %6168 = vmatprep.subr.mxu0 0.0
        %6169 = vmatpush1.msra.mxu0 %v5799
        %6170 = vmatprep.subr.mxu0 0.0
        %6171 = vmatpush1.msra.mxu0 %v5798
        %6172 = vmatprep.subr.mxu0 0.0
        %6173 = vmatpush1.msra.mxu0 %v5797
        %6174 = vmatprep.subr.mxu0 0.0
        %6175 = vmatpush1.msra.mxu0 %v5796
        %6176 = vmatprep.subr.mxu0 0.0
        %6177 = vmatpush1.msra.mxu0 %v5795
        %6178 = vmatprep.subr.mxu0 0.0
        %6179 = vmatpush1.msra.mxu0 %v5794
        %6180 = vmatprep.subr.mxu0 0.0
        %6181 = vmatpush2.msra.mxu0 %v5825
        %6182 = vmatprep.subr.mxu0 0.0
        %6183 = vmatpush2.msra.mxu0 %v5824
        %6184 = vmatprep.subr.mxu0 0.0
        %6185 = vmatpush2.msra.mxu0 %v5823
        %6186 = vmatprep.subr.mxu0 0.0
        %6187 = vmatpush2.msra.mxu0 %v5822
        %6188 = vmatprep.subr.mxu0 0.0
        %6189 = vmatpush2.msra.mxu0 %v5821
        %6190 = vmatprep.subr.mxu0 0.0
        %6191 = vmatpush2.msra.mxu0 %v5820
        %6192 = vmatprep.subr.mxu0 0.0
        %6193 = vmatpush2.msra.mxu0 %v5819
        %6194 = vmatprep.subr.mxu0 0.0
        %6195 = vmatpush2.msra.mxu0 %v5818
        %6196 = vmatprep.subr.mxu0 0.0
        %6197 = vmatpush2.msra.mxu0 %v5817
        %6198 = vmatprep.subr.mxu0 0.0
        %6199 = vmatpush2.msra.mxu0 %v5816
        %6200 = vmatprep.subr.mxu0 0.0
        %6201 = vmatpush2.msra.mxu0 %v5815
        %6202 = vmatprep.subr.mxu0 0.0
        %6203 = vmatpush2.msra.mxu0 %v5814
        %6204 = vmatprep.subr.mxu0 0.0
        %6205 = vmatpush2.msra.mxu0 %v5813
        %6206 = vmatprep.subr.mxu0 0.0
        %6207 = vmatpush2.msra.mxu0 %v5812
        %6208 = vmatprep.subr.mxu0 0.0
        %6209 = vmatpush2.msra.mxu0 %v5811
        %6210 = vmatprep.subr.mxu0 0.0
        %6211 = vmatpush2.msra.mxu0 %v5810
        %6212 = vmatprep.mubr.f32.mxu0 %v5607
        %6213 = vmatmul.mubr.f32.gmra.mxu0 %v5606
        %v6214 = vpop.f32.mrf.mxu0
        %v6215 = vadd.f32 %v6070, %v6214
        %v6216 = vpop.f32.mrf.mxu0
        %6217 = vmatprep.mubr.f32.mxu0 %v5615
        %6218 = vmatmul.mubr.f32.gmra.mxu0 %v5614
        %v6219 = vpop.f32.mrf.mxu0
        %v6220 = vadd.f32 %v6075, %v6219
        %v6221 = vpop.f32.mrf.mxu0
        %6222 = vmatprep.mubr.f32.mxu0 %v5623
        %6223 = vmatmul.mubr.f32.gmra.mxu0 %v5622
        %v6224 = vpop.f32.mrf.mxu0
        %v6225 = vadd.f32 %v6080, %v6224
        %v6226 = vpop.f32.mrf.mxu0
        %6227 = vmatprep.mubr.f32.mxu0 %v5631
        %6228 = vmatmul.mubr.f32.gmra.mxu0 %v5630
        %v6229 = vpop.f32.mrf.mxu0
        %v6230 = vadd.f32 %v6085, %v6229
        %v6231 = vpop.f32.mrf.mxu0
        %6232 = vmatprep.mubr.f32.mxu0 %v5639
        %6233 = vmatmul.mubr.f32.gmra.mxu0 %v5638
        %v6234 = vpop.f32.mrf.mxu0
        %v6235 = vadd.f32 %v6090, %v6234
        %v6236 = vpop.f32.mrf.mxu0
        %6237 = vmatprep.mubr.f32.mxu0 %v5647
        %6238 = vmatmul.mubr.f32.gmra.mxu0 %v5646
        %v6239 = vpop.f32.mrf.mxu0
        %v6240 = vadd.f32 %v6095, %v6239
        %v6241 = vpop.f32.mrf.mxu0
        %6242 = vmatprep.mubr.f32.mxu0 %v5655
        %6243 = vmatmul.mubr.f32.gmra.mxu0 %v5654
        %v6244 = vpop.f32.mrf.mxu0
        %v6245 = vadd.f32 %v6100, %v6244
        %v6246 = vpop.f32.mrf.mxu0
        %6247 = vmatprep.mubr.f32.mxu0 %v5663
        %6248 = vmatmul.mubr.f32.gmra.mxu0 %v5662
        %v6249 = vpop.f32.mrf.mxu0
        %v6250 = vadd.f32 %v6105, %v6249
        %v6251 = vpop.f32.mrf.mxu0
        %6252 = vmatprep.mubr.f32.mxu0 %v5671
        %6253 = vmatmul.mubr.f32.gmra.mxu0 %v5670
        %v6254 = vpop.f32.mrf.mxu0
        %v6255 = vadd.f32 %v6110, %v6254
        %v6256 = vpop.f32.mrf.mxu0
        %6257 = vmatprep.mubr.f32.mxu0 %v5679
        %6258 = vmatmul.mubr.f32.gmra.mxu0 %v5678
        %v6259 = vpop.f32.mrf.mxu0
        %v6260 = vadd.f32 %v6115, %v6259
        %v6261 = vpop.f32.mrf.mxu0
        %6262 = vmatprep.mubr.f32.mxu0 %v5687
        %6263 = vmatmul.mubr.f32.gmra.mxu0 %v5686
        %v6264 = vpop.f32.mrf.mxu0
        %v6265 = vadd.f32 %v6120, %v6264
        %v6266 = vpop.f32.mrf.mxu0
        %6267 = vmatprep.mubr.f32.mxu0 %v5695
        %6268 = vmatmul.mubr.f32.gmra.mxu0 %v5694
        %v6269 = vpop.f32.mrf.mxu0
        %v6270 = vadd.f32 %v6125, %v6269
        %v6271 = vpop.f32.mrf.mxu0
        %6272 = vmatprep.mubr.f32.mxu0 %v5703
        %6273 = vmatmul.mubr.f32.gmra.mxu0 %v5702
        %v6274 = vpop.f32.mrf.mxu0
        %v6275 = vadd.f32 %v6130, %v6274
        %v6276 = vpop.f32.mrf.mxu0
        %6277 = vmatprep.mubr.f32.mxu0 %v5711
        %6278 = vmatmul.mubr.f32.gmra.mxu0 %v5710
        %v6279 = vpop.f32.mrf.mxu0
        %v6280 = vadd.f32 %v6135, %v6279
        %v6281 = vpop.f32.mrf.mxu0
        %6282 = vmatprep.mubr.f32.mxu0 %v5719
        %6283 = vmatmul.mubr.f32.gmra.mxu0 %v5718
        %v6284 = vpop.f32.mrf.mxu0
        %v6285 = vadd.f32 %v6140, %v6284
        %v6286 = vpop.f32.mrf.mxu0
        %6287 = vmatprep.mubr.f32.mxu0 %v5727
        %6288 = vmatmul.mubr.f32.gmra.mxu0 %v5726
        %v6289 = vpop.f32.mrf.mxu0
        %v6290 = vadd.f32 %v6145, %v6289
        %v6291 = vpop.f32.mrf.mxu0
        %6292 = vdwg.mxu0
        %6293 = vmatprep.subr.mxu0 0.0
        %6294 = vmatpush1.msra.mxu0 %v5841
        %6295 = vmatprep.subr.mxu0 0.0
        %6296 = vmatpush1.msra.mxu0 %v5840
        %6297 = vmatprep.subr.mxu0 0.0
        %6298 = vmatpush1.msra.mxu0 %v5839
        %6299 = vmatprep.subr.mxu0 0.0
        %6300 = vmatpush1.msra.mxu0 %v5838
        %6301 = vmatprep.subr.mxu0 0.0
        %6302 = vmatpush1.msra.mxu0 %v5837
        %6303 = vmatprep.subr.mxu0 0.0
        %6304 = vmatpush1.msra.mxu0 %v5836
        %6305 = vmatprep.subr.mxu0 0.0
        %6306 = vmatpush1.msra.mxu0 %v5835
        %6307 = vmatprep.subr.mxu0 0.0
        %6308 = vmatpush1.msra.mxu0 %v5834
        %6309 = vmatprep.subr.mxu0 0.0
        %6310 = vmatpush1.msra.mxu0 %v5833
        %6311 = vmatprep.subr.mxu0 0.0
        %6312 = vmatpush1.msra.mxu0 %v5832
        %6313 = vmatprep.subr.mxu0 0.0
        %6314 = vmatpush1.msra.mxu0 %v5831
        %6315 = vmatprep.subr.mxu0 0.0
        %6316 = vmatpush1.msra.mxu0 %v5830
        %6317 = vmatprep.subr.mxu0 0.0
        %6318 = vmatpush1.msra.mxu0 %v5829
        %6319 = vmatprep.subr.mxu0 0.0
        %6320 = vmatpush1.msra.mxu0 %v5828
        %6321 = vmatprep.subr.mxu0 0.0
        %6322 = vmatpush1.msra.mxu0 %v5827
        %6323 = vmatprep.subr.mxu0 0.0
        %6324 = vmatpush1.msra.mxu0 %v5826
        %6325 = vmatprep.subr.mxu0 0.0
        %6326 = vmatpush2.msra.mxu0 %v5857
        %6327 = vmatprep.subr.mxu0 0.0
        %6328 = vmatpush2.msra.mxu0 %v5856
        %6329 = vmatprep.subr.mxu0 0.0
        %6330 = vmatpush2.msra.mxu0 %v5855
        %6331 = vmatprep.subr.mxu0 0.0
        %6332 = vmatpush2.msra.mxu0 %v5854
        %6333 = vmatprep.subr.mxu0 0.0
        %6334 = vmatpush2.msra.mxu0 %v5853
        %6335 = vmatprep.subr.mxu0 0.0
        %6336 = vmatpush2.msra.mxu0 %v5852
        %6337 = vmatprep.subr.mxu0 0.0
        %6338 = vmatpush2.msra.mxu0 %v5851
        %6339 = vmatprep.subr.mxu0 0.0
        %6340 = vmatpush2.msra.mxu0 %v5850
        %6341 = vmatprep.subr.mxu0 0.0
        %6342 = vmatpush2.msra.mxu0 %v5849
        %6343 = vmatprep.subr.mxu0 0.0
        %6344 = vmatpush2.msra.mxu0 %v5848
        %6345 = vmatprep.subr.mxu0 0.0
        %6346 = vmatpush2.msra.mxu0 %v5847
        %6347 = vmatprep.subr.mxu0 0.0
        %6348 = vmatpush2.msra.mxu0 %v5846
        %6349 = vmatprep.subr.mxu0 0.0
        %6350 = vmatpush2.msra.mxu0 %v5845
        %6351 = vmatprep.subr.mxu0 0.0
        %6352 = vmatpush2.msra.mxu0 %v5844
        %6353 = vmatprep.subr.mxu0 0.0
        %6354 = vmatpush2.msra.mxu0 %v5843
        %6355 = vmatprep.subr.mxu0 0.0
        %6356 = vmatpush2.msra.mxu0 %v5842
        %6357 = vmatprep.mubr.f32.mxu0 %v5609
        %6358 = vmatmul.mubr.f32.gmra.mxu0 %v5608
        %v6359 = vpop.f32.mrf.mxu0
        %v6360 = vadd.f32 %v6215, %v6359
        %v6361 = vpop.f32.mrf.mxu0
        %6362 = vmatprep.mubr.f32.mxu0 %v5617
        %6363 = vmatmul.mubr.f32.gmra.mxu0 %v5616
        %v6364 = vpop.f32.mrf.mxu0
        %v6365 = vadd.f32 %v6220, %v6364
        %v6366 = vpop.f32.mrf.mxu0
        %6367 = vmatprep.mubr.f32.mxu0 %v5625
        %6368 = vmatmul.mubr.f32.gmra.mxu0 %v5624
        %v6369 = vpop.f32.mrf.mxu0
        %v6370 = vadd.f32 %v6225, %v6369
        %v6371 = vpop.f32.mrf.mxu0
        %6372 = vmatprep.mubr.f32.mxu0 %v5633
        %6373 = vmatmul.mubr.f32.gmra.mxu0 %v5632
        %v6374 = vpop.f32.mrf.mxu0
        %v6375 = vadd.f32 %v6230, %v6374
        %v6376 = vpop.f32.mrf.mxu0
        %6377 = vmatprep.mubr.f32.mxu0 %v5641
        %6378 = vmatmul.mubr.f32.gmra.mxu0 %v5640
        %v6379 = vpop.f32.mrf.mxu0
        %v6380 = vadd.f32 %v6235, %v6379
        %v6381 = vpop.f32.mrf.mxu0
        %6382 = vmatprep.mubr.f32.mxu0 %v5649
        %6383 = vmatmul.mubr.f32.gmra.mxu0 %v5648
        %v6384 = vpop.f32.mrf.mxu0
        %v6385 = vadd.f32 %v6240, %v6384
        %v6386 = vpop.f32.mrf.mxu0
        %6387 = vmatprep.mubr.f32.mxu0 %v5657
        %6388 = vmatmul.mubr.f32.gmra.mxu0 %v5656
        %v6389 = vpop.f32.mrf.mxu0
        %v6390 = vadd.f32 %v6245, %v6389
        %v6391 = vpop.f32.mrf.mxu0
        %6392 = vmatprep.mubr.f32.mxu0 %v5665
        %6393 = vmatmul.mubr.f32.gmra.mxu0 %v5664
        %v6394 = vpop.f32.mrf.mxu0
        %v6395 = vadd.f32 %v6250, %v6394
        %v6396 = vpop.f32.mrf.mxu0
        %6397 = vmatprep.mubr.f32.mxu0 %v5673
        %6398 = vmatmul.mubr.f32.gmra.mxu0 %v5672
        %v6399 = vpop.f32.mrf.mxu0
        %v6400 = vadd.f32 %v6255, %v6399
        %v6401 = vpop.f32.mrf.mxu0
        %6402 = vmatprep.mubr.f32.mxu0 %v5681
        %6403 = vmatmul.mubr.f32.gmra.mxu0 %v5680
        %v6404 = vpop.f32.mrf.mxu0
        %v6405 = vadd.f32 %v6260, %v6404
        %v6406 = vpop.f32.mrf.mxu0
        %6407 = vmatprep.mubr.f32.mxu0 %v5689
        %6408 = vmatmul.mubr.f32.gmra.mxu0 %v5688
        %v6409 = vpop.f32.mrf.mxu0
        %v6410 = vadd.f32 %v6265, %v6409
        %v6411 = vpop.f32.mrf.mxu0
        %6412 = vmatprep.mubr.f32.mxu0 %v5697
        %6413 = vmatmul.mubr.f32.gmra.mxu0 %v5696
        %v6414 = vpop.f32.mrf.mxu0
        %v6415 = vadd.f32 %v6270, %v6414
        %v6416 = vpop.f32.mrf.mxu0
        %6417 = vmatprep.mubr.f32.mxu0 %v5705
        %6418 = vmatmul.mubr.f32.gmra.mxu0 %v5704
        %v6419 = vpop.f32.mrf.mxu0
        %v6420 = vadd.f32 %v6275, %v6419
        %v6421 = vpop.f32.mrf.mxu0
        %6422 = vmatprep.mubr.f32.mxu0 %v5713
        %6423 = vmatmul.mubr.f32.gmra.mxu0 %v5712
        %v6424 = vpop.f32.mrf.mxu0
        %v6425 = vadd.f32 %v6280, %v6424
        %v6426 = vpop.f32.mrf.mxu0
        %6427 = vmatprep.mubr.f32.mxu0 %v5721
        %6428 = vmatmul.mubr.f32.gmra.mxu0 %v5720
        %v6429 = vpop.f32.mrf.mxu0
        %v6430 = vadd.f32 %v6285, %v6429
        %v6431 = vpop.f32.mrf.mxu0
        %6432 = vmatprep.mubr.f32.mxu0 %v5729
        %6433 = vmatmul.mubr.f32.gmra.mxu0 %v5728
        %v6434 = vpop.f32.mrf.mxu0
        %v6435 = vadd.f32 %v6290, %v6434
        %v6436 = vpop.f32.mrf.mxu0
        %6437 = vdwg.mxu0
        %v6438 = vadd.f32 %v5524, %v6360
        %v6439 = vadd.f32 %v5529, %v6365
        %v6440 = vadd.f32 %v5534, %v6370
        %v6441 = vadd.f32 %v5539, %v6375
        %v6442 = vadd.f32 %v5544, %v6380
        %v6443 = vadd.f32 %v5549, %v6385
        %v6444 = vadd.f32 %v5554, %v6390
        %v6445 = vadd.f32 %v5559, %v6395
        %v6446 = vadd.f32 %v5564, %v6400
        %v6447 = vadd.f32 %v5569, %v6405
        %v6448 = vadd.f32 %v5574, %v6410
        %v6449 = vadd.f32 %v5579, %v6415
        %v6450 = vadd.f32 %v5584, %v6420
        %v6451 = vadd.f32 %v5589, %v6425
        %v6452 = vadd.f32 %v5594, %v6430
        %v6453 = vadd.f32 %v5599, %v6435
        %v6454 = vld [vmem:[%s503] sm:$0xff]
        %v6455 = vld [vmem:[%s503 + $0x8] sm:$0xff]
        %v6456 = vld [vmem:[%s503 + $0x10] sm:$0xff]
        %v6457 = vld [vmem:[%s503 + $0x18] sm:$0xff]
        %v6458 = vld [vmem:[%s503 + $0x20] sm:$0xff]
        %v6459 = vld [vmem:[%s503 + $0x28] sm:$0xff]
        %v6460 = vld [vmem:[%s503 + $0x30] sm:$0xff]
        %v6461 = vld [vmem:[%s503 + $0x38] sm:$0xff]
        %v6462 = vld [vmem:[%s503 + $0x40] sm:$0xff]
        %v6463 = vld [vmem:[%s503 + $0x48] sm:$0xff]
        %v6464 = vld [vmem:[%s503 + $0x50] sm:$0xff]
        %v6465 = vld [vmem:[%s503 + $0x58] sm:$0xff]
        %v6466 = vld [vmem:[%s503 + $0x60] sm:$0xff]
        %v6467 = vld [vmem:[%s503 + $0x68] sm:$0xff]
        %v6468 = vld [vmem:[%s503 + $0x70] sm:$0xff]
        %v6469 = vld [vmem:[%s503 + $0x78] sm:$0xff]
        %v6470 = vld [vmem:[%s503 + $0x80] sm:$0xff]
        %v6471 = vld [vmem:[%s503 + $0x88] sm:$0xff]
        %v6472 = vld [vmem:[%s503 + $0x90] sm:$0xff]
        %v6473 = vld [vmem:[%s503 + $0x98] sm:$0xff]
        %v6474 = vld [vmem:[%s503 + $0xa0] sm:$0xff]
        %v6475 = vld [vmem:[%s503 + $0xa8] sm:$0xff]
        %v6476 = vld [vmem:[%s503 + $0xb0] sm:$0xff]
        %v6477 = vld [vmem:[%s503 + $0xb8] sm:$0xff]
        %v6478 = vld [vmem:[%s503 + $0xc0] sm:$0xff]
        %v6479 = vld [vmem:[%s503 + $0xc8] sm:$0xff]
        %v6480 = vld [vmem:[%s503 + $0xd0] sm:$0xff]
        %v6481 = vld [vmem:[%s503 + $0xd8] sm:$0xff]
        %v6482 = vld [vmem:[%s503 + $0xe0] sm:$0xff]
        %v6483 = vld [vmem:[%s503 + $0xe8] sm:$0xff]
        %v6484 = vld [vmem:[%s503 + $0xf0] sm:$0xff]
        %v6485 = vld [vmem:[%s503 + $0xf8] sm:$0xff]
        %v6486 = vld [vmem:[%s503 + $0x100] sm:$0xff]
        %v6487 = vld [vmem:[%s503 + $0x108] sm:$0xff]
        %v6488 = vld [vmem:[%s503 + $0x110] sm:$0xff]
        %v6489 = vld [vmem:[%s503 + $0x118] sm:$0xff]
        %v6490 = vld [vmem:[%s503 + $0x120] sm:$0xff]
        %v6491 = vld [vmem:[%s503 + $0x128] sm:$0xff]
        %v6492 = vld [vmem:[%s503 + $0x130] sm:$0xff]
        %v6493 = vld [vmem:[%s503 + $0x138] sm:$0xff]
        %v6494 = vld [vmem:[%s503 + $0x140] sm:$0xff]
        %v6495 = vld [vmem:[%s503 + $0x148] sm:$0xff]
        %v6496 = vld [vmem:[%s503 + $0x150] sm:$0xff]
        %v6497 = vld [vmem:[%s503 + $0x158] sm:$0xff]
        %v6498 = vld [vmem:[%s503 + $0x160] sm:$0xff]
        %v6499 = vld [vmem:[%s503 + $0x168] sm:$0xff]
        %v6500 = vld [vmem:[%s503 + $0x170] sm:$0xff]
        %v6501 = vld [vmem:[%s503 + $0x178] sm:$0xff]
        %v6502 = vld [vmem:[%s503 + $0x180] sm:$0xff]
        %v6503 = vld [vmem:[%s503 + $0x188] sm:$0xff]
        %v6504 = vld [vmem:[%s503 + $0x190] sm:$0xff]
        %v6505 = vld [vmem:[%s503 + $0x198] sm:$0xff]
        %v6506 = vld [vmem:[%s503 + $0x1a0] sm:$0xff]
        %v6507 = vld [vmem:[%s503 + $0x1a8] sm:$0xff]
        %v6508 = vld [vmem:[%s503 + $0x1b0] sm:$0xff]
        %v6509 = vld [vmem:[%s503 + $0x1b8] sm:$0xff]
        %v6510 = vld [vmem:[%s503 + $0x1c0] sm:$0xff]
        %v6511 = vld [vmem:[%s503 + $0x1c8] sm:$0xff]
        %v6512 = vld [vmem:[%s503 + $0x1d0] sm:$0xff]
        %v6513 = vld [vmem:[%s503 + $0x1d8] sm:$0xff]
        %v6514 = vld [vmem:[%s503 + $0x1e0] sm:$0xff]
        %v6515 = vld [vmem:[%s503 + $0x1e8] sm:$0xff]
        %v6516 = vld [vmem:[%s503 + $0x1f0] sm:$0xff]
        %v6517 = vld [vmem:[%s503 + $0x1f8] sm:$0xff]
        %v6518 = vld [vmem:[#allocation14] sm:$0xff]
        %v6519 = vld [vmem:[#allocation14 + $0x8] sm:$0xff]
        %v6520 = vld [vmem:[#allocation14 + $0x10] sm:$0xff]
        %v6521 = vld [vmem:[#allocation14 + $0x18] sm:$0xff]
        %v6522 = vld [vmem:[#allocation14 + $0x20] sm:$0xff]
        %v6523 = vld [vmem:[#allocation14 + $0x28] sm:$0xff]
        %v6524 = vld [vmem:[#allocation14 + $0x30] sm:$0xff]
        %v6525 = vld [vmem:[#allocation14 + $0x38] sm:$0xff]
        %v6526 = vld [vmem:[#allocation14 + $0x40] sm:$0xff]
        %v6527 = vld [vmem:[#allocation14 + $0x48] sm:$0xff]
        %v6528 = vld [vmem:[#allocation14 + $0x50] sm:$0xff]
        %v6529 = vld [vmem:[#allocation14 + $0x58] sm:$0xff]
        %v6530 = vld [vmem:[#allocation14 + $0x60] sm:$0xff]
        %v6531 = vld [vmem:[#allocation14 + $0x68] sm:$0xff]
        %v6532 = vld [vmem:[#allocation14 + $0x70] sm:$0xff]
        %v6533 = vld [vmem:[#allocation14 + $0x78] sm:$0xff]
        %v6534 = vld [vmem:[#allocation14 + $0x80] sm:$0xff]
        %v6535 = vld [vmem:[#allocation14 + $0x88] sm:$0xff]
        %v6536 = vld [vmem:[#allocation14 + $0x90] sm:$0xff]
        %v6537 = vld [vmem:[#allocation14 + $0x98] sm:$0xff]
        %v6538 = vld [vmem:[#allocation14 + $0xa0] sm:$0xff]
        %v6539 = vld [vmem:[#allocation14 + $0xa8] sm:$0xff]
        %v6540 = vld [vmem:[#allocation14 + $0xb0] sm:$0xff]
        %v6541 = vld [vmem:[#allocation14 + $0xb8] sm:$0xff]
        %v6542 = vld [vmem:[#allocation14 + $0xc0] sm:$0xff]
        %v6543 = vld [vmem:[#allocation14 + $0xc8] sm:$0xff]
        %v6544 = vld [vmem:[#allocation14 + $0xd0] sm:$0xff]
        %v6545 = vld [vmem:[#allocation14 + $0xd8] sm:$0xff]
        %v6546 = vld [vmem:[#allocation14 + $0xe0] sm:$0xff]
        %v6547 = vld [vmem:[#allocation14 + $0xe8] sm:$0xff]
        %v6548 = vld [vmem:[#allocation14 + $0xf0] sm:$0xff]
        %v6549 = vld [vmem:[#allocation14 + $0xf8] sm:$0xff]
        %v6550 = vld [vmem:[#allocation14 + $0x100] sm:$0xff]
        %v6551 = vld [vmem:[#allocation14 + $0x108] sm:$0xff]
        %v6552 = vld [vmem:[#allocation14 + $0x110] sm:$0xff]
        %v6553 = vld [vmem:[#allocation14 + $0x118] sm:$0xff]
        %v6554 = vld [vmem:[#allocation14 + $0x120] sm:$0xff]
        %v6555 = vld [vmem:[#allocation14 + $0x128] sm:$0xff]
        %v6556 = vld [vmem:[#allocation14 + $0x130] sm:$0xff]
        %v6557 = vld [vmem:[#allocation14 + $0x138] sm:$0xff]
        %v6558 = vld [vmem:[#allocation14 + $0x140] sm:$0xff]
        %v6559 = vld [vmem:[#allocation14 + $0x148] sm:$0xff]
        %v6560 = vld [vmem:[#allocation14 + $0x150] sm:$0xff]
        %v6561 = vld [vmem:[#allocation14 + $0x158] sm:$0xff]
        %v6562 = vld [vmem:[#allocation14 + $0x160] sm:$0xff]
        %v6563 = vld [vmem:[#allocation14 + $0x168] sm:$0xff]
        %v6564 = vld [vmem:[#allocation14 + $0x170] sm:$0xff]
        %v6565 = vld [vmem:[#allocation14 + $0x178] sm:$0xff]
        %v6566 = vld [vmem:[#allocation14 + $0x180] sm:$0xff]
        %v6567 = vld [vmem:[#allocation14 + $0x188] sm:$0xff]
        %v6568 = vld [vmem:[#allocation14 + $0x190] sm:$0xff]
        %v6569 = vld [vmem:[#allocation14 + $0x198] sm:$0xff]
        %v6570 = vld [vmem:[#allocation14 + $0x1a0] sm:$0xff]
        %v6571 = vld [vmem:[#allocation14 + $0x1a8] sm:$0xff]
        %v6572 = vld [vmem:[#allocation14 + $0x1b0] sm:$0xff]
        %v6573 = vld [vmem:[#allocation14 + $0x1b8] sm:$0xff]
        %v6574 = vld [vmem:[#allocation14 + $0x1c0] sm:$0xff]
        %v6575 = vld [vmem:[#allocation14 + $0x1c8] sm:$0xff]
        %v6576 = vld [vmem:[#allocation14 + $0x1d0] sm:$0xff]
        %v6577 = vld [vmem:[#allocation14 + $0x1d8] sm:$0xff]
        %v6578 = vld [vmem:[#allocation14 + $0x1e0] sm:$0xff]
        %v6579 = vld [vmem:[#allocation14 + $0x1e8] sm:$0xff]
        %v6580 = vld [vmem:[#allocation14 + $0x1f0] sm:$0xff]
        %v6581 = vld [vmem:[#allocation14 + $0x1f8] sm:$0xff]
        %6582 = vmatprep.subr.mxu0 0.0
        %6583 = vmatpush1.msra.mxu0 %v6533
        %6584 = vmatprep.subr.mxu0 0.0
        %6585 = vmatpush1.msra.mxu0 %v6532
        %6586 = vmatprep.subr.mxu0 0.0
        %6587 = vmatpush1.msra.mxu0 %v6531
        %6588 = vmatprep.subr.mxu0 0.0
        %6589 = vmatpush1.msra.mxu0 %v6530
        %6590 = vmatprep.subr.mxu0 0.0
        %6591 = vmatpush1.msra.mxu0 %v6529
        %6592 = vmatprep.subr.mxu0 0.0
        %6593 = vmatpush1.msra.mxu0 %v6528
        %6594 = vmatprep.subr.mxu0 0.0
        %6595 = vmatpush1.msra.mxu0 %v6527
        %6596 = vmatprep.subr.mxu0 0.0
        %6597 = vmatpush1.msra.mxu0 %v6526
        %6598 = vmatprep.subr.mxu0 0.0
        %6599 = vmatpush1.msra.mxu0 %v6525
        %6600 = vmatprep.subr.mxu0 0.0
        %6601 = vmatpush1.msra.mxu0 %v6524
        %6602 = vmatprep.subr.mxu0 0.0
        %6603 = vmatpush1.msra.mxu0 %v6523
        %6604 = vmatprep.subr.mxu0 0.0
        %6605 = vmatpush1.msra.mxu0 %v6522
        %6606 = vmatprep.subr.mxu0 0.0
        %6607 = vmatpush1.msra.mxu0 %v6521
        %6608 = vmatprep.subr.mxu0 0.0
        %6609 = vmatpush1.msra.mxu0 %v6520
        %6610 = vmatprep.subr.mxu0 0.0
        %6611 = vmatpush1.msra.mxu0 %v6519
        %6612 = vmatprep.subr.mxu0 0.0
        %6613 = vmatpush1.msra.mxu0 %v6518
        %6614 = vmatprep.subr.mxu0 0.0
        %6615 = vmatpush2.msra.mxu0 %v6549
        %6616 = vmatprep.subr.mxu0 0.0
        %6617 = vmatpush2.msra.mxu0 %v6548
        %6618 = vmatprep.subr.mxu0 0.0
        %6619 = vmatpush2.msra.mxu0 %v6547
        %6620 = vmatprep.subr.mxu0 0.0
        %6621 = vmatpush2.msra.mxu0 %v6546
        %6622 = vmatprep.subr.mxu0 0.0
        %6623 = vmatpush2.msra.mxu0 %v6545
        %6624 = vmatprep.subr.mxu0 0.0
        %6625 = vmatpush2.msra.mxu0 %v6544
        %6626 = vmatprep.subr.mxu0 0.0
        %6627 = vmatpush2.msra.mxu0 %v6543
        %6628 = vmatprep.subr.mxu0 0.0
        %6629 = vmatpush2.msra.mxu0 %v6542
        %6630 = vmatprep.subr.mxu0 0.0
        %6631 = vmatpush2.msra.mxu0 %v6541
        %6632 = vmatprep.subr.mxu0 0.0
        %6633 = vmatpush2.msra.mxu0 %v6540
        %6634 = vmatprep.subr.mxu0 0.0
        %6635 = vmatpush2.msra.mxu0 %v6539
        %6636 = vmatprep.subr.mxu0 0.0
        %6637 = vmatpush2.msra.mxu0 %v6538
        %6638 = vmatprep.subr.mxu0 0.0
        %6639 = vmatpush2.msra.mxu0 %v6537
        %6640 = vmatprep.subr.mxu0 0.0
        %6641 = vmatpush2.msra.mxu0 %v6536
        %6642 = vmatprep.subr.mxu0 0.0
        %6643 = vmatpush2.msra.mxu0 %v6535
        %6644 = vmatprep.subr.mxu0 0.0
        %6645 = vmatpush2.msra.mxu0 %v6534
        %6646 = vmatprep.mubr.f32.mxu0 %v6455
        %6647 = vmatmul.mubr.f32.gmra.mxu0 %v6454
        %v6648 = vpop.f32.mrf.mxu0
        %v6649 = vadd.f32 0.0, %v6648
        %v6650 = vpop.f32.mrf.mxu0
        %6651 = vmatprep.mubr.f32.mxu0 %v6459
        %6652 = vmatmul.mubr.f32.gmra.mxu0 %v6458
        %v6653 = vpop.f32.mrf.mxu0
        %v6654 = vadd.f32 0.0, %v6653
        %v6655 = vpop.f32.mrf.mxu0
        %6656 = vmatprep.mubr.f32.mxu0 %v6463
        %6657 = vmatmul.mubr.f32.gmra.mxu0 %v6462
        %v6658 = vpop.f32.mrf.mxu0
        %v6659 = vadd.f32 0.0, %v6658
        %v6660 = vpop.f32.mrf.mxu0
        %6661 = vmatprep.mubr.f32.mxu0 %v6467
        %6662 = vmatmul.mubr.f32.gmra.mxu0 %v6466
        %v6663 = vpop.f32.mrf.mxu0
        %v6664 = vadd.f32 0.0, %v6663
        %v6665 = vpop.f32.mrf.mxu0
        %6666 = vmatprep.mubr.f32.mxu0 %v6471
        %6667 = vmatmul.mubr.f32.gmra.mxu0 %v6470
        %v6668 = vpop.f32.mrf.mxu0
        %v6669 = vadd.f32 0.0, %v6668
        %v6670 = vpop.f32.mrf.mxu0
        %6671 = vmatprep.mubr.f32.mxu0 %v6475
        %6672 = vmatmul.mubr.f32.gmra.mxu0 %v6474
        %v6673 = vpop.f32.mrf.mxu0
        %v6674 = vadd.f32 0.0, %v6673
        %v6675 = vpop.f32.mrf.mxu0
        %6676 = vmatprep.mubr.f32.mxu0 %v6479
        %6677 = vmatmul.mubr.f32.gmra.mxu0 %v6478
        %v6678 = vpop.f32.mrf.mxu0
        %v6679 = vadd.f32 0.0, %v6678
        %v6680 = vpop.f32.mrf.mxu0
        %6681 = vmatprep.mubr.f32.mxu0 %v6483
        %6682 = vmatmul.mubr.f32.gmra.mxu0 %v6482
        %v6683 = vpop.f32.mrf.mxu0
        %v6684 = vadd.f32 0.0, %v6683
        %v6685 = vpop.f32.mrf.mxu0
        %6686 = vmatprep.mubr.f32.mxu0 %v6487
        %6687 = vmatmul.mubr.f32.gmra.mxu0 %v6486
        %v6688 = vpop.f32.mrf.mxu0
        %v6689 = vadd.f32 0.0, %v6688
        %v6690 = vpop.f32.mrf.mxu0
        %6691 = vmatprep.mubr.f32.mxu0 %v6491
        %6692 = vmatmul.mubr.f32.gmra.mxu0 %v6490
        %v6693 = vpop.f32.mrf.mxu0
        %v6694 = vadd.f32 0.0, %v6693
        %v6695 = vpop.f32.mrf.mxu0
        %6696 = vmatprep.mubr.f32.mxu0 %v6495
        %6697 = vmatmul.mubr.f32.gmra.mxu0 %v6494
        %v6698 = vpop.f32.mrf.mxu0
        %v6699 = vadd.f32 0.0, %v6698
        %v6700 = vpop.f32.mrf.mxu0
        %6701 = vmatprep.mubr.f32.mxu0 %v6499
        %6702 = vmatmul.mubr.f32.gmra.mxu0 %v6498
        %v6703 = vpop.f32.mrf.mxu0
        %v6704 = vadd.f32 0.0, %v6703
        %v6705 = vpop.f32.mrf.mxu0
        %6706 = vmatprep.mubr.f32.mxu0 %v6503
        %6707 = vmatmul.mubr.f32.gmra.mxu0 %v6502
        %v6708 = vpop.f32.mrf.mxu0
        %v6709 = vadd.f32 0.0, %v6708
        %v6710 = vpop.f32.mrf.mxu0
        %6711 = vmatprep.mubr.f32.mxu0 %v6507
        %6712 = vmatmul.mubr.f32.gmra.mxu0 %v6506
        %v6713 = vpop.f32.mrf.mxu0
        %v6714 = vadd.f32 0.0, %v6713
        %v6715 = vpop.f32.mrf.mxu0
        %6716 = vmatprep.mubr.f32.mxu0 %v6511
        %6717 = vmatmul.mubr.f32.gmra.mxu0 %v6510
        %v6718 = vpop.f32.mrf.mxu0
        %v6719 = vadd.f32 0.0, %v6718
        %v6720 = vpop.f32.mrf.mxu0
        %6721 = vmatprep.mubr.f32.mxu0 %v6515
        %6722 = vmatmul.mubr.f32.gmra.mxu0 %v6514
        %v6723 = vpop.f32.mrf.mxu0
        %v6724 = vadd.f32 0.0, %v6723
        %v6725 = vpop.f32.mrf.mxu0
        %6726 = vdwg.mxu0
        %6727 = vmatprep.subr.mxu0 0.0
        %6728 = vmatpush1.msra.mxu0 %v6565
        %6729 = vmatprep.subr.mxu0 0.0
        %6730 = vmatpush1.msra.mxu0 %v6564
        %6731 = vmatprep.subr.mxu0 0.0
        %6732 = vmatpush1.msra.mxu0 %v6563
        %6733 = vmatprep.subr.mxu0 0.0
        %6734 = vmatpush1.msra.mxu0 %v6562
        %6735 = vmatprep.subr.mxu0 0.0
        %6736 = vmatpush1.msra.mxu0 %v6561
        %6737 = vmatprep.subr.mxu0 0.0
        %6738 = vmatpush1.msra.mxu0 %v6560
        %6739 = vmatprep.subr.mxu0 0.0
        %6740 = vmatpush1.msra.mxu0 %v6559
        %6741 = vmatprep.subr.mxu0 0.0
        %6742 = vmatpush1.msra.mxu0 %v6558
        %6743 = vmatprep.subr.mxu0 0.0
        %6744 = vmatpush1.msra.mxu0 %v6557
        %6745 = vmatprep.subr.mxu0 0.0
        %6746 = vmatpush1.msra.mxu0 %v6556
        %6747 = vmatprep.subr.mxu0 0.0
        %6748 = vmatpush1.msra.mxu0 %v6555
        %6749 = vmatprep.subr.mxu0 0.0
        %6750 = vmatpush1.msra.mxu0 %v6554
        %6751 = vmatprep.subr.mxu0 0.0
        %6752 = vmatpush1.msra.mxu0 %v6553
        %6753 = vmatprep.subr.mxu0 0.0
        %6754 = vmatpush1.msra.mxu0 %v6552
        %6755 = vmatprep.subr.mxu0 0.0
        %6756 = vmatpush1.msra.mxu0 %v6551
        %6757 = vmatprep.subr.mxu0 0.0
        %6758 = vmatpush1.msra.mxu0 %v6550
        %6759 = vmatprep.subr.mxu0 0.0
        %6760 = vmatpush2.msra.mxu0 %v6581
        %6761 = vmatprep.subr.mxu0 0.0
        %6762 = vmatpush2.msra.mxu0 %v6580
        %6763 = vmatprep.subr.mxu0 0.0
        %6764 = vmatpush2.msra.mxu0 %v6579
        %6765 = vmatprep.subr.mxu0 0.0
        %6766 = vmatpush2.msra.mxu0 %v6578
        %6767 = vmatprep.subr.mxu0 0.0
        %6768 = vmatpush2.msra.mxu0 %v6577
        %6769 = vmatprep.subr.mxu0 0.0
        %6770 = vmatpush2.msra.mxu0 %v6576
        %6771 = vmatprep.subr.mxu0 0.0
        %6772 = vmatpush2.msra.mxu0 %v6575
        %6773 = vmatprep.subr.mxu0 0.0
        %6774 = vmatpush2.msra.mxu0 %v6574
        %6775 = vmatprep.subr.mxu0 0.0
        %6776 = vmatpush2.msra.mxu0 %v6573
        %6777 = vmatprep.subr.mxu0 0.0
        %6778 = vmatpush2.msra.mxu0 %v6572
        %6779 = vmatprep.subr.mxu0 0.0
        %6780 = vmatpush2.msra.mxu0 %v6571
        %6781 = vmatprep.subr.mxu0 0.0
        %6782 = vmatpush2.msra.mxu0 %v6570
        %6783 = vmatprep.subr.mxu0 0.0
        %6784 = vmatpush2.msra.mxu0 %v6569
        %6785 = vmatprep.subr.mxu0 0.0
        %6786 = vmatpush2.msra.mxu0 %v6568
        %6787 = vmatprep.subr.mxu0 0.0
        %6788 = vmatpush2.msra.mxu0 %v6567
        %6789 = vmatprep.subr.mxu0 0.0
        %6790 = vmatpush2.msra.mxu0 %v6566
        %6791 = vmatprep.mubr.f32.mxu0 %v6457
        %6792 = vmatmul.mubr.f32.gmra.mxu0 %v6456
        %v6793 = vpop.f32.mrf.mxu0
        %v6794 = vadd.f32 %v6649, %v6793
        %v6795 = vpop.f32.mrf.mxu0
        %6796 = vmatprep.mubr.f32.mxu0 %v6461
        %6797 = vmatmul.mubr.f32.gmra.mxu0 %v6460
        %v6798 = vpop.f32.mrf.mxu0
        %v6799 = vadd.f32 %v6654, %v6798
        %v6800 = vpop.f32.mrf.mxu0
        %6801 = vmatprep.mubr.f32.mxu0 %v6465
        %6802 = vmatmul.mubr.f32.gmra.mxu0 %v6464
        %v6803 = vpop.f32.mrf.mxu0
        %v6804 = vadd.f32 %v6659, %v6803
        %v6805 = vpop.f32.mrf.mxu0
        %6806 = vmatprep.mubr.f32.mxu0 %v6469
        %6807 = vmatmul.mubr.f32.gmra.mxu0 %v6468
        %v6808 = vpop.f32.mrf.mxu0
        %v6809 = vadd.f32 %v6664, %v6808
        %v6810 = vpop.f32.mrf.mxu0
        %6811 = vmatprep.mubr.f32.mxu0 %v6473
        %6812 = vmatmul.mubr.f32.gmra.mxu0 %v6472
        %v6813 = vpop.f32.mrf.mxu0
        %v6814 = vadd.f32 %v6669, %v6813
        %v6815 = vpop.f32.mrf.mxu0
        %6816 = vmatprep.mubr.f32.mxu0 %v6477
        %6817 = vmatmul.mubr.f32.gmra.mxu0 %v6476
        %v6818 = vpop.f32.mrf.mxu0
        %v6819 = vadd.f32 %v6674, %v6818
        %v6820 = vpop.f32.mrf.mxu0
        %6821 = vmatprep.mubr.f32.mxu0 %v6481
        %6822 = vmatmul.mubr.f32.gmra.mxu0 %v6480
        %v6823 = vpop.f32.mrf.mxu0
        %v6824 = vadd.f32 %v6679, %v6823
        %v6825 = vpop.f32.mrf.mxu0
        %6826 = vmatprep.mubr.f32.mxu0 %v6485
        %6827 = vmatmul.mubr.f32.gmra.mxu0 %v6484
        %v6828 = vpop.f32.mrf.mxu0
        %v6829 = vadd.f32 %v6684, %v6828
        %v6830 = vpop.f32.mrf.mxu0
        %6831 = vmatprep.mubr.f32.mxu0 %v6489
        %6832 = vmatmul.mubr.f32.gmra.mxu0 %v6488
        %v6833 = vpop.f32.mrf.mxu0
        %v6834 = vadd.f32 %v6689, %v6833
        %v6835 = vpop.f32.mrf.mxu0
        %6836 = vmatprep.mubr.f32.mxu0 %v6493
        %6837 = vmatmul.mubr.f32.gmra.mxu0 %v6492
        %v6838 = vpop.f32.mrf.mxu0
        %v6839 = vadd.f32 %v6694, %v6838
        %v6840 = vpop.f32.mrf.mxu0
        %6841 = vmatprep.mubr.f32.mxu0 %v6497
        %6842 = vmatmul.mubr.f32.gmra.mxu0 %v6496
        %v6843 = vpop.f32.mrf.mxu0
        %v6844 = vadd.f32 %v6699, %v6843
        %v6845 = vpop.f32.mrf.mxu0
        %6846 = vmatprep.mubr.f32.mxu0 %v6501
        %6847 = vmatmul.mubr.f32.gmra.mxu0 %v6500
        %v6848 = vpop.f32.mrf.mxu0
        %v6849 = vadd.f32 %v6704, %v6848
        %v6850 = vpop.f32.mrf.mxu0
        %6851 = vmatprep.mubr.f32.mxu0 %v6505
        %6852 = vmatmul.mubr.f32.gmra.mxu0 %v6504
        %v6853 = vpop.f32.mrf.mxu0
        %v6854 = vadd.f32 %v6709, %v6853
        %v6855 = vpop.f32.mrf.mxu0
        %6856 = vmatprep.mubr.f32.mxu0 %v6509
        %6857 = vmatmul.mubr.f32.gmra.mxu0 %v6508
        %v6858 = vpop.f32.mrf.mxu0
        %v6859 = vadd.f32 %v6714, %v6858
        %v6860 = vpop.f32.mrf.mxu0
        %6861 = vmatprep.mubr.f32.mxu0 %v6513
        %6862 = vmatmul.mubr.f32.gmra.mxu0 %v6512
        %v6863 = vpop.f32.mrf.mxu0
        %v6864 = vadd.f32 %v6719, %v6863
        %v6865 = vpop.f32.mrf.mxu0
        %6866 = vmatprep.mubr.f32.mxu0 %v6517
        %6867 = vmatmul.mubr.f32.gmra.mxu0 %v6516
        %v6868 = vpop.f32.mrf.mxu0
        %v6869 = vadd.f32 %v6724, %v6868
        %v6870 = vpop.f32.mrf.mxu0
        %6871 = vdwg.mxu0
        %v6872 = vadd.f32 %v6438, %v6794
        %v6873 = vadd.f32 %v6439, %v6799
        %v6874 = vadd.f32 %v6440, %v6804
        %v6875 = vadd.f32 %v6441, %v6809
        %v6876 = vadd.f32 %v6442, %v6814
        %v6877 = vadd.f32 %v6443, %v6819
        %v6878 = vadd.f32 %v6444, %v6824
        %v6879 = vadd.f32 %v6445, %v6829
        %v6880 = vadd.f32 %v6446, %v6834
        %v6881 = vadd.f32 %v6447, %v6839
        %v6882 = vadd.f32 %v6448, %v6844
        %v6883 = vadd.f32 %v6449, %v6849
        %v6884 = vadd.f32 %v6450, %v6854
        %v6885 = vadd.f32 %v6451, %v6859
        %v6886 = vadd.f32 %v6452, %v6864
        %v6887 = vadd.f32 %v6453, %v6869
        %v6888 = vld [vmem:[#allocation16] sm:$0x1]
        %v6890 = vlaneseq
        %v6891 = vshrl.u32 %v6890, 7
        %v6892 = vsub.s32 0, %v6891
        %v6893 = vrot.slane %v6888, %v6892
        %v6895 = vadd.f32 %v6872, %v6893
        %v6896 = vadd.f32 %v6873, %v6893
        %v6897 = vadd.f32 %v6874, %v6893
        %v6898 = vadd.f32 %v6875, %v6893
        %v6899 = vadd.f32 %v6876, %v6893
        %v6900 = vadd.f32 %v6877, %v6893
        %v6901 = vadd.f32 %v6878, %v6893
        %v6902 = vadd.f32 %v6879, %v6893
        %v6903 = vadd.f32 %v6880, %v6893
        %v6904 = vadd.f32 %v6881, %v6893
        %v6905 = vadd.f32 %v6882, %v6893
        %v6906 = vadd.f32 %v6883, %v6893
        %v6907 = vadd.f32 %v6884, %v6893
        %v6908 = vadd.f32 %v6885, %v6893
        %v6909 = vadd.f32 %v6886, %v6893
        %v6910 = vadd.f32 %v6887, %v6893
        %v6911 = vmax.f32 %v6895, 0.0
        %v6912 = vmax.f32 %v6896, 0.0
        %v6913 = vmax.f32 %v6897, 0.0
        %v6914 = vmax.f32 %v6898, 0.0
        %v6915 = vmax.f32 %v6899, 0.0
        %v6916 = vmax.f32 %v6900, 0.0
        %v6917 = vmax.f32 %v6901, 0.0
        %v6918 = vmax.f32 %v6902, 0.0
        %v6919 = vmax.f32 %v6903, 0.0
        %v6920 = vmax.f32 %v6904, 0.0
        %v6921 = vmax.f32 %v6905, 0.0
        %v6922 = vmax.f32 %v6906, 0.0
        %v6923 = vmax.f32 %v6907, 0.0
        %v6924 = vmax.f32 %v6908, 0.0
        %v6925 = vmax.f32 %v6909, 0.0
        %v6926 = vmax.f32 %v6910, 0.0
        %6927 = vst [vmem:[%s572] sm:$0xff] %v6911
        %6928 = vst [vmem:[%s572 + $0x8] sm:$0xff] %v6912
        %6929 = vst [vmem:[%s572 + $0x10] sm:$0xff] %v6913
        %6930 = vst [vmem:[%s572 + $0x18] sm:$0xff] %v6914
        %6931 = vst [vmem:[%s572 + $0x20] sm:$0xff] %v6915
        %6932 = vst [vmem:[%s572 + $0x28] sm:$0xff] %v6916
        %6933 = vst [vmem:[%s572 + $0x30] sm:$0xff] %v6917
        %6934 = vst [vmem:[%s572 + $0x38] sm:$0xff] %v6918
        %6935 = vst [vmem:[%s572 + $0x40] sm:$0xff] %v6919
        %6936 = vst [vmem:[%s572 + $0x48] sm:$0xff] %v6920
        %6937 = vst [vmem:[%s572 + $0x50] sm:$0xff] %v6921
        %6938 = vst [vmem:[%s572 + $0x58] sm:$0xff] %v6922
        %6939 = vst [vmem:[%s572 + $0x60] sm:$0xff] %v6923
        %6940 = vst [vmem:[%s572 + $0x68] sm:$0xff] %v6924
        %6941 = vst [vmem:[%s572 + $0x70] sm:$0xff] %v6925
        %6942 = vst [vmem:[%s572 + $0x78] sm:$0xff] %v6926
        %v6943 = vmul.f32 %v6911, %v6911
        %v6944 = vmul.f32 %v6912, %v6912
        %v6945 = vmul.f32 %v6913, %v6913
        %v6946 = vmul.f32 %v6914, %v6914
        %v6947 = vmul.f32 %v6915, %v6915
        %v6948 = vmul.f32 %v6916, %v6916
        %v6949 = vmul.f32 %v6917, %v6917
        %v6950 = vmul.f32 %v6918, %v6918
        %v6951 = vmul.f32 %v6919, %v6919
        %v6952 = vmul.f32 %v6920, %v6920
        %v6953 = vmul.f32 %v6921, %v6921
        %v6954 = vmul.f32 %v6922, %v6922
        %v6955 = vmul.f32 %v6923, %v6923
        %v6956 = vmul.f32 %v6924, %v6924
        %v6957 = vmul.f32 %v6925, %v6925
        %v6958 = vmul.f32 %v6926, %v6926
        %6959 = vadd.xlane.f32.xlu0 %v6943
        %v6960 = vpop.xlane.xlu0 %6959
        %6961 = vadd.xlane.f32.xlu0 %v6944
        %v6962 = vpop.xlane.xlu0 %6961
        %6963 = vadd.xlane.f32.xlu0 %v6945
        %v6964 = vpop.xlane.xlu0 %6963
        %6965 = vadd.xlane.f32.xlu0 %v6946
        %v6966 = vpop.xlane.xlu0 %6965
        %6967 = vadd.xlane.f32.xlu0 %v6947
        %v6968 = vpop.xlane.xlu0 %6967
        %6969 = vadd.xlane.f32.xlu0 %v6948
        %v6970 = vpop.xlane.xlu0 %6969
        %6971 = vadd.xlane.f32.xlu0 %v6949
        %v6972 = vpop.xlane.xlu0 %6971
        %6973 = vadd.xlane.f32.xlu0 %v6950
        %v6974 = vpop.xlane.xlu0 %6973
        %6975 = vadd.xlane.f32.xlu0 %v6951
        %v6976 = vpop.xlane.xlu0 %6975
        %6977 = vadd.xlane.f32.xlu0 %v6952
        %v6978 = vpop.xlane.xlu0 %6977
        %6979 = vadd.xlane.f32.xlu0 %v6953
        %v6980 = vpop.xlane.xlu0 %6979
        %6981 = vadd.xlane.f32.xlu0 %v6954
        %v6982 = vpop.xlane.xlu0 %6981
        %6983 = vadd.xlane.f32.xlu0 %v6955
        %v6984 = vpop.xlane.xlu0 %6983
        %6985 = vadd.xlane.f32.xlu0 %v6956
        %v6986 = vpop.xlane.xlu0 %6985
        %6987 = vadd.xlane.f32.xlu0 %v6957
        %v6988 = vpop.xlane.xlu0 %6987
        %6989 = vadd.xlane.f32.xlu0 %v6958
        %v6990 = vpop.xlane.xlu0 %6989
        %v6991 = vadd.f32 %v6960, 1e-10
        %v6992 = vadd.f32 %v6962, 1e-10
        %v6993 = vadd.f32 %v6964, 1e-10
        %v6994 = vadd.f32 %v6966, 1e-10
        %v6995 = vadd.f32 %v6968, 1e-10
        %v6996 = vadd.f32 %v6970, 1e-10
        %v6997 = vadd.f32 %v6972, 1e-10
        %v6998 = vadd.f32 %v6974, 1e-10
        %v6999 = vadd.f32 %v6976, 1e-10
        %v7000 = vadd.f32 %v6978, 1e-10
        %v7001 = vadd.f32 %v6980, 1e-10
        %v7002 = vadd.f32 %v6982, 1e-10
        %v7003 = vadd.f32 %v6984, 1e-10
        %v7004 = vadd.f32 %v6986, 1e-10
        %v7005 = vadd.f32 %v6988, 1e-10
        %v7006 = vadd.f32 %v6990, 1e-10
        %v7007 = vrsqrt.pop %v6991
        %v7008 = vrsqrt.pop %v6992
        %v7009 = vrsqrt.pop %v6993
        %v7010 = vrsqrt.pop %v6994
        %v7011 = vrsqrt.pop %v6995
        %v7012 = vrsqrt.pop %v6996
        %v7013 = vrsqrt.pop %v6997
        %v7014 = vrsqrt.pop %v6998
        %v7015 = vrsqrt.pop %v6999
        %v7016 = vrsqrt.pop %v7000
        %v7017 = vrsqrt.pop %v7001
        %v7018 = vrsqrt.pop %v7002
        %v7019 = vrsqrt.pop %v7003
        %v7020 = vrsqrt.pop %v7004
        %v7021 = vrsqrt.pop %v7005
        %v7022 = vrsqrt.pop %v7006
        %v7023 = vmul.f32 %v6911, %v7007
        %v7024 = vmul.f32 %v6912, %v7008
        %v7025 = vmul.f32 %v6913, %v7009
        %v7026 = vmul.f32 %v6914, %v7010
        %v7027 = vmul.f32 %v6915, %v7011
        %v7028 = vmul.f32 %v6916, %v7012
        %v7029 = vmul.f32 %v6917, %v7013
        %v7030 = vmul.f32 %v6918, %v7014
        %v7031 = vmul.f32 %v6919, %v7015
        %v7032 = vmul.f32 %v6920, %v7016
        %v7033 = vmul.f32 %v6921, %v7017
        %v7034 = vmul.f32 %v6922, %v7018
        %v7035 = vmul.f32 %v6923, %v7019
        %v7036 = vmul.f32 %v6924, %v7020
        %v7037 = vmul.f32 %v6925, %v7021
        %v7038 = vmul.f32 %v6926, %v7022
        %7039 = vst [vmem:[%s579] sm:$0xff] %v7023
        %7040 = vst [vmem:[%s579 + $0x8] sm:$0xff] %v7024
        %7041 = vst [vmem:[%s579 + $0x10] sm:$0xff] %v7025
        %7042 = vst [vmem:[%s579 + $0x18] sm:$0xff] %v7026
        %7043 = vst [vmem:[%s579 + $0x20] sm:$0xff] %v7027
        %7044 = vst [vmem:[%s579 + $0x28] sm:$0xff] %v7028
        %7045 = vst [vmem:[%s579 + $0x30] sm:$0xff] %v7029
        %7046 = vst [vmem:[%s579 + $0x38] sm:$0xff] %v7030
        %7047 = vst [vmem:[%s579 + $0x40] sm:$0xff] %v7031
        %7048 = vst [vmem:[%s579 + $0x48] sm:$0xff] %v7032
        %7049 = vst [vmem:[%s579 + $0x50] sm:$0xff] %v7033
        %7050 = vst [vmem:[%s579 + $0x58] sm:$0xff] %v7034
        %7051 = vst [vmem:[%s579 + $0x60] sm:$0xff] %v7035
        %7052 = vst [vmem:[%s579 + $0x68] sm:$0xff] %v7036
        %7053 = vst [vmem:[%s579 + $0x70] sm:$0xff] %v7037
        %7054 = vst [vmem:[%s579 + $0x78] sm:$0xff] %v7038
        %s7055 = sand.u32 %s256, 1
        %s7056 = scalar_lea.sflag [#allocation4], %s7055
        %s7057 = sand.u32 %s256, 1
        %s7058 = smul.addr %s7057, 128
        %s7059 = scalar_lea.vmem [#allocation17], %s7058
        %s7060 = sand.u32 %s282, 1
        %s7061 = scalar_lea.sflag [#allocation19], %s7060
        %s7062 = sand.u32 %s282, 1
        %s7063 = smul.addr %s7062, 128
        %s7064 = scalar_lea.vmem [#allocation18], %s7063
        // Predicated region
        $region93: #{tpu_custom_call.1} parent=55 // pred_check
          %p7065 = pneg %p266
        $region94: #{tpu_custom_call.1} parent=55 // pred_check_branch
          %7067 = sbr.rel (%p7065) target = $region96
        $region95: #{tpu_custom_call.1} parent=55 // pred_region
          %s7068 = smul.u32 16, %s39
          %s7070 = ssub.s32 2048, 2048
          %7071 = vsyncadd %s7056, %s7070
          %s7072 = smul.addr %s7068, 128
          %s7073 = scalar_lea.hbm %s9, %s7072
          %s7074 = sshll.u32 %s7059, 4
          %s7075 = int_to_ptr.vmem [resolvable:$true] %s7074
          %7080 = dma.vmem_to_hbm [thread:$0]  %s7075, 2048, %s7073, %s7056, 128, 128, 8
        $region96: #{tpu_custom_call.1} parent=55 // pred_fallthru
          _
        // Predicated region
        $region97: #{tpu_custom_call.1} parent=55 // pred_check
          %p7081 = pneg %p292
        $region98: #{tpu_custom_call.1} parent=55 // pred_check_branch
          %7083 = sbr.rel (%p7081) target = $region100
        $region99: #{tpu_custom_call.1} parent=55 // pred_region
          %s7084 = smul.u32 16, %s39
          %s7086 = ssub.s32 2048, 2048
          %7087 = vsyncadd %s7061, %s7086
          %s7088 = smul.addr %s7084, 128
          %s7089 = scalar_lea.hbm %s10, %s7088
          %s7090 = sshll.u32 %s7064, 4
          %s7091 = int_to_ptr.vmem [resolvable:$true] %s7090
          %7096 = dma.vmem_to_hbm [thread:$0]  %s7091, 2048, %s7089, %s7061, 128, 128, 8
        $region100: #{tpu_custom_call.1} parent=55 // pred_fallthru
          _
      $region56: #{tpu_custom_call.1} parent=5 // pred_fallthru
        _
      %p7097 = scmp.le.s32.totalorder 2, %s34
      // Predicated region
      $region101: #{tpu_custom_call.1} parent=5 // pred_check
        %p7098 = pneg %p7097
      $region102: #{tpu_custom_call.1} parent=5 // pred_check_branch
        %7100 = sbr.rel (%p7098) target = $region104
      $region103: #{tpu_custom_call.1} parent=5 // pred_region
        %s7101 = ssub.s32 %s34, 2
        // Predicated region
        $region105: #{tpu_custom_call.1} parent=103 // pred_check
          %p7102 = pneg %p272
        $region106: #{tpu_custom_call.1} parent=103 // pred_check_branch
          %7104 = sbr.rel (%p7102) target = $region108
        $region107: #{tpu_custom_call.1} parent=103 // pred_region
          %s7105 = sand.u32 %s257, 1
          %s7106 = scalar_lea.sflag [#allocation4], %s7105
          %s7107 = sand.u32 %s257, 1
          %s7108 = smul.addr %s7107, 128
          %s7109 = scalar_lea.vmem [#allocation17], %s7108
          %7110 = dma.done %s7106, 2048
        $region108: #{tpu_custom_call.1} parent=103 // pred_fallthru
          _
        // Predicated region
        $region109: #{tpu_custom_call.1} parent=103 // pred_check
          %p7111 = pneg %p298
        $region110: #{tpu_custom_call.1} parent=103 // pred_check_branch
          %7113 = sbr.rel (%p7111) target = $region112
        $region111: #{tpu_custom_call.1} parent=103 // pred_region
          %s7114 = sand.u32 %s283, 1
          %s7115 = scalar_lea.sflag [#allocation19], %s7114
          %s7116 = sand.u32 %s283, 1
          %s7117 = smul.addr %s7116, 128
          %s7118 = scalar_lea.vmem [#allocation18], %s7117
          %7119 = dma.done %s7115, 2048
        $region112: #{tpu_custom_call.1} parent=103 // pred_fallthru
          _
      $region104: #{tpu_custom_call.1} parent=5 // pred_fallthru
        _
    $region6: #{tpu_custom_call.1} parent=1 // loop_footer
      %s38 = sadd.s32 1, %s34
    $region7: #{tpu_custom_call.1} parent=1 // loop_footer_branch
      %33 = sbr.rel target = $region3
    $region8: #{tpu_custom_call.1} parent=1 // loop_exit
      _
    %7120 = vsyncpa [#allocation3], 1
    %s7121 = scalar_lea.sflag [#allocation3], 1
    %7122 = vsyncpa %s7121, 1
    %7123 = vsyncpa [#allocation6], 1
    %s7124 = scalar_lea.sflag [#allocation6], 1
    %7125 = vsyncpa %s7124, 1
    %7126 = vsyncpa [#allocation9], 1
    %s7127 = scalar_lea.sflag [#allocation9], 1
    %7128 = vsyncpa %s7127, 1
    %7129 = vsyncpa [#allocation12], 1
    %7130 = vsyncpa [#allocation15], 1
    %7131 = vsyncpa [#allocation4], 1
    %s7132 = scalar_lea.sflag [#allocation4], 1
    %7133 = vsyncpa %s7132, 1
    %7134 = vsyncpa [#allocation19], 1
    %s7135 = scalar_lea.sflag [#allocation19], 1
    %7136 = vsyncpa %s7135, 1

</llo_original>
